<compile_context>
chip_gen: v7x
topology: tpu7x:2x2x1
jax: 0.10.0
libtpu: 0.0.40
codegen_flags: <defaults>
</compile_context>

<pallas_src>
import math
from functools import partial

import jax
import jax.numpy as jnp
from jax.experimental import pallas as pl
from jax.experimental.pallas import tpu as pltpu

# ----------------------------- model config -----------------------------
VOCAB = 32
D_MODEL = 32
N_HEADS = 4
D_HEAD = D_MODEL // N_HEADS
FFN_HIDDEN = 64
LN_EPS = 1e-5
OUT_PAD = 128  # lane-dense padded width of the output head

# ----------------------------- static packing layouts -----------------------------
# Shared between pack_params (host) and the kernel (trace-time constants).
_W32_ORDER = [  # (name, n_cols); every matrix here has D_MODEL rows
    ("w_out", OUT_PAD),
    ("e_wqkv", 3 * D_MODEL), ("d_wqkv", 3 * D_MODEL),
    ("e_w1", FFN_HIDDEN), ("c_wkv", 2 * D_MODEL), ("f_w1", FFN_HIDDEN),
    ("enc_emb", D_MODEL), ("dec_emb", D_MODEL),
    ("e_wo", D_MODEL), ("d_wo", D_MODEL), ("c_wq", D_MODEL), ("c_wo", D_MODEL),
]
_W32_OFF, _W32_W = {}, {}
_off = 0
for _n, _w in _W32_ORDER:
    _W32_OFF[_n], _W32_W[_n] = _off, _w
    _off += _w
W32_COLS = _off

_W64_ORDER = [("e_w2", D_MODEL), ("f_w2", D_MODEL)]  # FFN_HIDDEN rows each
_W64_OFF, _W64_W = {}, {}
_off = 0
for _n, _w in _W64_ORDER:
    _W64_OFF[_n], _W64_W[_n] = _off, _w
    _off += _w
W64_COLS = _off

_VEC_ORDER = [  # (name, logical width); each stored as one zero-padded (1,128) row
    ("e_bqkv", 3 * D_MODEL), ("e_bo", D_MODEL), ("e_g1", D_MODEL), ("e_bt1", D_MODEL),
    ("e_fb1", FFN_HIDDEN), ("e_fb2", D_MODEL), ("e_g2", D_MODEL), ("e_bt2", D_MODEL),
    ("d_bqkv", 3 * D_MODEL), ("d_bo", D_MODEL), ("d_g1", D_MODEL), ("d_bt1", D_MODEL),
    ("c_bq", D_MODEL), ("c_bkv", 2 * D_MODEL), ("c_bo", D_MODEL),
    ("d_g2", D_MODEL), ("d_bt2", D_MODEL),
    ("f_b1", FFN_HIDDEN), ("f_b2", D_MODEL), ("d_g3", D_MODEL), ("d_bt3", D_MODEL),
    ("b_out", OUT_PAD),
]
_VEC_ROW = {n: i for i, (n, _) in enumerate(_VEC_ORDER)}
_VEC_W = {n: w for n, w in _VEC_ORDER}
VEC_ROWS = len(_VEC_ORDER)
VEC_COLS = 128


# ----------------------------- in-kernel attention (pure jnp, traced) ---------------
def _attention_heads(q2d, k2d, v2d, batch, sq, sk, causal):
    """q2d: (batch*sq, D); k2d/v2d: (batch*sk, D) -> (batch*sq, D).
    The 1/sqrt(d_head) scale is folded into the Q projection at pack time."""
    if causal:
        row = jax.lax.broadcasted_iota(jnp.int32, (sq, sk), 0)
        col = jax.lax.broadcasted_iota(jnp.int32, (sq, sk), 1)
        causal_bias = jnp.where(col <= row, 0.0, -1e9).astype(jnp.float32)
    out_batches = []
    for b in range(batch):
        qb = q2d[b * sq:(b + 1) * sq, :]
        kb = k2d[b * sk:(b + 1) * sk, :]
        vb = v2d[b * sk:(b + 1) * sk, :]
        heads = []
        for h in range(N_HEADS):
            lo, hi = h * D_HEAD, (h + 1) * D_HEAD
            qh, kh, vh = qb[:, lo:hi], kb[:, lo:hi], vb[:, lo:hi]
            s = jnp.einsum("qd,kd->qk", qh, kh, preferred_element_type=jnp.float32)
            if causal:
                s = s + causal_bias
            m = jnp.max(s, axis=-1, keepdims=True)
            p = jnp.exp(s - m)
            denom = jnp.sum(p, axis=-1, keepdims=True)
            o = jnp.dot(p, vh, preferred_element_type=jnp.float32)
            o = o * pl.reciprocal(denom, approx=True)
            heads.append(o)
        out_batches.append(jnp.concatenate(heads, axis=-1))
    return jnp.concatenate(out_batches, axis=0)


# ----------------------------- the single fused kernel -----------------------------
def _fused_seq2seq_kernel(ids_ref, pos_ref, w32_ref, w64_ref, vec_ref, out_ref,
                          *, batch, s_enc, s_dec):
    D = D_MODEL
    bse, bsd = batch * s_enc, batch * s_dec

    def w32(name):
        o = _W32_OFF[name]
        return w32_ref[:, o:o + _W32_W[name]]

    def w64(name):
        o = _W64_OFF[name]
        return w64_ref[:, o:o + _W64_W[name]]

    def vec(name):
        r = _VEC_ROW[name]
        return vec_ref[r:r + 1, :_VEC_W[name]]

    def embed(ids, emb, pos):
        # one-hot matmul embedding (sqrt(D) already folded into emb at pack time)
        vocab_ids = jax.lax.broadcasted_iota(jnp.int32, (ids.shape[0], VOCAB), 1)
        onehot = (ids == vocab_ids).astype(jnp.float32)
        return jnp.dot(onehot, emb, preferred_element_type=jnp.float32) + pos

    def mm(x, w, b):
        return jnp.dot(x, w, preferred_element_type=jnp.float32) + b

    def layer_norm(x, g, bt):
        mu = jnp.mean(x, axis=-1, keepdims=True)
        var = jnp.mean((x - mu) ** 2, axis=-1, keepdims=True)
        return (x - mu) * jax.lax.rsqrt(var + LN_EPS) * g + bt

    # ---------------- encoder block ----------------
    x = embed(ids_ref[0:bse, :], w32("enc_emb"), pos_ref[0:bse, :])
    qkv = mm(x, w32("e_wqkv"), vec("e_bqkv"))                        # (B*Se, 3D)
    attn = _attention_heads(qkv[:, 0:D], qkv[:, D:2 * D], qkv[:, 2 * D:3 * D],
                            batch, s_enc, s_enc, causal=False)
    x = layer_norm(x + mm(attn, w32("e_wo"), vec("e_bo")), vec("e_g1"), vec("e_bt1"))
    h = jnp.maximum(mm(x, w32("e_w1"), vec("e_fb1")), 0.0)
    enc_out = layer_norm(x + mm(h, w64("e_w2"), vec("e_fb2")),
                         vec("e_g2"), vec("e_bt2"))

    # ---------------- decoder block ----------------
    x = embed(ids_ref[bse:bse + bsd, :], w32("dec_emb"), pos_ref[bse:bse + bsd, :])
    qkv = mm(x, w32("d_wqkv"), vec("d_bqkv"))                        # masked self-attn
    attn = _attention_heads(qkv[:, 0:D], qkv[:, D:2 * D], qkv[:, 2 * D:3 * D],
                            batch, s_dec, s_dec, causal=True)
    x = layer_norm(x + mm(attn, w32("d_wo"), vec("d_bo")), vec("d_g1"), vec("d_bt1"))

    q = mm(x, w32("c_wq"), vec("c_bq"))                              # cross-attention
    kv = mm(enc_out, w32("c_wkv"), vec("c_bkv"))
    attn = _attention_heads(q, kv[:, 0:D], kv[:, D:2 * D],
                            batch, s_dec, s_enc, causal=False)
    x = layer_norm(x + mm(attn, w32("c_wo"), vec("c_bo")), vec("d_g2"), vec("d_bt2"))

    h = jnp.maximum(mm(x, w32("f_w1"), vec("f_b1")), 0.0)            # FFN
    x = layer_norm(x + mm(h, w64("f_w2"), vec("f_b2")), vec("d_g3"), vec("d_bt3"))

    # lane-dense (128-wide, zero-padded) output head
    out_ref[...] = mm(x, w32("w_out"), vec("b_out")).astype(out_ref.dtype)


# ----------------------------- host-side glue -----------------------------
def positional_encoding(seq, d):
    pos = jnp.arange(seq, dtype=jnp.float32)[:, None]
    i = jnp.arange(0, d, 2, dtype=jnp.float32)
    angles = pos / jnp.power(10000.0, i / d)
    pe = jnp.zeros((seq, d), dtype=jnp.float32)
    pe = pe.at[:, 0::2].set(jnp.sin(angles))
    pe = pe.at[:, 1::2].set(jnp.cos(angles))
    return pe


def _vmem_spec():
    return pl.BlockSpec(memory_space=pltpu.MemorySpace.VMEM)


@jax.jit
def encoder_decoder_forward(enc_X, dec_X, packed):
    """Mirrors EncoderDecoder.forward: enc -> init_state (= enc_outputs) -> dec."""
    # TODO(synk): enc_valid_lens-based padding masks are omitted (treated as None).
    B, S_enc = enc_X.shape
    _, S_dec = dec_X.shape
    ids = jnp.concatenate(
        [enc_X.reshape(-1), dec_X.reshape(-1)]).astype(jnp.int32).reshape(-1, 1)
    pe = jnp.concatenate(
        [jnp.tile(positional_encoding(S_enc, D_MODEL), (B, 1)),
         jnp.tile(positional_encoding(S_dec, D_MODEL), (B, 1))], axis=0)

    out = pl.pallas_call(
        partial(_fused_seq2seq_kernel, batch=B, s_enc=S_enc, s_dec=S_dec),
        out_shape=jax.ShapeDtypeStruct((B * S_dec, OUT_PAD), jnp.float32),
        in_specs=[_vmem_spec() for _ in range(5)],
        out_specs=_vmem_spec(),
    )(ids, pe, packed["w32"], packed["w64"], packed["vec"])
    return out[:, :VOCAB].reshape(B, S_dec, VOCAB)


# ----------------------------- parameter init & packing -----------------------------
def _dense(key, din, dout, scale=0.02):
    return (scale * jax.random.normal(key, (din, dout), dtype=jnp.float32),
            jnp.zeros((dout,), dtype=jnp.float32))


def _attn_params(key):
    ks = jax.random.split(key, 4)
    Wq, bq = _dense(ks[0], D_MODEL, D_MODEL)
    Wk, bk = _dense(ks[1], D_MODEL, D_MODEL)
    Wv, bv = _dense(ks[2], D_MODEL, D_MODEL)
    Wo, bo = _dense(ks[3], D_MODEL, D_MODEL)
    return dict(Wq=Wq, bq=bq, Wk=Wk, bk=bk, Wv=Wv, bv=bv, Wo=Wo, bo=bo)


def _ln_params():
    return dict(gamma=jnp.ones((D_MODEL,), jnp.float32),
                beta=jnp.zeros((D_MODEL,), jnp.float32))


def _ffn_params(key):
    k1, k2 = jax.random.split(key)
    W1, b1 = _dense(k1, D_MODEL, FFN_HIDDEN)
    W2, b2 = _dense(k2, FFN_HIDDEN, D_MODEL)
    return dict(W1=W1, b1=b1, W2=W2, b2=b2)


def init_params(key):
    ke, kd = jax.random.split(key)
    ke = jax.random.split(ke, 3)
    kd = jax.random.split(kd, 5)
    encoder = dict(
        emb=0.02 * jax.random.normal(ke[0], (VOCAB, D_MODEL), jnp.float32),
        attn=_attn_params(ke[1]), ln1=_ln_params(),
        ffn=_ffn_params(ke[2]), ln2=_ln_params(),
    )
    Wout, bout = _dense(kd[4], D_MODEL, VOCAB)
    decoder = dict(
        emb=0.02 * jax.random.normal(kd[0], (VOCAB, D_MODEL), jnp.float32),
        self_attn=_attn_params(kd[1]), ln1=_ln_params(),
        cross_attn=_attn_params(kd[2]), ln2=_ln_params(),
        ffn=_ffn_params(kd[3]), ln3=_ln_params(),
        Wout=Wout, bout=bout,
    )
    return dict(encoder=encoder, decoder=decoder)


def pack_params(params):
    """One-time packing:
      - fuse Q|K|V (and K|V) weights, fold 1/sqrt(d_head) into Q projections,
      - fold sqrt(D) into embedding tables,
      - pad the output head to a lane-dense 128-wide slab,
      - pack all matrices into two weight slabs (by row count) and all bias/LN
        vectors into one (22, 128) slab -> only 3 parameter tensors enter the kernel."""
    enc, dec = params["encoder"], params["decoder"]
    sqd = math.sqrt(D_MODEL)
    inv_scale = 1.0 / math.sqrt(D_HEAD)

    def fuse_qkv(a):
        w = jnp.concatenate([a["Wq"] * inv_scale, a["Wk"], a["Wv"]], axis=1)
        b = jnp.concatenate([a["bq"] * inv_scale, a["bk"], a["bv"]])
        return w, b

    e_wqkv, e_bqkv = fuse_qkv(enc["attn"])
    d_wqkv, d_bqkv = fuse_qkv(dec["self_attn"])
    ca = dec["cross_attn"]
    c_wkv = jnp.concatenate([ca["Wk"], ca["Wv"]], axis=1)
    c_bkv = jnp.concatenate([ca["bk"], ca["bv"]])

    w_out = jnp.pad(dec["Wout"], ((0, 0), (0, OUT_PAD - VOCAB)))
    b_out = jnp.pad(dec["bout"], (0, OUT_PAD - VOCAB))

    w32_parts = dict(
        w_out=w_out, e_wqkv=e_wqkv, d_wqkv=d_wqkv,
        e_w1=enc["ffn"]["W1"], c_wkv=c_wkv, f_w1=dec["ffn"]["W1"],
        enc_emb=enc["emb"] * sqd, dec_emb=dec["emb"] * sqd,
        e_wo=enc["attn"]["Wo"], d_wo=dec["self_attn"]["Wo"],
        c_wq=ca["Wq"] * inv_scale, c_wo=ca["Wo"],
    )
    w64_parts = dict(e_w2=enc["ffn"]["W2"], f_w2=dec["ffn"]["W2"])
    vec_parts = dict(
        e_bqkv=e_bqkv, e_bo=enc["attn"]["bo"],
        e_g1=enc["ln1"]["gamma"], e_bt1=enc["ln1"]["beta"],
        e_fb1=enc["ffn"]["b1"], e_fb2=enc["ffn"]["b2"],
        e_g2=enc["ln2"]["gamma"], e_bt2=enc["ln2"]["beta"],
        d_bqkv=d_bqkv, d_bo=dec["self_attn"]["bo"],
        d_g1=dec["ln1"]["gamma"], d_bt1=dec["ln1"]["beta"],
        c_bq=ca["bq"] * inv_scale, c_bkv=c_bkv, c_bo=ca["bo"],
        d_g2=dec["ln2"]["gamma"], d_bt2=dec["ln2"]["beta"],
        f_b1=dec["ffn"]["b1"], f_b2=dec["ffn"]["b2"],
        d_g3=dec["ln3"]["gamma"], d_bt3=dec["ln3"]["beta"],
        b_out=b_out,
    )

    w32 = jnp.concatenate([w32_parts[n] for n, _ in _W32_ORDER], axis=1)
    w64 = jnp.concatenate([w64_parts[n] for n, _ in _W64_ORDER], axis=1)

    def row128(v):
        v = v.reshape(-1)
        return jnp.pad(v, (0, VEC_COLS - v.shape[0])).reshape(1, VEC_COLS)

    vec = jnp.concatenate([row128(vec_parts[n]) for n, _ in _VEC_ORDER], axis=0)

    assert w32.shape == (D_MODEL, W32_COLS)
    assert w64.shape == (FFN_HIDDEN, W64_COLS)
    assert vec.shape == (VEC_ROWS, VEC_COLS)
    return dict(w32=w32, w64=w64, vec=vec)


# ----------------------------- main -----------------------------
if __name__ == "__main__":
    key = jax.random.PRNGKey(0)
    k_param, k_enc, k_dec = jax.random.split(key, 3)

    B, S_ENC, S_DEC = 2, 8, 8
    params = init_params(k_param)
    packed = pack_params(params)
    enc_X = jax.random.randint(k_enc, (B, S_ENC), 0, VOCAB, dtype=jnp.int32)
    dec_X = jax.random.randint(k_dec, (B, S_DEC), 0, VOCAB, dtype=jnp.int32)

    logits = encoder_decoder_forward(enc_X, dec_X, packed)
    logits = jax.block_until_ready(logits)

    assert logits.shape == (B, S_DEC, VOCAB)
    assert bool(jnp.all(jnp.isfinite(logits)))
    print("KERNEL_OK")
</pallas_src>

<mosaic_0001>
module attributes {stable_mosaic.version = 11 : i64} {
  func.func @_fused_seq2seq_kernel(%arg0: memref<32x1xi32, #tpu.memory_space<vmem>>, %arg1: memref<32x32xf32, #tpu.memory_space<vmem>>, %arg2: memref<32x704xf32, #tpu.memory_space<vmem>>, %arg3: memref<64x64xf32, #tpu.memory_space<vmem>>, %arg4: memref<22x128xf32, #tpu.memory_space<vmem>>, %arg5: memref<16x128xf32, #tpu.memory_space<vmem>>) attributes {dimension_semantics = [], scalar_prefetch = 0 : i64, scratch_operands = 0 : i64, tpu.core_type = #tpu.core_type<tc>} {
    %c0 = arith.constant 0 : index
    %c0_0 = arith.constant 0 : index
    %0 = vector.load %arg0[%c0, %c0_0] : memref<32x1xi32, #tpu.memory_space<vmem>>, vector<16x1xi32>
    %c0_1 = arith.constant 0 : index
    %c512 = arith.constant 512 : index
    %1 = vector.load %arg2[%c0_1, %c512] : memref<32x704xf32, #tpu.memory_space<vmem>>, vector<32x32xf32>
    %c0_2 = arith.constant 0 : index
    %c0_3 = arith.constant 0 : index
    %2 = vector.load %arg1[%c0_2, %c0_3] : memref<32x32xf32, #tpu.memory_space<vmem>>, vector<16x32xf32>
    %3 = tpu.iota {dimensions = array<i32: 1>} : vector<16x32xi32>
    %4 = vector.broadcast %0 : vector<16x1xi32> to vector<16x32xi32>
    %5 = arith.cmpi eq, %4, %3 : vector<16x32xi32>
    %6 = arith.extui %5 : vector<16x32xi1> to vector<16x32xi32>
    %7 = arith.sitofp %6 : vector<16x32xi32> to vector<16x32xf32>
    %cst = arith.constant dense<0.000000e+00> : vector<16x32xf32>
    %8 = tpu.matmul %7, %1, %cst {dimension_numbers = #tpu.dot_dimension_numbers<[1], [0], [0], [1], [0, 0, 1, 1], [], []>} : vector<16x32xf32>, vector<32x32xf32>, vector<16x32xf32> -> vector<16x32xf32>
    %9 = arith.addf %8, %2 : vector<16x32xf32>
    %c0_4 = arith.constant 0 : index
    %c128 = arith.constant 128 : index
    %10 = vector.load %arg2[%c0_4, %c128] : memref<32x704xf32, #tpu.memory_space<vmem>>, vector<32x96xf32>
    %c0_5 = arith.constant 0 : index
    %c0_6 = arith.constant 0 : index
    %11 = vector.load %arg4[%c0_5, %c0_6] : memref<22x128xf32, #tpu.memory_space<vmem>>, vector<1x96xf32>
    %cst_7 = arith.constant dense<0.000000e+00> : vector<16x96xf32>
    %12 = tpu.matmul %9, %10, %cst_7 {dimension_numbers = #tpu.dot_dimension_numbers<[1], [0], [0], [1], [0, 0, 1, 1], [], []>} : vector<16x32xf32>, vector<32x96xf32>, vector<16x96xf32> -> vector<16x96xf32>
    %13 = vector.broadcast %11 : vector<1x96xf32> to vector<16x96xf32>
    %14 = arith.addf %12, %13 : vector<16x96xf32>
    %15 = vector.extract_strided_slice %14 {offsets = [0, 0], sizes = [16, 32], strides = [1, 1]} : vector<16x96xf32> to vector<16x32xf32>
    %16 = vector.extract_strided_slice %14 {offsets = [0, 32], sizes = [16, 32], strides = [1, 1]} : vector<16x96xf32> to vector<16x32xf32>
    %17 = vector.extract_strided_slice %14 {offsets = [0, 64], sizes = [16, 32], strides = [1, 1]} : vector<16x96xf32> to vector<16x32xf32>
    %18 = vector.extract_strided_slice %15 {offsets = [0, 0], sizes = [8, 32], strides = [1, 1]} : vector<16x32xf32> to vector<8x32xf32>
    %19 = vector.extract_strided_slice %16 {offsets = [0, 0], sizes = [8, 32], strides = [1, 1]} : vector<16x32xf32> to vector<8x32xf32>
    %20 = vector.extract_strided_slice %17 {offsets = [0, 0], sizes = [8, 32], strides = [1, 1]} : vector<16x32xf32> to vector<8x32xf32>
    %21 = vector.extract_strided_slice %18 {offsets = [0, 0], sizes = [8, 8], strides = [1, 1]} : vector<8x32xf32> to vector<8x8xf32>
    %22 = vector.extract_strided_slice %19 {offsets = [0, 0], sizes = [8, 8], strides = [1, 1]} : vector<8x32xf32> to vector<8x8xf32>
    %23 = vector.extract_strided_slice %20 {offsets = [0, 0], sizes = [8, 8], strides = [1, 1]} : vector<8x32xf32> to vector<8x8xf32>
    "tpu.trace_start"() <{level = 10 : i32, message = "qd,kd->qk"}> : () -> ()
    %cst_8 = arith.constant dense<0.000000e+00> : vector<8x8xf32>
    %24 = tpu.matmul %21, %22, %cst_8 {dimension_numbers = #tpu.dot_dimension_numbers<[1], [1], [0], [0], [0, 0, 1, 0], [], []>} : vector<8x8xf32>, vector<8x8xf32>, vector<8x8xf32> -> vector<8x8xf32>
    "tpu.trace_stop"() : () -> ()
    %cst_9 = arith.constant dense<0xFF800000> : vector<8xf32>
    %25 = vector.multi_reduction <maximumf>, %24, %cst_9 [1] : vector<8x8xf32> to vector<8xf32>
    %26 = vector.shape_cast %25 : vector<8xf32> to vector<8x1xf32>
    %27 = vector.broadcast %26 : vector<8x1xf32> to vector<8x8xf32>
    %28 = arith.subf %24, %27 : vector<8x8xf32>
    %29 = math.exp %28 : vector<8x8xf32>
    %cst_10 = arith.constant dense<0.000000e+00> : vector<8xf32>
    %30 = vector.multi_reduction <add>, %29, %cst_10 [1] : vector<8x8xf32> to vector<8xf32>
    %31 = vector.shape_cast %30 : vector<8xf32> to vector<8x1xf32>
    %cst_11 = arith.constant dense<0.000000e+00> : vector<8x8xf32>
    %32 = tpu.matmul %29, %23, %cst_11 {dimension_numbers = #tpu.dot_dimension_numbers<[1], [0], [0], [1], [0, 0, 1, 1], [], []>} : vector<8x8xf32>, vector<8x8xf32>, vector<8x8xf32> -> vector<8x8xf32>
    %33 = tpu.reciprocal %31 {approx = true} : vector<8x1xf32> -> vector<8x1xf32>
    %34 = vector.broadcast %33 : vector<8x1xf32> to vector<8x8xf32>
    %35 = arith.mulf %32, %34 : vector<8x8xf32>
    %36 = vector.extract_strided_slice %18 {offsets = [0, 8], sizes = [8, 8], strides = [1, 1]} : vector<8x32xf32> to vector<8x8xf32>
    %37 = vector.extract_strided_slice %19 {offsets = [0, 8], sizes = [8, 8], strides = [1, 1]} : vector<8x32xf32> to vector<8x8xf32>
    %38 = vector.extract_strided_slice %20 {offsets = [0, 8], sizes = [8, 8], strides = [1, 1]} : vector<8x32xf32> to vector<8x8xf32>
    "tpu.trace_start"() <{level = 10 : i32, message = "qd,kd->qk"}> : () -> ()
    %cst_12 = arith.constant dense<0.000000e+00> : vector<8x8xf32>
    %39 = tpu.matmul %36, %37, %cst_12 {dimension_numbers = #tpu.dot_dimension_numbers<[1], [1], [0], [0], [0, 0, 1, 0], [], []>} : vector<8x8xf32>, vector<8x8xf32>, vector<8x8xf32> -> vector<8x8xf32>
    "tpu.trace_stop"() : () -> ()
    %cst_13 = arith.constant dense<0xFF800000> : vector<8xf32>
    %40 = vector.multi_reduction <maximumf>, %39, %cst_13 [1] : vector<8x8xf32> to vector<8xf32>
    %41 = vector.shape_cast %40 : vector<8xf32> to vector<8x1xf32>
    %42 = vector.broadcast %41 : vector<8x1xf32> to vector<8x8xf32>
    %43 = arith.subf %39, %42 : vector<8x8xf32>
    %44 = math.exp %43 : vector<8x8xf32>
    %cst_14 = arith.constant dense<0.000000e+00> : vector<8xf32>
    %45 = vector.multi_reduction <add>, %44, %cst_14 [1] : vector<8x8xf32> to vector<8xf32>
    %46 = vector.shape_cast %45 : vector<8xf32> to vector<8x1xf32>
    %cst_15 = arith.constant dense<0.000000e+00> : vector<8x8xf32>
    %47 = tpu.matmul %44, %38, %cst_15 {dimension_numbers = #tpu.dot_dimension_numbers<[1], [0], [0], [1], [0, 0, 1, 1], [], []>} : vector<8x8xf32>, vector<8x8xf32>, vector<8x8xf32> -> vector<8x8xf32>
    %48 = tpu.reciprocal %46 {approx = true} : vector<8x1xf32> -> vector<8x1xf32>
    %49 = vector.broadcast %48 : vector<8x1xf32> to vector<8x8xf32>
    %50 = arith.mulf %47, %49 : vector<8x8xf32>
    %51 = vector.extract_strided_slice %18 {offsets = [0, 16], sizes = [8, 8], strides = [1, 1]} : vector<8x32xf32> to vector<8x8xf32>
    %52 = vector.extract_strided_slice %19 {offsets = [0, 16], sizes = [8, 8], strides = [1, 1]} : vector<8x32xf32> to vector<8x8xf32>
    %53 = vector.extract_strided_slice %20 {offsets = [0, 16], sizes = [8, 8], strides = [1, 1]} : vector<8x32xf32> to vector<8x8xf32>
    "tpu.trace_start"() <{level = 10 : i32, message = "qd,kd->qk"}> : () -> ()
    %cst_16 = arith.constant dense<0.000000e+00> : vector<8x8xf32>
    %54 = tpu.matmul %51, %52, %cst_16 {dimension_numbers = #tpu.dot_dimension_numbers<[1], [1], [0], [0], [0, 0, 1, 0], [], []>} : vector<8x8xf32>, vector<8x8xf32>, vector<8x8xf32> -> vector<8x8xf32>
    "tpu.trace_stop"() : () -> ()
    %cst_17 = arith.constant dense<0xFF800000> : vector<8xf32>
    %55 = vector.multi_reduction <maximumf>, %54, %cst_17 [1] : vector<8x8xf32> to vector<8xf32>
    %56 = vector.shape_cast %55 : vector<8xf32> to vector<8x1xf32>
    %57 = vector.broadcast %56 : vector<8x1xf32> to vector<8x8xf32>
    %58 = arith.subf %54, %57 : vector<8x8xf32>
    %59 = math.exp %58 : vector<8x8xf32>
    %cst_18 = arith.constant dense<0.000000e+00> : vector<8xf32>
    %60 = vector.multi_reduction <add>, %59, %cst_18 [1] : vector<8x8xf32> to vector<8xf32>
    %61 = vector.shape_cast %60 : vector<8xf32> to vector<8x1xf32>
    %cst_19 = arith.constant dense<0.000000e+00> : vector<8x8xf32>
    %62 = tpu.matmul %59, %53, %cst_19 {dimension_numbers = #tpu.dot_dimension_numbers<[1], [0], [0], [1], [0, 0, 1, 1], [], []>} : vector<8x8xf32>, vector<8x8xf32>, vector<8x8xf32> -> vector<8x8xf32>
    %63 = tpu.reciprocal %61 {approx = true} : vector<8x1xf32> -> vector<8x1xf32>
    %64 = vector.broadcast %63 : vector<8x1xf32> to vector<8x8xf32>
    %65 = arith.mulf %62, %64 : vector<8x8xf32>
    %66 = vector.extract_strided_slice %18 {offsets = [0, 24], sizes = [8, 8], strides = [1, 1]} : vector<8x32xf32> to vector<8x8xf32>
    %67 = vector.extract_strided_slice %19 {offsets = [0, 24], sizes = [8, 8], strides = [1, 1]} : vector<8x32xf32> to vector<8x8xf32>
    %68 = vector.extract_strided_slice %20 {offsets = [0, 24], sizes = [8, 8], strides = [1, 1]} : vector<8x32xf32> to vector<8x8xf32>
    "tpu.trace_start"() <{level = 10 : i32, message = "qd,kd->qk"}> : () -> ()
    %cst_20 = arith.constant dense<0.000000e+00> : vector<8x8xf32>
    %69 = tpu.matmul %66, %67, %cst_20 {dimension_numbers = #tpu.dot_dimension_numbers<[1], [1], [0], [0], [0, 0, 1, 0], [], []>} : vector<8x8xf32>, vector<8x8xf32>, vector<8x8xf32> -> vector<8x8xf32>
    "tpu.trace_stop"() : () -> ()
    %cst_21 = arith.constant dense<0xFF800000> : vector<8xf32>
    %70 = vector.multi_reduction <maximumf>, %69, %cst_21 [1] : vector<8x8xf32> to vector<8xf32>
    %71 = vector.shape_cast %70 : vector<8xf32> to vector<8x1xf32>
    %72 = vector.broadcast %71 : vector<8x1xf32> to vector<8x8xf32>
    %73 = arith.subf %69, %72 : vector<8x8xf32>
    %74 = math.exp %73 : vector<8x8xf32>
    %cst_22 = arith.constant dense<0.000000e+00> : vector<8xf32>
    %75 = vector.multi_reduction <add>, %74, %cst_22 [1] : vector<8x8xf32> to vector<8xf32>
    %76 = vector.shape_cast %75 : vector<8xf32> to vector<8x1xf32>
    %cst_23 = arith.constant dense<0.000000e+00> : vector<8x8xf32>
    %77 = tpu.matmul %74, %68, %cst_23 {dimension_numbers = #tpu.dot_dimension_numbers<[1], [0], [0], [1], [0, 0, 1, 1], [], []>} : vector<8x8xf32>, vector<8x8xf32>, vector<8x8xf32> -> vector<8x8xf32>
    %78 = tpu.reciprocal %76 {approx = true} : vector<8x1xf32> -> vector<8x1xf32>
    %79 = vector.broadcast %78 : vector<8x1xf32> to vector<8x8xf32>
    %80 = arith.mulf %77, %79 : vector<8x8xf32>
    %81 = tpu.concatenate %35, %50, %65, %80 in 1 : vector<8x8xf32>, vector<8x8xf32>, vector<8x8xf32>, vector<8x8xf32> -> vector<8x32xf32>
    %82 = vector.extract_strided_slice %15 {offsets = [8, 0], sizes = [8, 32], strides = [1, 1]} : vector<16x32xf32> to vector<8x32xf32>
    %83 = vector.extract_strided_slice %16 {offsets = [8, 0], sizes = [8, 32], strides = [1, 1]} : vector<16x32xf32> to vector<8x32xf32>
    %84 = vector.extract_strided_slice %17 {offsets = [8, 0], sizes = [8, 32], strides = [1, 1]} : vector<16x32xf32> to vector<8x32xf32>
    %85 = vector.extract_strided_slice %82 {offsets = [0, 0], sizes = [8, 8], strides = [1, 1]} : vector<8x32xf32> to vector<8x8xf32>
    %86 = vector.extract_strided_slice %83 {offsets = [0, 0], sizes = [8, 8], strides = [1, 1]} : vector<8x32xf32> to vector<8x8xf32>
    %87 = vector.extract_strided_slice %84 {offsets = [0, 0], sizes = [8, 8], strides = [1, 1]} : vector<8x32xf32> to vector<8x8xf32>
    "tpu.trace_start"() <{level = 10 : i32, message = "qd,kd->qk"}> : () -> ()
    %cst_24 = arith.constant dense<0.000000e+00> : vector<8x8xf32>
    %88 = tpu.matmul %85, %86, %cst_24 {dimension_numbers = #tpu.dot_dimension_numbers<[1], [1], [0], [0], [0, 0, 1, 0], [], []>} : vector<8x8xf32>, vector<8x8xf32>, vector<8x8xf32> -> vector<8x8xf32>
    "tpu.trace_stop"() : () -> ()
    %cst_25 = arith.constant dense<0xFF800000> : vector<8xf32>
    %89 = vector.multi_reduction <maximumf>, %88, %cst_25 [1] : vector<8x8xf32> to vector<8xf32>
    %90 = vector.shape_cast %89 : vector<8xf32> to vector<8x1xf32>
    %91 = vector.broadcast %90 : vector<8x1xf32> to vector<8x8xf32>
    %92 = arith.subf %88, %91 : vector<8x8xf32>
    %93 = math.exp %92 : vector<8x8xf32>
    %cst_26 = arith.constant dense<0.000000e+00> : vector<8xf32>
    %94 = vector.multi_reduction <add>, %93, %cst_26 [1] : vector<8x8xf32> to vector<8xf32>
    %95 = vector.shape_cast %94 : vector<8xf32> to vector<8x1xf32>
    %cst_27 = arith.constant dense<0.000000e+00> : vector<8x8xf32>
    %96 = tpu.matmul %93, %87, %cst_27 {dimension_numbers = #tpu.dot_dimension_numbers<[1], [0], [0], [1], [0, 0, 1, 1], [], []>} : vector<8x8xf32>, vector<8x8xf32>, vector<8x8xf32> -> vector<8x8xf32>
    %97 = tpu.reciprocal %95 {approx = true} : vector<8x1xf32> -> vector<8x1xf32>
    %98 = vector.broadcast %97 : vector<8x1xf32> to vector<8x8xf32>
    %99 = arith.mulf %96, %98 : vector<8x8xf32>
    %100 = vector.extract_strided_slice %82 {offsets = [0, 8], sizes = [8, 8], strides = [1, 1]} : vector<8x32xf32> to vector<8x8xf32>
    %101 = vector.extract_strided_slice %83 {offsets = [0, 8], sizes = [8, 8], strides = [1, 1]} : vector<8x32xf32> to vector<8x8xf32>
    %102 = vector.extract_strided_slice %84 {offsets = [0, 8], sizes = [8, 8], strides = [1, 1]} : vector<8x32xf32> to vector<8x8xf32>
    "tpu.trace_start"() <{level = 10 : i32, message = "qd,kd->qk"}> : () -> ()
    %cst_28 = arith.constant dense<0.000000e+00> : vector<8x8xf32>
    %103 = tpu.matmul %100, %101, %cst_28 {dimension_numbers = #tpu.dot_dimension_numbers<[1], [1], [0], [0], [0, 0, 1, 0], [], []>} : vector<8x8xf32>, vector<8x8xf32>, vector<8x8xf32> -> vector<8x8xf32>
    "tpu.trace_stop"() : () -> ()
    %cst_29 = arith.constant dense<0xFF800000> : vector<8xf32>
    %104 = vector.multi_reduction <maximumf>, %103, %cst_29 [1] : vector<8x8xf32> to vector<8xf32>
    %105 = vector.shape_cast %104 : vector<8xf32> to vector<8x1xf32>
    %106 = vector.broadcast %105 : vector<8x1xf32> to vector<8x8xf32>
    %107 = arith.subf %103, %106 : vector<8x8xf32>
    %108 = math.exp %107 : vector<8x8xf32>
    %cst_30 = arith.constant dense<0.000000e+00> : vector<8xf32>
    %109 = vector.multi_reduction <add>, %108, %cst_30 [1] : vector<8x8xf32> to vector<8xf32>
    %110 = vector.shape_cast %109 : vector<8xf32> to vector<8x1xf32>
    %cst_31 = arith.constant dense<0.000000e+00> : vector<8x8xf32>
    %111 = tpu.matmul %108, %102, %cst_31 {dimension_numbers = #tpu.dot_dimension_numbers<[1], [0], [0], [1], [0, 0, 1, 1], [], []>} : vector<8x8xf32>, vector<8x8xf32>, vector<8x8xf32> -> vector<8x8xf32>
    %112 = tpu.reciprocal %110 {approx = true} : vector<8x1xf32> -> vector<8x1xf32>
    %113 = vector.broadcast %112 : vector<8x1xf32> to vector<8x8xf32>
    %114 = arith.mulf %111, %113 : vector<8x8xf32>
    %115 = vector.extract_strided_slice %82 {offsets = [0, 16], sizes = [8, 8], strides = [1, 1]} : vector<8x32xf32> to vector<8x8xf32>
    %116 = vector.extract_strided_slice %83 {offsets = [0, 16], sizes = [8, 8], strides = [1, 1]} : vector<8x32xf32> to vector<8x8xf32>
    %117 = vector.extract_strided_slice %84 {offsets = [0, 16], sizes = [8, 8], strides = [1, 1]} : vector<8x32xf32> to vector<8x8xf32>
    "tpu.trace_start"() <{level = 10 : i32, message = "qd,kd->qk"}> : () -> ()
    %cst_32 = arith.constant dense<0.000000e+00> : vector<8x8xf32>
    %118 = tpu.matmul %115, %116, %cst_32 {dimension_numbers = #tpu.dot_dimension_numbers<[1], [1], [0], [0], [0, 0, 1, 0], [], []>} : vector<8x8xf32>, vector<8x8xf32>, vector<8x8xf32> -> vector<8x8xf32>
    "tpu.trace_stop"() : () -> ()
    %cst_33 = arith.constant dense<0xFF800000> : vector<8xf32>
    %119 = vector.multi_reduction <maximumf>, %118, %cst_33 [1] : vector<8x8xf32> to vector<8xf32>
    %120 = vector.shape_cast %119 : vector<8xf32> to vector<8x1xf32>
    %121 = vector.broadcast %120 : vector<8x1xf32> to vector<8x8xf32>
    %122 = arith.subf %118, %121 : vector<8x8xf32>
    %123 = math.exp %122 : vector<8x8xf32>
    %cst_34 = arith.constant dense<0.000000e+00> : vector<8xf32>
    %124 = vector.multi_reduction <add>, %123, %cst_34 [1] : vector<8x8xf32> to vector<8xf32>
    %125 = vector.shape_cast %124 : vector<8xf32> to vector<8x1xf32>
    %cst_35 = arith.constant dense<0.000000e+00> : vector<8x8xf32>
    %126 = tpu.matmul %123, %117, %cst_35 {dimension_numbers = #tpu.dot_dimension_numbers<[1], [0], [0], [1], [0, 0, 1, 1], [], []>} : vector<8x8xf32>, vector<8x8xf32>, vector<8x8xf32> -> vector<8x8xf32>
    %127 = tpu.reciprocal %125 {approx = true} : vector<8x1xf32> -> vector<8x1xf32>
    %128 = vector.broadcast %127 : vector<8x1xf32> to vector<8x8xf32>
    %129 = arith.mulf %126, %128 : vector<8x8xf32>
    %130 = vector.extract_strided_slice %82 {offsets = [0, 24], sizes = [8, 8], strides = [1, 1]} : vector<8x32xf32> to vector<8x8xf32>
    %131 = vector.extract_strided_slice %83 {offsets = [0, 24], sizes = [8, 8], strides = [1, 1]} : vector<8x32xf32> to vector<8x8xf32>
    %132 = vector.extract_strided_slice %84 {offsets = [0, 24], sizes = [8, 8], strides = [1, 1]} : vector<8x32xf32> to vector<8x8xf32>
    "tpu.trace_start"() <{level = 10 : i32, message = "qd,kd->qk"}> : () -> ()
    %cst_36 = arith.constant dense<0.000000e+00> : vector<8x8xf32>
    %133 = tpu.matmul %130, %131, %cst_36 {dimension_numbers = #tpu.dot_dimension_numbers<[1], [1], [0], [0], [0, 0, 1, 0], [], []>} : vector<8x8xf32>, vector<8x8xf32>, vector<8x8xf32> -> vector<8x8xf32>
    "tpu.trace_stop"() : () -> ()
    %cst_37 = arith.constant dense<0xFF800000> : vector<8xf32>
    %134 = vector.multi_reduction <maximumf>, %133, %cst_37 [1] : vector<8x8xf32> to vector<8xf32>
    %135 = vector.shape_cast %134 : vector<8xf32> to vector<8x1xf32>
    %136 = vector.broadcast %135 : vector<8x1xf32> to vector<8x8xf32>
    %137 = arith.subf %133, %136 : vector<8x8xf32>
    %138 = math.exp %137 : vector<8x8xf32>
    %cst_38 = arith.constant dense<0.000000e+00> : vector<8xf32>
    %139 = vector.multi_reduction <add>, %138, %cst_38 [1] : vector<8x8xf32> to vector<8xf32>
    %140 = vector.shape_cast %139 : vector<8xf32> to vector<8x1xf32>
    %cst_39 = arith.constant dense<0.000000e+00> : vector<8x8xf32>
    %141 = tpu.matmul %138, %132, %cst_39 {dimension_numbers = #tpu.dot_dimension_numbers<[1], [0], [0], [1], [0, 0, 1, 1], [], []>} : vector<8x8xf32>, vector<8x8xf32>, vector<8x8xf32> -> vector<8x8xf32>
    %142 = tpu.reciprocal %140 {approx = true} : vector<8x1xf32> -> vector<8x1xf32>
    %143 = vector.broadcast %142 : vector<8x1xf32> to vector<8x8xf32>
    %144 = arith.mulf %141, %143 : vector<8x8xf32>
    %145 = tpu.concatenate %99, %114, %129, %144 in 1 : vector<8x8xf32>, vector<8x8xf32>, vector<8x8xf32>, vector<8x8xf32> -> vector<8x32xf32>
    %146 = tpu.concatenate %81, %145 in 0 : vector<8x32xf32>, vector<8x32xf32> -> vector<16x32xf32>
    %c0_40 = arith.constant 0 : index
    %c576 = arith.constant 576 : index
    %147 = vector.load %arg2[%c0_40, %c576] : memref<32x704xf32, #tpu.memory_space<vmem>>, vector<32x32xf32>
    %c1 = arith.constant 1 : index
    %c0_41 = arith.constant 0 : index
    %148 = vector.load %arg4[%c1, %c0_41] : memref<22x128xf32, #tpu.memory_space<vmem>>, vector<1x32xf32>
    %cst_42 = arith.constant dense<0.000000e+00> : vector<16x32xf32>
    %149 = tpu.matmul %146, %147, %cst_42 {dimension_numbers = #tpu.dot_dimension_numbers<[1], [0], [0], [1], [0, 0, 1, 1], [], []>} : vector<16x32xf32>, vector<32x32xf32>, vector<16x32xf32> -> vector<16x32xf32>
    %150 = vector.broadcast %148 : vector<1x32xf32> to vector<16x32xf32>
    %151 = arith.addf %149, %150 : vector<16x32xf32>
    %152 = arith.addf %9, %151 : vector<16x32xf32>
    %c2 = arith.constant 2 : index
    %c0_43 = arith.constant 0 : index
    %153 = vector.load %arg4[%c2, %c0_43] : memref<22x128xf32, #tpu.memory_space<vmem>>, vector<1x32xf32>
    %c3 = arith.constant 3 : index
    %c0_44 = arith.constant 0 : index
    %154 = vector.load %arg4[%c3, %c0_44] : memref<22x128xf32, #tpu.memory_space<vmem>>, vector<1x32xf32>
    %cst_45 = arith.constant dense<0.000000e+00> : vector<16xf32>
    %155 = vector.multi_reduction <add>, %152, %cst_45 [1] : vector<16x32xf32> to vector<16xf32>
    %156 = vector.shape_cast %155 : vector<16xf32> to vector<16x1xf32>
    %cst_46 = arith.constant 3.200000e+01 : f32
    %157 = vector.broadcast %cst_46 : f32 to vector<16x1xf32>
    %158 = arith.divf %156, %157 : vector<16x1xf32>
    %159 = vector.broadcast %158 : vector<16x1xf32> to vector<16x32xf32>
    %160 = arith.subf %152, %159 : vector<16x32xf32>
    %161 = arith.mulf %160, %160 : vector<16x32xf32>
    %cst_47 = arith.constant dense<0.000000e+00> : vector<16xf32>
    %162 = vector.multi_reduction <add>, %161, %cst_47 [1] : vector<16x32xf32> to vector<16xf32>
    %163 = vector.shape_cast %162 : vector<16xf32> to vector<16x1xf32>
    %cst_48 = arith.constant 3.200000e+01 : f32
    %164 = vector.broadcast %cst_48 : f32 to vector<16x1xf32>
    %165 = arith.divf %163, %164 : vector<16x1xf32>
    %166 = vector.broadcast %158 : vector<16x1xf32> to vector<16x32xf32>
    %167 = arith.subf %152, %166 : vector<16x32xf32>
    %cst_49 = arith.constant 9.99999974E-6 : f32
    %168 = vector.broadcast %cst_49 : f32 to vector<16x1xf32>
    %169 = arith.addf %165, %168 : vector<16x1xf32>
    %170 = math.rsqrt %169 : vector<16x1xf32>
    %171 = vector.broadcast %170 : vector<16x1xf32> to vector<16x32xf32>
    %172 = arith.mulf %167, %171 : vector<16x32xf32>
    %173 = vector.broadcast %153 : vector<1x32xf32> to vector<16x32xf32>
    %174 = arith.mulf %172, %173 : vector<16x32xf32>
    %175 = vector.broadcast %154 : vector<1x32xf32> to vector<16x32xf32>
    %176 = arith.addf %174, %175 : vector<16x32xf32>
    %c0_50 = arith.constant 0 : index
    %c320 = arith.constant 320 : index
    %177 = vector.load %arg2[%c0_50, %c320] : memref<32x704xf32, #tpu.memory_space<vmem>>, vector<32x64xf32>
    %c4 = arith.constant 4 : index
    %c0_51 = arith.constant 0 : index
    %178 = vector.load %arg4[%c4, %c0_51] : memref<22x128xf32, #tpu.memory_space<vmem>>, vector<1x64xf32>
    %cst_52 = arith.constant dense<0.000000e+00> : vector<16x64xf32>
    %179 = tpu.matmul %176, %177, %cst_52 {dimension_numbers = #tpu.dot_dimension_numbers<[1], [0], [0], [1], [0, 0, 1, 1], [], []>} : vector<16x32xf32>, vector<32x64xf32>, vector<16x64xf32> -> vector<16x64xf32>
    %180 = vector.broadcast %178 : vector<1x64xf32> to vector<16x64xf32>
    %181 = arith.addf %179, %180 : vector<16x64xf32>
    %cst_53 = arith.constant 0.000000e+00 : f32
    %182 = vector.broadcast %cst_53 : f32 to vector<16x64xf32>
    %183 = arith.maximumf %181, %182 : vector<16x64xf32>
    %c0_54 = arith.constant 0 : index
    %c0_55 = arith.constant 0 : index
    %184 = vector.load %arg3[%c0_54, %c0_55] : memref<64x64xf32, #tpu.memory_space<vmem>>, vector<64x32xf32>
    %c5 = arith.constant 5 : index
    %c0_56 = arith.constant 0 : index
    %185 = vector.load %arg4[%c5, %c0_56] : memref<22x128xf32, #tpu.memory_space<vmem>>, vector<1x32xf32>
    %cst_57 = arith.constant dense<0.000000e+00> : vector<16x32xf32>
    %186 = tpu.matmul %183, %184, %cst_57 {dimension_numbers = #tpu.dot_dimension_numbers<[1], [0], [0], [1], [0, 0, 1, 1], [], []>} : vector<16x64xf32>, vector<64x32xf32>, vector<16x32xf32> -> vector<16x32xf32>
    %187 = vector.broadcast %185 : vector<1x32xf32> to vector<16x32xf32>
    %188 = arith.addf %186, %187 : vector<16x32xf32>
    %189 = arith.addf %176, %188 : vector<16x32xf32>
    %c6 = arith.constant 6 : index
    %c0_58 = arith.constant 0 : index
    %190 = vector.load %arg4[%c6, %c0_58] : memref<22x128xf32, #tpu.memory_space<vmem>>, vector<1x32xf32>
    %c7 = arith.constant 7 : index
    %c0_59 = arith.constant 0 : index
    %191 = vector.load %arg4[%c7, %c0_59] : memref<22x128xf32, #tpu.memory_space<vmem>>, vector<1x32xf32>
    %cst_60 = arith.constant dense<0.000000e+00> : vector<16xf32>
    %192 = vector.multi_reduction <add>, %189, %cst_60 [1] : vector<16x32xf32> to vector<16xf32>
    %193 = vector.shape_cast %192 : vector<16xf32> to vector<16x1xf32>
    %cst_61 = arith.constant 3.200000e+01 : f32
    %194 = vector.broadcast %cst_61 : f32 to vector<16x1xf32>
    %195 = arith.divf %193, %194 : vector<16x1xf32>
    %196 = vector.broadcast %195 : vector<16x1xf32> to vector<16x32xf32>
    %197 = arith.subf %189, %196 : vector<16x32xf32>
    %198 = arith.mulf %197, %197 : vector<16x32xf32>
    %cst_62 = arith.constant dense<0.000000e+00> : vector<16xf32>
    %199 = vector.multi_reduction <add>, %198, %cst_62 [1] : vector<16x32xf32> to vector<16xf32>
    %200 = vector.shape_cast %199 : vector<16xf32> to vector<16x1xf32>
    %cst_63 = arith.constant 3.200000e+01 : f32
    %201 = vector.broadcast %cst_63 : f32 to vector<16x1xf32>
    %202 = arith.divf %200, %201 : vector<16x1xf32>
    %203 = vector.broadcast %195 : vector<16x1xf32> to vector<16x32xf32>
    %204 = arith.subf %189, %203 : vector<16x32xf32>
    %cst_64 = arith.constant 9.99999974E-6 : f32
    %205 = vector.broadcast %cst_64 : f32 to vector<16x1xf32>
    %206 = arith.addf %202, %205 : vector<16x1xf32>
    %207 = math.rsqrt %206 : vector<16x1xf32>
    %208 = vector.broadcast %207 : vector<16x1xf32> to vector<16x32xf32>
    %209 = arith.mulf %204, %208 : vector<16x32xf32>
    %210 = vector.broadcast %190 : vector<1x32xf32> to vector<16x32xf32>
    %211 = arith.mulf %209, %210 : vector<16x32xf32>
    %212 = vector.broadcast %191 : vector<1x32xf32> to vector<16x32xf32>
    %213 = arith.addf %211, %212 : vector<16x32xf32>
    %c16 = arith.constant 16 : index
    %c0_65 = arith.constant 0 : index
    %214 = vector.load %arg0[%c16, %c0_65] : memref<32x1xi32, #tpu.memory_space<vmem>>, vector<16x1xi32>
    %c0_66 = arith.constant 0 : index
    %c544 = arith.constant 544 : index
    %215 = vector.load %arg2[%c0_66, %c544] : memref<32x704xf32, #tpu.memory_space<vmem>>, vector<32x32xf32>
    %c16_67 = arith.constant 16 : index
    %c0_68 = arith.constant 0 : index
    %216 = vector.load %arg1[%c16_67, %c0_68] : memref<32x32xf32, #tpu.memory_space<vmem>>, vector<16x32xf32>
    %217 = tpu.iota {dimensions = array<i32: 1>} : vector<16x32xi32>
    %218 = vector.broadcast %214 : vector<16x1xi32> to vector<16x32xi32>
    %219 = arith.cmpi eq, %218, %217 : vector<16x32xi32>
    %220 = arith.extui %219 : vector<16x32xi1> to vector<16x32xi32>
    %221 = arith.sitofp %220 : vector<16x32xi32> to vector<16x32xf32>
    %cst_69 = arith.constant dense<0.000000e+00> : vector<16x32xf32>
    %222 = tpu.matmul %221, %215, %cst_69 {dimension_numbers = #tpu.dot_dimension_numbers<[1], [0], [0], [1], [0, 0, 1, 1], [], []>} : vector<16x32xf32>, vector<32x32xf32>, vector<16x32xf32> -> vector<16x32xf32>
    %223 = arith.addf %222, %216 : vector<16x32xf32>
    %c0_70 = arith.constant 0 : index
    %c224 = arith.constant 224 : index
    %224 = vector.load %arg2[%c0_70, %c224] : memref<32x704xf32, #tpu.memory_space<vmem>>, vector<32x96xf32>
    %c8 = arith.constant 8 : index
    %c0_71 = arith.constant 0 : index
    %225 = vector.load %arg4[%c8, %c0_71] : memref<22x128xf32, #tpu.memory_space<vmem>>, vector<1x96xf32>
    %cst_72 = arith.constant dense<0.000000e+00> : vector<16x96xf32>
    %226 = tpu.matmul %223, %224, %cst_72 {dimension_numbers = #tpu.dot_dimension_numbers<[1], [0], [0], [1], [0, 0, 1, 1], [], []>} : vector<16x32xf32>, vector<32x96xf32>, vector<16x96xf32> -> vector<16x96xf32>
    %227 = vector.broadcast %225 : vector<1x96xf32> to vector<16x96xf32>
    %228 = arith.addf %226, %227 : vector<16x96xf32>
    %229 = vector.extract_strided_slice %228 {offsets = [0, 0], sizes = [16, 32], strides = [1, 1]} : vector<16x96xf32> to vector<16x32xf32>
    %230 = vector.extract_strided_slice %228 {offsets = [0, 32], sizes = [16, 32], strides = [1, 1]} : vector<16x96xf32> to vector<16x32xf32>
    %231 = vector.extract_strided_slice %228 {offsets = [0, 64], sizes = [16, 32], strides = [1, 1]} : vector<16x96xf32> to vector<16x32xf32>
    %232 = tpu.iota {dimensions = array<i32: 0>} : vector<8x8xi32>
    %233 = tpu.iota {dimensions = array<i32: 1>} : vector<8x8xi32>
    %234 = arith.cmpi sle, %233, %232 : vector<8x8xi32>
    %cst_73 = arith.constant 0.000000e+00 : f32
    %cst_74 = arith.constant -1.000000e+09 : f32
    %235 = vector.broadcast %cst_73 : f32 to vector<8x8xf32>
    %236 = vector.broadcast %cst_74 : f32 to vector<8x8xf32>
    %237 = arith.select %234, %235, %236 : vector<8x8xi1>, vector<8x8xf32>
    %238 = vector.extract_strided_slice %229 {offsets = [0, 0], sizes = [8, 32], strides = [1, 1]} : vector<16x32xf32> to vector<8x32xf32>
    %239 = vector.extract_strided_slice %230 {offsets = [0, 0], sizes = [8, 32], strides = [1, 1]} : vector<16x32xf32> to vector<8x32xf32>
    %240 = vector.extract_strided_slice %231 {offsets = [0, 0], sizes = [8, 32], strides = [1, 1]} : vector<16x32xf32> to vector<8x32xf32>
    %241 = vector.extract_strided_slice %238 {offsets = [0, 0], sizes = [8, 8], strides = [1, 1]} : vector<8x32xf32> to vector<8x8xf32>
    %242 = vector.extract_strided_slice %239 {offsets = [0, 0], sizes = [8, 8], strides = [1, 1]} : vector<8x32xf32> to vector<8x8xf32>
    %243 = vector.extract_strided_slice %240 {offsets = [0, 0], sizes = [8, 8], strides = [1, 1]} : vector<8x32xf32> to vector<8x8xf32>
    "tpu.trace_start"() <{level = 10 : i32, message = "qd,kd->qk"}> : () -> ()
    %cst_75 = arith.constant dense<0.000000e+00> : vector<8x8xf32>
    %244 = tpu.matmul %241, %242, %cst_75 {dimension_numbers = #tpu.dot_dimension_numbers<[1], [1], [0], [0], [0, 0, 1, 0], [], []>} : vector<8x8xf32>, vector<8x8xf32>, vector<8x8xf32> -> vector<8x8xf32>
    "tpu.trace_stop"() : () -> ()
    %245 = arith.addf %244, %237 : vector<8x8xf32>
    %cst_76 = arith.constant dense<0xFF800000> : vector<8xf32>
    %246 = vector.multi_reduction <maximumf>, %245, %cst_76 [1] : vector<8x8xf32> to vector<8xf32>
    %247 = vector.shape_cast %246 : vector<8xf32> to vector<8x1xf32>
    %248 = vector.broadcast %247 : vector<8x1xf32> to vector<8x8xf32>
    %249 = arith.subf %245, %248 : vector<8x8xf32>
    %250 = math.exp %249 : vector<8x8xf32>
    %cst_77 = arith.constant dense<0.000000e+00> : vector<8xf32>
    %251 = vector.multi_reduction <add>, %250, %cst_77 [1] : vector<8x8xf32> to vector<8xf32>
    %252 = vector.shape_cast %251 : vector<8xf32> to vector<8x1xf32>
    %cst_78 = arith.constant dense<0.000000e+00> : vector<8x8xf32>
    %253 = tpu.matmul %250, %243, %cst_78 {dimension_numbers = #tpu.dot_dimension_numbers<[1], [0], [0], [1], [0, 0, 1, 1], [], []>} : vector<8x8xf32>, vector<8x8xf32>, vector<8x8xf32> -> vector<8x8xf32>
    %254 = tpu.reciprocal %252 {approx = true} : vector<8x1xf32> -> vector<8x1xf32>
    %255 = vector.broadcast %254 : vector<8x1xf32> to vector<8x8xf32>
    %256 = arith.mulf %253, %255 : vector<8x8xf32>
    %257 = vector.extract_strided_slice %238 {offsets = [0, 8], sizes = [8, 8], strides = [1, 1]} : vector<8x32xf32> to vector<8x8xf32>
    %258 = vector.extract_strided_slice %239 {offsets = [0, 8], sizes = [8, 8], strides = [1, 1]} : vector<8x32xf32> to vector<8x8xf32>
    %259 = vector.extract_strided_slice %240 {offsets = [0, 8], sizes = [8, 8], strides = [1, 1]} : vector<8x32xf32> to vector<8x8xf32>
    "tpu.trace_start"() <{level = 10 : i32, message = "qd,kd->qk"}> : () -> ()
    %cst_79 = arith.constant dense<0.000000e+00> : vector<8x8xf32>
    %260 = tpu.matmul %257, %258, %cst_79 {dimension_numbers = #tpu.dot_dimension_numbers<[1], [1], [0], [0], [0, 0, 1, 0], [], []>} : vector<8x8xf32>, vector<8x8xf32>, vector<8x8xf32> -> vector<8x8xf32>
    "tpu.trace_stop"() : () -> ()
    %261 = arith.addf %260, %237 : vector<8x8xf32>
    %cst_80 = arith.constant dense<0xFF800000> : vector<8xf32>
    %262 = vector.multi_reduction <maximumf>, %261, %cst_80 [1] : vector<8x8xf32> to vector<8xf32>
    %263 = vector.shape_cast %262 : vector<8xf32> to vector<8x1xf32>
    %264 = vector.broadcast %263 : vector<8x1xf32> to vector<8x8xf32>
    %265 = arith.subf %261, %264 : vector<8x8xf32>
    %266 = math.exp %265 : vector<8x8xf32>
    %cst_81 = arith.constant dense<0.000000e+00> : vector<8xf32>
    %267 = vector.multi_reduction <add>, %266, %cst_81 [1] : vector<8x8xf32> to vector<8xf32>
    %268 = vector.shape_cast %267 : vector<8xf32> to vector<8x1xf32>
    %cst_82 = arith.constant dense<0.000000e+00> : vector<8x8xf32>
    %269 = tpu.matmul %266, %259, %cst_82 {dimension_numbers = #tpu.dot_dimension_numbers<[1], [0], [0], [1], [0, 0, 1, 1], [], []>} : vector<8x8xf32>, vector<8x8xf32>, vector<8x8xf32> -> vector<8x8xf32>
    %270 = tpu.reciprocal %268 {approx = true} : vector<8x1xf32> -> vector<8x1xf32>
    %271 = vector.broadcast %270 : vector<8x1xf32> to vector<8x8xf32>
    %272 = arith.mulf %269, %271 : vector<8x8xf32>
    %273 = vector.extract_strided_slice %238 {offsets = [0, 16], sizes = [8, 8], strides = [1, 1]} : vector<8x32xf32> to vector<8x8xf32>
    %274 = vector.extract_strided_slice %239 {offsets = [0, 16], sizes = [8, 8], strides = [1, 1]} : vector<8x32xf32> to vector<8x8xf32>
    %275 = vector.extract_strided_slice %240 {offsets = [0, 16], sizes = [8, 8], strides = [1, 1]} : vector<8x32xf32> to vector<8x8xf32>
    "tpu.trace_start"() <{level = 10 : i32, message = "qd,kd->qk"}> : () -> ()
    %cst_83 = arith.constant dense<0.000000e+00> : vector<8x8xf32>
    %276 = tpu.matmul %273, %274, %cst_83 {dimension_numbers = #tpu.dot_dimension_numbers<[1], [1], [0], [0], [0, 0, 1, 0], [], []>} : vector<8x8xf32>, vector<8x8xf32>, vector<8x8xf32> -> vector<8x8xf32>
    "tpu.trace_stop"() : () -> ()
    %277 = arith.addf %276, %237 : vector<8x8xf32>
    %cst_84 = arith.constant dense<0xFF800000> : vector<8xf32>
    %278 = vector.multi_reduction <maximumf>, %277, %cst_84 [1] : vector<8x8xf32> to vector<8xf32>
    %279 = vector.shape_cast %278 : vector<8xf32> to vector<8x1xf32>
    %280 = vector.broadcast %279 : vector<8x1xf32> to vector<8x8xf32>
    %281 = arith.subf %277, %280 : vector<8x8xf32>
    %282 = math.exp %281 : vector<8x8xf32>
    %cst_85 = arith.constant dense<0.000000e+00> : vector<8xf32>
    %283 = vector.multi_reduction <add>, %282, %cst_85 [1] : vector<8x8xf32> to vector<8xf32>
    %284 = vector.shape_cast %283 : vector<8xf32> to vector<8x1xf32>
    %cst_86 = arith.constant dense<0.000000e+00> : vector<8x8xf32>
    %285 = tpu.matmul %282, %275, %cst_86 {dimension_numbers = #tpu.dot_dimension_numbers<[1], [0], [0], [1], [0, 0, 1, 1], [], []>} : vector<8x8xf32>, vector<8x8xf32>, vector<8x8xf32> -> vector<8x8xf32>
    %286 = tpu.reciprocal %284 {approx = true} : vector<8x1xf32> -> vector<8x1xf32>
    %287 = vector.broadcast %286 : vector<8x1xf32> to vector<8x8xf32>
    %288 = arith.mulf %285, %287 : vector<8x8xf32>
    %289 = vector.extract_strided_slice %238 {offsets = [0, 24], sizes = [8, 8], strides = [1, 1]} : vector<8x32xf32> to vector<8x8xf32>
    %290 = vector.extract_strided_slice %239 {offsets = [0, 24], sizes = [8, 8], strides = [1, 1]} : vector<8x32xf32> to vector<8x8xf32>
    %291 = vector.extract_strided_slice %240 {offsets = [0, 24], sizes = [8, 8], strides = [1, 1]} : vector<8x32xf32> to vector<8x8xf32>
    "tpu.trace_start"() <{level = 10 : i32, message = "qd,kd->qk"}> : () -> ()
    %cst_87 = arith.constant dense<0.000000e+00> : vector<8x8xf32>
    %292 = tpu.matmul %289, %290, %cst_87 {dimension_numbers = #tpu.dot_dimension_numbers<[1], [1], [0], [0], [0, 0, 1, 0], [], []>} : vector<8x8xf32>, vector<8x8xf32>, vector<8x8xf32> -> vector<8x8xf32>
    "tpu.trace_stop"() : () -> ()
    %293 = arith.addf %292, %237 : vector<8x8xf32>
    %cst_88 = arith.constant dense<0xFF800000> : vector<8xf32>
    %294 = vector.multi_reduction <maximumf>, %293, %cst_88 [1] : vector<8x8xf32> to vector<8xf32>
    %295 = vector.shape_cast %294 : vector<8xf32> to vector<8x1xf32>
    %296 = vector.broadcast %295 : vector<8x1xf32> to vector<8x8xf32>
    %297 = arith.subf %293, %296 : vector<8x8xf32>
    %298 = math.exp %297 : vector<8x8xf32>
    %cst_89 = arith.constant dense<0.000000e+00> : vector<8xf32>
    %299 = vector.multi_reduction <add>, %298, %cst_89 [1] : vector<8x8xf32> to vector<8xf32>
    %300 = vector.shape_cast %299 : vector<8xf32> to vector<8x1xf32>
    %cst_90 = arith.constant dense<0.000000e+00> : vector<8x8xf32>
    %301 = tpu.matmul %298, %291, %cst_90 {dimension_numbers = #tpu.dot_dimension_numbers<[1], [0], [0], [1], [0, 0, 1, 1], [], []>} : vector<8x8xf32>, vector<8x8xf32>, vector<8x8xf32> -> vector<8x8xf32>
    %302 = tpu.reciprocal %300 {approx = true} : vector<8x1xf32> -> vector<8x1xf32>
    %303 = vector.broadcast %302 : vector<8x1xf32> to vector<8x8xf32>
    %304 = arith.mulf %301, %303 : vector<8x8xf32>
    %305 = tpu.concatenate %256, %272, %288, %304 in 1 : vector<8x8xf32>, vector<8x8xf32>, vector<8x8xf32>, vector<8x8xf32> -> vector<8x32xf32>
    %306 = vector.extract_strided_slice %229 {offsets = [8, 0], sizes = [8, 32], strides = [1, 1]} : vector<16x32xf32> to vector<8x32xf32>
    %307 = vector.extract_strided_slice %230 {offsets = [8, 0], sizes = [8, 32], strides = [1, 1]} : vector<16x32xf32> to vector<8x32xf32>
    %308 = vector.extract_strided_slice %231 {offsets = [8, 0], sizes = [8, 32], strides = [1, 1]} : vector<16x32xf32> to vector<8x32xf32>
    %309 = vector.extract_strided_slice %306 {offsets = [0, 0], sizes = [8, 8], strides = [1, 1]} : vector<8x32xf32> to vector<8x8xf32>
    %310 = vector.extract_strided_slice %307 {offsets = [0, 0], sizes = [8, 8], strides = [1, 1]} : vector<8x32xf32> to vector<8x8xf32>
    %311 = vector.extract_strided_slice %308 {offsets = [0, 0], sizes = [8, 8], strides = [1, 1]} : vector<8x32xf32> to vector<8x8xf32>
    "tpu.trace_start"() <{level = 10 : i32, message = "qd,kd->qk"}> : () -> ()
    %cst_91 = arith.constant dense<0.000000e+00> : vector<8x8xf32>
    %312 = tpu.matmul %309, %310, %cst_91 {dimension_numbers = #tpu.dot_dimension_numbers<[1], [1], [0], [0], [0, 0, 1, 0], [], []>} : vector<8x8xf32>, vector<8x8xf32>, vector<8x8xf32> -> vector<8x8xf32>
    "tpu.trace_stop"() : () -> ()
    %313 = arith.addf %312, %237 : vector<8x8xf32>
    %cst_92 = arith.constant dense<0xFF800000> : vector<8xf32>
    %314 = vector.multi_reduction <maximumf>, %313, %cst_92 [1] : vector<8x8xf32> to vector<8xf32>
    %315 = vector.shape_cast %314 : vector<8xf32> to vector<8x1xf32>
    %316 = vector.broadcast %315 : vector<8x1xf32> to vector<8x8xf32>
    %317 = arith.subf %313, %316 : vector<8x8xf32>
    %318 = math.exp %317 : vector<8x8xf32>
    %cst_93 = arith.constant dense<0.000000e+00> : vector<8xf32>
    %319 = vector.multi_reduction <add>, %318, %cst_93 [1] : vector<8x8xf32> to vector<8xf32>
    %320 = vector.shape_cast %319 : vector<8xf32> to vector<8x1xf32>
    %cst_94 = arith.constant dense<0.000000e+00> : vector<8x8xf32>
    %321 = tpu.matmul %318, %311, %cst_94 {dimension_numbers = #tpu.dot_dimension_numbers<[1], [0], [0], [1], [0, 0, 1, 1], [], []>} : vector<8x8xf32>, vector<8x8xf32>, vector<8x8xf32> -> vector<8x8xf32>
    %322 = tpu.reciprocal %320 {approx = true} : vector<8x1xf32> -> vector<8x1xf32>
    %323 = vector.broadcast %322 : vector<8x1xf32> to vector<8x8xf32>
    %324 = arith.mulf %321, %323 : vector<8x8xf32>
    %325 = vector.extract_strided_slice %306 {offsets = [0, 8], sizes = [8, 8], strides = [1, 1]} : vector<8x32xf32> to vector<8x8xf32>
    %326 = vector.extract_strided_slice %307 {offsets = [0, 8], sizes = [8, 8], strides = [1, 1]} : vector<8x32xf32> to vector<8x8xf32>
    %327 = vector.extract_strided_slice %308 {offsets = [0, 8], sizes = [8, 8], strides = [1, 1]} : vector<8x32xf32> to vector<8x8xf32>
    "tpu.trace_start"() <{level = 10 : i32, message = "qd,kd->qk"}> : () -> ()
    %cst_95 = arith.constant dense<0.000000e+00> : vector<8x8xf32>
    %328 = tpu.matmul %325, %326, %cst_95 {dimension_numbers = #tpu.dot_dimension_numbers<[1], [1], [0], [0], [0, 0, 1, 0], [], []>} : vector<8x8xf32>, vector<8x8xf32>, vector<8x8xf32> -> vector<8x8xf32>
    "tpu.trace_stop"() : () -> ()
    %329 = arith.addf %328, %237 : vector<8x8xf32>
    %cst_96 = arith.constant dense<0xFF800000> : vector<8xf32>
    %330 = vector.multi_reduction <maximumf>, %329, %cst_96 [1] : vector<8x8xf32> to vector<8xf32>
    %331 = vector.shape_cast %330 : vector<8xf32> to vector<8x1xf32>
    %332 = vector.broadcast %331 : vector<8x1xf32> to vector<8x8xf32>
    %333 = arith.subf %329, %332 : vector<8x8xf32>
    %334 = math.exp %333 : vector<8x8xf32>
    %cst_97 = arith.constant dense<0.000000e+00> : vector<8xf32>
    %335 = vector.multi_reduction <add>, %334, %cst_97 [1] : vector<8x8xf32> to vector<8xf32>
    %336 = vector.shape_cast %335 : vector<8xf32> to vector<8x1xf32>
    %cst_98 = arith.constant dense<0.000000e+00> : vector<8x8xf32>
    %337 = tpu.matmul %334, %327, %cst_98 {dimension_numbers = #tpu.dot_dimension_numbers<[1], [0], [0], [1], [0, 0, 1, 1], [], []>} : vector<8x8xf32>, vector<8x8xf32>, vector<8x8xf32> -> vector<8x8xf32>
    %338 = tpu.reciprocal %336 {approx = true} : vector<8x1xf32> -> vector<8x1xf32>
    %339 = vector.broadcast %338 : vector<8x1xf32> to vector<8x8xf32>
    %340 = arith.mulf %337, %339 : vector<8x8xf32>
    %341 = vector.extract_strided_slice %306 {offsets = [0, 16], sizes = [8, 8], strides = [1, 1]} : vector<8x32xf32> to vector<8x8xf32>
    %342 = vector.extract_strided_slice %307 {offsets = [0, 16], sizes = [8, 8], strides = [1, 1]} : vector<8x32xf32> to vector<8x8xf32>
    %343 = vector.extract_strided_slice %308 {offsets = [0, 16], sizes = [8, 8], strides = [1, 1]} : vector<8x32xf32> to vector<8x8xf32>
    "tpu.trace_start"() <{level = 10 : i32, message = "qd,kd->qk"}> : () -> ()
    %cst_99 = arith.constant dense<0.000000e+00> : vector<8x8xf32>
    %344 = tpu.matmul %341, %342, %cst_99 {dimension_numbers = #tpu.dot_dimension_numbers<[1], [1], [0], [0], [0, 0, 1, 0], [], []>} : vector<8x8xf32>, vector<8x8xf32>, vector<8x8xf32> -> vector<8x8xf32>
    "tpu.trace_stop"() : () -> ()
    %345 = arith.addf %344, %237 : vector<8x8xf32>
    %cst_100 = arith.constant dense<0xFF800000> : vector<8xf32>
    %346 = vector.multi_reduction <maximumf>, %345, %cst_100 [1] : vector<8x8xf32> to vector<8xf32>
    %347 = vector.shape_cast %346 : vector<8xf32> to vector<8x1xf32>
    %348 = vector.broadcast %347 : vector<8x1xf32> to vector<8x8xf32>
    %349 = arith.subf %345, %348 : vector<8x8xf32>
    %350 = math.exp %349 : vector<8x8xf32>
    %cst_101 = arith.constant dense<0.000000e+00> : vector<8xf32>
    %351 = vector.multi_reduction <add>, %350, %cst_101 [1] : vector<8x8xf32> to vector<8xf32>
    %352 = vector.shape_cast %351 : vector<8xf32> to vector<8x1xf32>
    %cst_102 = arith.constant dense<0.000000e+00> : vector<8x8xf32>
    %353 = tpu.matmul %350, %343, %cst_102 {dimension_numbers = #tpu.dot_dimension_numbers<[1], [0], [0], [1], [0, 0, 1, 1], [], []>} : vector<8x8xf32>, vector<8x8xf32>, vector<8x8xf32> -> vector<8x8xf32>
    %354 = tpu.reciprocal %352 {approx = true} : vector<8x1xf32> -> vector<8x1xf32>
    %355 = vector.broadcast %354 : vector<8x1xf32> to vector<8x8xf32>
    %356 = arith.mulf %353, %355 : vector<8x8xf32>
    %357 = vector.extract_strided_slice %306 {offsets = [0, 24], sizes = [8, 8], strides = [1, 1]} : vector<8x32xf32> to vector<8x8xf32>
    %358 = vector.extract_strided_slice %307 {offsets = [0, 24], sizes = [8, 8], strides = [1, 1]} : vector<8x32xf32> to vector<8x8xf32>
    %359 = vector.extract_strided_slice %308 {offsets = [0, 24], sizes = [8, 8], strides = [1, 1]} : vector<8x32xf32> to vector<8x8xf32>
    "tpu.trace_start"() <{level = 10 : i32, message = "qd,kd->qk"}> : () -> ()
    %cst_103 = arith.constant dense<0.000000e+00> : vector<8x8xf32>
    %360 = tpu.matmul %357, %358, %cst_103 {dimension_numbers = #tpu.dot_dimension_numbers<[1], [1], [0], [0], [0, 0, 1, 0], [], []>} : vector<8x8xf32>, vector<8x8xf32>, vector<8x8xf32> -> vector<8x8xf32>
    "tpu.trace_stop"() : () -> ()
    %361 = arith.addf %360, %237 : vector<8x8xf32>
    %cst_104 = arith.constant dense<0xFF800000> : vector<8xf32>
    %362 = vector.multi_reduction <maximumf>, %361, %cst_104 [1] : vector<8x8xf32> to vector<8xf32>
    %363 = vector.shape_cast %362 : vector<8xf32> to vector<8x1xf32>
    %364 = vector.broadcast %363 : vector<8x1xf32> to vector<8x8xf32>
    %365 = arith.subf %361, %364 : vector<8x8xf32>
    %366 = math.exp %365 : vector<8x8xf32>
    %cst_105 = arith.constant dense<0.000000e+00> : vector<8xf32>
    %367 = vector.multi_reduction <add>, %366, %cst_105 [1] : vector<8x8xf32> to vector<8xf32>
    %368 = vector.shape_cast %367 : vector<8xf32> to vector<8x1xf32>
    %cst_106 = arith.constant dense<0.000000e+00> : vector<8x8xf32>
    %369 = tpu.matmul %366, %359, %cst_106 {dimension_numbers = #tpu.dot_dimension_numbers<[1], [0], [0], [1], [0, 0, 1, 1], [], []>} : vector<8x8xf32>, vector<8x8xf32>, vector<8x8xf32> -> vector<8x8xf32>
    %370 = tpu.reciprocal %368 {approx = true} : vector<8x1xf32> -> vector<8x1xf32>
    %371 = vector.broadcast %370 : vector<8x1xf32> to vector<8x8xf32>
    %372 = arith.mulf %369, %371 : vector<8x8xf32>
    %373 = tpu.concatenate %324, %340, %356, %372 in 1 : vector<8x8xf32>, vector<8x8xf32>, vector<8x8xf32>, vector<8x8xf32> -> vector<8x32xf32>
    %374 = tpu.concatenate %305, %373 in 0 : vector<8x32xf32>, vector<8x32xf32> -> vector<16x32xf32>
    %c0_107 = arith.constant 0 : index
    %c608 = arith.constant 608 : index
    %375 = vector.load %arg2[%c0_107, %c608] : memref<32x704xf32, #tpu.memory_space<vmem>>, vector<32x32xf32>
    %c9 = arith.constant 9 : index
    %c0_108 = arith.constant 0 : index
    %376 = vector.load %arg4[%c9, %c0_108] : memref<22x128xf32, #tpu.memory_space<vmem>>, vector<1x32xf32>
    %cst_109 = arith.constant dense<0.000000e+00> : vector<16x32xf32>
    %377 = tpu.matmul %374, %375, %cst_109 {dimension_numbers = #tpu.dot_dimension_numbers<[1], [0], [0], [1], [0, 0, 1, 1], [], []>} : vector<16x32xf32>, vector<32x32xf32>, vector<16x32xf32> -> vector<16x32xf32>
    %378 = vector.broadcast %376 : vector<1x32xf32> to vector<16x32xf32>
    %379 = arith.addf %377, %378 : vector<16x32xf32>
    %380 = arith.addf %223, %379 : vector<16x32xf32>
    %c10 = arith.constant 10 : index
    %c0_110 = arith.constant 0 : index
    %381 = vector.load %arg4[%c10, %c0_110] : memref<22x128xf32, #tpu.memory_space<vmem>>, vector<1x32xf32>
    %c11 = arith.constant 11 : index
    %c0_111 = arith.constant 0 : index
    %382 = vector.load %arg4[%c11, %c0_111] : memref<22x128xf32, #tpu.memory_space<vmem>>, vector<1x32xf32>
    %cst_112 = arith.constant dense<0.000000e+00> : vector<16xf32>
    %383 = vector.multi_reduction <add>, %380, %cst_112 [1] : vector<16x32xf32> to vector<16xf32>
    %384 = vector.shape_cast %383 : vector<16xf32> to vector<16x1xf32>
    %cst_113 = arith.constant 3.200000e+01 : f32
    %385 = vector.broadcast %cst_113 : f32 to vector<16x1xf32>
    %386 = arith.divf %384, %385 : vector<16x1xf32>
    %387 = vector.broadcast %386 : vector<16x1xf32> to vector<16x32xf32>
    %388 = arith.subf %380, %387 : vector<16x32xf32>
    %389 = arith.mulf %388, %388 : vector<16x32xf32>
    %cst_114 = arith.constant dense<0.000000e+00> : vector<16xf32>
    %390 = vector.multi_reduction <add>, %389, %cst_114 [1] : vector<16x32xf32> to vector<16xf32>
    %391 = vector.shape_cast %390 : vector<16xf32> to vector<16x1xf32>
    %cst_115 = arith.constant 3.200000e+01 : f32
    %392 = vector.broadcast %cst_115 : f32 to vector<16x1xf32>
    %393 = arith.divf %391, %392 : vector<16x1xf32>
    %394 = vector.broadcast %386 : vector<16x1xf32> to vector<16x32xf32>
    %395 = arith.subf %380, %394 : vector<16x32xf32>
    %cst_116 = arith.constant 9.99999974E-6 : f32
    %396 = vector.broadcast %cst_116 : f32 to vector<16x1xf32>
    %397 = arith.addf %393, %396 : vector<16x1xf32>
    %398 = math.rsqrt %397 : vector<16x1xf32>
    %399 = vector.broadcast %398 : vector<16x1xf32> to vector<16x32xf32>
    %400 = arith.mulf %395, %399 : vector<16x32xf32>
    %401 = vector.broadcast %381 : vector<1x32xf32> to vector<16x32xf32>
    %402 = arith.mulf %400, %401 : vector<16x32xf32>
    %403 = vector.broadcast %382 : vector<1x32xf32> to vector<16x32xf32>
    %404 = arith.addf %402, %403 : vector<16x32xf32>
    %c0_117 = arith.constant 0 : index
    %c640 = arith.constant 640 : index
    %405 = vector.load %arg2[%c0_117, %c640] : memref<32x704xf32, #tpu.memory_space<vmem>>, vector<32x32xf32>
    %c12 = arith.constant 12 : index
    %c0_118 = arith.constant 0 : index
    %406 = vector.load %arg4[%c12, %c0_118] : memref<22x128xf32, #tpu.memory_space<vmem>>, vector<1x32xf32>
    %cst_119 = arith.constant dense<0.000000e+00> : vector<16x32xf32>
    %407 = tpu.matmul %404, %405, %cst_119 {dimension_numbers = #tpu.dot_dimension_numbers<[1], [0], [0], [1], [0, 0, 1, 1], [], []>} : vector<16x32xf32>, vector<32x32xf32>, vector<16x32xf32> -> vector<16x32xf32>
    %408 = vector.broadcast %406 : vector<1x32xf32> to vector<16x32xf32>
    %409 = arith.addf %407, %408 : vector<16x32xf32>
    %c0_120 = arith.constant 0 : index
    %c384 = arith.constant 384 : index
    %410 = vector.load %arg2[%c0_120, %c384] : memref<32x704xf32, #tpu.memory_space<vmem>>, vector<32x64xf32>
    %c13 = arith.constant 13 : index
    %c0_121 = arith.constant 0 : index
    %411 = vector.load %arg4[%c13, %c0_121] : memref<22x128xf32, #tpu.memory_space<vmem>>, vector<1x64xf32>
    %cst_122 = arith.constant dense<0.000000e+00> : vector<16x64xf32>
    %412 = tpu.matmul %213, %410, %cst_122 {dimension_numbers = #tpu.dot_dimension_numbers<[1], [0], [0], [1], [0, 0, 1, 1], [], []>} : vector<16x32xf32>, vector<32x64xf32>, vector<16x64xf32> -> vector<16x64xf32>
    %413 = vector.broadcast %411 : vector<1x64xf32> to vector<16x64xf32>
    %414 = arith.addf %412, %413 : vector<16x64xf32>
    %415 = vector.extract_strided_slice %414 {offsets = [0, 0], sizes = [16, 32], strides = [1, 1]} : vector<16x64xf32> to vector<16x32xf32>
    %416 = vector.extract_strided_slice %414 {offsets = [0, 32], sizes = [16, 32], strides = [1, 1]} : vector<16x64xf32> to vector<16x32xf32>
    %417 = vector.extract_strided_slice %409 {offsets = [0, 0], sizes = [8, 32], strides = [1, 1]} : vector<16x32xf32> to vector<8x32xf32>
    %418 = vector.extract_strided_slice %415 {offsets = [0, 0], sizes = [8, 32], strides = [1, 1]} : vector<16x32xf32> to vector<8x32xf32>
    %419 = vector.extract_strided_slice %416 {offsets = [0, 0], sizes = [8, 32], strides = [1, 1]} : vector<16x32xf32> to vector<8x32xf32>
    %420 = vector.extract_strided_slice %417 {offsets = [0, 0], sizes = [8, 8], strides = [1, 1]} : vector<8x32xf32> to vector<8x8xf32>
    %421 = vector.extract_strided_slice %418 {offsets = [0, 0], sizes = [8, 8], strides = [1, 1]} : vector<8x32xf32> to vector<8x8xf32>
    %422 = vector.extract_strided_slice %419 {offsets = [0, 0], sizes = [8, 8], strides = [1, 1]} : vector<8x32xf32> to vector<8x8xf32>
    "tpu.trace_start"() <{level = 10 : i32, message = "qd,kd->qk"}> : () -> ()
    %cst_123 = arith.constant dense<0.000000e+00> : vector<8x8xf32>
    %423 = tpu.matmul %420, %421, %cst_123 {dimension_numbers = #tpu.dot_dimension_numbers<[1], [1], [0], [0], [0, 0, 1, 0], [], []>} : vector<8x8xf32>, vector<8x8xf32>, vector<8x8xf32> -> vector<8x8xf32>
    "tpu.trace_stop"() : () -> ()
    %cst_124 = arith.constant dense<0xFF800000> : vector<8xf32>
    %424 = vector.multi_reduction <maximumf>, %423, %cst_124 [1] : vector<8x8xf32> to vector<8xf32>
    %425 = vector.shape_cast %424 : vector<8xf32> to vector<8x1xf32>
    %426 = vector.broadcast %425 : vector<8x1xf32> to vector<8x8xf32>
    %427 = arith.subf %423, %426 : vector<8x8xf32>
    %428 = math.exp %427 : vector<8x8xf32>
    %cst_125 = arith.constant dense<0.000000e+00> : vector<8xf32>
    %429 = vector.multi_reduction <add>, %428, %cst_125 [1] : vector<8x8xf32> to vector<8xf32>
    %430 = vector.shape_cast %429 : vector<8xf32> to vector<8x1xf32>
    %cst_126 = arith.constant dense<0.000000e+00> : vector<8x8xf32>
    %431 = tpu.matmul %428, %422, %cst_126 {dimension_numbers = #tpu.dot_dimension_numbers<[1], [0], [0], [1], [0, 0, 1, 1], [], []>} : vector<8x8xf32>, vector<8x8xf32>, vector<8x8xf32> -> vector<8x8xf32>
    %432 = tpu.reciprocal %430 {approx = true} : vector<8x1xf32> -> vector<8x1xf32>
    %433 = vector.broadcast %432 : vector<8x1xf32> to vector<8x8xf32>
    %434 = arith.mulf %431, %433 : vector<8x8xf32>
    %435 = vector.extract_strided_slice %417 {offsets = [0, 8], sizes = [8, 8], strides = [1, 1]} : vector<8x32xf32> to vector<8x8xf32>
    %436 = vector.extract_strided_slice %418 {offsets = [0, 8], sizes = [8, 8], strides = [1, 1]} : vector<8x32xf32> to vector<8x8xf32>
    %437 = vector.extract_strided_slice %419 {offsets = [0, 8], sizes = [8, 8], strides = [1, 1]} : vector<8x32xf32> to vector<8x8xf32>
    "tpu.trace_start"() <{level = 10 : i32, message = "qd,kd->qk"}> : () -> ()
    %cst_127 = arith.constant dense<0.000000e+00> : vector<8x8xf32>
    %438 = tpu.matmul %435, %436, %cst_127 {dimension_numbers = #tpu.dot_dimension_numbers<[1], [1], [0], [0], [0, 0, 1, 0], [], []>} : vector<8x8xf32>, vector<8x8xf32>, vector<8x8xf32> -> vector<8x8xf32>
    "tpu.trace_stop"() : () -> ()
    %cst_128 = arith.constant dense<0xFF800000> : vector<8xf32>
    %439 = vector.multi_reduction <maximumf>, %438, %cst_128 [1] : vector<8x8xf32> to vector<8xf32>
    %440 = vector.shape_cast %439 : vector<8xf32> to vector<8x1xf32>
    %441 = vector.broadcast %440 : vector<8x1xf32> to vector<8x8xf32>
    %442 = arith.subf %438, %441 : vector<8x8xf32>
    %443 = math.exp %442 : vector<8x8xf32>
    %cst_129 = arith.constant dense<0.000000e+00> : vector<8xf32>
    %444 = vector.multi_reduction <add>, %443, %cst_129 [1] : vector<8x8xf32> to vector<8xf32>
    %445 = vector.shape_cast %444 : vector<8xf32> to vector<8x1xf32>
    %cst_130 = arith.constant dense<0.000000e+00> : vector<8x8xf32>
    %446 = tpu.matmul %443, %437, %cst_130 {dimension_numbers = #tpu.dot_dimension_numbers<[1], [0], [0], [1], [0, 0, 1, 1], [], []>} : vector<8x8xf32>, vector<8x8xf32>, vector<8x8xf32> -> vector<8x8xf32>
    %447 = tpu.reciprocal %445 {approx = true} : vector<8x1xf32> -> vector<8x1xf32>
    %448 = vector.broadcast %447 : vector<8x1xf32> to vector<8x8xf32>
    %449 = arith.mulf %446, %448 : vector<8x8xf32>
    %450 = vector.extract_strided_slice %417 {offsets = [0, 16], sizes = [8, 8], strides = [1, 1]} : vector<8x32xf32> to vector<8x8xf32>
    %451 = vector.extract_strided_slice %418 {offsets = [0, 16], sizes = [8, 8], strides = [1, 1]} : vector<8x32xf32> to vector<8x8xf32>
    %452 = vector.extract_strided_slice %419 {offsets = [0, 16], sizes = [8, 8], strides = [1, 1]} : vector<8x32xf32> to vector<8x8xf32>
    "tpu.trace_start"() <{level = 10 : i32, message = "qd,kd->qk"}> : () -> ()
    %cst_131 = arith.constant dense<0.000000e+00> : vector<8x8xf32>
    %453 = tpu.matmul %450, %451, %cst_131 {dimension_numbers = #tpu.dot_dimension_numbers<[1], [1], [0], [0], [0, 0, 1, 0], [], []>} : vector<8x8xf32>, vector<8x8xf32>, vector<8x8xf32> -> vector<8x8xf32>
    "tpu.trace_stop"() : () -> ()
    %cst_132 = arith.constant dense<0xFF800000> : vector<8xf32>
    %454 = vector.multi_reduction <maximumf>, %453, %cst_132 [1] : vector<8x8xf32> to vector<8xf32>
    %455 = vector.shape_cast %454 : vector<8xf32> to vector<8x1xf32>
    %456 = vector.broadcast %455 : vector<8x1xf32> to vector<8x8xf32>
    %457 = arith.subf %453, %456 : vector<8x8xf32>
    %458 = math.exp %457 : vector<8x8xf32>
    %cst_133 = arith.constant dense<0.000000e+00> : vector<8xf32>
    %459 = vector.multi_reduction <add>, %458, %cst_133 [1] : vector<8x8xf32> to vector<8xf32>
    %460 = vector.shape_cast %459 : vector<8xf32> to vector<8x1xf32>
    %cst_134 = arith.constant dense<0.000000e+00> : vector<8x8xf32>
    %461 = tpu.matmul %458, %452, %cst_134 {dimension_numbers = #tpu.dot_dimension_numbers<[1], [0], [0], [1], [0, 0, 1, 1], [], []>} : vector<8x8xf32>, vector<8x8xf32>, vector<8x8xf32> -> vector<8x8xf32>
    %462 = tpu.reciprocal %460 {approx = true} : vector<8x1xf32> -> vector<8x1xf32>
    %463 = vector.broadcast %462 : vector<8x1xf32> to vector<8x8xf32>
    %464 = arith.mulf %461, %463 : vector<8x8xf32>
    %465 = vector.extract_strided_slice %417 {offsets = [0, 24], sizes = [8, 8], strides = [1, 1]} : vector<8x32xf32> to vector<8x8xf32>
    %466 = vector.extract_strided_slice %418 {offsets = [0, 24], sizes = [8, 8], strides = [1, 1]} : vector<8x32xf32> to vector<8x8xf32>
    %467 = vector.extract_strided_slice %419 {offsets = [0, 24], sizes = [8, 8], strides = [1, 1]} : vector<8x32xf32> to vector<8x8xf32>
    "tpu.trace_start"() <{level = 10 : i32, message = "qd,kd->qk"}> : () -> ()
    %cst_135 = arith.constant dense<0.000000e+00> : vector<8x8xf32>
    %468 = tpu.matmul %465, %466, %cst_135 {dimension_numbers = #tpu.dot_dimension_numbers<[1], [1], [0], [0], [0, 0, 1, 0], [], []>} : vector<8x8xf32>, vector<8x8xf32>, vector<8x8xf32> -> vector<8x8xf32>
    "tpu.trace_stop"() : () -> ()
    %cst_136 = arith.constant dense<0xFF800000> : vector<8xf32>
    %469 = vector.multi_reduction <maximumf>, %468, %cst_136 [1] : vector<8x8xf32> to vector<8xf32>
    %470 = vector.shape_cast %469 : vector<8xf32> to vector<8x1xf32>
    %471 = vector.broadcast %470 : vector<8x1xf32> to vector<8x8xf32>
    %472 = arith.subf %468, %471 : vector<8x8xf32>
    %473 = math.exp %472 : vector<8x8xf32>
    %cst_137 = arith.constant dense<0.000000e+00> : vector<8xf32>
    %474 = vector.multi_reduction <add>, %473, %cst_137 [1] : vector<8x8xf32> to vector<8xf32>
    %475 = vector.shape_cast %474 : vector<8xf32> to vector<8x1xf32>
    %cst_138 = arith.constant dense<0.000000e+00> : vector<8x8xf32>
    %476 = tpu.matmul %473, %467, %cst_138 {dimension_numbers = #tpu.dot_dimension_numbers<[1], [0], [0], [1], [0, 0, 1, 1], [], []>} : vector<8x8xf32>, vector<8x8xf32>, vector<8x8xf32> -> vector<8x8xf32>
    %477 = tpu.reciprocal %475 {approx = true} : vector<8x1xf32> -> vector<8x1xf32>
    %478 = vector.broadcast %477 : vector<8x1xf32> to vector<8x8xf32>
    %479 = arith.mulf %476, %478 : vector<8x8xf32>
    %480 = tpu.concatenate %434, %449, %464, %479 in 1 : vector<8x8xf32>, vector<8x8xf32>, vector<8x8xf32>, vector<8x8xf32> -> vector<8x32xf32>
    %481 = vector.extract_strided_slice %409 {offsets = [8, 0], sizes = [8, 32], strides = [1, 1]} : vector<16x32xf32> to vector<8x32xf32>
    %482 = vector.extract_strided_slice %415 {offsets = [8, 0], sizes = [8, 32], strides = [1, 1]} : vector<16x32xf32> to vector<8x32xf32>
    %483 = vector.extract_strided_slice %416 {offsets = [8, 0], sizes = [8, 32], strides = [1, 1]} : vector<16x32xf32> to vector<8x32xf32>
    %484 = vector.extract_strided_slice %481 {offsets = [0, 0], sizes = [8, 8], strides = [1, 1]} : vector<8x32xf32> to vector<8x8xf32>
    %485 = vector.extract_strided_slice %482 {offsets = [0, 0], sizes = [8, 8], strides = [1, 1]} : vector<8x32xf32> to vector<8x8xf32>
    %486 = vector.extract_strided_slice %483 {offsets = [0, 0], sizes = [8, 8], strides = [1, 1]} : vector<8x32xf32> to vector<8x8xf32>
    "tpu.trace_start"() <{level = 10 : i32, message = "qd,kd->qk"}> : () -> ()
    %cst_139 = arith.constant dense<0.000000e+00> : vector<8x8xf32>
    %487 = tpu.matmul %484, %485, %cst_139 {dimension_numbers = #tpu.dot_dimension_numbers<[1], [1], [0], [0], [0, 0, 1, 0], [], []>} : vector<8x8xf32>, vector<8x8xf32>, vector<8x8xf32> -> vector<8x8xf32>
    "tpu.trace_stop"() : () -> ()
    %cst_140 = arith.constant dense<0xFF800000> : vector<8xf32>
    %488 = vector.multi_reduction <maximumf>, %487, %cst_140 [1] : vector<8x8xf32> to vector<8xf32>
    %489 = vector.shape_cast %488 : vector<8xf32> to vector<8x1xf32>
    %490 = vector.broadcast %489 : vector<8x1xf32> to vector<8x8xf32>
    %491 = arith.subf %487, %490 : vector<8x8xf32>
    %492 = math.exp %491 : vector<8x8xf32>
    %cst_141 = arith.constant dense<0.000000e+00> : vector<8xf32>
    %493 = vector.multi_reduction <add>, %492, %cst_141 [1] : vector<8x8xf32> to vector<8xf32>
    %494 = vector.shape_cast %493 : vector<8xf32> to vector<8x1xf32>
    %cst_142 = arith.constant dense<0.000000e+00> : vector<8x8xf32>
    %495 = tpu.matmul %492, %486, %cst_142 {dimension_numbers = #tpu.dot_dimension_numbers<[1], [0], [0], [1], [0, 0, 1, 1], [], []>} : vector<8x8xf32>, vector<8x8xf32>, vector<8x8xf32> -> vector<8x8xf32>
    %496 = tpu.reciprocal %494 {approx = true} : vector<8x1xf32> -> vector<8x1xf32>
    %497 = vector.broadcast %496 : vector<8x1xf32> to vector<8x8xf32>
    %498 = arith.mulf %495, %497 : vector<8x8xf32>
    %499 = vector.extract_strided_slice %481 {offsets = [0, 8], sizes = [8, 8], strides = [1, 1]} : vector<8x32xf32> to vector<8x8xf32>
    %500 = vector.extract_strided_slice %482 {offsets = [0, 8], sizes = [8, 8], strides = [1, 1]} : vector<8x32xf32> to vector<8x8xf32>
    %501 = vector.extract_strided_slice %483 {offsets = [0, 8], sizes = [8, 8], strides = [1, 1]} : vector<8x32xf32> to vector<8x8xf32>
    "tpu.trace_start"() <{level = 10 : i32, message = "qd,kd->qk"}> : () -> ()
    %cst_143 = arith.constant dense<0.000000e+00> : vector<8x8xf32>
    %502 = tpu.matmul %499, %500, %cst_143 {dimension_numbers = #tpu.dot_dimension_numbers<[1], [1], [0], [0], [0, 0, 1, 0], [], []>} : vector<8x8xf32>, vector<8x8xf32>, vector<8x8xf32> -> vector<8x8xf32>
    "tpu.trace_stop"() : () -> ()
    %cst_144 = arith.constant dense<0xFF800000> : vector<8xf32>
    %503 = vector.multi_reduction <maximumf>, %502, %cst_144 [1] : vector<8x8xf32> to vector<8xf32>
    %504 = vector.shape_cast %503 : vector<8xf32> to vector<8x1xf32>
    %505 = vector.broadcast %504 : vector<8x1xf32> to vector<8x8xf32>
    %506 = arith.subf %502, %505 : vector<8x8xf32>
    %507 = math.exp %506 : vector<8x8xf32>
    %cst_145 = arith.constant dense<0.000000e+00> : vector<8xf32>
    %508 = vector.multi_reduction <add>, %507, %cst_145 [1] : vector<8x8xf32> to vector<8xf32>
    %509 = vector.shape_cast %508 : vector<8xf32> to vector<8x1xf32>
    %cst_146 = arith.constant dense<0.000000e+00> : vector<8x8xf32>
    %510 = tpu.matmul %507, %501, %cst_146 {dimension_numbers = #tpu.dot_dimension_numbers<[1], [0], [0], [1], [0, 0, 1, 1], [], []>} : vector<8x8xf32>, vector<8x8xf32>, vector<8x8xf32> -> vector<8x8xf32>
    %511 = tpu.reciprocal %509 {approx = true} : vector<8x1xf32> -> vector<8x1xf32>
    %512 = vector.broadcast %511 : vector<8x1xf32> to vector<8x8xf32>
    %513 = arith.mulf %510, %512 : vector<8x8xf32>
    %514 = vector.extract_strided_slice %481 {offsets = [0, 16], sizes = [8, 8], strides = [1, 1]} : vector<8x32xf32> to vector<8x8xf32>
    %515 = vector.extract_strided_slice %482 {offsets = [0, 16], sizes = [8, 8], strides = [1, 1]} : vector<8x32xf32> to vector<8x8xf32>
    %516 = vector.extract_strided_slice %483 {offsets = [0, 16], sizes = [8, 8], strides = [1, 1]} : vector<8x32xf32> to vector<8x8xf32>
    "tpu.trace_start"() <{level = 10 : i32, message = "qd,kd->qk"}> : () -> ()
    %cst_147 = arith.constant dense<0.000000e+00> : vector<8x8xf32>
    %517 = tpu.matmul %514, %515, %cst_147 {dimension_numbers = #tpu.dot_dimension_numbers<[1], [1], [0], [0], [0, 0, 1, 0], [], []>} : vector<8x8xf32>, vector<8x8xf32>, vector<8x8xf32> -> vector<8x8xf32>
    "tpu.trace_stop"() : () -> ()
    %cst_148 = arith.constant dense<0xFF800000> : vector<8xf32>
    %518 = vector.multi_reduction <maximumf>, %517, %cst_148 [1] : vector<8x8xf32> to vector<8xf32>
    %519 = vector.shape_cast %518 : vector<8xf32> to vector<8x1xf32>
    %520 = vector.broadcast %519 : vector<8x1xf32> to vector<8x8xf32>
    %521 = arith.subf %517, %520 : vector<8x8xf32>
    %522 = math.exp %521 : vector<8x8xf32>
    %cst_149 = arith.constant dense<0.000000e+00> : vector<8xf32>
    %523 = vector.multi_reduction <add>, %522, %cst_149 [1] : vector<8x8xf32> to vector<8xf32>
    %524 = vector.shape_cast %523 : vector<8xf32> to vector<8x1xf32>
    %cst_150 = arith.constant dense<0.000000e+00> : vector<8x8xf32>
    %525 = tpu.matmul %522, %516, %cst_150 {dimension_numbers = #tpu.dot_dimension_numbers<[1], [0], [0], [1], [0, 0, 1, 1], [], []>} : vector<8x8xf32>, vector<8x8xf32>, vector<8x8xf32> -> vector<8x8xf32>
    %526 = tpu.reciprocal %524 {approx = true} : vector<8x1xf32> -> vector<8x1xf32>
    %527 = vector.broadcast %526 : vector<8x1xf32> to vector<8x8xf32>
    %528 = arith.mulf %525, %527 : vector<8x8xf32>
    %529 = vector.extract_strided_slice %481 {offsets = [0, 24], sizes = [8, 8], strides = [1, 1]} : vector<8x32xf32> to vector<8x8xf32>
    %530 = vector.extract_strided_slice %482 {offsets = [0, 24], sizes = [8, 8], strides = [1, 1]} : vector<8x32xf32> to vector<8x8xf32>
    %531 = vector.extract_strided_slice %483 {offsets = [0, 24], sizes = [8, 8], strides = [1, 1]} : vector<8x32xf32> to vector<8x8xf32>
    "tpu.trace_start"() <{level = 10 : i32, message = "qd,kd->qk"}> : () -> ()
    %cst_151 = arith.constant dense<0.000000e+00> : vector<8x8xf32>
    %532 = tpu.matmul %529, %530, %cst_151 {dimension_numbers = #tpu.dot_dimension_numbers<[1], [1], [0], [0], [0, 0, 1, 0], [], []>} : vector<8x8xf32>, vector<8x8xf32>, vector<8x8xf32> -> vector<8x8xf32>
    "tpu.trace_stop"() : () -> ()
    %cst_152 = arith.constant dense<0xFF800000> : vector<8xf32>
    %533 = vector.multi_reduction <maximumf>, %532, %cst_152 [1] : vector<8x8xf32> to vector<8xf32>
    %534 = vector.shape_cast %533 : vector<8xf32> to vector<8x1xf32>
    %535 = vector.broadcast %534 : vector<8x1xf32> to vector<8x8xf32>
    %536 = arith.subf %532, %535 : vector<8x8xf32>
    %537 = math.exp %536 : vector<8x8xf32>
    %cst_153 = arith.constant dense<0.000000e+00> : vector<8xf32>
    %538 = vector.multi_reduction <add>, %537, %cst_153 [1] : vector<8x8xf32> to vector<8xf32>
    %539 = vector.shape_cast %538 : vector<8xf32> to vector<8x1xf32>
    %cst_154 = arith.constant dense<0.000000e+00> : vector<8x8xf32>
    %540 = tpu.matmul %537, %531, %cst_154 {dimension_numbers = #tpu.dot_dimension_numbers<[1], [0], [0], [1], [0, 0, 1, 1], [], []>} : vector<8x8xf32>, vector<8x8xf32>, vector<8x8xf32> -> vector<8x8xf32>
    %541 = tpu.reciprocal %539 {approx = true} : vector<8x1xf32> -> vector<8x1xf32>
    %542 = vector.broadcast %541 : vector<8x1xf32> to vector<8x8xf32>
    %543 = arith.mulf %540, %542 : vector<8x8xf32>
    %544 = tpu.concatenate %498, %513, %528, %543 in 1 : vector<8x8xf32>, vector<8x8xf32>, vector<8x8xf32>, vector<8x8xf32> -> vector<8x32xf32>
    %545 = tpu.concatenate %480, %544 in 0 : vector<8x32xf32>, vector<8x32xf32> -> vector<16x32xf32>
    %c0_155 = arith.constant 0 : index
    %c672 = arith.constant 672 : index
    %546 = vector.load %arg2[%c0_155, %c672] : memref<32x704xf32, #tpu.memory_space<vmem>>, vector<32x32xf32>
    %c14 = arith.constant 14 : index
    %c0_156 = arith.constant 0 : index
    %547 = vector.load %arg4[%c14, %c0_156] : memref<22x128xf32, #tpu.memory_space<vmem>>, vector<1x32xf32>
    %cst_157 = arith.constant dense<0.000000e+00> : vector<16x32xf32>
    %548 = tpu.matmul %545, %546, %cst_157 {dimension_numbers = #tpu.dot_dimension_numbers<[1], [0], [0], [1], [0, 0, 1, 1], [], []>} : vector<16x32xf32>, vector<32x32xf32>, vector<16x32xf32> -> vector<16x32xf32>
    %549 = vector.broadcast %547 : vector<1x32xf32> to vector<16x32xf32>
    %550 = arith.addf %548, %549 : vector<16x32xf32>
    %551 = arith.addf %404, %550 : vector<16x32xf32>
    %c15 = arith.constant 15 : index
    %c0_158 = arith.constant 0 : index
    %552 = vector.load %arg4[%c15, %c0_158] : memref<22x128xf32, #tpu.memory_space<vmem>>, vector<1x32xf32>
    %c16_159 = arith.constant 16 : index
    %c0_160 = arith.constant 0 : index
    %553 = vector.load %arg4[%c16_159, %c0_160] : memref<22x128xf32, #tpu.memory_space<vmem>>, vector<1x32xf32>
    %cst_161 = arith.constant dense<0.000000e+00> : vector<16xf32>
    %554 = vector.multi_reduction <add>, %551, %cst_161 [1] : vector<16x32xf32> to vector<16xf32>
    %555 = vector.shape_cast %554 : vector<16xf32> to vector<16x1xf32>
    %cst_162 = arith.constant 3.200000e+01 : f32
    %556 = vector.broadcast %cst_162 : f32 to vector<16x1xf32>
    %557 = arith.divf %555, %556 : vector<16x1xf32>
    %558 = vector.broadcast %557 : vector<16x1xf32> to vector<16x32xf32>
    %559 = arith.subf %551, %558 : vector<16x32xf32>
    %560 = arith.mulf %559, %559 : vector<16x32xf32>
    %cst_163 = arith.constant dense<0.000000e+00> : vector<16xf32>
    %561 = vector.multi_reduction <add>, %560, %cst_163 [1] : vector<16x32xf32> to vector<16xf32>
    %562 = vector.shape_cast %561 : vector<16xf32> to vector<16x1xf32>
    %cst_164 = arith.constant 3.200000e+01 : f32
    %563 = vector.broadcast %cst_164 : f32 to vector<16x1xf32>
    %564 = arith.divf %562, %563 : vector<16x1xf32>
    %565 = vector.broadcast %557 : vector<16x1xf32> to vector<16x32xf32>
    %566 = arith.subf %551, %565 : vector<16x32xf32>
    %cst_165 = arith.constant 9.99999974E-6 : f32
    %567 = vector.broadcast %cst_165 : f32 to vector<16x1xf32>
    %568 = arith.addf %564, %567 : vector<16x1xf32>
    %569 = math.rsqrt %568 : vector<16x1xf32>
    %570 = vector.broadcast %569 : vector<16x1xf32> to vector<16x32xf32>
    %571 = arith.mulf %566, %570 : vector<16x32xf32>
    %572 = vector.broadcast %552 : vector<1x32xf32> to vector<16x32xf32>
    %573 = arith.mulf %571, %572 : vector<16x32xf32>
    %574 = vector.broadcast %553 : vector<1x32xf32> to vector<16x32xf32>
    %575 = arith.addf %573, %574 : vector<16x32xf32>
    %c0_166 = arith.constant 0 : index
    %c448 = arith.constant 448 : index
    %576 = vector.load %arg2[%c0_166, %c448] : memref<32x704xf32, #tpu.memory_space<vmem>>, vector<32x64xf32>
    %c17 = arith.constant 17 : index
    %c0_167 = arith.constant 0 : index
    %577 = vector.load %arg4[%c17, %c0_167] : memref<22x128xf32, #tpu.memory_space<vmem>>, vector<1x64xf32>
    %cst_168 = arith.constant dense<0.000000e+00> : vector<16x64xf32>
    %578 = tpu.matmul %575, %576, %cst_168 {dimension_numbers = #tpu.dot_dimension_numbers<[1], [0], [0], [1], [0, 0, 1, 1], [], []>} : vector<16x32xf32>, vector<32x64xf32>, vector<16x64xf32> -> vector<16x64xf32>
    %579 = vector.broadcast %577 : vector<1x64xf32> to vector<16x64xf32>
    %580 = arith.addf %578, %579 : vector<16x64xf32>
    %cst_169 = arith.constant 0.000000e+00 : f32
    %581 = vector.broadcast %cst_169 : f32 to vector<16x64xf32>
    %582 = arith.maximumf %580, %581 : vector<16x64xf32>
    %c0_170 = arith.constant 0 : index
    %c32 = arith.constant 32 : index
    %583 = vector.load %arg3[%c0_170, %c32] : memref<64x64xf32, #tpu.memory_space<vmem>>, vector<64x32xf32>
    %c18 = arith.constant 18 : index
    %c0_171 = arith.constant 0 : index
    %584 = vector.load %arg4[%c18, %c0_171] : memref<22x128xf32, #tpu.memory_space<vmem>>, vector<1x32xf32>
    %cst_172 = arith.constant dense<0.000000e+00> : vector<16x32xf32>
    %585 = tpu.matmul %582, %583, %cst_172 {dimension_numbers = #tpu.dot_dimension_numbers<[1], [0], [0], [1], [0, 0, 1, 1], [], []>} : vector<16x64xf32>, vector<64x32xf32>, vector<16x32xf32> -> vector<16x32xf32>
    %586 = vector.broadcast %584 : vector<1x32xf32> to vector<16x32xf32>
    %587 = arith.addf %585, %586 : vector<16x32xf32>
    %588 = arith.addf %575, %587 : vector<16x32xf32>
    %c19 = arith.constant 19 : index
    %c0_173 = arith.constant 0 : index
    %589 = vector.load %arg4[%c19, %c0_173] : memref<22x128xf32, #tpu.memory_space<vmem>>, vector<1x32xf32>
    %c20 = arith.constant 20 : index
    %c0_174 = arith.constant 0 : index
    %590 = vector.load %arg4[%c20, %c0_174] : memref<22x128xf32, #tpu.memory_space<vmem>>, vector<1x32xf32>
    %cst_175 = arith.constant dense<0.000000e+00> : vector<16xf32>
    %591 = vector.multi_reduction <add>, %588, %cst_175 [1] : vector<16x32xf32> to vector<16xf32>
    %592 = vector.shape_cast %591 : vector<16xf32> to vector<16x1xf32>
    %cst_176 = arith.constant 3.200000e+01 : f32
    %593 = vector.broadcast %cst_176 : f32 to vector<16x1xf32>
    %594 = arith.divf %592, %593 : vector<16x1xf32>
    %595 = vector.broadcast %594 : vector<16x1xf32> to vector<16x32xf32>
    %596 = arith.subf %588, %595 : vector<16x32xf32>
    %597 = arith.mulf %596, %596 : vector<16x32xf32>
    %cst_177 = arith.constant dense<0.000000e+00> : vector<16xf32>
    %598 = vector.multi_reduction <add>, %597, %cst_177 [1] : vector<16x32xf32> to vector<16xf32>
    %599 = vector.shape_cast %598 : vector<16xf32> to vector<16x1xf32>
    %cst_178 = arith.constant 3.200000e+01 : f32
    %600 = vector.broadcast %cst_178 : f32 to vector<16x1xf32>
    %601 = arith.divf %599, %600 : vector<16x1xf32>
    %602 = vector.broadcast %594 : vector<16x1xf32> to vector<16x32xf32>
    %603 = arith.subf %588, %602 : vector<16x32xf32>
    %cst_179 = arith.constant 9.99999974E-6 : f32
    %604 = vector.broadcast %cst_179 : f32 to vector<16x1xf32>
    %605 = arith.addf %601, %604 : vector<16x1xf32>
    %606 = math.rsqrt %605 : vector<16x1xf32>
    %607 = vector.broadcast %606 : vector<16x1xf32> to vector<16x32xf32>
    %608 = arith.mulf %603, %607 : vector<16x32xf32>
    %609 = vector.broadcast %589 : vector<1x32xf32> to vector<16x32xf32>
    %610 = arith.mulf %608, %609 : vector<16x32xf32>
    %611 = vector.broadcast %590 : vector<1x32xf32> to vector<16x32xf32>
    %612 = arith.addf %610, %611 : vector<16x32xf32>
    %c0_180 = arith.constant 0 : index
    %c0_181 = arith.constant 0 : index
    %613 = vector.load %arg2[%c0_180, %c0_181] : memref<32x704xf32, #tpu.memory_space<vmem>>, vector<32x128xf32>
    %c21 = arith.constant 21 : index
    %c0_182 = arith.constant 0 : index
    %614 = vector.load %arg4[%c21, %c0_182] : memref<22x128xf32, #tpu.memory_space<vmem>>, vector<1x128xf32>
    %cst_183 = arith.constant dense<0.000000e+00> : vector<16x128xf32>
    %615 = tpu.matmul %612, %613, %cst_183 {dimension_numbers = #tpu.dot_dimension_numbers<[1], [0], [0], [1], [0, 0, 1, 1], [], []>} : vector<16x32xf32>, vector<32x128xf32>, vector<16x128xf32> -> vector<16x128xf32>
    %616 = vector.broadcast %614 : vector<1x128xf32> to vector<16x128xf32>
    %617 = arith.addf %615, %616 : vector<16x128xf32>
    %c0_184 = arith.constant 0 : index
    %c0_185 = arith.constant 0 : index
    %618 = vector.load %arg5[%c0_184, %c0_185] : memref<16x128xf32, #tpu.memory_space<vmem>>, vector<16x128xf32>
    tpu.vector_store %arg5[%c0_184, %c0_185], %617 {strides = array<i32>} : memref<16x128xf32, #tpu.memory_space<vmem>>, vector<16x128xf32>,
    return
  }
}

</mosaic_0001>

<llo_original>
// kernel: encoder_decoder_forward.1
$region0: #{encoder_decoder_forward.1}
  #allocation0 [shape = 'u32[]', space=smem, size = 0x4, offset = 0x4, fixed_abs, tag = 'smem constant byte address 0x4 - core index']
  #allocation1 [shape = 'u32[144,128]{1,0:T(1,128)}', space=vmem, size = 0x12000, scoped, tag = 'internal scratch']
  %s0 = inlined_call_operand.vmem [shape: s32[32,1], index: 0, kind: input, shape index: {}]
  %s1 = inlined_call_operand.vmem [shape: f32[32,32], index: 1, kind: input, shape index: {}]
  %s2 = inlined_call_operand.vmem [shape: f32[32,704], index: 2, kind: input, shape index: {}]
  %s3 = inlined_call_operand.hbm [shape: f32[64,64], index: 3, kind: input, shape index: {}]
  %s4 = inlined_call_operand.vmem [shape: f32[22,128], index: 4, kind: input, shape index: {}]
  %s5 = inlined_call_operand.vmem [shape: f32[16,128], index: 5, kind: output, shape index: {}]
  %s6 = sld [smem:[#allocation0]]
  $region34: #{encoder_decoder_forward.1} parent=0
    _
  %s8 = ssub.s32 1, %s6
  %s9 = scalar_select 0, %s8, %s6
  $region1: #{encoder_decoder_forward.1} parent=0
    #allocation2 [shape = 'u8[32768]{0}', space=vmem, size = 0x8000, scoped, tag = 'input window, operand 3, single buffered']
    #allocation3 [shape = 's32[1]{0}', space=sflag, size = 0x4, scoped, tag = 'scoped memory for encoder_decoder_forward.1']
    %10 = vsyncpa [#allocation3], 0
    // Predicated region
    $region2: #{encoder_decoder_forward.1} parent=1 // pred_check
      _
    $region3: #{encoder_decoder_forward.1} parent=1 // pred_check_branch
      %12 = sbr.rel (0) target = $region5
    $region4: #{encoder_decoder_forward.1} parent=1 // pred_region
      _
    $region5: #{encoder_decoder_forward.1} parent=1 // pred_fallthru
      _
    // Predicated region
    $region6: #{encoder_decoder_forward.1} parent=1 // pred_check
      _
    $region7: #{encoder_decoder_forward.1} parent=1 // pred_check_branch
      %14 = sbr.rel (0) target = $region9
    $region8: #{encoder_decoder_forward.1} parent=1 // pred_region
      _
    $region9: #{encoder_decoder_forward.1} parent=1 // pred_fallthru
      _
    // Predicated region
    $region10: #{encoder_decoder_forward.1} parent=1 // pred_check
      _
    $region11: #{encoder_decoder_forward.1} parent=1 // pred_check_branch
      %16 = sbr.rel (0) target = $region13
    $region12: #{encoder_decoder_forward.1} parent=1 // pred_region
      _
    $region13: #{encoder_decoder_forward.1} parent=1 // pred_fallthru
      _
    // Predicated region
    $region14: #{encoder_decoder_forward.1} parent=1 // pred_check
      _
    $region15: #{encoder_decoder_forward.1} parent=1 // pred_check_branch
      %18 = sbr.rel (0) target = $region17
    $region16: #{encoder_decoder_forward.1} parent=1 // pred_region
      %s20 = ssub.s32 1024, 1024
      %21 = vsyncadd [#allocation3], %s20
      %s22 = sshll.u32 [#allocation2], 4
      %s23 = int_to_ptr.vmem [resolvable:$true] %s22
      %28 = dma.hbm_to_vmem [thread:$0]  %s3, 1024, %s23, [#allocation3], 128, 128, 8
    $region17: #{encoder_decoder_forward.1} parent=1 // pred_fallthru
      _
    // Predicated region
    $region18: #{encoder_decoder_forward.1} parent=1 // pred_check
      _
    $region19: #{encoder_decoder_forward.1} parent=1 // pred_check_branch
      %30 = sbr.rel (0) target = $region21
    $region20: #{encoder_decoder_forward.1} parent=1 // pred_region
      _
    $region21: #{encoder_decoder_forward.1} parent=1 // pred_fallthru
      _
    // Predicated region
    $region22: #{encoder_decoder_forward.1} parent=1 // pred_check
      _
    $region23: #{encoder_decoder_forward.1} parent=1 // pred_check_branch
      %32 = sbr.rel (0) target = $region25
    $region24: #{encoder_decoder_forward.1} parent=1 // pred_region
      %33 = dma.done [#allocation3], 1024
    $region25: #{encoder_decoder_forward.1} parent=1 // pred_fallthru
      _
    %v34 = vld [vmem:[%s0] sm:$0xff]
    %v35 = vld [vmem:[%s0 + $0x8] sm:$0xff]
    %v36 = vld [vmem:[%s2 + $0x20] sm:$0xff]
    %v37 = vld [vmem:[%s2 + $0x50] sm:$0xff]
    %v38 = vld [vmem:[%s2 + $0x80] sm:$0xff]
    %v39 = vld [vmem:[%s2 + $0xb0] sm:$0xff]
    %v40 = vld [vmem:[%s1] sm:$0xff]
    %v41 = vld [vmem:[%s1 + $0x8] sm:$0xff]
    %v42 = vlaneseq
    %v43 = vand.u32 %v42, 127
    %44 = vset.pattern.permute.xlu0 0
    %45 = vperm.xlu0 %44, %v34
    %v46 = vpop.permute.xlu0 %45
    %47 = vset.pattern.permute.xlu0 0
    %48 = vperm.xlu0 %47, %v35
    %v49 = vpop.permute.xlu0 %48
    %vm50 = vcmp.eq.s32.totalorder %v46, %v43
    %vm51 = vcmp.eq.s32.totalorder %v49, %v43
    %v52 = vsel %vm50, 1, 0
    %v53 = vsel %vm51, 1, 0
    %v54 = vcvt.s32.f32 %v52
    %v55 = vcvt.s32.f32 %v53
    %vm56 = vcmask 261120
    %v58 = vsel %vm56, %v54, 0
    %v61 = vsel %vm56, %v55, 0
    %63 = vmatprep.subr.mxu0 0.0
    %64 = vmatpush1.msra.mxu0 %v36
    %65 = vmatprep.subr.mxu0 0.0
    %66 = vmatpush1.msra.mxu0 %v37
    %67 = vmatprep.subr.mxu0 0.0
    %68 = vmatpush1.msra.mxu0 %v38
    %69 = vmatprep.subr.mxu0 0.0
    %70 = vmatpush1.msra.mxu0 %v39
    %71 = vmatprep.subr.mxu0 0.0
    %72 = vmatpush1.msra.mxu0 0.0
    %73 = vmatprep.subr.mxu0 0.0
    %74 = vmatpush1.msra.mxu0 0.0
    %75 = vmatprep.subr.mxu0 0.0
    %76 = vmatpush1.msra.mxu0 0.0
    %77 = vmatprep.subr.mxu0 0.0
    %78 = vmatpush1.msra.mxu0 0.0
    %79 = vmatprep.subr.mxu0 0.0
    %80 = vmatpush1.msra.mxu0 0.0
    %81 = vmatprep.subr.mxu0 0.0
    %82 = vmatpush1.msra.mxu0 0.0
    %83 = vmatprep.subr.mxu0 0.0
    %84 = vmatpush1.msra.mxu0 0.0
    %85 = vmatprep.subr.mxu0 0.0
    %86 = vmatpush1.msra.mxu0 0.0
    %87 = vmatprep.subr.mxu0 0.0
    %88 = vmatpush1.msra.mxu0 0.0
    %89 = vmatprep.subr.mxu0 0.0
    %90 = vmatpush1.msra.mxu0 0.0
    %91 = vmatprep.subr.mxu0 0.0
    %92 = vmatpush1.msra.mxu0 0.0
    %93 = vmatprep.subr.mxu0 0.0
    %94 = vmatpush1.msra.mxu0 0.0
    %95 = vmatprep.subr.mxu0 0.0
    %96 = vmatpush1.msra.mxu0 0.0
    %97 = vmatprep.subr.mxu0 0.0
    %98 = vmatpush1.msra.mxu0 0.0
    %99 = vmatprep.subr.mxu0 0.0
    %100 = vmatpush1.msra.mxu0 0.0
    %101 = vmatprep.subr.mxu0 0.0
    %102 = vmatpush1.msra.mxu0 0.0
    %103 = vmatprep.subr.mxu0 0.0
    %104 = vmatpush1.msra.mxu0 0.0
    %105 = vmatprep.subr.mxu0 0.0
    %106 = vmatpush1.msra.mxu0 0.0
    %107 = vmatprep.subr.mxu0 0.0
    %108 = vmatpush1.msra.mxu0 0.0
    %109 = vmatprep.subr.mxu0 0.0
    %110 = vmatpush1.msra.mxu0 0.0
    %111 = vmatprep.subr.mxu0 0.0
    %112 = vmatpush1.msra.mxu0 0.0
    %113 = vmatprep.subr.mxu0 0.0
    %114 = vmatpush1.msra.mxu0 0.0
    %115 = vmatprep.subr.mxu0 0.0
    %116 = vmatpush1.msra.mxu0 0.0
    %117 = vmatprep.subr.mxu0 0.0
    %118 = vmatpush1.msra.mxu0 0.0
    %119 = vmatprep.subr.mxu0 0.0
    %120 = vmatpush1.msra.mxu0 0.0
    %121 = vmatprep.subr.mxu0 0.0
    %122 = vmatpush1.msra.mxu0 0.0
    %123 = vmatprep.subr.mxu0 0.0
    %124 = vmatpush1.msra.mxu0 0.0
    %125 = vmatprep.subr.mxu0 0.0
    %126 = vmatpush1.msra.mxu0 0.0
    %127 = vmatprep.mubr.f32.mxu0 0.0
    %128 = vmatmul.mubr.f32.gmra.mrb[0].mxu0 %v58
    %v129 = vpop.f32.mrb[0].mxu0
    %v130 = vadd.f32 %v40, %v129
    %v131 = vpop.f32.mrb[0].mxu0
    %132 = vmatprep.mubr.f32.mxu0 0.0
    %133 = vmatmul.mubr.f32.gmra.mrb[0].mxu0 %v61
    %v134 = vpop.f32.mrb[0].mxu0
    %v135 = vadd.f32 %v41, %v134
    %v136 = vpop.f32.mrb[0].mxu0
    %137 = vdwg.mxu0
    %v138 = vld [vmem:[%s2 + $0x8] sm:$0xff]
    %v139 = vld [vmem:[%s2 + $0x38] sm:$0xff]
    %v140 = vld [vmem:[%s2 + $0x68] sm:$0xff]
    %v141 = vld [vmem:[%s2 + $0x98] sm:$0xff]
    %v142 = vld [vmem:[%s4] sm:$0x1]
    %v143 = vlaneseq
    %v144 = vshrl.u32 %v143, 7
    %v145 = vsub.s32 0, %v144
    %v146 = vrot.slane %v142, %v145
    %v148 = vsel %vm56, %v130, 0
    %v151 = vsel %vm56, %v135, 0
    %153 = vmatprep.subr.mxu0 0.0
    %154 = vmatpush1.msra.mxu0 %v138
    %155 = vmatprep.subr.mxu0 0.0
    %156 = vmatpush1.msra.mxu0 %v139
    %157 = vmatprep.subr.mxu0 0.0
    %158 = vmatpush1.msra.mxu0 %v140
    %159 = vmatprep.subr.mxu0 0.0
    %160 = vmatpush1.msra.mxu0 %v141
    %161 = vmatprep.subr.mxu0 0.0
    %162 = vmatpush1.msra.mxu0 0.0
    %163 = vmatprep.subr.mxu0 0.0
    %164 = vmatpush1.msra.mxu0 0.0
    %165 = vmatprep.subr.mxu0 0.0
    %166 = vmatpush1.msra.mxu0 0.0
    %167 = vmatprep.subr.mxu0 0.0
    %168 = vmatpush1.msra.mxu0 0.0
    %169 = vmatprep.subr.mxu0 0.0
    %170 = vmatpush1.msra.mxu0 0.0
    %171 = vmatprep.subr.mxu0 0.0
    %172 = vmatpush1.msra.mxu0 0.0
    %173 = vmatprep.subr.mxu0 0.0
    %174 = vmatpush1.msra.mxu0 0.0
    %175 = vmatprep.subr.mxu0 0.0
    %176 = vmatpush1.msra.mxu0 0.0
    %177 = vmatprep.subr.mxu0 0.0
    %178 = vmatpush1.msra.mxu0 0.0
    %179 = vmatprep.subr.mxu0 0.0
    %180 = vmatpush1.msra.mxu0 0.0
    %181 = vmatprep.subr.mxu0 0.0
    %182 = vmatpush1.msra.mxu0 0.0
    %183 = vmatprep.subr.mxu0 0.0
    %184 = vmatpush1.msra.mxu0 0.0
    %185 = vmatprep.subr.mxu0 0.0
    %186 = vmatpush1.msra.mxu0 0.0
    %187 = vmatprep.subr.mxu0 0.0
    %188 = vmatpush1.msra.mxu0 0.0
    %189 = vmatprep.subr.mxu0 0.0
    %190 = vmatpush1.msra.mxu0 0.0
    %191 = vmatprep.subr.mxu0 0.0
    %192 = vmatpush1.msra.mxu0 0.0
    %193 = vmatprep.subr.mxu0 0.0
    %194 = vmatpush1.msra.mxu0 0.0
    %195 = vmatprep.subr.mxu0 0.0
    %196 = vmatpush1.msra.mxu0 0.0
    %197 = vmatprep.subr.mxu0 0.0
    %198 = vmatpush1.msra.mxu0 0.0
    %199 = vmatprep.subr.mxu0 0.0
    %200 = vmatpush1.msra.mxu0 0.0
    %201 = vmatprep.subr.mxu0 0.0
    %202 = vmatpush1.msra.mxu0 0.0
    %203 = vmatprep.subr.mxu0 0.0
    %204 = vmatpush1.msra.mxu0 0.0
    %205 = vmatprep.subr.mxu0 0.0
    %206 = vmatpush1.msra.mxu0 0.0
    %207 = vmatprep.subr.mxu0 0.0
    %208 = vmatpush1.msra.mxu0 0.0
    %209 = vmatprep.subr.mxu0 0.0
    %210 = vmatpush1.msra.mxu0 0.0
    %211 = vmatprep.subr.mxu0 0.0
    %212 = vmatpush1.msra.mxu0 0.0
    %213 = vmatprep.subr.mxu0 0.0
    %214 = vmatpush1.msra.mxu0 0.0
    %215 = vmatprep.subr.mxu0 0.0
    %216 = vmatpush1.msra.mxu0 0.0
    %217 = vmatprep.mubr.f32.mxu0 0.0
    %218 = vmatmul.mubr.f32.gmra.mrb[0].mxu0 %v148
    %v219 = vpop.f32.mrb[0].mxu0
    %v220 = vadd.f32 %v146, %v219
    %v221 = vpop.f32.mrb[0].mxu0
    %222 = vmatprep.mubr.f32.mxu0 0.0
    %223 = vmatmul.mubr.f32.gmra.mrb[0].mxu0 %v151
    %v224 = vpop.f32.mrb[0].mxu0
    %v225 = vadd.f32 %v146, %v224
    %v226 = vpop.f32.mrb[0].mxu0
    %227 = vdwg.mxu0
    %229 = vrot.lane.b32.xlu0 %v220, 96
    %v230 = vpop.permute.xlu0 %229
    %vm231 = vcmask 64512
    %v232 = vsel %vm231, %v220, 0
    %v234 = vsel %vm231, %v230, 0
    %236 = vmatprep.subr.mxu0 0.0
    %237 = vmatpush1.xpose.msra.mxu0 %v234
    %238 = vmatprep.subr.mxu0 0.0
    %239 = vmatpush1.xpose.msra.mxu0 0.0
    %240 = vmatprep.subr.mxu0 0.0
    %241 = vmatpush1.xpose.msra.mxu0 0.0
    %242 = vmatprep.subr.mxu0 0.0
    %243 = vmatpush1.xpose.msra.mxu0 0.0
    %244 = vmatprep.subr.mxu0 0.0
    %245 = vmatpush1.xpose.msra.mxu0 0.0
    %246 = vmatprep.subr.mxu0 0.0
    %247 = vmatpush1.xpose.msra.mxu0 0.0
    %248 = vmatprep.subr.mxu0 0.0
    %249 = vmatpush1.xpose.msra.mxu0 0.0
    %250 = vmatprep.subr.mxu0 0.0
    %251 = vmatpush1.xpose.msra.mxu0 0.0
    %252 = vmatprep.subr.mxu0 0.0
    %253 = vmatpush1.xpose.msra.mxu0 0.0
    %254 = vmatprep.subr.mxu0 0.0
    %255 = vmatpush1.xpose.msra.mxu0 0.0
    %256 = vmatprep.subr.mxu0 0.0
    %257 = vmatpush1.xpose.msra.mxu0 0.0
    %258 = vmatprep.subr.mxu0 0.0
    %259 = vmatpush1.xpose.msra.mxu0 0.0
    %260 = vmatprep.subr.mxu0 0.0
    %261 = vmatpush1.xpose.msra.mxu0 0.0
    %262 = vmatprep.subr.mxu0 0.0
    %263 = vmatpush1.xpose.msra.mxu0 0.0
    %264 = vmatprep.subr.mxu0 0.0
    %265 = vmatpush1.xpose.msra.mxu0 0.0
    %266 = vmatprep.subr.mxu0 0.0
    %267 = vmatpush1.xpose.msra.mxu0 0.0
    %268 = vmatprep.subr.mxu0 0.0
    %269 = vmatpush1.xpose.msra.mxu0 0.0
    %270 = vmatprep.subr.mxu0 0.0
    %271 = vmatpush1.xpose.msra.mxu0 0.0
    %272 = vmatprep.subr.mxu0 0.0
    %273 = vmatpush1.xpose.msra.mxu0 0.0
    %274 = vmatprep.subr.mxu0 0.0
    %275 = vmatpush1.xpose.msra.mxu0 0.0
    %276 = vmatprep.subr.mxu0 0.0
    %277 = vmatpush1.xpose.msra.mxu0 0.0
    %278 = vmatprep.subr.mxu0 0.0
    %279 = vmatpush1.xpose.msra.mxu0 0.0
    %280 = vmatprep.subr.mxu0 0.0
    %281 = vmatpush1.xpose.msra.mxu0 0.0
    %282 = vmatprep.subr.mxu0 0.0
    %283 = vmatpush1.xpose.msra.mxu0 0.0
    %284 = vmatprep.subr.mxu0 0.0
    %285 = vmatpush1.xpose.msra.mxu0 0.0
    %286 = vmatprep.subr.mxu0 0.0
    %287 = vmatpush1.xpose.msra.mxu0 0.0
    %288 = vmatprep.subr.mxu0 0.0
    %289 = vmatpush1.xpose.msra.mxu0 0.0
    %290 = vmatprep.subr.mxu0 0.0
    %291 = vmatpush1.xpose.msra.mxu0 0.0
    %292 = vmatprep.subr.mxu0 0.0
    %293 = vmatpush1.xpose.msra.mxu0 0.0
    %294 = vmatprep.subr.mxu0 0.0
    %295 = vmatpush1.xpose.msra.mxu0 0.0
    %296 = vmatprep.subr.mxu0 0.0
    %297 = vmatpush1.xpose.msra.mxu0 0.0
    %298 = vmatprep.subr.mxu0 0.0
    %299 = vmatpush1.xpose.msra.mxu0 0.0
    %300 = vmatprep.mubr.f32.mxu0 0.0
    %301 = vmatmul.mubr.f32.gmra.mrb[0].mxu0 %v232
    %v302 = vpop.f32.mrb[0].mxu0
    %v303 = vadd.f32 0.0, %v302
    %v304 = vpop.f32.mrb[0].mxu0
    %305 = vdwg.mxu0
    %v306 = vsel %vm231, %v303, -inf
    %307 = vmax.xlane.f32.xlu0 %v306
    %v308 = vpop.xlane.xlu0 %307
    %v309 = vsub.f32 %v303, %v308
    %v310 = vmul.f32 %v309, 1.442695
    %v311 = vpow.pop %v310
    %v312 = vsel %vm231, %v311, 0.0
    %313 = vadd.xlane.f32.xlu0 %v312
    %v314 = vpop.xlane.xlu0 %313
    %315 = vrot.lane.b32.xlu0 %v220, 64
    %v316 = vpop.permute.xlu0 %315
    %v319 = vsel %vm231, %v311, 0
    %321 = vmatprep.subr.mxu0 0.0
    %322 = vmatpush1.msra.mxu0 %v316
    %323 = vmatprep.subr.mxu0 0.0
    %324 = vmatpush1.msra.mxu0 0.0
    %325 = vmatprep.subr.mxu0 0.0
    %326 = vmatpush1.msra.mxu0 0.0
    %327 = vmatprep.subr.mxu0 0.0
    %328 = vmatpush1.msra.mxu0 0.0
    %329 = vmatprep.subr.mxu0 0.0
    %330 = vmatpush1.msra.mxu0 0.0
    %331 = vmatprep.subr.mxu0 0.0
    %332 = vmatpush1.msra.mxu0 0.0
    %333 = vmatprep.subr.mxu0 0.0
    %334 = vmatpush1.msra.mxu0 0.0
    %335 = vmatprep.subr.mxu0 0.0
    %336 = vmatpush1.msra.mxu0 0.0
    %337 = vmatprep.subr.mxu0 0.0
    %338 = vmatpush1.msra.mxu0 0.0
    %339 = vmatprep.subr.mxu0 0.0
    %340 = vmatpush1.msra.mxu0 0.0
    %341 = vmatprep.subr.mxu0 0.0
    %342 = vmatpush1.msra.mxu0 0.0
    %343 = vmatprep.subr.mxu0 0.0
    %344 = vmatpush1.msra.mxu0 0.0
    %345 = vmatprep.subr.mxu0 0.0
    %346 = vmatpush1.msra.mxu0 0.0
    %347 = vmatprep.subr.mxu0 0.0
    %348 = vmatpush1.msra.mxu0 0.0
    %349 = vmatprep.subr.mxu0 0.0
    %350 = vmatpush1.msra.mxu0 0.0
    %351 = vmatprep.subr.mxu0 0.0
    %352 = vmatpush1.msra.mxu0 0.0
    %353 = vmatprep.subr.mxu0 0.0
    %354 = vmatpush1.msra.mxu0 0.0
    %355 = vmatprep.subr.mxu0 0.0
    %356 = vmatpush1.msra.mxu0 0.0
    %357 = vmatprep.subr.mxu0 0.0
    %358 = vmatpush1.msra.mxu0 0.0
    %359 = vmatprep.subr.mxu0 0.0
    %360 = vmatpush1.msra.mxu0 0.0
    %361 = vmatprep.subr.mxu0 0.0
    %362 = vmatpush1.msra.mxu0 0.0
    %363 = vmatprep.subr.mxu0 0.0
    %364 = vmatpush1.msra.mxu0 0.0
    %365 = vmatprep.subr.mxu0 0.0
    %366 = vmatpush1.msra.mxu0 0.0
    %367 = vmatprep.subr.mxu0 0.0
    %368 = vmatpush1.msra.mxu0 0.0
    %369 = vmatprep.subr.mxu0 0.0
    %370 = vmatpush1.msra.mxu0 0.0
    %371 = vmatprep.subr.mxu0 0.0
    %372 = vmatpush1.msra.mxu0 0.0
    %373 = vmatprep.subr.mxu0 0.0
    %374 = vmatpush1.msra.mxu0 0.0
    %375 = vmatprep.subr.mxu0 0.0
    %376 = vmatpush1.msra.mxu0 0.0
    %377 = vmatprep.subr.mxu0 0.0
    %378 = vmatpush1.msra.mxu0 0.0
    %379 = vmatprep.subr.mxu0 0.0
    %380 = vmatpush1.msra.mxu0 0.0
    %381 = vmatprep.subr.mxu0 0.0
    %382 = vmatpush1.msra.mxu0 0.0
    %383 = vmatprep.subr.mxu0 0.0
    %384 = vmatpush1.msra.mxu0 0.0
    %385 = vmatprep.mubr.f32.mxu0 0.0
    %386 = vmatmul.mubr.f32.gmra.mrb[0].mxu0 %v319
    %v387 = vpop.f32.mrb[0].mxu0
    %v388 = vadd.f32 0.0, %v387
    %v389 = vpop.f32.mrb[0].mxu0
    %390 = vdwg.mxu0
    %v391 = vrcp.pop %v314
    %v392 = vmul.f32 %v388, %v391
    %393 = vrot.lane.b32.xlu0 %v220, 120
    %v394 = vpop.permute.xlu0 %393
    %395 = vrot.lane.b32.xlu0 %v220, 88
    %v396 = vpop.permute.xlu0 %395
    %v397 = vsel %vm231, %v394, 0
    %v399 = vsel %vm231, %v396, 0
    %401 = vmatprep.subr.mxu0 0.0
    %402 = vmatpush1.xpose.msra.mxu0 %v399
    %403 = vmatprep.subr.mxu0 0.0
    %404 = vmatpush1.xpose.msra.mxu0 0.0
    %405 = vmatprep.subr.mxu0 0.0
    %406 = vmatpush1.xpose.msra.mxu0 0.0
    %407 = vmatprep.subr.mxu0 0.0
    %408 = vmatpush1.xpose.msra.mxu0 0.0
    %409 = vmatprep.subr.mxu0 0.0
    %410 = vmatpush1.xpose.msra.mxu0 0.0
    %411 = vmatprep.subr.mxu0 0.0
    %412 = vmatpush1.xpose.msra.mxu0 0.0
    %413 = vmatprep.subr.mxu0 0.0
    %414 = vmatpush1.xpose.msra.mxu0 0.0
    %415 = vmatprep.subr.mxu0 0.0
    %416 = vmatpush1.xpose.msra.mxu0 0.0
    %417 = vmatprep.subr.mxu0 0.0
    %418 = vmatpush1.xpose.msra.mxu0 0.0
    %419 = vmatprep.subr.mxu0 0.0
    %420 = vmatpush1.xpose.msra.mxu0 0.0
    %421 = vmatprep.subr.mxu0 0.0
    %422 = vmatpush1.xpose.msra.mxu0 0.0
    %423 = vmatprep.subr.mxu0 0.0
    %424 = vmatpush1.xpose.msra.mxu0 0.0
    %425 = vmatprep.subr.mxu0 0.0
    %426 = vmatpush1.xpose.msra.mxu0 0.0
    %427 = vmatprep.subr.mxu0 0.0
    %428 = vmatpush1.xpose.msra.mxu0 0.0
    %429 = vmatprep.subr.mxu0 0.0
    %430 = vmatpush1.xpose.msra.mxu0 0.0
    %431 = vmatprep.subr.mxu0 0.0
    %432 = vmatpush1.xpose.msra.mxu0 0.0
    %433 = vmatprep.subr.mxu0 0.0
    %434 = vmatpush1.xpose.msra.mxu0 0.0
    %435 = vmatprep.subr.mxu0 0.0
    %436 = vmatpush1.xpose.msra.mxu0 0.0
    %437 = vmatprep.subr.mxu0 0.0
    %438 = vmatpush1.xpose.msra.mxu0 0.0
    %439 = vmatprep.subr.mxu0 0.0
    %440 = vmatpush1.xpose.msra.mxu0 0.0
    %441 = vmatprep.subr.mxu0 0.0
    %442 = vmatpush1.xpose.msra.mxu0 0.0
    %443 = vmatprep.subr.mxu0 0.0
    %444 = vmatpush1.xpose.msra.mxu0 0.0
    %445 = vmatprep.subr.mxu0 0.0
    %446 = vmatpush1.xpose.msra.mxu0 0.0
    %447 = vmatprep.subr.mxu0 0.0
    %448 = vmatpush1.xpose.msra.mxu0 0.0
    %449 = vmatprep.subr.mxu0 0.0
    %450 = vmatpush1.xpose.msra.mxu0 0.0
    %451 = vmatprep.subr.mxu0 0.0
    %452 = vmatpush1.xpose.msra.mxu0 0.0
    %453 = vmatprep.subr.mxu0 0.0
    %454 = vmatpush1.xpose.msra.mxu0 0.0
    %455 = vmatprep.subr.mxu0 0.0
    %456 = vmatpush1.xpose.msra.mxu0 0.0
    %457 = vmatprep.subr.mxu0 0.0
    %458 = vmatpush1.xpose.msra.mxu0 0.0
    %459 = vmatprep.subr.mxu0 0.0
    %460 = vmatpush1.xpose.msra.mxu0 0.0
    %461 = vmatprep.subr.mxu0 0.0
    %462 = vmatpush1.xpose.msra.mxu0 0.0
    %463 = vmatprep.subr.mxu0 0.0
    %464 = vmatpush1.xpose.msra.mxu0 0.0
    %465 = vmatprep.mubr.f32.mxu0 0.0
    %466 = vmatmul.mubr.f32.gmra.mrb[0].mxu0 %v397
    %v467 = vpop.f32.mrb[0].mxu0
    %v468 = vadd.f32 0.0, %v467
    %v469 = vpop.f32.mrb[0].mxu0
    %470 = vdwg.mxu0
    %v471 = vsel %vm231, %v468, -inf
    %472 = vmax.xlane.f32.xlu0 %v471
    %v473 = vpop.xlane.xlu0 %472
    %v474 = vsub.f32 %v468, %v473
    %v475 = vmul.f32 %v474, 1.442695
    %v476 = vpow.pop %v475
    %v477 = vsel %vm231, %v476, 0.0
    %478 = vadd.xlane.f32.xlu0 %v477
    %v479 = vpop.xlane.xlu0 %478
    %480 = vrot.lane.b32.xlu0 %v220, 56
    %v481 = vpop.permute.xlu0 %480
    %v484 = vsel %vm231, %v476, 0
    %486 = vmatprep.subr.mxu0 0.0
    %487 = vmatpush1.msra.mxu0 %v481
    %488 = vmatprep.subr.mxu0 0.0
    %489 = vmatpush1.msra.mxu0 0.0
    %490 = vmatprep.subr.mxu0 0.0
    %491 = vmatpush1.msra.mxu0 0.0
    %492 = vmatprep.subr.mxu0 0.0
    %493 = vmatpush1.msra.mxu0 0.0
    %494 = vmatprep.subr.mxu0 0.0
    %495 = vmatpush1.msra.mxu0 0.0
    %496 = vmatprep.subr.mxu0 0.0
    %497 = vmatpush1.msra.mxu0 0.0
    %498 = vmatprep.subr.mxu0 0.0
    %499 = vmatpush1.msra.mxu0 0.0
    %500 = vmatprep.subr.mxu0 0.0
    %501 = vmatpush1.msra.mxu0 0.0
    %502 = vmatprep.subr.mxu0 0.0
    %503 = vmatpush1.msra.mxu0 0.0
    %504 = vmatprep.subr.mxu0 0.0
    %505 = vmatpush1.msra.mxu0 0.0
    %506 = vmatprep.subr.mxu0 0.0
    %507 = vmatpush1.msra.mxu0 0.0
    %508 = vmatprep.subr.mxu0 0.0
    %509 = vmatpush1.msra.mxu0 0.0
    %510 = vmatprep.subr.mxu0 0.0
    %511 = vmatpush1.msra.mxu0 0.0
    %512 = vmatprep.subr.mxu0 0.0
    %513 = vmatpush1.msra.mxu0 0.0
    %514 = vmatprep.subr.mxu0 0.0
    %515 = vmatpush1.msra.mxu0 0.0
    %516 = vmatprep.subr.mxu0 0.0
    %517 = vmatpush1.msra.mxu0 0.0
    %518 = vmatprep.subr.mxu0 0.0
    %519 = vmatpush1.msra.mxu0 0.0
    %520 = vmatprep.subr.mxu0 0.0
    %521 = vmatpush1.msra.mxu0 0.0
    %522 = vmatprep.subr.mxu0 0.0
    %523 = vmatpush1.msra.mxu0 0.0
    %524 = vmatprep.subr.mxu0 0.0
    %525 = vmatpush1.msra.mxu0 0.0
    %526 = vmatprep.subr.mxu0 0.0
    %527 = vmatpush1.msra.mxu0 0.0
    %528 = vmatprep.subr.mxu0 0.0
    %529 = vmatpush1.msra.mxu0 0.0
    %530 = vmatprep.subr.mxu0 0.0
    %531 = vmatpush1.msra.mxu0 0.0
    %532 = vmatprep.subr.mxu0 0.0
    %533 = vmatpush1.msra.mxu0 0.0
    %534 = vmatprep.subr.mxu0 0.0
    %535 = vmatpush1.msra.mxu0 0.0
    %536 = vmatprep.subr.mxu0 0.0
    %537 = vmatpush1.msra.mxu0 0.0
    %538 = vmatprep.subr.mxu0 0.0
    %539 = vmatpush1.msra.mxu0 0.0
    %540 = vmatprep.subr.mxu0 0.0
    %541 = vmatpush1.msra.mxu0 0.0
    %542 = vmatprep.subr.mxu0 0.0
    %543 = vmatpush1.msra.mxu0 0.0
    %544 = vmatprep.subr.mxu0 0.0
    %545 = vmatpush1.msra.mxu0 0.0
    %546 = vmatprep.subr.mxu0 0.0
    %547 = vmatpush1.msra.mxu0 0.0
    %548 = vmatprep.subr.mxu0 0.0
    %549 = vmatpush1.msra.mxu0 0.0
    %550 = vmatprep.mubr.f32.mxu0 0.0
    %551 = vmatmul.mubr.f32.gmra.mrb[0].mxu0 %v484
    %v552 = vpop.f32.mrb[0].mxu0
    %v553 = vadd.f32 0.0, %v552
    %v554 = vpop.f32.mrb[0].mxu0
    %555 = vdwg.mxu0
    %v556 = vrcp.pop %v479
    %v557 = vmul.f32 %v553, %v556
    %558 = vrot.lane.b32.xlu0 %v220, 112
    %v559 = vpop.permute.xlu0 %558
    %560 = vrot.lane.b32.xlu0 %v220, 80
    %v561 = vpop.permute.xlu0 %560
    %v562 = vsel %vm231, %v559, 0
    %v564 = vsel %vm231, %v561, 0
    %566 = vmatprep.subr.mxu0 0.0
    %567 = vmatpush1.xpose.msra.mxu0 %v564
    %568 = vmatprep.subr.mxu0 0.0
    %569 = vmatpush1.xpose.msra.mxu0 0.0
    %570 = vmatprep.subr.mxu0 0.0
    %571 = vmatpush1.xpose.msra.mxu0 0.0
    %572 = vmatprep.subr.mxu0 0.0
    %573 = vmatpush1.xpose.msra.mxu0 0.0
    %574 = vmatprep.subr.mxu0 0.0
    %575 = vmatpush1.xpose.msra.mxu0 0.0
    %576 = vmatprep.subr.mxu0 0.0
    %577 = vmatpush1.xpose.msra.mxu0 0.0
    %578 = vmatprep.subr.mxu0 0.0
    %579 = vmatpush1.xpose.msra.mxu0 0.0
    %580 = vmatprep.subr.mxu0 0.0
    %581 = vmatpush1.xpose.msra.mxu0 0.0
    %582 = vmatprep.subr.mxu0 0.0
    %583 = vmatpush1.xpose.msra.mxu0 0.0
    %584 = vmatprep.subr.mxu0 0.0
    %585 = vmatpush1.xpose.msra.mxu0 0.0
    %586 = vmatprep.subr.mxu0 0.0
    %587 = vmatpush1.xpose.msra.mxu0 0.0
    %588 = vmatprep.subr.mxu0 0.0
    %589 = vmatpush1.xpose.msra.mxu0 0.0
    %590 = vmatprep.subr.mxu0 0.0
    %591 = vmatpush1.xpose.msra.mxu0 0.0
    %592 = vmatprep.subr.mxu0 0.0
    %593 = vmatpush1.xpose.msra.mxu0 0.0
    %594 = vmatprep.subr.mxu0 0.0
    %595 = vmatpush1.xpose.msra.mxu0 0.0
    %596 = vmatprep.subr.mxu0 0.0
    %597 = vmatpush1.xpose.msra.mxu0 0.0
    %598 = vmatprep.subr.mxu0 0.0
    %599 = vmatpush1.xpose.msra.mxu0 0.0
    %600 = vmatprep.subr.mxu0 0.0
    %601 = vmatpush1.xpose.msra.mxu0 0.0
    %602 = vmatprep.subr.mxu0 0.0
    %603 = vmatpush1.xpose.msra.mxu0 0.0
    %604 = vmatprep.subr.mxu0 0.0
    %605 = vmatpush1.xpose.msra.mxu0 0.0
    %606 = vmatprep.subr.mxu0 0.0
    %607 = vmatpush1.xpose.msra.mxu0 0.0
    %608 = vmatprep.subr.mxu0 0.0
    %609 = vmatpush1.xpose.msra.mxu0 0.0
    %610 = vmatprep.subr.mxu0 0.0
    %611 = vmatpush1.xpose.msra.mxu0 0.0
    %612 = vmatprep.subr.mxu0 0.0
    %613 = vmatpush1.xpose.msra.mxu0 0.0
    %614 = vmatprep.subr.mxu0 0.0
    %615 = vmatpush1.xpose.msra.mxu0 0.0
    %616 = vmatprep.subr.mxu0 0.0
    %617 = vmatpush1.xpose.msra.mxu0 0.0
    %618 = vmatprep.subr.mxu0 0.0
    %619 = vmatpush1.xpose.msra.mxu0 0.0
    %620 = vmatprep.subr.mxu0 0.0
    %621 = vmatpush1.xpose.msra.mxu0 0.0
    %622 = vmatprep.subr.mxu0 0.0
    %623 = vmatpush1.xpose.msra.mxu0 0.0
    %624 = vmatprep.subr.mxu0 0.0
    %625 = vmatpush1.xpose.msra.mxu0 0.0
    %626 = vmatprep.subr.mxu0 0.0
    %627 = vmatpush1.xpose.msra.mxu0 0.0
    %628 = vmatprep.subr.mxu0 0.0
    %629 = vmatpush1.xpose.msra.mxu0 0.0
    %630 = vmatprep.mubr.f32.mxu0 0.0
    %631 = vmatmul.mubr.f32.gmra.mrb[0].mxu0 %v562
    %v632 = vpop.f32.mrb[0].mxu0
    %v633 = vadd.f32 0.0, %v632
    %v634 = vpop.f32.mrb[0].mxu0
    %635 = vdwg.mxu0
    %v636 = vsel %vm231, %v633, -inf
    %637 = vmax.xlane.f32.xlu0 %v636
    %v638 = vpop.xlane.xlu0 %637
    %v639 = vsub.f32 %v633, %v638
    %v640 = vmul.f32 %v639, 1.442695
    %v641 = vpow.pop %v640
    %v642 = vsel %vm231, %v641, 0.0
    %643 = vadd.xlane.f32.xlu0 %v642
    %v644 = vpop.xlane.xlu0 %643
    %645 = vrot.lane.b32.xlu0 %v220, 48
    %v646 = vpop.permute.xlu0 %645
    %v649 = vsel %vm231, %v641, 0
    %651 = vmatprep.subr.mxu0 0.0
    %652 = vmatpush1.msra.mxu0 %v646
    %653 = vmatprep.subr.mxu0 0.0
    %654 = vmatpush1.msra.mxu0 0.0
    %655 = vmatprep.subr.mxu0 0.0
    %656 = vmatpush1.msra.mxu0 0.0
    %657 = vmatprep.subr.mxu0 0.0
    %658 = vmatpush1.msra.mxu0 0.0
    %659 = vmatprep.subr.mxu0 0.0
    %660 = vmatpush1.msra.mxu0 0.0
    %661 = vmatprep.subr.mxu0 0.0
    %662 = vmatpush1.msra.mxu0 0.0
    %663 = vmatprep.subr.mxu0 0.0
    %664 = vmatpush1.msra.mxu0 0.0
    %665 = vmatprep.subr.mxu0 0.0
    %666 = vmatpush1.msra.mxu0 0.0
    %667 = vmatprep.subr.mxu0 0.0
    %668 = vmatpush1.msra.mxu0 0.0
    %669 = vmatprep.subr.mxu0 0.0
    %670 = vmatpush1.msra.mxu0 0.0
    %671 = vmatprep.subr.mxu0 0.0
    %672 = vmatpush1.msra.mxu0 0.0
    %673 = vmatprep.subr.mxu0 0.0
    %674 = vmatpush1.msra.mxu0 0.0
    %675 = vmatprep.subr.mxu0 0.0
    %676 = vmatpush1.msra.mxu0 0.0
    %677 = vmatprep.subr.mxu0 0.0
    %678 = vmatpush1.msra.mxu0 0.0
    %679 = vmatprep.subr.mxu0 0.0
    %680 = vmatpush1.msra.mxu0 0.0
    %681 = vmatprep.subr.mxu0 0.0
    %682 = vmatpush1.msra.mxu0 0.0
    %683 = vmatprep.subr.mxu0 0.0
    %684 = vmatpush1.msra.mxu0 0.0
    %685 = vmatprep.subr.mxu0 0.0
    %686 = vmatpush1.msra.mxu0 0.0
    %687 = vmatprep.subr.mxu0 0.0
    %688 = vmatpush1.msra.mxu0 0.0
    %689 = vmatprep.subr.mxu0 0.0
    %690 = vmatpush1.msra.mxu0 0.0
    %691 = vmatprep.subr.mxu0 0.0
    %692 = vmatpush1.msra.mxu0 0.0
    %693 = vmatprep.subr.mxu0 0.0
    %694 = vmatpush1.msra.mxu0 0.0
    %695 = vmatprep.subr.mxu0 0.0
    %696 = vmatpush1.msra.mxu0 0.0
    %697 = vmatprep.subr.mxu0 0.0
    %698 = vmatpush1.msra.mxu0 0.0
    %699 = vmatprep.subr.mxu0 0.0
    %700 = vmatpush1.msra.mxu0 0.0
    %701 = vmatprep.subr.mxu0 0.0
    %702 = vmatpush1.msra.mxu0 0.0
    %703 = vmatprep.subr.mxu0 0.0
    %704 = vmatpush1.msra.mxu0 0.0
    %705 = vmatprep.subr.mxu0 0.0
    %706 = vmatpush1.msra.mxu0 0.0
    %707 = vmatprep.subr.mxu0 0.0
    %708 = vmatpush1.msra.mxu0 0.0
    %709 = vmatprep.subr.mxu0 0.0
    %710 = vmatpush1.msra.mxu0 0.0
    %711 = vmatprep.subr.mxu0 0.0
    %712 = vmatpush1.msra.mxu0 0.0
    %713 = vmatprep.subr.mxu0 0.0
    %714 = vmatpush1.msra.mxu0 0.0
    %715 = vmatprep.mubr.f32.mxu0 0.0
    %716 = vmatmul.mubr.f32.gmra.mrb[0].mxu0 %v649
    %v717 = vpop.f32.mrb[0].mxu0
    %v718 = vadd.f32 0.0, %v717
    %v719 = vpop.f32.mrb[0].mxu0
    %720 = vdwg.mxu0
    %v721 = vrcp.pop %v644
    %v722 = vmul.f32 %v718, %v721
    %723 = vrot.lane.b32.xlu0 %v220, 104
    %v724 = vpop.permute.xlu0 %723
    %725 = vrot.lane.b32.xlu0 %v220, 72
    %v726 = vpop.permute.xlu0 %725
    %v727 = vsel %vm231, %v724, 0
    %v729 = vsel %vm231, %v726, 0
    %731 = vmatprep.subr.mxu0 0.0
    %732 = vmatpush1.xpose.msra.mxu0 %v729
    %733 = vmatprep.subr.mxu0 0.0
    %734 = vmatpush1.xpose.msra.mxu0 0.0
    %735 = vmatprep.subr.mxu0 0.0
    %736 = vmatpush1.xpose.msra.mxu0 0.0
    %737 = vmatprep.subr.mxu0 0.0
    %738 = vmatpush1.xpose.msra.mxu0 0.0
    %739 = vmatprep.subr.mxu0 0.0
    %740 = vmatpush1.xpose.msra.mxu0 0.0
    %741 = vmatprep.subr.mxu0 0.0
    %742 = vmatpush1.xpose.msra.mxu0 0.0
    %743 = vmatprep.subr.mxu0 0.0
    %744 = vmatpush1.xpose.msra.mxu0 0.0
    %745 = vmatprep.subr.mxu0 0.0
    %746 = vmatpush1.xpose.msra.mxu0 0.0
    %747 = vmatprep.subr.mxu0 0.0
    %748 = vmatpush1.xpose.msra.mxu0 0.0
    %749 = vmatprep.subr.mxu0 0.0
    %750 = vmatpush1.xpose.msra.mxu0 0.0
    %751 = vmatprep.subr.mxu0 0.0
    %752 = vmatpush1.xpose.msra.mxu0 0.0
    %753 = vmatprep.subr.mxu0 0.0
    %754 = vmatpush1.xpose.msra.mxu0 0.0
    %755 = vmatprep.subr.mxu0 0.0
    %756 = vmatpush1.xpose.msra.mxu0 0.0
    %757 = vmatprep.subr.mxu0 0.0
    %758 = vmatpush1.xpose.msra.mxu0 0.0
    %759 = vmatprep.subr.mxu0 0.0
    %760 = vmatpush1.xpose.msra.mxu0 0.0
    %761 = vmatprep.subr.mxu0 0.0
    %762 = vmatpush1.xpose.msra.mxu0 0.0
    %763 = vmatprep.subr.mxu0 0.0
    %764 = vmatpush1.xpose.msra.mxu0 0.0
    %765 = vmatprep.subr.mxu0 0.0
    %766 = vmatpush1.xpose.msra.mxu0 0.0
    %767 = vmatprep.subr.mxu0 0.0
    %768 = vmatpush1.xpose.msra.mxu0 0.0
    %769 = vmatprep.subr.mxu0 0.0
    %770 = vmatpush1.xpose.msra.mxu0 0.0
    %771 = vmatprep.subr.mxu0 0.0
    %772 = vmatpush1.xpose.msra.mxu0 0.0
    %773 = vmatprep.subr.mxu0 0.0
    %774 = vmatpush1.xpose.msra.mxu0 0.0
    %775 = vmatprep.subr.mxu0 0.0
    %776 = vmatpush1.xpose.msra.mxu0 0.0
    %777 = vmatprep.subr.mxu0 0.0
    %778 = vmatpush1.xpose.msra.mxu0 0.0
    %779 = vmatprep.subr.mxu0 0.0
    %780 = vmatpush1.xpose.msra.mxu0 0.0
    %781 = vmatprep.subr.mxu0 0.0
    %782 = vmatpush1.xpose.msra.mxu0 0.0
    %783 = vmatprep.subr.mxu0 0.0
    %784 = vmatpush1.xpose.msra.mxu0 0.0
    %785 = vmatprep.subr.mxu0 0.0
    %786 = vmatpush1.xpose.msra.mxu0 0.0
    %787 = vmatprep.subr.mxu0 0.0
    %788 = vmatpush1.xpose.msra.mxu0 0.0
    %789 = vmatprep.subr.mxu0 0.0
    %790 = vmatpush1.xpose.msra.mxu0 0.0
    %791 = vmatprep.subr.mxu0 0.0
    %792 = vmatpush1.xpose.msra.mxu0 0.0
    %793 = vmatprep.subr.mxu0 0.0
    %794 = vmatpush1.xpose.msra.mxu0 0.0
    %795 = vmatprep.mubr.f32.mxu0 0.0
    %796 = vmatmul.mubr.f32.gmra.mrb[0].mxu0 %v727
    %v797 = vpop.f32.mrb[0].mxu0
    %v798 = vadd.f32 0.0, %v797
    %v799 = vpop.f32.mrb[0].mxu0
    %800 = vdwg.mxu0
    %v801 = vsel %vm231, %v798, -inf
    %802 = vmax.xlane.f32.xlu0 %v801
    %v803 = vpop.xlane.xlu0 %802
    %v804 = vsub.f32 %v798, %v803
    %v805 = vmul.f32 %v804, 1.442695
    %v806 = vpow.pop %v805
    %v807 = vsel %vm231, %v806, 0.0
    %808 = vadd.xlane.f32.xlu0 %v807
    %v809 = vpop.xlane.xlu0 %808
    %810 = vrot.lane.b32.xlu0 %v220, 40
    %v811 = vpop.permute.xlu0 %810
    %v814 = vsel %vm231, %v806, 0
    %816 = vmatprep.subr.mxu0 0.0
    %817 = vmatpush1.msra.mxu0 %v811
    %818 = vmatprep.subr.mxu0 0.0
    %819 = vmatpush1.msra.mxu0 0.0
    %820 = vmatprep.subr.mxu0 0.0
    %821 = vmatpush1.msra.mxu0 0.0
    %822 = vmatprep.subr.mxu0 0.0
    %823 = vmatpush1.msra.mxu0 0.0
    %824 = vmatprep.subr.mxu0 0.0
    %825 = vmatpush1.msra.mxu0 0.0
    %826 = vmatprep.subr.mxu0 0.0
    %827 = vmatpush1.msra.mxu0 0.0
    %828 = vmatprep.subr.mxu0 0.0
    %829 = vmatpush1.msra.mxu0 0.0
    %830 = vmatprep.subr.mxu0 0.0
    %831 = vmatpush1.msra.mxu0 0.0
    %832 = vmatprep.subr.mxu0 0.0
    %833 = vmatpush1.msra.mxu0 0.0
    %834 = vmatprep.subr.mxu0 0.0
    %835 = vmatpush1.msra.mxu0 0.0
    %836 = vmatprep.subr.mxu0 0.0
    %837 = vmatpush1.msra.mxu0 0.0
    %838 = vmatprep.subr.mxu0 0.0
    %839 = vmatpush1.msra.mxu0 0.0
    %840 = vmatprep.subr.mxu0 0.0
    %841 = vmatpush1.msra.mxu0 0.0
    %842 = vmatprep.subr.mxu0 0.0
    %843 = vmatpush1.msra.mxu0 0.0
    %844 = vmatprep.subr.mxu0 0.0
    %845 = vmatpush1.msra.mxu0 0.0
    %846 = vmatprep.subr.mxu0 0.0
    %847 = vmatpush1.msra.mxu0 0.0
    %848 = vmatprep.subr.mxu0 0.0
    %849 = vmatpush1.msra.mxu0 0.0
    %850 = vmatprep.subr.mxu0 0.0
    %851 = vmatpush1.msra.mxu0 0.0
    %852 = vmatprep.subr.mxu0 0.0
    %853 = vmatpush1.msra.mxu0 0.0
    %854 = vmatprep.subr.mxu0 0.0
    %855 = vmatpush1.msra.mxu0 0.0
    %856 = vmatprep.subr.mxu0 0.0
    %857 = vmatpush1.msra.mxu0 0.0
    %858 = vmatprep.subr.mxu0 0.0
    %859 = vmatpush1.msra.mxu0 0.0
    %860 = vmatprep.subr.mxu0 0.0
    %861 = vmatpush1.msra.mxu0 0.0
    %862 = vmatprep.subr.mxu0 0.0
    %863 = vmatpush1.msra.mxu0 0.0
    %864 = vmatprep.subr.mxu0 0.0
    %865 = vmatpush1.msra.mxu0 0.0
    %866 = vmatprep.subr.mxu0 0.0
    %867 = vmatpush1.msra.mxu0 0.0
    %868 = vmatprep.subr.mxu0 0.0
    %869 = vmatpush1.msra.mxu0 0.0
    %870 = vmatprep.subr.mxu0 0.0
    %871 = vmatpush1.msra.mxu0 0.0
    %872 = vmatprep.subr.mxu0 0.0
    %873 = vmatpush1.msra.mxu0 0.0
    %874 = vmatprep.subr.mxu0 0.0
    %875 = vmatpush1.msra.mxu0 0.0
    %876 = vmatprep.subr.mxu0 0.0
    %877 = vmatpush1.msra.mxu0 0.0
    %878 = vmatprep.subr.mxu0 0.0
    %879 = vmatpush1.msra.mxu0 0.0
    %880 = vmatprep.mubr.f32.mxu0 0.0
    %881 = vmatmul.mubr.f32.gmra.mrb[0].mxu0 %v814
    %v882 = vpop.f32.mrb[0].mxu0
    %v883 = vadd.f32 0.0, %v882
    %v884 = vpop.f32.mrb[0].mxu0
    %885 = vdwg.mxu0
    %v886 = vrcp.pop %v809
    %v887 = vmul.f32 %v883, %v886
    %889 = vrot.lane.b32.xlu0 %v557, 8
    %v890 = vpop.permute.xlu0 %889
    %893 = vrot.lane.b32.xlu0 %v722, 16
    %v894 = vpop.permute.xlu0 %893
    %897 = vrot.lane.b32.xlu0 %v887, 24
    %v898 = vpop.permute.xlu0 %897
    %v900 = vsel %vm231, %v392, %v890
    %vm901 = vcmask 130048
    %v902 = vsel %vm901, %v900, %v894
    %vm903 = vcmask 195584
    %v904 = vsel %vm903, %v902, %v898
    %906 = vrot.lane.b32.xlu0 %v225, 96
    %v907 = vpop.permute.xlu0 %906
    %v908 = vsel %vm231, %v225, 0
    %v910 = vsel %vm231, %v907, 0
    %912 = vmatprep.subr.mxu0 0.0
    %913 = vmatpush1.xpose.msra.mxu0 %v910
    %914 = vmatprep.subr.mxu0 0.0
    %915 = vmatpush1.xpose.msra.mxu0 0.0
    %916 = vmatprep.subr.mxu0 0.0
    %917 = vmatpush1.xpose.msra.mxu0 0.0
    %918 = vmatprep.subr.mxu0 0.0
    %919 = vmatpush1.xpose.msra.mxu0 0.0
    %920 = vmatprep.subr.mxu0 0.0
    %921 = vmatpush1.xpose.msra.mxu0 0.0
    %922 = vmatprep.subr.mxu0 0.0
    %923 = vmatpush1.xpose.msra.mxu0 0.0
    %924 = vmatprep.subr.mxu0 0.0
    %925 = vmatpush1.xpose.msra.mxu0 0.0
    %926 = vmatprep.subr.mxu0 0.0
    %927 = vmatpush1.xpose.msra.mxu0 0.0
    %928 = vmatprep.subr.mxu0 0.0
    %929 = vmatpush1.xpose.msra.mxu0 0.0
    %930 = vmatprep.subr.mxu0 0.0
    %931 = vmatpush1.xpose.msra.mxu0 0.0
    %932 = vmatprep.subr.mxu0 0.0
    %933 = vmatpush1.xpose.msra.mxu0 0.0
    %934 = vmatprep.subr.mxu0 0.0
    %935 = vmatpush1.xpose.msra.mxu0 0.0
    %936 = vmatprep.subr.mxu0 0.0
    %937 = vmatpush1.xpose.msra.mxu0 0.0
    %938 = vmatprep.subr.mxu0 0.0
    %939 = vmatpush1.xpose.msra.mxu0 0.0
    %940 = vmatprep.subr.mxu0 0.0
    %941 = vmatpush1.xpose.msra.mxu0 0.0
    %942 = vmatprep.subr.mxu0 0.0
    %943 = vmatpush1.xpose.msra.mxu0 0.0
    %944 = vmatprep.subr.mxu0 0.0
    %945 = vmatpush1.xpose.msra.mxu0 0.0
    %946 = vmatprep.subr.mxu0 0.0
    %947 = vmatpush1.xpose.msra.mxu0 0.0
    %948 = vmatprep.subr.mxu0 0.0
    %949 = vmatpush1.xpose.msra.mxu0 0.0
    %950 = vmatprep.subr.mxu0 0.0
    %951 = vmatpush1.xpose.msra.mxu0 0.0
    %952 = vmatprep.subr.mxu0 0.0
    %953 = vmatpush1.xpose.msra.mxu0 0.0
    %954 = vmatprep.subr.mxu0 0.0
    %955 = vmatpush1.xpose.msra.mxu0 0.0
    %956 = vmatprep.subr.mxu0 0.0
    %957 = vmatpush1.xpose.msra.mxu0 0.0
    %958 = vmatprep.subr.mxu0 0.0
    %959 = vmatpush1.xpose.msra.mxu0 0.0
    %960 = vmatprep.subr.mxu0 0.0
    %961 = vmatpush1.xpose.msra.mxu0 0.0
    %962 = vmatprep.subr.mxu0 0.0
    %963 = vmatpush1.xpose.msra.mxu0 0.0
    %964 = vmatprep.subr.mxu0 0.0
    %965 = vmatpush1.xpose.msra.mxu0 0.0
    %966 = vmatprep.subr.mxu0 0.0
    %967 = vmatpush1.xpose.msra.mxu0 0.0
    %968 = vmatprep.subr.mxu0 0.0
    %969 = vmatpush1.xpose.msra.mxu0 0.0
    %970 = vmatprep.subr.mxu0 0.0
    %971 = vmatpush1.xpose.msra.mxu0 0.0
    %972 = vmatprep.subr.mxu0 0.0
    %973 = vmatpush1.xpose.msra.mxu0 0.0
    %974 = vmatprep.subr.mxu0 0.0
    %975 = vmatpush1.xpose.msra.mxu0 0.0
    %976 = vmatprep.mubr.f32.mxu0 0.0
    %977 = vmatmul.mubr.f32.gmra.mrb[0].mxu0 %v908
    %v978 = vpop.f32.mrb[0].mxu0
    %v979 = vadd.f32 0.0, %v978
    %v980 = vpop.f32.mrb[0].mxu0
    %981 = vdwg.mxu0
    %v982 = vsel %vm231, %v979, -inf
    %983 = vmax.xlane.f32.xlu0 %v982
    %v984 = vpop.xlane.xlu0 %983
    %v985 = vsub.f32 %v979, %v984
    %v986 = vmul.f32 %v985, 1.442695
    %v987 = vpow.pop %v986
    %v988 = vsel %vm231, %v987, 0.0
    %989 = vadd.xlane.f32.xlu0 %v988
    %v990 = vpop.xlane.xlu0 %989
    %991 = vrot.lane.b32.xlu0 %v225, 64
    %v992 = vpop.permute.xlu0 %991
    %v995 = vsel %vm231, %v987, 0
    %997 = vmatprep.subr.mxu0 0.0
    %998 = vmatpush1.msra.mxu0 %v992
    %999 = vmatprep.subr.mxu0 0.0
    %1000 = vmatpush1.msra.mxu0 0.0
    %1001 = vmatprep.subr.mxu0 0.0
    %1002 = vmatpush1.msra.mxu0 0.0
    %1003 = vmatprep.subr.mxu0 0.0
    %1004 = vmatpush1.msra.mxu0 0.0
    %1005 = vmatprep.subr.mxu0 0.0
    %1006 = vmatpush1.msra.mxu0 0.0
    %1007 = vmatprep.subr.mxu0 0.0
    %1008 = vmatpush1.msra.mxu0 0.0
    %1009 = vmatprep.subr.mxu0 0.0
    %1010 = vmatpush1.msra.mxu0 0.0
    %1011 = vmatprep.subr.mxu0 0.0
    %1012 = vmatpush1.msra.mxu0 0.0
    %1013 = vmatprep.subr.mxu0 0.0
    %1014 = vmatpush1.msra.mxu0 0.0
    %1015 = vmatprep.subr.mxu0 0.0
    %1016 = vmatpush1.msra.mxu0 0.0
    %1017 = vmatprep.subr.mxu0 0.0
    %1018 = vmatpush1.msra.mxu0 0.0
    %1019 = vmatprep.subr.mxu0 0.0
    %1020 = vmatpush1.msra.mxu0 0.0
    %1021 = vmatprep.subr.mxu0 0.0
    %1022 = vmatpush1.msra.mxu0 0.0
    %1023 = vmatprep.subr.mxu0 0.0
    %1024 = vmatpush1.msra.mxu0 0.0
    %1025 = vmatprep.subr.mxu0 0.0
    %1026 = vmatpush1.msra.mxu0 0.0
    %1027 = vmatprep.subr.mxu0 0.0
    %1028 = vmatpush1.msra.mxu0 0.0
    %1029 = vmatprep.subr.mxu0 0.0
    %1030 = vmatpush1.msra.mxu0 0.0
    %1031 = vmatprep.subr.mxu0 0.0
    %1032 = vmatpush1.msra.mxu0 0.0
    %1033 = vmatprep.subr.mxu0 0.0
    %1034 = vmatpush1.msra.mxu0 0.0
    %1035 = vmatprep.subr.mxu0 0.0
    %1036 = vmatpush1.msra.mxu0 0.0
    %1037 = vmatprep.subr.mxu0 0.0
    %1038 = vmatpush1.msra.mxu0 0.0
    %1039 = vmatprep.subr.mxu0 0.0
    %1040 = vmatpush1.msra.mxu0 0.0
    %1041 = vmatprep.subr.mxu0 0.0
    %1042 = vmatpush1.msra.mxu0 0.0
    %1043 = vmatprep.subr.mxu0 0.0
    %1044 = vmatpush1.msra.mxu0 0.0
    %1045 = vmatprep.subr.mxu0 0.0
    %1046 = vmatpush1.msra.mxu0 0.0
    %1047 = vmatprep.subr.mxu0 0.0
    %1048 = vmatpush1.msra.mxu0 0.0
    %1049 = vmatprep.subr.mxu0 0.0
    %1050 = vmatpush1.msra.mxu0 0.0
    %1051 = vmatprep.subr.mxu0 0.0
    %1052 = vmatpush1.msra.mxu0 0.0
    %1053 = vmatprep.subr.mxu0 0.0
    %1054 = vmatpush1.msra.mxu0 0.0
    %1055 = vmatprep.subr.mxu0 0.0
    %1056 = vmatpush1.msra.mxu0 0.0
    %1057 = vmatprep.subr.mxu0 0.0
    %1058 = vmatpush1.msra.mxu0 0.0
    %1059 = vmatprep.subr.mxu0 0.0
    %1060 = vmatpush1.msra.mxu0 0.0
    %1061 = vmatprep.mubr.f32.mxu0 0.0
    %1062 = vmatmul.mubr.f32.gmra.mrb[0].mxu0 %v995
    %v1063 = vpop.f32.mrb[0].mxu0
    %v1064 = vadd.f32 0.0, %v1063
    %v1065 = vpop.f32.mrb[0].mxu0
    %1066 = vdwg.mxu0
    %v1067 = vrcp.pop %v990
    %v1068 = vmul.f32 %v1064, %v1067
    %1069 = vrot.lane.b32.xlu0 %v225, 120
    %v1070 = vpop.permute.xlu0 %1069
    %1071 = vrot.lane.b32.xlu0 %v225, 88
    %v1072 = vpop.permute.xlu0 %1071
    %v1073 = vsel %vm231, %v1070, 0
    %v1075 = vsel %vm231, %v1072, 0
    %1077 = vmatprep.subr.mxu0 0.0
    %1078 = vmatpush1.xpose.msra.mxu0 %v1075
    %1079 = vmatprep.subr.mxu0 0.0
    %1080 = vmatpush1.xpose.msra.mxu0 0.0
    %1081 = vmatprep.subr.mxu0 0.0
    %1082 = vmatpush1.xpose.msra.mxu0 0.0
    %1083 = vmatprep.subr.mxu0 0.0
    %1084 = vmatpush1.xpose.msra.mxu0 0.0
    %1085 = vmatprep.subr.mxu0 0.0
    %1086 = vmatpush1.xpose.msra.mxu0 0.0
    %1087 = vmatprep.subr.mxu0 0.0
    %1088 = vmatpush1.xpose.msra.mxu0 0.0
    %1089 = vmatprep.subr.mxu0 0.0
    %1090 = vmatpush1.xpose.msra.mxu0 0.0
    %1091 = vmatprep.subr.mxu0 0.0
    %1092 = vmatpush1.xpose.msra.mxu0 0.0
    %1093 = vmatprep.subr.mxu0 0.0
    %1094 = vmatpush1.xpose.msra.mxu0 0.0
    %1095 = vmatprep.subr.mxu0 0.0
    %1096 = vmatpush1.xpose.msra.mxu0 0.0
    %1097 = vmatprep.subr.mxu0 0.0
    %1098 = vmatpush1.xpose.msra.mxu0 0.0
    %1099 = vmatprep.subr.mxu0 0.0
    %1100 = vmatpush1.xpose.msra.mxu0 0.0
    %1101 = vmatprep.subr.mxu0 0.0
    %1102 = vmatpush1.xpose.msra.mxu0 0.0
    %1103 = vmatprep.subr.mxu0 0.0
    %1104 = vmatpush1.xpose.msra.mxu0 0.0
    %1105 = vmatprep.subr.mxu0 0.0
    %1106 = vmatpush1.xpose.msra.mxu0 0.0
    %1107 = vmatprep.subr.mxu0 0.0
    %1108 = vmatpush1.xpose.msra.mxu0 0.0
    %1109 = vmatprep.subr.mxu0 0.0
    %1110 = vmatpush1.xpose.msra.mxu0 0.0
    %1111 = vmatprep.subr.mxu0 0.0
    %1112 = vmatpush1.xpose.msra.mxu0 0.0
    %1113 = vmatprep.subr.mxu0 0.0
    %1114 = vmatpush1.xpose.msra.mxu0 0.0
    %1115 = vmatprep.subr.mxu0 0.0
    %1116 = vmatpush1.xpose.msra.mxu0 0.0
    %1117 = vmatprep.subr.mxu0 0.0
    %1118 = vmatpush1.xpose.msra.mxu0 0.0
    %1119 = vmatprep.subr.mxu0 0.0
    %1120 = vmatpush1.xpose.msra.mxu0 0.0
    %1121 = vmatprep.subr.mxu0 0.0
    %1122 = vmatpush1.xpose.msra.mxu0 0.0
    %1123 = vmatprep.subr.mxu0 0.0
    %1124 = vmatpush1.xpose.msra.mxu0 0.0
    %1125 = vmatprep.subr.mxu0 0.0
    %1126 = vmatpush1.xpose.msra.mxu0 0.0
    %1127 = vmatprep.subr.mxu0 0.0
    %1128 = vmatpush1.xpose.msra.mxu0 0.0
    %1129 = vmatprep.subr.mxu0 0.0
    %1130 = vmatpush1.xpose.msra.mxu0 0.0
    %1131 = vmatprep.subr.mxu0 0.0
    %1132 = vmatpush1.xpose.msra.mxu0 0.0
    %1133 = vmatprep.subr.mxu0 0.0
    %1134 = vmatpush1.xpose.msra.mxu0 0.0
    %1135 = vmatprep.subr.mxu0 0.0
    %1136 = vmatpush1.xpose.msra.mxu0 0.0
    %1137 = vmatprep.subr.mxu0 0.0
    %1138 = vmatpush1.xpose.msra.mxu0 0.0
    %1139 = vmatprep.subr.mxu0 0.0
    %1140 = vmatpush1.xpose.msra.mxu0 0.0
    %1141 = vmatprep.mubr.f32.mxu0 0.0
    %1142 = vmatmul.mubr.f32.gmra.mrb[0].mxu0 %v1073
    %v1143 = vpop.f32.mrb[0].mxu0
    %v1144 = vadd.f32 0.0, %v1143
    %v1145 = vpop.f32.mrb[0].mxu0
    %1146 = vdwg.mxu0
    %v1147 = vsel %vm231, %v1144, -inf
    %1148 = vmax.xlane.f32.xlu0 %v1147
    %v1149 = vpop.xlane.xlu0 %1148
    %v1150 = vsub.f32 %v1144, %v1149
    %v1151 = vmul.f32 %v1150, 1.442695
    %v1152 = vpow.pop %v1151
    %v1153 = vsel %vm231, %v1152, 0.0
    %1154 = vadd.xlane.f32.xlu0 %v1153
    %v1155 = vpop.xlane.xlu0 %1154
    %1156 = vrot.lane.b32.xlu0 %v225, 56
    %v1157 = vpop.permute.xlu0 %1156
    %v1160 = vsel %vm231, %v1152, 0
    %1162 = vmatprep.subr.mxu0 0.0
    %1163 = vmatpush1.msra.mxu0 %v1157
    %1164 = vmatprep.subr.mxu0 0.0
    %1165 = vmatpush1.msra.mxu0 0.0
    %1166 = vmatprep.subr.mxu0 0.0
    %1167 = vmatpush1.msra.mxu0 0.0
    %1168 = vmatprep.subr.mxu0 0.0
    %1169 = vmatpush1.msra.mxu0 0.0
    %1170 = vmatprep.subr.mxu0 0.0
    %1171 = vmatpush1.msra.mxu0 0.0
    %1172 = vmatprep.subr.mxu0 0.0
    %1173 = vmatpush1.msra.mxu0 0.0
    %1174 = vmatprep.subr.mxu0 0.0
    %1175 = vmatpush1.msra.mxu0 0.0
    %1176 = vmatprep.subr.mxu0 0.0
    %1177 = vmatpush1.msra.mxu0 0.0
    %1178 = vmatprep.subr.mxu0 0.0
    %1179 = vmatpush1.msra.mxu0 0.0
    %1180 = vmatprep.subr.mxu0 0.0
    %1181 = vmatpush1.msra.mxu0 0.0
    %1182 = vmatprep.subr.mxu0 0.0
    %1183 = vmatpush1.msra.mxu0 0.0
    %1184 = vmatprep.subr.mxu0 0.0
    %1185 = vmatpush1.msra.mxu0 0.0
    %1186 = vmatprep.subr.mxu0 0.0
    %1187 = vmatpush1.msra.mxu0 0.0
    %1188 = vmatprep.subr.mxu0 0.0
    %1189 = vmatpush1.msra.mxu0 0.0
    %1190 = vmatprep.subr.mxu0 0.0
    %1191 = vmatpush1.msra.mxu0 0.0
    %1192 = vmatprep.subr.mxu0 0.0
    %1193 = vmatpush1.msra.mxu0 0.0
    %1194 = vmatprep.subr.mxu0 0.0
    %1195 = vmatpush1.msra.mxu0 0.0
    %1196 = vmatprep.subr.mxu0 0.0
    %1197 = vmatpush1.msra.mxu0 0.0
    %1198 = vmatprep.subr.mxu0 0.0
    %1199 = vmatpush1.msra.mxu0 0.0
    %1200 = vmatprep.subr.mxu0 0.0
    %1201 = vmatpush1.msra.mxu0 0.0
    %1202 = vmatprep.subr.mxu0 0.0
    %1203 = vmatpush1.msra.mxu0 0.0
    %1204 = vmatprep.subr.mxu0 0.0
    %1205 = vmatpush1.msra.mxu0 0.0
    %1206 = vmatprep.subr.mxu0 0.0
    %1207 = vmatpush1.msra.mxu0 0.0
    %1208 = vmatprep.subr.mxu0 0.0
    %1209 = vmatpush1.msra.mxu0 0.0
    %1210 = vmatprep.subr.mxu0 0.0
    %1211 = vmatpush1.msra.mxu0 0.0
    %1212 = vmatprep.subr.mxu0 0.0
    %1213 = vmatpush1.msra.mxu0 0.0
    %1214 = vmatprep.subr.mxu0 0.0
    %1215 = vmatpush1.msra.mxu0 0.0
    %1216 = vmatprep.subr.mxu0 0.0
    %1217 = vmatpush1.msra.mxu0 0.0
    %1218 = vmatprep.subr.mxu0 0.0
    %1219 = vmatpush1.msra.mxu0 0.0
    %1220 = vmatprep.subr.mxu0 0.0
    %1221 = vmatpush1.msra.mxu0 0.0
    %1222 = vmatprep.subr.mxu0 0.0
    %1223 = vmatpush1.msra.mxu0 0.0
    %1224 = vmatprep.subr.mxu0 0.0
    %1225 = vmatpush1.msra.mxu0 0.0
    %1226 = vmatprep.mubr.f32.mxu0 0.0
    %1227 = vmatmul.mubr.f32.gmra.mrb[0].mxu0 %v1160
    %v1228 = vpop.f32.mrb[0].mxu0
    %v1229 = vadd.f32 0.0, %v1228
    %v1230 = vpop.f32.mrb[0].mxu0
    %1231 = vdwg.mxu0
    %v1232 = vrcp.pop %v1155
    %v1233 = vmul.f32 %v1229, %v1232
    %1234 = vrot.lane.b32.xlu0 %v225, 112
    %v1235 = vpop.permute.xlu0 %1234
    %1236 = vrot.lane.b32.xlu0 %v225, 80
    %v1237 = vpop.permute.xlu0 %1236
    %v1238 = vsel %vm231, %v1235, 0
    %v1240 = vsel %vm231, %v1237, 0
    %1242 = vmatprep.subr.mxu0 0.0
    %1243 = vmatpush1.xpose.msra.mxu0 %v1240
    %1244 = vmatprep.subr.mxu0 0.0
    %1245 = vmatpush1.xpose.msra.mxu0 0.0
    %1246 = vmatprep.subr.mxu0 0.0
    %1247 = vmatpush1.xpose.msra.mxu0 0.0
    %1248 = vmatprep.subr.mxu0 0.0
    %1249 = vmatpush1.xpose.msra.mxu0 0.0
    %1250 = vmatprep.subr.mxu0 0.0
    %1251 = vmatpush1.xpose.msra.mxu0 0.0
    %1252 = vmatprep.subr.mxu0 0.0
    %1253 = vmatpush1.xpose.msra.mxu0 0.0
    %1254 = vmatprep.subr.mxu0 0.0
    %1255 = vmatpush1.xpose.msra.mxu0 0.0
    %1256 = vmatprep.subr.mxu0 0.0
    %1257 = vmatpush1.xpose.msra.mxu0 0.0
    %1258 = vmatprep.subr.mxu0 0.0
    %1259 = vmatpush1.xpose.msra.mxu0 0.0
    %1260 = vmatprep.subr.mxu0 0.0
    %1261 = vmatpush1.xpose.msra.mxu0 0.0
    %1262 = vmatprep.subr.mxu0 0.0
    %1263 = vmatpush1.xpose.msra.mxu0 0.0
    %1264 = vmatprep.subr.mxu0 0.0
    %1265 = vmatpush1.xpose.msra.mxu0 0.0
    %1266 = vmatprep.subr.mxu0 0.0
    %1267 = vmatpush1.xpose.msra.mxu0 0.0
    %1268 = vmatprep.subr.mxu0 0.0
    %1269 = vmatpush1.xpose.msra.mxu0 0.0
    %1270 = vmatprep.subr.mxu0 0.0
    %1271 = vmatpush1.xpose.msra.mxu0 0.0
    %1272 = vmatprep.subr.mxu0 0.0
    %1273 = vmatpush1.xpose.msra.mxu0 0.0
    %1274 = vmatprep.subr.mxu0 0.0
    %1275 = vmatpush1.xpose.msra.mxu0 0.0
    %1276 = vmatprep.subr.mxu0 0.0
    %1277 = vmatpush1.xpose.msra.mxu0 0.0
    %1278 = vmatprep.subr.mxu0 0.0
    %1279 = vmatpush1.xpose.msra.mxu0 0.0
    %1280 = vmatprep.subr.mxu0 0.0
    %1281 = vmatpush1.xpose.msra.mxu0 0.0
    %1282 = vmatprep.subr.mxu0 0.0
    %1283 = vmatpush1.xpose.msra.mxu0 0.0
    %1284 = vmatprep.subr.mxu0 0.0
    %1285 = vmatpush1.xpose.msra.mxu0 0.0
    %1286 = vmatprep.subr.mxu0 0.0
    %1287 = vmatpush1.xpose.msra.mxu0 0.0
    %1288 = vmatprep.subr.mxu0 0.0
    %1289 = vmatpush1.xpose.msra.mxu0 0.0
    %1290 = vmatprep.subr.mxu0 0.0
    %1291 = vmatpush1.xpose.msra.mxu0 0.0
    %1292 = vmatprep.subr.mxu0 0.0
    %1293 = vmatpush1.xpose.msra.mxu0 0.0
    %1294 = vmatprep.subr.mxu0 0.0
    %1295 = vmatpush1.xpose.msra.mxu0 0.0
    %1296 = vmatprep.subr.mxu0 0.0
    %1297 = vmatpush1.xpose.msra.mxu0 0.0
    %1298 = vmatprep.subr.mxu0 0.0
    %1299 = vmatpush1.xpose.msra.mxu0 0.0
    %1300 = vmatprep.subr.mxu0 0.0
    %1301 = vmatpush1.xpose.msra.mxu0 0.0
    %1302 = vmatprep.subr.mxu0 0.0
    %1303 = vmatpush1.xpose.msra.mxu0 0.0
    %1304 = vmatprep.subr.mxu0 0.0
    %1305 = vmatpush1.xpose.msra.mxu0 0.0
    %1306 = vmatprep.mubr.f32.mxu0 0.0
    %1307 = vmatmul.mubr.f32.gmra.mrb[0].mxu0 %v1238
    %v1308 = vpop.f32.mrb[0].mxu0
    %v1309 = vadd.f32 0.0, %v1308
    %v1310 = vpop.f32.mrb[0].mxu0
    %1311 = vdwg.mxu0
    %v1312 = vsel %vm231, %v1309, -inf
    %1313 = vmax.xlane.f32.xlu0 %v1312
    %v1314 = vpop.xlane.xlu0 %1313
    %v1315 = vsub.f32 %v1309, %v1314
    %v1316 = vmul.f32 %v1315, 1.442695
    %v1317 = vpow.pop %v1316
    %v1318 = vsel %vm231, %v1317, 0.0
    %1319 = vadd.xlane.f32.xlu0 %v1318
    %v1320 = vpop.xlane.xlu0 %1319
    %1321 = vrot.lane.b32.xlu0 %v225, 48
    %v1322 = vpop.permute.xlu0 %1321
    %v1325 = vsel %vm231, %v1317, 0
    %1327 = vmatprep.subr.mxu0 0.0
    %1328 = vmatpush1.msra.mxu0 %v1322
    %1329 = vmatprep.subr.mxu0 0.0
    %1330 = vmatpush1.msra.mxu0 0.0
    %1331 = vmatprep.subr.mxu0 0.0
    %1332 = vmatpush1.msra.mxu0 0.0
    %1333 = vmatprep.subr.mxu0 0.0
    %1334 = vmatpush1.msra.mxu0 0.0
    %1335 = vmatprep.subr.mxu0 0.0
    %1336 = vmatpush1.msra.mxu0 0.0
    %1337 = vmatprep.subr.mxu0 0.0
    %1338 = vmatpush1.msra.mxu0 0.0
    %1339 = vmatprep.subr.mxu0 0.0
    %1340 = vmatpush1.msra.mxu0 0.0
    %1341 = vmatprep.subr.mxu0 0.0
    %1342 = vmatpush1.msra.mxu0 0.0
    %1343 = vmatprep.subr.mxu0 0.0
    %1344 = vmatpush1.msra.mxu0 0.0
    %1345 = vmatprep.subr.mxu0 0.0
    %1346 = vmatpush1.msra.mxu0 0.0
    %1347 = vmatprep.subr.mxu0 0.0
    %1348 = vmatpush1.msra.mxu0 0.0
    %1349 = vmatprep.subr.mxu0 0.0
    %1350 = vmatpush1.msra.mxu0 0.0
    %1351 = vmatprep.subr.mxu0 0.0
    %1352 = vmatpush1.msra.mxu0 0.0
    %1353 = vmatprep.subr.mxu0 0.0
    %1354 = vmatpush1.msra.mxu0 0.0
    %1355 = vmatprep.subr.mxu0 0.0
    %1356 = vmatpush1.msra.mxu0 0.0
    %1357 = vmatprep.subr.mxu0 0.0
    %1358 = vmatpush1.msra.mxu0 0.0
    %1359 = vmatprep.subr.mxu0 0.0
    %1360 = vmatpush1.msra.mxu0 0.0
    %1361 = vmatprep.subr.mxu0 0.0
    %1362 = vmatpush1.msra.mxu0 0.0
    %1363 = vmatprep.subr.mxu0 0.0
    %1364 = vmatpush1.msra.mxu0 0.0
    %1365 = vmatprep.subr.mxu0 0.0
    %1366 = vmatpush1.msra.mxu0 0.0
    %1367 = vmatprep.subr.mxu0 0.0
    %1368 = vmatpush1.msra.mxu0 0.0
    %1369 = vmatprep.subr.mxu0 0.0
    %1370 = vmatpush1.msra.mxu0 0.0
    %1371 = vmatprep.subr.mxu0 0.0
    %1372 = vmatpush1.msra.mxu0 0.0
    %1373 = vmatprep.subr.mxu0 0.0
    %1374 = vmatpush1.msra.mxu0 0.0
    %1375 = vmatprep.subr.mxu0 0.0
    %1376 = vmatpush1.msra.mxu0 0.0
    %1377 = vmatprep.subr.mxu0 0.0
    %1378 = vmatpush1.msra.mxu0 0.0
    %1379 = vmatprep.subr.mxu0 0.0
    %1380 = vmatpush1.msra.mxu0 0.0
    %1381 = vmatprep.subr.mxu0 0.0
    %1382 = vmatpush1.msra.mxu0 0.0
    %1383 = vmatprep.subr.mxu0 0.0
    %1384 = vmatpush1.msra.mxu0 0.0
    %1385 = vmatprep.subr.mxu0 0.0
    %1386 = vmatpush1.msra.mxu0 0.0
    %1387 = vmatprep.subr.mxu0 0.0
    %1388 = vmatpush1.msra.mxu0 0.0
    %1389 = vmatprep.subr.mxu0 0.0
    %1390 = vmatpush1.msra.mxu0 0.0
    %1391 = vmatprep.mubr.f32.mxu0 0.0
    %1392 = vmatmul.mubr.f32.gmra.mrb[0].mxu0 %v1325
    %v1393 = vpop.f32.mrb[0].mxu0
    %v1394 = vadd.f32 0.0, %v1393
    %v1395 = vpop.f32.mrb[0].mxu0
    %1396 = vdwg.mxu0
    %v1397 = vrcp.pop %v1320
    %v1398 = vmul.f32 %v1394, %v1397
    %1399 = vrot.lane.b32.xlu0 %v225, 104
    %v1400 = vpop.permute.xlu0 %1399
    %1401 = vrot.lane.b32.xlu0 %v225, 72
    %v1402 = vpop.permute.xlu0 %1401
    %v1403 = vsel %vm231, %v1400, 0
    %v1405 = vsel %vm231, %v1402, 0
    %1407 = vmatprep.subr.mxu0 0.0
    %1408 = vmatpush1.xpose.msra.mxu0 %v1405
    %1409 = vmatprep.subr.mxu0 0.0
    %1410 = vmatpush1.xpose.msra.mxu0 0.0
    %1411 = vmatprep.subr.mxu0 0.0
    %1412 = vmatpush1.xpose.msra.mxu0 0.0
    %1413 = vmatprep.subr.mxu0 0.0
    %1414 = vmatpush1.xpose.msra.mxu0 0.0
    %1415 = vmatprep.subr.mxu0 0.0
    %1416 = vmatpush1.xpose.msra.mxu0 0.0
    %1417 = vmatprep.subr.mxu0 0.0
    %1418 = vmatpush1.xpose.msra.mxu0 0.0
    %1419 = vmatprep.subr.mxu0 0.0
    %1420 = vmatpush1.xpose.msra.mxu0 0.0
    %1421 = vmatprep.subr.mxu0 0.0
    %1422 = vmatpush1.xpose.msra.mxu0 0.0
    %1423 = vmatprep.subr.mxu0 0.0
    %1424 = vmatpush1.xpose.msra.mxu0 0.0
    %1425 = vmatprep.subr.mxu0 0.0
    %1426 = vmatpush1.xpose.msra.mxu0 0.0
    %1427 = vmatprep.subr.mxu0 0.0
    %1428 = vmatpush1.xpose.msra.mxu0 0.0
    %1429 = vmatprep.subr.mxu0 0.0
    %1430 = vmatpush1.xpose.msra.mxu0 0.0
    %1431 = vmatprep.subr.mxu0 0.0
    %1432 = vmatpush1.xpose.msra.mxu0 0.0
    %1433 = vmatprep.subr.mxu0 0.0
    %1434 = vmatpush1.xpose.msra.mxu0 0.0
    %1435 = vmatprep.subr.mxu0 0.0
    %1436 = vmatpush1.xpose.msra.mxu0 0.0
    %1437 = vmatprep.subr.mxu0 0.0
    %1438 = vmatpush1.xpose.msra.mxu0 0.0
    %1439 = vmatprep.subr.mxu0 0.0
    %1440 = vmatpush1.xpose.msra.mxu0 0.0
    %1441 = vmatprep.subr.mxu0 0.0
    %1442 = vmatpush1.xpose.msra.mxu0 0.0
    %1443 = vmatprep.subr.mxu0 0.0
    %1444 = vmatpush1.xpose.msra.mxu0 0.0
    %1445 = vmatprep.subr.mxu0 0.0
    %1446 = vmatpush1.xpose.msra.mxu0 0.0
    %1447 = vmatprep.subr.mxu0 0.0
    %1448 = vmatpush1.xpose.msra.mxu0 0.0
    %1449 = vmatprep.subr.mxu0 0.0
    %1450 = vmatpush1.xpose.msra.mxu0 0.0
    %1451 = vmatprep.subr.mxu0 0.0
    %1452 = vmatpush1.xpose.msra.mxu0 0.0
    %1453 = vmatprep.subr.mxu0 0.0
    %1454 = vmatpush1.xpose.msra.mxu0 0.0
    %1455 = vmatprep.subr.mxu0 0.0
    %1456 = vmatpush1.xpose.msra.mxu0 0.0
    %1457 = vmatprep.subr.mxu0 0.0
    %1458 = vmatpush1.xpose.msra.mxu0 0.0
    %1459 = vmatprep.subr.mxu0 0.0
    %1460 = vmatpush1.xpose.msra.mxu0 0.0
    %1461 = vmatprep.subr.mxu0 0.0
    %1462 = vmatpush1.xpose.msra.mxu0 0.0
    %1463 = vmatprep.subr.mxu0 0.0
    %1464 = vmatpush1.xpose.msra.mxu0 0.0
    %1465 = vmatprep.subr.mxu0 0.0
    %1466 = vmatpush1.xpose.msra.mxu0 0.0
    %1467 = vmatprep.subr.mxu0 0.0
    %1468 = vmatpush1.xpose.msra.mxu0 0.0
    %1469 = vmatprep.subr.mxu0 0.0
    %1470 = vmatpush1.xpose.msra.mxu0 0.0
    %1471 = vmatprep.mubr.f32.mxu0 0.0
    %1472 = vmatmul.mubr.f32.gmra.mrb[0].mxu0 %v1403
    %v1473 = vpop.f32.mrb[0].mxu0
    %v1474 = vadd.f32 0.0, %v1473
    %v1475 = vpop.f32.mrb[0].mxu0
    %1476 = vdwg.mxu0
    %v1477 = vsel %vm231, %v1474, -inf
    %1478 = vmax.xlane.f32.xlu0 %v1477
    %v1479 = vpop.xlane.xlu0 %1478
    %v1480 = vsub.f32 %v1474, %v1479
    %v1481 = vmul.f32 %v1480, 1.442695
    %v1482 = vpow.pop %v1481
    %v1483 = vsel %vm231, %v1482, 0.0
    %1484 = vadd.xlane.f32.xlu0 %v1483
    %v1485 = vpop.xlane.xlu0 %1484
    %1486 = vrot.lane.b32.xlu0 %v225, 40
    %v1487 = vpop.permute.xlu0 %1486
    %v1490 = vsel %vm231, %v1482, 0
    %1492 = vmatprep.subr.mxu0 0.0
    %1493 = vmatpush1.msra.mxu0 %v1487
    %1494 = vmatprep.subr.mxu0 0.0
    %1495 = vmatpush1.msra.mxu0 0.0
    %1496 = vmatprep.subr.mxu0 0.0
    %1497 = vmatpush1.msra.mxu0 0.0
    %1498 = vmatprep.subr.mxu0 0.0
    %1499 = vmatpush1.msra.mxu0 0.0
    %1500 = vmatprep.subr.mxu0 0.0
    %1501 = vmatpush1.msra.mxu0 0.0
    %1502 = vmatprep.subr.mxu0 0.0
    %1503 = vmatpush1.msra.mxu0 0.0
    %1504 = vmatprep.subr.mxu0 0.0
    %1505 = vmatpush1.msra.mxu0 0.0
    %1506 = vmatprep.subr.mxu0 0.0
    %1507 = vmatpush1.msra.mxu0 0.0
    %1508 = vmatprep.subr.mxu0 0.0
    %1509 = vmatpush1.msra.mxu0 0.0
    %1510 = vmatprep.subr.mxu0 0.0
    %1511 = vmatpush1.msra.mxu0 0.0
    %1512 = vmatprep.subr.mxu0 0.0
    %1513 = vmatpush1.msra.mxu0 0.0
    %1514 = vmatprep.subr.mxu0 0.0
    %1515 = vmatpush1.msra.mxu0 0.0
    %1516 = vmatprep.subr.mxu0 0.0
    %1517 = vmatpush1.msra.mxu0 0.0
    %1518 = vmatprep.subr.mxu0 0.0
    %1519 = vmatpush1.msra.mxu0 0.0
    %1520 = vmatprep.subr.mxu0 0.0
    %1521 = vmatpush1.msra.mxu0 0.0
    %1522 = vmatprep.subr.mxu0 0.0
    %1523 = vmatpush1.msra.mxu0 0.0
    %1524 = vmatprep.subr.mxu0 0.0
    %1525 = vmatpush1.msra.mxu0 0.0
    %1526 = vmatprep.subr.mxu0 0.0
    %1527 = vmatpush1.msra.mxu0 0.0
    %1528 = vmatprep.subr.mxu0 0.0
    %1529 = vmatpush1.msra.mxu0 0.0
    %1530 = vmatprep.subr.mxu0 0.0
    %1531 = vmatpush1.msra.mxu0 0.0
    %1532 = vmatprep.subr.mxu0 0.0
    %1533 = vmatpush1.msra.mxu0 0.0
    %1534 = vmatprep.subr.mxu0 0.0
    %1535 = vmatpush1.msra.mxu0 0.0
    %1536 = vmatprep.subr.mxu0 0.0
    %1537 = vmatpush1.msra.mxu0 0.0
    %1538 = vmatprep.subr.mxu0 0.0
    %1539 = vmatpush1.msra.mxu0 0.0
    %1540 = vmatprep.subr.mxu0 0.0
    %1541 = vmatpush1.msra.mxu0 0.0
    %1542 = vmatprep.subr.mxu0 0.0
    %1543 = vmatpush1.msra.mxu0 0.0
    %1544 = vmatprep.subr.mxu0 0.0
    %1545 = vmatpush1.msra.mxu0 0.0
    %1546 = vmatprep.subr.mxu0 0.0
    %1547 = vmatpush1.msra.mxu0 0.0
    %1548 = vmatprep.subr.mxu0 0.0
    %1549 = vmatpush1.msra.mxu0 0.0
    %1550 = vmatprep.subr.mxu0 0.0
    %1551 = vmatpush1.msra.mxu0 0.0
    %1552 = vmatprep.subr.mxu0 0.0
    %1553 = vmatpush1.msra.mxu0 0.0
    %1554 = vmatprep.subr.mxu0 0.0
    %1555 = vmatpush1.msra.mxu0 0.0
    %1556 = vmatprep.mubr.f32.mxu0 0.0
    %1557 = vmatmul.mubr.f32.gmra.mrb[0].mxu0 %v1490
    %v1558 = vpop.f32.mrb[0].mxu0
    %v1559 = vadd.f32 0.0, %v1558
    %v1560 = vpop.f32.mrb[0].mxu0
    %1561 = vdwg.mxu0
    %v1562 = vrcp.pop %v1485
    %v1563 = vmul.f32 %v1559, %v1562
    %1565 = vrot.lane.b32.xlu0 %v1233, 8
    %v1566 = vpop.permute.xlu0 %1565
    %1569 = vrot.lane.b32.xlu0 %v1398, 16
    %v1570 = vpop.permute.xlu0 %1569
    %1573 = vrot.lane.b32.xlu0 %v1563, 24
    %v1574 = vpop.permute.xlu0 %1573
    %v1576 = vsel %vm231, %v1068, %v1566
    %v1577 = vsel %vm901, %v1576, %v1570
    %v1578 = vsel %vm903, %v1577, %v1574
    %v1579 = vld [vmem:[%s2 + $0x20] sm:$0xff]
    %v1580 = vld [vmem:[%s2 + $0x50] sm:$0xff]
    %v1581 = vld [vmem:[%s2 + $0x80] sm:$0xff]
    %v1582 = vld [vmem:[%s2 + $0xb0] sm:$0xff]
    %v1583 = vld [vmem:[%s4 + $0x1] sm:$0x1]
    %v1584 = vlaneseq
    %v1585 = vshrl.u32 %v1584, 7
    %v1586 = vsub.s32 0, %v1585
    %v1587 = vrot.slane %v1583, %v1586
    %1592 = vrot.lane.b32.xlu0 %v1579, 64
    %v1593 = vpop.permute.xlu0 %1592
    %1594 = vrot.lane.b32.xlu0 %v1580, 64
    %v1595 = vpop.permute.xlu0 %1594
    %1596 = vrot.lane.b32.xlu0 %v1581, 64
    %v1597 = vpop.permute.xlu0 %1596
    %1598 = vrot.lane.b32.xlu0 %v1582, 64
    %v1599 = vpop.permute.xlu0 %1598
    %v1605 = vsel %vm56, %v904, 0
    %v1608 = vsel %vm56, %v1578, 0
    %1610 = vmatprep.subr.mxu0 0.0
    %1611 = vmatpush1.msra.mxu0 %v1593
    %1612 = vmatprep.subr.mxu0 0.0
    %1613 = vmatpush1.msra.mxu0 %v1595
    %1614 = vmatprep.subr.mxu0 0.0
    %1615 = vmatpush1.msra.mxu0 %v1597
    %1616 = vmatprep.subr.mxu0 0.0
    %1617 = vmatpush1.msra.mxu0 %v1599
    %1618 = vmatprep.subr.mxu0 0.0
    %1619 = vmatpush1.msra.mxu0 0.0
    %1620 = vmatprep.subr.mxu0 0.0
    %1621 = vmatpush1.msra.mxu0 0.0
    %1622 = vmatprep.subr.mxu0 0.0
    %1623 = vmatpush1.msra.mxu0 0.0
    %1624 = vmatprep.subr.mxu0 0.0
    %1625 = vmatpush1.msra.mxu0 0.0
    %1626 = vmatprep.subr.mxu0 0.0
    %1627 = vmatpush1.msra.mxu0 0.0
    %1628 = vmatprep.subr.mxu0 0.0
    %1629 = vmatpush1.msra.mxu0 0.0
    %1630 = vmatprep.subr.mxu0 0.0
    %1631 = vmatpush1.msra.mxu0 0.0
    %1632 = vmatprep.subr.mxu0 0.0
    %1633 = vmatpush1.msra.mxu0 0.0
    %1634 = vmatprep.subr.mxu0 0.0
    %1635 = vmatpush1.msra.mxu0 0.0
    %1636 = vmatprep.subr.mxu0 0.0
    %1637 = vmatpush1.msra.mxu0 0.0
    %1638 = vmatprep.subr.mxu0 0.0
    %1639 = vmatpush1.msra.mxu0 0.0
    %1640 = vmatprep.subr.mxu0 0.0
    %1641 = vmatpush1.msra.mxu0 0.0
    %1642 = vmatprep.subr.mxu0 0.0
    %1643 = vmatpush1.msra.mxu0 0.0
    %1644 = vmatprep.subr.mxu0 0.0
    %1645 = vmatpush1.msra.mxu0 0.0
    %1646 = vmatprep.subr.mxu0 0.0
    %1647 = vmatpush1.msra.mxu0 0.0
    %1648 = vmatprep.subr.mxu0 0.0
    %1649 = vmatpush1.msra.mxu0 0.0
    %1650 = vmatprep.subr.mxu0 0.0
    %1651 = vmatpush1.msra.mxu0 0.0
    %1652 = vmatprep.subr.mxu0 0.0
    %1653 = vmatpush1.msra.mxu0 0.0
    %1654 = vmatprep.subr.mxu0 0.0
    %1655 = vmatpush1.msra.mxu0 0.0
    %1656 = vmatprep.subr.mxu0 0.0
    %1657 = vmatpush1.msra.mxu0 0.0
    %1658 = vmatprep.subr.mxu0 0.0
    %1659 = vmatpush1.msra.mxu0 0.0
    %1660 = vmatprep.subr.mxu0 0.0
    %1661 = vmatpush1.msra.mxu0 0.0
    %1662 = vmatprep.subr.mxu0 0.0
    %1663 = vmatpush1.msra.mxu0 0.0
    %1664 = vmatprep.subr.mxu0 0.0
    %1665 = vmatpush1.msra.mxu0 0.0
    %1666 = vmatprep.subr.mxu0 0.0
    %1667 = vmatpush1.msra.mxu0 0.0
    %1668 = vmatprep.subr.mxu0 0.0
    %1669 = vmatpush1.msra.mxu0 0.0
    %1670 = vmatprep.subr.mxu0 0.0
    %1671 = vmatpush1.msra.mxu0 0.0
    %1672 = vmatprep.subr.mxu0 0.0
    %1673 = vmatpush1.msra.mxu0 0.0
    %1674 = vmatprep.mubr.f32.mxu0 0.0
    %1675 = vmatmul.mubr.f32.gmra.mrb[0].mxu0 %v1605
    %v1676 = vpop.f32.mrb[0].mxu0
    %v1677 = vadd.f32 %v1587, %v1676
    %v1678 = vpop.f32.mrb[0].mxu0
    %1679 = vmatprep.mubr.f32.mxu0 0.0
    %1680 = vmatmul.mubr.f32.gmra.mrb[0].mxu0 %v1608
    %v1681 = vpop.f32.mrb[0].mxu0
    %v1682 = vadd.f32 %v1587, %v1681
    %v1683 = vpop.f32.mrb[0].mxu0
    %1684 = vdwg.mxu0
    %v1685 = vadd.f32 %v130, %v1677
    %v1686 = vadd.f32 %v135, %v1682
    %v1687 = vld [vmem:[%s4 + $0x2] sm:$0x1]
    %v1688 = vld [vmem:[%s4 + $0x3] sm:$0x1]
    %v1689 = vsel %vm56, %v1685, 0.0
    %1690 = vadd.xlane.f32.xlu0 %v1689
    %v1691 = vpop.xlane.xlu0 %1690
    %v1692 = vsel %vm56, %v1686, 0.0
    %1693 = vadd.xlane.f32.xlu0 %v1692
    %v1694 = vpop.xlane.xlu0 %1693
    %v1695 = vrcp.pop 32.0
    %v1696 = vmul.f32 %v1691, %v1695
    %v1697 = vmul.f32 %v1694, %v1695
    %v1698 = vsub.f32 %v1685, %v1696
    %v1699 = vsub.f32 %v1686, %v1697
    %v1700 = vmul.f32 %v1698, %v1698
    %v1701 = vmul.f32 %v1699, %v1699
    %v1702 = vsel %vm56, %v1700, 0.0
    %1703 = vadd.xlane.f32.xlu0 %v1702
    %v1704 = vpop.xlane.xlu0 %1703
    %v1705 = vsel %vm56, %v1701, 0.0
    %1706 = vadd.xlane.f32.xlu0 %v1705
    %v1707 = vpop.xlane.xlu0 %1706
    %v1708 = vmul.f32 %v1704, %v1695
    %v1709 = vmul.f32 %v1707, %v1695
    %v1710 = vadd.f32 %v1708, 1e-05
    %v1711 = vadd.f32 %v1709, 1e-05
    %v1712 = vrsqrt.pop %v1710
    %v1713 = vrsqrt.pop %v1711
    %v1714 = vmul.f32 %v1698, %v1712
    %v1715 = vmul.f32 %v1699, %v1713
    %v1716 = vlaneseq
    %v1717 = vshrl.u32 %v1716, 7
    %v1718 = vsub.s32 0, %v1717
    %v1719 = vrot.slane %v1687, %v1718
    %v1720 = vmul.f32 %v1714, %v1719
    %v1721 = vmul.f32 %v1715, %v1719
    %v1722 = vlaneseq
    %v1723 = vshrl.u32 %v1722, 7
    %v1724 = vsub.s32 0, %v1723
    %v1725 = vrot.slane %v1688, %v1724
    %v1726 = vadd.f32 %v1720, %v1725
    %v1727 = vadd.f32 %v1721, %v1725
    %v1728 = vld [vmem:[%s2 + $0x10] sm:$0xff]
    %v1729 = vld [vmem:[%s2 + $0x40] sm:$0xff]
    %v1730 = vld [vmem:[%s2 + $0x70] sm:$0xff]
    %v1731 = vld [vmem:[%s2 + $0xa0] sm:$0xff]
    %v1732 = vld [vmem:[%s4 + $0x4] sm:$0x1]
    %v1733 = vlaneseq
    %v1734 = vshrl.u32 %v1733, 7
    %v1735 = vsub.s32 0, %v1734
    %v1736 = vrot.slane %v1732, %v1735
    %1741 = vrot.lane.b32.xlu0 %v1728, 64
    %v1742 = vpop.permute.xlu0 %1741
    %1743 = vrot.lane.b32.xlu0 %v1729, 64
    %v1744 = vpop.permute.xlu0 %1743
    %1745 = vrot.lane.b32.xlu0 %v1730, 64
    %v1746 = vpop.permute.xlu0 %1745
    %1747 = vrot.lane.b32.xlu0 %v1731, 64
    %v1748 = vpop.permute.xlu0 %1747
    %v1754 = vsel %vm56, %v1726, 0
    %v1757 = vsel %vm56, %v1727, 0
    %1759 = vmatprep.subr.mxu0 0.0
    %1760 = vmatpush1.msra.mxu0 %v1742
    %1761 = vmatprep.subr.mxu0 0.0
    %1762 = vmatpush1.msra.mxu0 %v1744
    %1763 = vmatprep.subr.mxu0 0.0
    %1764 = vmatpush1.msra.mxu0 %v1746
    %1765 = vmatprep.subr.mxu0 0.0
    %1766 = vmatpush1.msra.mxu0 %v1748
    %1767 = vmatprep.subr.mxu0 0.0
    %1768 = vmatpush1.msra.mxu0 0.0
    %1769 = vmatprep.subr.mxu0 0.0
    %1770 = vmatpush1.msra.mxu0 0.0
    %1771 = vmatprep.subr.mxu0 0.0
    %1772 = vmatpush1.msra.mxu0 0.0
    %1773 = vmatprep.subr.mxu0 0.0
    %1774 = vmatpush1.msra.mxu0 0.0
    %1775 = vmatprep.subr.mxu0 0.0
    %1776 = vmatpush1.msra.mxu0 0.0
    %1777 = vmatprep.subr.mxu0 0.0
    %1778 = vmatpush1.msra.mxu0 0.0
    %1779 = vmatprep.subr.mxu0 0.0
    %1780 = vmatpush1.msra.mxu0 0.0
    %1781 = vmatprep.subr.mxu0 0.0
    %1782 = vmatpush1.msra.mxu0 0.0
    %1783 = vmatprep.subr.mxu0 0.0
    %1784 = vmatpush1.msra.mxu0 0.0
    %1785 = vmatprep.subr.mxu0 0.0
    %1786 = vmatpush1.msra.mxu0 0.0
    %1787 = vmatprep.subr.mxu0 0.0
    %1788 = vmatpush1.msra.mxu0 0.0
    %1789 = vmatprep.subr.mxu0 0.0
    %1790 = vmatpush1.msra.mxu0 0.0
    %1791 = vmatprep.subr.mxu0 0.0
    %1792 = vmatpush1.msra.mxu0 0.0
    %1793 = vmatprep.subr.mxu0 0.0
    %1794 = vmatpush1.msra.mxu0 0.0
    %1795 = vmatprep.subr.mxu0 0.0
    %1796 = vmatpush1.msra.mxu0 0.0
    %1797 = vmatprep.subr.mxu0 0.0
    %1798 = vmatpush1.msra.mxu0 0.0
    %1799 = vmatprep.subr.mxu0 0.0
    %1800 = vmatpush1.msra.mxu0 0.0
    %1801 = vmatprep.subr.mxu0 0.0
    %1802 = vmatpush1.msra.mxu0 0.0
    %1803 = vmatprep.subr.mxu0 0.0
    %1804 = vmatpush1.msra.mxu0 0.0
    %1805 = vmatprep.subr.mxu0 0.0
    %1806 = vmatpush1.msra.mxu0 0.0
    %1807 = vmatprep.subr.mxu0 0.0
    %1808 = vmatpush1.msra.mxu0 0.0
    %1809 = vmatprep.subr.mxu0 0.0
    %1810 = vmatpush1.msra.mxu0 0.0
    %1811 = vmatprep.subr.mxu0 0.0
    %1812 = vmatpush1.msra.mxu0 0.0
    %1813 = vmatprep.subr.mxu0 0.0
    %1814 = vmatpush1.msra.mxu0 0.0
    %1815 = vmatprep.subr.mxu0 0.0
    %1816 = vmatpush1.msra.mxu0 0.0
    %1817 = vmatprep.subr.mxu0 0.0
    %1818 = vmatpush1.msra.mxu0 0.0
    %1819 = vmatprep.subr.mxu0 0.0
    %1820 = vmatpush1.msra.mxu0 0.0
    %1821 = vmatprep.subr.mxu0 0.0
    %1822 = vmatpush1.msra.mxu0 0.0
    %1823 = vmatprep.mubr.f32.mxu0 0.0
    %1824 = vmatmul.mubr.f32.gmra.mrb[0].mxu0 %v1754
    %v1825 = vpop.f32.mrb[0].mxu0
    %v1826 = vadd.f32 %v1736, %v1825
    %v1827 = vpop.f32.mrb[0].mxu0
    %1828 = vmatprep.mubr.f32.mxu0 0.0
    %1829 = vmatmul.mubr.f32.gmra.mrb[0].mxu0 %v1757
    %v1830 = vpop.f32.mrb[0].mxu0
    %v1831 = vadd.f32 %v1736, %v1830
    %v1832 = vpop.f32.mrb[0].mxu0
    %1833 = vdwg.mxu0
    %v1834 = vmax.f32 %v1826, 0.0
    %v1835 = vmax.f32 %v1831, 0.0
    %v1836 = vld [vmem:[#allocation2] sm:$0xff]
    %v1837 = vld [vmem:[#allocation2 + $0x8] sm:$0xff]
    %v1838 = vld [vmem:[#allocation2 + $0x10] sm:$0xff]
    %v1839 = vld [vmem:[#allocation2 + $0x18] sm:$0xff]
    %v1840 = vld [vmem:[#allocation2 + $0x20] sm:$0xff]
    %v1841 = vld [vmem:[#allocation2 + $0x28] sm:$0xff]
    %v1842 = vld [vmem:[#allocation2 + $0x30] sm:$0xff]
    %v1843 = vld [vmem:[#allocation2 + $0x38] sm:$0xff]
    %v1844 = vld [vmem:[%s4 + $0x5] sm:$0x1]
    %v1845 = vlaneseq
    %v1846 = vshrl.u32 %v1845, 7
    %v1847 = vsub.s32 0, %v1846
    %v1848 = vrot.slane %v1844, %v1847
    %vm1849 = vcmask 523264
    %v1851 = vsel %vm1849, %v1834, 0
    %v1854 = vsel %vm1849, %v1835, 0
    %1856 = vmatprep.subr.mxu0 0.0
    %1857 = vmatpush1.msra.mxu0 %v1836
    %1858 = vmatprep.subr.mxu0 0.0
    %1859 = vmatpush1.msra.mxu0 %v1837
    %1860 = vmatprep.subr.mxu0 0.0
    %1861 = vmatpush1.msra.mxu0 %v1838
    %1862 = vmatprep.subr.mxu0 0.0
    %1863 = vmatpush1.msra.mxu0 %v1839
    %1864 = vmatprep.subr.mxu0 0.0
    %1865 = vmatpush1.msra.mxu0 %v1840
    %1866 = vmatprep.subr.mxu0 0.0
    %1867 = vmatpush1.msra.mxu0 %v1841
    %1868 = vmatprep.subr.mxu0 0.0
    %1869 = vmatpush1.msra.mxu0 %v1842
    %1870 = vmatprep.subr.mxu0 0.0
    %1871 = vmatpush1.msra.mxu0 %v1843
    %1872 = vmatprep.subr.mxu0 0.0
    %1873 = vmatpush1.msra.mxu0 0.0
    %1874 = vmatprep.subr.mxu0 0.0
    %1875 = vmatpush1.msra.mxu0 0.0
    %1876 = vmatprep.subr.mxu0 0.0
    %1877 = vmatpush1.msra.mxu0 0.0
    %1878 = vmatprep.subr.mxu0 0.0
    %1879 = vmatpush1.msra.mxu0 0.0
    %1880 = vmatprep.subr.mxu0 0.0
    %1881 = vmatpush1.msra.mxu0 0.0
    %1882 = vmatprep.subr.mxu0 0.0
    %1883 = vmatpush1.msra.mxu0 0.0
    %1884 = vmatprep.subr.mxu0 0.0
    %1885 = vmatpush1.msra.mxu0 0.0
    %1886 = vmatprep.subr.mxu0 0.0
    %1887 = vmatpush1.msra.mxu0 0.0
    %1888 = vmatprep.subr.mxu0 0.0
    %1889 = vmatpush1.msra.mxu0 0.0
    %1890 = vmatprep.subr.mxu0 0.0
    %1891 = vmatpush1.msra.mxu0 0.0
    %1892 = vmatprep.subr.mxu0 0.0
    %1893 = vmatpush1.msra.mxu0 0.0
    %1894 = vmatprep.subr.mxu0 0.0
    %1895 = vmatpush1.msra.mxu0 0.0
    %1896 = vmatprep.subr.mxu0 0.0
    %1897 = vmatpush1.msra.mxu0 0.0
    %1898 = vmatprep.subr.mxu0 0.0
    %1899 = vmatpush1.msra.mxu0 0.0
    %1900 = vmatprep.subr.mxu0 0.0
    %1901 = vmatpush1.msra.mxu0 0.0
    %1902 = vmatprep.subr.mxu0 0.0
    %1903 = vmatpush1.msra.mxu0 0.0
    %1904 = vmatprep.subr.mxu0 0.0
    %1905 = vmatpush1.msra.mxu0 0.0
    %1906 = vmatprep.subr.mxu0 0.0
    %1907 = vmatpush1.msra.mxu0 0.0
    %1908 = vmatprep.subr.mxu0 0.0
    %1909 = vmatpush1.msra.mxu0 0.0
    %1910 = vmatprep.subr.mxu0 0.0
    %1911 = vmatpush1.msra.mxu0 0.0
    %1912 = vmatprep.subr.mxu0 0.0
    %1913 = vmatpush1.msra.mxu0 0.0
    %1914 = vmatprep.subr.mxu0 0.0
    %1915 = vmatpush1.msra.mxu0 0.0
    %1916 = vmatprep.subr.mxu0 0.0
    %1917 = vmatpush1.msra.mxu0 0.0
    %1918 = vmatprep.subr.mxu0 0.0
    %1919 = vmatpush1.msra.mxu0 0.0
    %1920 = vmatprep.mubr.f32.mxu0 0.0
    %1921 = vmatmul.mubr.f32.gmra.mrb[0].mxu0 %v1851
    %v1922 = vpop.f32.mrb[0].mxu0
    %v1923 = vadd.f32 %v1848, %v1922
    %v1924 = vpop.f32.mrb[0].mxu0
    %1925 = vmatprep.mubr.f32.mxu0 0.0
    %1926 = vmatmul.mubr.f32.gmra.mrb[0].mxu0 %v1854
    %v1927 = vpop.f32.mrb[0].mxu0
    %v1928 = vadd.f32 %v1848, %v1927
    %v1929 = vpop.f32.mrb[0].mxu0
    %1930 = vdwg.mxu0
    %v1931 = vadd.f32 %v1726, %v1923
    %v1932 = vadd.f32 %v1727, %v1928
    %v1933 = vld [vmem:[%s4 + $0x6] sm:$0x1]
    %v1934 = vld [vmem:[%s4 + $0x7] sm:$0x1]
    %v1935 = vsel %vm56, %v1931, 0.0
    %1936 = vadd.xlane.f32.xlu0 %v1935
    %v1937 = vpop.xlane.xlu0 %1936
    %v1938 = vsel %vm56, %v1932, 0.0
    %1939 = vadd.xlane.f32.xlu0 %v1938
    %v1940 = vpop.xlane.xlu0 %1939
    %v1941 = vmul.f32 %v1937, %v1695
    %v1942 = vmul.f32 %v1940, %v1695
    %v1943 = vsub.f32 %v1931, %v1941
    %v1944 = vsub.f32 %v1932, %v1942
    %v1945 = vmul.f32 %v1943, %v1943
    %v1946 = vmul.f32 %v1944, %v1944
    %v1947 = vsel %vm56, %v1945, 0.0
    %1948 = vadd.xlane.f32.xlu0 %v1947
    %v1949 = vpop.xlane.xlu0 %1948
    %v1950 = vsel %vm56, %v1946, 0.0
    %1951 = vadd.xlane.f32.xlu0 %v1950
    %v1952 = vpop.xlane.xlu0 %1951
    %v1953 = vmul.f32 %v1949, %v1695
    %v1954 = vmul.f32 %v1952, %v1695
    %v1955 = vadd.f32 %v1953, 1e-05
    %v1956 = vadd.f32 %v1954, 1e-05
    %v1957 = vrsqrt.pop %v1955
    %v1958 = vrsqrt.pop %v1956
    %v1959 = vmul.f32 %v1943, %v1957
    %v1960 = vmul.f32 %v1944, %v1958
    %v1961 = vlaneseq
    %v1962 = vshrl.u32 %v1961, 7
    %v1963 = vsub.s32 0, %v1962
    %v1964 = vrot.slane %v1933, %v1963
    %v1965 = vmul.f32 %v1959, %v1964
    %v1966 = vmul.f32 %v1960, %v1964
    %v1967 = vlaneseq
    %v1968 = vshrl.u32 %v1967, 7
    %v1969 = vsub.s32 0, %v1968
    %v1970 = vrot.slane %v1934, %v1969
    %v1971 = vadd.f32 %v1965, %v1970
    %v1972 = vadd.f32 %v1966, %v1970
    %v1973 = vld [vmem:[%s0 + $0x10] sm:$0xff]
    %v1974 = vld [vmem:[%s0 + $0x18] sm:$0xff]
    %v1975 = vld [vmem:[%s1 + $0x10] sm:$0xff]
    %v1976 = vld [vmem:[%s1 + $0x18] sm:$0xff]
    %1977 = vset.pattern.permute.xlu0 0
    %1978 = vperm.xlu0 %1977, %v1973
    %v1979 = vpop.permute.xlu0 %1978
    %1980 = vset.pattern.permute.xlu0 0
    %1981 = vperm.xlu0 %1980, %v1974
    %v1982 = vpop.permute.xlu0 %1981
    %vm1983 = vcmp.eq.s32.totalorder %v1979, %v43
    %vm1984 = vcmp.eq.s32.totalorder %v1982, %v43
    %v1985 = vsel %vm1983, 1, 0
    %v1986 = vsel %vm1984, 1, 0
    %v1987 = vcvt.s32.f32 %v1985
    %v1988 = vcvt.s32.f32 %v1986
    %1989 = vrot.lane.b32.xlu0 %v1579, 96
    %v1990 = vpop.permute.xlu0 %1989
    %1991 = vrot.lane.b32.xlu0 %v1580, 96
    %v1992 = vpop.permute.xlu0 %1991
    %1993 = vrot.lane.b32.xlu0 %v1581, 96
    %v1994 = vpop.permute.xlu0 %1993
    %1995 = vrot.lane.b32.xlu0 %v1582, 96
    %v1996 = vpop.permute.xlu0 %1995
    %v2002 = vsel %vm56, %v1987, 0
    %v2005 = vsel %vm56, %v1988, 0
    %2007 = vmatprep.subr.mxu0 0.0
    %2008 = vmatpush1.msra.mxu0 %v1990
    %2009 = vmatprep.subr.mxu0 0.0
    %2010 = vmatpush1.msra.mxu0 %v1992
    %2011 = vmatprep.subr.mxu0 0.0
    %2012 = vmatpush1.msra.mxu0 %v1994
    %2013 = vmatprep.subr.mxu0 0.0
    %2014 = vmatpush1.msra.mxu0 %v1996
    %2015 = vmatprep.subr.mxu0 0.0
    %2016 = vmatpush1.msra.mxu0 0.0
    %2017 = vmatprep.subr.mxu0 0.0
    %2018 = vmatpush1.msra.mxu0 0.0
    %2019 = vmatprep.subr.mxu0 0.0
    %2020 = vmatpush1.msra.mxu0 0.0
    %2021 = vmatprep.subr.mxu0 0.0
    %2022 = vmatpush1.msra.mxu0 0.0
    %2023 = vmatprep.subr.mxu0 0.0
    %2024 = vmatpush1.msra.mxu0 0.0
    %2025 = vmatprep.subr.mxu0 0.0
    %2026 = vmatpush1.msra.mxu0 0.0
    %2027 = vmatprep.subr.mxu0 0.0
    %2028 = vmatpush1.msra.mxu0 0.0
    %2029 = vmatprep.subr.mxu0 0.0
    %2030 = vmatpush1.msra.mxu0 0.0
    %2031 = vmatprep.subr.mxu0 0.0
    %2032 = vmatpush1.msra.mxu0 0.0
    %2033 = vmatprep.subr.mxu0 0.0
    %2034 = vmatpush1.msra.mxu0 0.0
    %2035 = vmatprep.subr.mxu0 0.0
    %2036 = vmatpush1.msra.mxu0 0.0
    %2037 = vmatprep.subr.mxu0 0.0
    %2038 = vmatpush1.msra.mxu0 0.0
    %2039 = vmatprep.subr.mxu0 0.0
    %2040 = vmatpush1.msra.mxu0 0.0
    %2041 = vmatprep.subr.mxu0 0.0
    %2042 = vmatpush1.msra.mxu0 0.0
    %2043 = vmatprep.subr.mxu0 0.0
    %2044 = vmatpush1.msra.mxu0 0.0
    %2045 = vmatprep.subr.mxu0 0.0
    %2046 = vmatpush1.msra.mxu0 0.0
    %2047 = vmatprep.subr.mxu0 0.0
    %2048 = vmatpush1.msra.mxu0 0.0
    %2049 = vmatprep.subr.mxu0 0.0
    %2050 = vmatpush1.msra.mxu0 0.0
    %2051 = vmatprep.subr.mxu0 0.0
    %2052 = vmatpush1.msra.mxu0 0.0
    %2053 = vmatprep.subr.mxu0 0.0
    %2054 = vmatpush1.msra.mxu0 0.0
    %2055 = vmatprep.subr.mxu0 0.0
    %2056 = vmatpush1.msra.mxu0 0.0
    %2057 = vmatprep.subr.mxu0 0.0
    %2058 = vmatpush1.msra.mxu0 0.0
    %2059 = vmatprep.subr.mxu0 0.0
    %2060 = vmatpush1.msra.mxu0 0.0
    %2061 = vmatprep.subr.mxu0 0.0
    %2062 = vmatpush1.msra.mxu0 0.0
    %2063 = vmatprep.subr.mxu0 0.0
    %2064 = vmatpush1.msra.mxu0 0.0
    %2065 = vmatprep.subr.mxu0 0.0
    %2066 = vmatpush1.msra.mxu0 0.0
    %2067 = vmatprep.subr.mxu0 0.0
    %2068 = vmatpush1.msra.mxu0 0.0
    %2069 = vmatprep.subr.mxu0 0.0
    %2070 = vmatpush1.msra.mxu0 0.0
    %2071 = vmatprep.mubr.f32.mxu0 0.0
    %2072 = vmatmul.mubr.f32.gmra.mrb[0].mxu0 %v2002
    %v2073 = vpop.f32.mrb[0].mxu0
    %v2074 = vadd.f32 %v1975, %v2073
    %v2075 = vpop.f32.mrb[0].mxu0
    %2076 = vmatprep.mubr.f32.mxu0 0.0
    %2077 = vmatmul.mubr.f32.gmra.mrb[0].mxu0 %v2005
    %v2078 = vpop.f32.mrb[0].mxu0
    %v2079 = vadd.f32 %v1976, %v2078
    %v2080 = vpop.f32.mrb[0].mxu0
    %2081 = vdwg.mxu0
    %v2082 = vld [vmem:[%s2 + $0x8] sm:$0xff]
    %v2083 = vld [vmem:[%s2 + $0x38] sm:$0xff]
    %v2084 = vld [vmem:[%s2 + $0x68] sm:$0xff]
    %v2085 = vld [vmem:[%s2 + $0x98] sm:$0xff]
    %v2086 = vld [vmem:[%s4 + $0x8] sm:$0x1]
    %v2087 = vlaneseq
    %v2088 = vshrl.u32 %v2087, 7
    %v2089 = vsub.s32 0, %v2088
    %v2090 = vrot.slane %v2086, %v2089
    %2095 = vrot.lane.b32.xlu0 %v2082, 32
    %v2096 = vpop.permute.xlu0 %2095
    %2097 = vrot.lane.b32.xlu0 %v1728, 32
    %v2098 = vpop.permute.xlu0 %2097
    %2099 = vrot.lane.b32.xlu0 %v2083, 32
    %v2100 = vpop.permute.xlu0 %2099
    %2101 = vrot.lane.b32.xlu0 %v1729, 32
    %v2102 = vpop.permute.xlu0 %2101
    %2103 = vrot.lane.b32.xlu0 %v2084, 32
    %v2104 = vpop.permute.xlu0 %2103
    %2105 = vrot.lane.b32.xlu0 %v1730, 32
    %v2106 = vpop.permute.xlu0 %2105
    %2107 = vrot.lane.b32.xlu0 %v2085, 32
    %v2108 = vpop.permute.xlu0 %2107
    %2109 = vrot.lane.b32.xlu0 %v1731, 32
    %v2110 = vpop.permute.xlu0 %2109
    %v2111 = vsel %vm56, %v2096, %v2098
    %v2112 = vsel %vm56, %v2100, %v2102
    %v2113 = vsel %vm56, %v2104, %v2106
    %v2114 = vsel %vm56, %v2108, %v2110
    %v2120 = vsel %vm56, %v2074, 0
    %v2123 = vsel %vm56, %v2079, 0
    %2125 = vmatprep.subr.mxu0 0.0
    %2126 = vmatpush1.msra.mxu0 %v2111
    %2127 = vmatprep.subr.mxu0 0.0
    %2128 = vmatpush1.msra.mxu0 %v2112
    %2129 = vmatprep.subr.mxu0 0.0
    %2130 = vmatpush1.msra.mxu0 %v2113
    %2131 = vmatprep.subr.mxu0 0.0
    %2132 = vmatpush1.msra.mxu0 %v2114
    %2133 = vmatprep.subr.mxu0 0.0
    %2134 = vmatpush1.msra.mxu0 0.0
    %2135 = vmatprep.subr.mxu0 0.0
    %2136 = vmatpush1.msra.mxu0 0.0
    %2137 = vmatprep.subr.mxu0 0.0
    %2138 = vmatpush1.msra.mxu0 0.0
    %2139 = vmatprep.subr.mxu0 0.0
    %2140 = vmatpush1.msra.mxu0 0.0
    %2141 = vmatprep.subr.mxu0 0.0
    %2142 = vmatpush1.msra.mxu0 0.0
    %2143 = vmatprep.subr.mxu0 0.0
    %2144 = vmatpush1.msra.mxu0 0.0
    %2145 = vmatprep.subr.mxu0 0.0
    %2146 = vmatpush1.msra.mxu0 0.0
    %2147 = vmatprep.subr.mxu0 0.0
    %2148 = vmatpush1.msra.mxu0 0.0
    %2149 = vmatprep.subr.mxu0 0.0
    %2150 = vmatpush1.msra.mxu0 0.0
    %2151 = vmatprep.subr.mxu0 0.0
    %2152 = vmatpush1.msra.mxu0 0.0
    %2153 = vmatprep.subr.mxu0 0.0
    %2154 = vmatpush1.msra.mxu0 0.0
    %2155 = vmatprep.subr.mxu0 0.0
    %2156 = vmatpush1.msra.mxu0 0.0
    %2157 = vmatprep.subr.mxu0 0.0
    %2158 = vmatpush1.msra.mxu0 0.0
    %2159 = vmatprep.subr.mxu0 0.0
    %2160 = vmatpush1.msra.mxu0 0.0
    %2161 = vmatprep.subr.mxu0 0.0
    %2162 = vmatpush1.msra.mxu0 0.0
    %2163 = vmatprep.subr.mxu0 0.0
    %2164 = vmatpush1.msra.mxu0 0.0
    %2165 = vmatprep.subr.mxu0 0.0
    %2166 = vmatpush1.msra.mxu0 0.0
    %2167 = vmatprep.subr.mxu0 0.0
    %2168 = vmatpush1.msra.mxu0 0.0
    %2169 = vmatprep.subr.mxu0 0.0
    %2170 = vmatpush1.msra.mxu0 0.0
    %2171 = vmatprep.subr.mxu0 0.0
    %2172 = vmatpush1.msra.mxu0 0.0
    %2173 = vmatprep.subr.mxu0 0.0
    %2174 = vmatpush1.msra.mxu0 0.0
    %2175 = vmatprep.subr.mxu0 0.0
    %2176 = vmatpush1.msra.mxu0 0.0
    %2177 = vmatprep.subr.mxu0 0.0
    %2178 = vmatpush1.msra.mxu0 0.0
    %2179 = vmatprep.subr.mxu0 0.0
    %2180 = vmatpush1.msra.mxu0 0.0
    %2181 = vmatprep.subr.mxu0 0.0
    %2182 = vmatpush1.msra.mxu0 0.0
    %2183 = vmatprep.subr.mxu0 0.0
    %2184 = vmatpush1.msra.mxu0 0.0
    %2185 = vmatprep.subr.mxu0 0.0
    %2186 = vmatpush1.msra.mxu0 0.0
    %2187 = vmatprep.subr.mxu0 0.0
    %2188 = vmatpush1.msra.mxu0 0.0
    %2189 = vmatprep.mubr.f32.mxu0 0.0
    %2190 = vmatmul.mubr.f32.gmra.mrb[0].mxu0 %v2120
    %v2191 = vpop.f32.mrb[0].mxu0
    %v2192 = vadd.f32 %v2090, %v2191
    %v2193 = vpop.f32.mrb[0].mxu0
    %2194 = vmatprep.mubr.f32.mxu0 0.0
    %2195 = vmatmul.mubr.f32.gmra.mrb[0].mxu0 %v2123
    %v2196 = vpop.f32.mrb[0].mxu0
    %v2197 = vadd.f32 %v2090, %v2196
    %v2198 = vpop.f32.mrb[0].mxu0
    %2199 = vdwg.mxu0
    %v2200 = vlaneseq
    %v2201 = vshrl.u32 %v2200, 7
    %vm2202 = vcmp.le.s32.totalorder %v43, %v2201
    %v2203 = vsel %vm2202, 0.0, -1e+09
    %2205 = vrot.lane.b32.xlu0 %v2192, 96
    %v2206 = vpop.permute.xlu0 %2205
    %v2207 = vsel %vm231, %v2192, 0
    %v2209 = vsel %vm231, %v2206, 0
    %2211 = vmatprep.subr.mxu0 0.0
    %2212 = vmatpush1.xpose.msra.mxu0 %v2209
    %2213 = vmatprep.subr.mxu0 0.0
    %2214 = vmatpush1.xpose.msra.mxu0 0.0
    %2215 = vmatprep.subr.mxu0 0.0
    %2216 = vmatpush1.xpose.msra.mxu0 0.0
    %2217 = vmatprep.subr.mxu0 0.0
    %2218 = vmatpush1.xpose.msra.mxu0 0.0
    %2219 = vmatprep.subr.mxu0 0.0
    %2220 = vmatpush1.xpose.msra.mxu0 0.0
    %2221 = vmatprep.subr.mxu0 0.0
    %2222 = vmatpush1.xpose.msra.mxu0 0.0
    %2223 = vmatprep.subr.mxu0 0.0
    %2224 = vmatpush1.xpose.msra.mxu0 0.0
    %2225 = vmatprep.subr.mxu0 0.0
    %2226 = vmatpush1.xpose.msra.mxu0 0.0
    %2227 = vmatprep.subr.mxu0 0.0
    %2228 = vmatpush1.xpose.msra.mxu0 0.0
    %2229 = vmatprep.subr.mxu0 0.0
    %2230 = vmatpush1.xpose.msra.mxu0 0.0
    %2231 = vmatprep.subr.mxu0 0.0
    %2232 = vmatpush1.xpose.msra.mxu0 0.0
    %2233 = vmatprep.subr.mxu0 0.0
    %2234 = vmatpush1.xpose.msra.mxu0 0.0
    %2235 = vmatprep.subr.mxu0 0.0
    %2236 = vmatpush1.xpose.msra.mxu0 0.0
    %2237 = vmatprep.subr.mxu0 0.0
    %2238 = vmatpush1.xpose.msra.mxu0 0.0
    %2239 = vmatprep.subr.mxu0 0.0
    %2240 = vmatpush1.xpose.msra.mxu0 0.0
    %2241 = vmatprep.subr.mxu0 0.0
    %2242 = vmatpush1.xpose.msra.mxu0 0.0
    %2243 = vmatprep.subr.mxu0 0.0
    %2244 = vmatpush1.xpose.msra.mxu0 0.0
    %2245 = vmatprep.subr.mxu0 0.0
    %2246 = vmatpush1.xpose.msra.mxu0 0.0
    %2247 = vmatprep.subr.mxu0 0.0
    %2248 = vmatpush1.xpose.msra.mxu0 0.0
    %2249 = vmatprep.subr.mxu0 0.0
    %2250 = vmatpush1.xpose.msra.mxu0 0.0
    %2251 = vmatprep.subr.mxu0 0.0
    %2252 = vmatpush1.xpose.msra.mxu0 0.0
    %2253 = vmatprep.subr.mxu0 0.0
    %2254 = vmatpush1.xpose.msra.mxu0 0.0
    %2255 = vmatprep.subr.mxu0 0.0
    %2256 = vmatpush1.xpose.msra.mxu0 0.0
    %2257 = vmatprep.subr.mxu0 0.0
    %2258 = vmatpush1.xpose.msra.mxu0 0.0
    %2259 = vmatprep.subr.mxu0 0.0
    %2260 = vmatpush1.xpose.msra.mxu0 0.0
    %2261 = vmatprep.subr.mxu0 0.0
    %2262 = vmatpush1.xpose.msra.mxu0 0.0
    %2263 = vmatprep.subr.mxu0 0.0
    %2264 = vmatpush1.xpose.msra.mxu0 0.0
    %2265 = vmatprep.subr.mxu0 0.0
    %2266 = vmatpush1.xpose.msra.mxu0 0.0
    %2267 = vmatprep.subr.mxu0 0.0
    %2268 = vmatpush1.xpose.msra.mxu0 0.0
    %2269 = vmatprep.subr.mxu0 0.0
    %2270 = vmatpush1.xpose.msra.mxu0 0.0
    %2271 = vmatprep.subr.mxu0 0.0
    %2272 = vmatpush1.xpose.msra.mxu0 0.0
    %2273 = vmatprep.subr.mxu0 0.0
    %2274 = vmatpush1.xpose.msra.mxu0 0.0
    %2275 = vmatprep.mubr.f32.mxu0 0.0
    %2276 = vmatmul.mubr.f32.gmra.mrb[0].mxu0 %v2207
    %v2277 = vpop.f32.mrb[0].mxu0
    %v2278 = vadd.f32 %v2203, %v2277
    %v2279 = vpop.f32.mrb[0].mxu0
    %2280 = vdwg.mxu0
    %v2281 = vsel %vm231, %v2278, -inf
    %2282 = vmax.xlane.f32.xlu0 %v2281
    %v2283 = vpop.xlane.xlu0 %2282
    %v2284 = vsub.f32 %v2278, %v2283
    %v2285 = vmul.f32 %v2284, 1.442695
    %v2286 = vpow.pop %v2285
    %v2287 = vsel %vm231, %v2286, 0.0
    %2288 = vadd.xlane.f32.xlu0 %v2287
    %v2289 = vpop.xlane.xlu0 %2288
    %2290 = vrot.lane.b32.xlu0 %v2192, 64
    %v2291 = vpop.permute.xlu0 %2290
    %v2294 = vsel %vm231, %v2286, 0
    %2296 = vmatprep.subr.mxu0 0.0
    %2297 = vmatpush1.msra.mxu0 %v2291
    %2298 = vmatprep.subr.mxu0 0.0
    %2299 = vmatpush1.msra.mxu0 0.0
    %2300 = vmatprep.subr.mxu0 0.0
    %2301 = vmatpush1.msra.mxu0 0.0
    %2302 = vmatprep.subr.mxu0 0.0
    %2303 = vmatpush1.msra.mxu0 0.0
    %2304 = vmatprep.subr.mxu0 0.0
    %2305 = vmatpush1.msra.mxu0 0.0
    %2306 = vmatprep.subr.mxu0 0.0
    %2307 = vmatpush1.msra.mxu0 0.0
    %2308 = vmatprep.subr.mxu0 0.0
    %2309 = vmatpush1.msra.mxu0 0.0
    %2310 = vmatprep.subr.mxu0 0.0
    %2311 = vmatpush1.msra.mxu0 0.0
    %2312 = vmatprep.subr.mxu0 0.0
    %2313 = vmatpush1.msra.mxu0 0.0
    %2314 = vmatprep.subr.mxu0 0.0
    %2315 = vmatpush1.msra.mxu0 0.0
    %2316 = vmatprep.subr.mxu0 0.0
    %2317 = vmatpush1.msra.mxu0 0.0
    %2318 = vmatprep.subr.mxu0 0.0
    %2319 = vmatpush1.msra.mxu0 0.0
    %2320 = vmatprep.subr.mxu0 0.0
    %2321 = vmatpush1.msra.mxu0 0.0
    %2322 = vmatprep.subr.mxu0 0.0
    %2323 = vmatpush1.msra.mxu0 0.0
    %2324 = vmatprep.subr.mxu0 0.0
    %2325 = vmatpush1.msra.mxu0 0.0
    %2326 = vmatprep.subr.mxu0 0.0
    %2327 = vmatpush1.msra.mxu0 0.0
    %2328 = vmatprep.subr.mxu0 0.0
    %2329 = vmatpush1.msra.mxu0 0.0
    %2330 = vmatprep.subr.mxu0 0.0
    %2331 = vmatpush1.msra.mxu0 0.0
    %2332 = vmatprep.subr.mxu0 0.0
    %2333 = vmatpush1.msra.mxu0 0.0
    %2334 = vmatprep.subr.mxu0 0.0
    %2335 = vmatpush1.msra.mxu0 0.0
    %2336 = vmatprep.subr.mxu0 0.0
    %2337 = vmatpush1.msra.mxu0 0.0
    %2338 = vmatprep.subr.mxu0 0.0
    %2339 = vmatpush1.msra.mxu0 0.0
    %2340 = vmatprep.subr.mxu0 0.0
    %2341 = vmatpush1.msra.mxu0 0.0
    %2342 = vmatprep.subr.mxu0 0.0
    %2343 = vmatpush1.msra.mxu0 0.0
    %2344 = vmatprep.subr.mxu0 0.0
    %2345 = vmatpush1.msra.mxu0 0.0
    %2346 = vmatprep.subr.mxu0 0.0
    %2347 = vmatpush1.msra.mxu0 0.0
    %2348 = vmatprep.subr.mxu0 0.0
    %2349 = vmatpush1.msra.mxu0 0.0
    %2350 = vmatprep.subr.mxu0 0.0
    %2351 = vmatpush1.msra.mxu0 0.0
    %2352 = vmatprep.subr.mxu0 0.0
    %2353 = vmatpush1.msra.mxu0 0.0
    %2354 = vmatprep.subr.mxu0 0.0
    %2355 = vmatpush1.msra.mxu0 0.0
    %2356 = vmatprep.subr.mxu0 0.0
    %2357 = vmatpush1.msra.mxu0 0.0
    %2358 = vmatprep.subr.mxu0 0.0
    %2359 = vmatpush1.msra.mxu0 0.0
    %2360 = vmatprep.mubr.f32.mxu0 0.0
    %2361 = vmatmul.mubr.f32.gmra.mrb[0].mxu0 %v2294
    %v2362 = vpop.f32.mrb[0].mxu0
    %v2363 = vadd.f32 0.0, %v2362
    %v2364 = vpop.f32.mrb[0].mxu0
    %2365 = vdwg.mxu0
    %v2366 = vrcp.pop %v2289
    %v2367 = vmul.f32 %v2363, %v2366
    %2368 = vrot.lane.b32.xlu0 %v2192, 120
    %v2369 = vpop.permute.xlu0 %2368
    %2370 = vrot.lane.b32.xlu0 %v2192, 88
    %v2371 = vpop.permute.xlu0 %2370
    %v2372 = vsel %vm231, %v2369, 0
    %v2374 = vsel %vm231, %v2371, 0
    %2376 = vmatprep.subr.mxu0 0.0
    %2377 = vmatpush1.xpose.msra.mxu0 %v2374
    %2378 = vmatprep.subr.mxu0 0.0
    %2379 = vmatpush1.xpose.msra.mxu0 0.0
    %2380 = vmatprep.subr.mxu0 0.0
    %2381 = vmatpush1.xpose.msra.mxu0 0.0
    %2382 = vmatprep.subr.mxu0 0.0
    %2383 = vmatpush1.xpose.msra.mxu0 0.0
    %2384 = vmatprep.subr.mxu0 0.0
    %2385 = vmatpush1.xpose.msra.mxu0 0.0
    %2386 = vmatprep.subr.mxu0 0.0
    %2387 = vmatpush1.xpose.msra.mxu0 0.0
    %2388 = vmatprep.subr.mxu0 0.0
    %2389 = vmatpush1.xpose.msra.mxu0 0.0
    %2390 = vmatprep.subr.mxu0 0.0
    %2391 = vmatpush1.xpose.msra.mxu0 0.0
    %2392 = vmatprep.subr.mxu0 0.0
    %2393 = vmatpush1.xpose.msra.mxu0 0.0
    %2394 = vmatprep.subr.mxu0 0.0
    %2395 = vmatpush1.xpose.msra.mxu0 0.0
    %2396 = vmatprep.subr.mxu0 0.0
    %2397 = vmatpush1.xpose.msra.mxu0 0.0
    %2398 = vmatprep.subr.mxu0 0.0
    %2399 = vmatpush1.xpose.msra.mxu0 0.0
    %2400 = vmatprep.subr.mxu0 0.0
    %2401 = vmatpush1.xpose.msra.mxu0 0.0
    %2402 = vmatprep.subr.mxu0 0.0
    %2403 = vmatpush1.xpose.msra.mxu0 0.0
    %2404 = vmatprep.subr.mxu0 0.0
    %2405 = vmatpush1.xpose.msra.mxu0 0.0
    %2406 = vmatprep.subr.mxu0 0.0
    %2407 = vmatpush1.xpose.msra.mxu0 0.0
    %2408 = vmatprep.subr.mxu0 0.0
    %2409 = vmatpush1.xpose.msra.mxu0 0.0
    %2410 = vmatprep.subr.mxu0 0.0
    %2411 = vmatpush1.xpose.msra.mxu0 0.0
    %2412 = vmatprep.subr.mxu0 0.0
    %2413 = vmatpush1.xpose.msra.mxu0 0.0
    %2414 = vmatprep.subr.mxu0 0.0
    %2415 = vmatpush1.xpose.msra.mxu0 0.0
    %2416 = vmatprep.subr.mxu0 0.0
    %2417 = vmatpush1.xpose.msra.mxu0 0.0
    %2418 = vmatprep.subr.mxu0 0.0
    %2419 = vmatpush1.xpose.msra.mxu0 0.0
    %2420 = vmatprep.subr.mxu0 0.0
    %2421 = vmatpush1.xpose.msra.mxu0 0.0
    %2422 = vmatprep.subr.mxu0 0.0
    %2423 = vmatpush1.xpose.msra.mxu0 0.0
    %2424 = vmatprep.subr.mxu0 0.0
    %2425 = vmatpush1.xpose.msra.mxu0 0.0
    %2426 = vmatprep.subr.mxu0 0.0
    %2427 = vmatpush1.xpose.msra.mxu0 0.0
    %2428 = vmatprep.subr.mxu0 0.0
    %2429 = vmatpush1.xpose.msra.mxu0 0.0
    %2430 = vmatprep.subr.mxu0 0.0
    %2431 = vmatpush1.xpose.msra.mxu0 0.0
    %2432 = vmatprep.subr.mxu0 0.0
    %2433 = vmatpush1.xpose.msra.mxu0 0.0
    %2434 = vmatprep.subr.mxu0 0.0
    %2435 = vmatpush1.xpose.msra.mxu0 0.0
    %2436 = vmatprep.subr.mxu0 0.0
    %2437 = vmatpush1.xpose.msra.mxu0 0.0
    %2438 = vmatprep.subr.mxu0 0.0
    %2439 = vmatpush1.xpose.msra.mxu0 0.0
    %2440 = vmatprep.mubr.f32.mxu0 0.0
    %2441 = vmatmul.mubr.f32.gmra.mrb[0].mxu0 %v2372
    %v2442 = vpop.f32.mrb[0].mxu0
    %v2443 = vadd.f32 %v2203, %v2442
    %v2444 = vpop.f32.mrb[0].mxu0
    %2445 = vdwg.mxu0
    %v2446 = vsel %vm231, %v2443, -inf
    %2447 = vmax.xlane.f32.xlu0 %v2446
    %v2448 = vpop.xlane.xlu0 %2447
    %v2449 = vsub.f32 %v2443, %v2448
    %v2450 = vmul.f32 %v2449, 1.442695
    %v2451 = vpow.pop %v2450
    %v2452 = vsel %vm231, %v2451, 0.0
    %2453 = vadd.xlane.f32.xlu0 %v2452
    %v2454 = vpop.xlane.xlu0 %2453
    %2455 = vrot.lane.b32.xlu0 %v2192, 56
    %v2456 = vpop.permute.xlu0 %2455
    %v2459 = vsel %vm231, %v2451, 0
    %2461 = vmatprep.subr.mxu0 0.0
    %2462 = vmatpush1.msra.mxu0 %v2456
    %2463 = vmatprep.subr.mxu0 0.0
    %2464 = vmatpush1.msra.mxu0 0.0
    %2465 = vmatprep.subr.mxu0 0.0
    %2466 = vmatpush1.msra.mxu0 0.0
    %2467 = vmatprep.subr.mxu0 0.0
    %2468 = vmatpush1.msra.mxu0 0.0
    %2469 = vmatprep.subr.mxu0 0.0
    %2470 = vmatpush1.msra.mxu0 0.0
    %2471 = vmatprep.subr.mxu0 0.0
    %2472 = vmatpush1.msra.mxu0 0.0
    %2473 = vmatprep.subr.mxu0 0.0
    %2474 = vmatpush1.msra.mxu0 0.0
    %2475 = vmatprep.subr.mxu0 0.0
    %2476 = vmatpush1.msra.mxu0 0.0
    %2477 = vmatprep.subr.mxu0 0.0
    %2478 = vmatpush1.msra.mxu0 0.0
    %2479 = vmatprep.subr.mxu0 0.0
    %2480 = vmatpush1.msra.mxu0 0.0
    %2481 = vmatprep.subr.mxu0 0.0
    %2482 = vmatpush1.msra.mxu0 0.0
    %2483 = vmatprep.subr.mxu0 0.0
    %2484 = vmatpush1.msra.mxu0 0.0
    %2485 = vmatprep.subr.mxu0 0.0
    %2486 = vmatpush1.msra.mxu0 0.0
    %2487 = vmatprep.subr.mxu0 0.0
    %2488 = vmatpush1.msra.mxu0 0.0
    %2489 = vmatprep.subr.mxu0 0.0
    %2490 = vmatpush1.msra.mxu0 0.0
    %2491 = vmatprep.subr.mxu0 0.0
    %2492 = vmatpush1.msra.mxu0 0.0
    %2493 = vmatprep.subr.mxu0 0.0
    %2494 = vmatpush1.msra.mxu0 0.0
    %2495 = vmatprep.subr.mxu0 0.0
    %2496 = vmatpush1.msra.mxu0 0.0
    %2497 = vmatprep.subr.mxu0 0.0
    %2498 = vmatpush1.msra.mxu0 0.0
    %2499 = vmatprep.subr.mxu0 0.0
    %2500 = vmatpush1.msra.mxu0 0.0
    %2501 = vmatprep.subr.mxu0 0.0
    %2502 = vmatpush1.msra.mxu0 0.0
    %2503 = vmatprep.subr.mxu0 0.0
    %2504 = vmatpush1.msra.mxu0 0.0
    %2505 = vmatprep.subr.mxu0 0.0
    %2506 = vmatpush1.msra.mxu0 0.0
    %2507 = vmatprep.subr.mxu0 0.0
    %2508 = vmatpush1.msra.mxu0 0.0
    %2509 = vmatprep.subr.mxu0 0.0
    %2510 = vmatpush1.msra.mxu0 0.0
    %2511 = vmatprep.subr.mxu0 0.0
    %2512 = vmatpush1.msra.mxu0 0.0
    %2513 = vmatprep.subr.mxu0 0.0
    %2514 = vmatpush1.msra.mxu0 0.0
    %2515 = vmatprep.subr.mxu0 0.0
    %2516 = vmatpush1.msra.mxu0 0.0
    %2517 = vmatprep.subr.mxu0 0.0
    %2518 = vmatpush1.msra.mxu0 0.0
    %2519 = vmatprep.subr.mxu0 0.0
    %2520 = vmatpush1.msra.mxu0 0.0
    %2521 = vmatprep.subr.mxu0 0.0
    %2522 = vmatpush1.msra.mxu0 0.0
    %2523 = vmatprep.subr.mxu0 0.0
    %2524 = vmatpush1.msra.mxu0 0.0
    %2525 = vmatprep.mubr.f32.mxu0 0.0
    %2526 = vmatmul.mubr.f32.gmra.mrb[0].mxu0 %v2459
    %v2527 = vpop.f32.mrb[0].mxu0
    %v2528 = vadd.f32 0.0, %v2527
    %v2529 = vpop.f32.mrb[0].mxu0
    %2530 = vdwg.mxu0
    %v2531 = vrcp.pop %v2454
    %v2532 = vmul.f32 %v2528, %v2531
    %2533 = vrot.lane.b32.xlu0 %v2192, 112
    %v2534 = vpop.permute.xlu0 %2533
    %2535 = vrot.lane.b32.xlu0 %v2192, 80
    %v2536 = vpop.permute.xlu0 %2535
    %v2537 = vsel %vm231, %v2534, 0
    %v2539 = vsel %vm231, %v2536, 0
    %2541 = vmatprep.subr.mxu0 0.0
    %2542 = vmatpush1.xpose.msra.mxu0 %v2539
    %2543 = vmatprep.subr.mxu0 0.0
    %2544 = vmatpush1.xpose.msra.mxu0 0.0
    %2545 = vmatprep.subr.mxu0 0.0
    %2546 = vmatpush1.xpose.msra.mxu0 0.0
    %2547 = vmatprep.subr.mxu0 0.0
    %2548 = vmatpush1.xpose.msra.mxu0 0.0
    %2549 = vmatprep.subr.mxu0 0.0
    %2550 = vmatpush1.xpose.msra.mxu0 0.0
    %2551 = vmatprep.subr.mxu0 0.0
    %2552 = vmatpush1.xpose.msra.mxu0 0.0
    %2553 = vmatprep.subr.mxu0 0.0
    %2554 = vmatpush1.xpose.msra.mxu0 0.0
    %2555 = vmatprep.subr.mxu0 0.0
    %2556 = vmatpush1.xpose.msra.mxu0 0.0
    %2557 = vmatprep.subr.mxu0 0.0
    %2558 = vmatpush1.xpose.msra.mxu0 0.0
    %2559 = vmatprep.subr.mxu0 0.0
    %2560 = vmatpush1.xpose.msra.mxu0 0.0
    %2561 = vmatprep.subr.mxu0 0.0
    %2562 = vmatpush1.xpose.msra.mxu0 0.0
    %2563 = vmatprep.subr.mxu0 0.0
    %2564 = vmatpush1.xpose.msra.mxu0 0.0
    %2565 = vmatprep.subr.mxu0 0.0
    %2566 = vmatpush1.xpose.msra.mxu0 0.0
    %2567 = vmatprep.subr.mxu0 0.0
    %2568 = vmatpush1.xpose.msra.mxu0 0.0
    %2569 = vmatprep.subr.mxu0 0.0
    %2570 = vmatpush1.xpose.msra.mxu0 0.0
    %2571 = vmatprep.subr.mxu0 0.0
    %2572 = vmatpush1.xpose.msra.mxu0 0.0
    %2573 = vmatprep.subr.mxu0 0.0
    %2574 = vmatpush1.xpose.msra.mxu0 0.0
    %2575 = vmatprep.subr.mxu0 0.0
    %2576 = vmatpush1.xpose.msra.mxu0 0.0
    %2577 = vmatprep.subr.mxu0 0.0
    %2578 = vmatpush1.xpose.msra.mxu0 0.0
    %2579 = vmatprep.subr.mxu0 0.0
    %2580 = vmatpush1.xpose.msra.mxu0 0.0
    %2581 = vmatprep.subr.mxu0 0.0
    %2582 = vmatpush1.xpose.msra.mxu0 0.0
    %2583 = vmatprep.subr.mxu0 0.0
    %2584 = vmatpush1.xpose.msra.mxu0 0.0
    %2585 = vmatprep.subr.mxu0 0.0
    %2586 = vmatpush1.xpose.msra.mxu0 0.0
    %2587 = vmatprep.subr.mxu0 0.0
    %2588 = vmatpush1.xpose.msra.mxu0 0.0
    %2589 = vmatprep.subr.mxu0 0.0
    %2590 = vmatpush1.xpose.msra.mxu0 0.0
    %2591 = vmatprep.subr.mxu0 0.0
    %2592 = vmatpush1.xpose.msra.mxu0 0.0
    %2593 = vmatprep.subr.mxu0 0.0
    %2594 = vmatpush1.xpose.msra.mxu0 0.0
    %2595 = vmatprep.subr.mxu0 0.0
    %2596 = vmatpush1.xpose.msra.mxu0 0.0
    %2597 = vmatprep.subr.mxu0 0.0
    %2598 = vmatpush1.xpose.msra.mxu0 0.0
    %2599 = vmatprep.subr.mxu0 0.0
    %2600 = vmatpush1.xpose.msra.mxu0 0.0
    %2601 = vmatprep.subr.mxu0 0.0
    %2602 = vmatpush1.xpose.msra.mxu0 0.0
    %2603 = vmatprep.subr.mxu0 0.0
    %2604 = vmatpush1.xpose.msra.mxu0 0.0
    %2605 = vmatprep.mubr.f32.mxu0 0.0
    %2606 = vmatmul.mubr.f32.gmra.mrb[0].mxu0 %v2537
    %v2607 = vpop.f32.mrb[0].mxu0
    %v2608 = vadd.f32 %v2203, %v2607
    %v2609 = vpop.f32.mrb[0].mxu0
    %2610 = vdwg.mxu0
    %v2611 = vsel %vm231, %v2608, -inf
    %2612 = vmax.xlane.f32.xlu0 %v2611
    %v2613 = vpop.xlane.xlu0 %2612
    %v2614 = vsub.f32 %v2608, %v2613
    %v2615 = vmul.f32 %v2614, 1.442695
    %v2616 = vpow.pop %v2615
    %v2617 = vsel %vm231, %v2616, 0.0
    %2618 = vadd.xlane.f32.xlu0 %v2617
    %v2619 = vpop.xlane.xlu0 %2618
    %2620 = vrot.lane.b32.xlu0 %v2192, 48
    %v2621 = vpop.permute.xlu0 %2620
    %v2624 = vsel %vm231, %v2616, 0
    %2626 = vmatprep.subr.mxu0 0.0
    %2627 = vmatpush1.msra.mxu0 %v2621
    %2628 = vmatprep.subr.mxu0 0.0
    %2629 = vmatpush1.msra.mxu0 0.0
    %2630 = vmatprep.subr.mxu0 0.0
    %2631 = vmatpush1.msra.mxu0 0.0
    %2632 = vmatprep.subr.mxu0 0.0
    %2633 = vmatpush1.msra.mxu0 0.0
    %2634 = vmatprep.subr.mxu0 0.0
    %2635 = vmatpush1.msra.mxu0 0.0
    %2636 = vmatprep.subr.mxu0 0.0
    %2637 = vmatpush1.msra.mxu0 0.0
    %2638 = vmatprep.subr.mxu0 0.0
    %2639 = vmatpush1.msra.mxu0 0.0
    %2640 = vmatprep.subr.mxu0 0.0
    %2641 = vmatpush1.msra.mxu0 0.0
    %2642 = vmatprep.subr.mxu0 0.0
    %2643 = vmatpush1.msra.mxu0 0.0
    %2644 = vmatprep.subr.mxu0 0.0
    %2645 = vmatpush1.msra.mxu0 0.0
    %2646 = vmatprep.subr.mxu0 0.0
    %2647 = vmatpush1.msra.mxu0 0.0
    %2648 = vmatprep.subr.mxu0 0.0
    %2649 = vmatpush1.msra.mxu0 0.0
    %2650 = vmatprep.subr.mxu0 0.0
    %2651 = vmatpush1.msra.mxu0 0.0
    %2652 = vmatprep.subr.mxu0 0.0
    %2653 = vmatpush1.msra.mxu0 0.0
    %2654 = vmatprep.subr.mxu0 0.0
    %2655 = vmatpush1.msra.mxu0 0.0
    %2656 = vmatprep.subr.mxu0 0.0
    %2657 = vmatpush1.msra.mxu0 0.0
    %2658 = vmatprep.subr.mxu0 0.0
    %2659 = vmatpush1.msra.mxu0 0.0
    %2660 = vmatprep.subr.mxu0 0.0
    %2661 = vmatpush1.msra.mxu0 0.0
    %2662 = vmatprep.subr.mxu0 0.0
    %2663 = vmatpush1.msra.mxu0 0.0
    %2664 = vmatprep.subr.mxu0 0.0
    %2665 = vmatpush1.msra.mxu0 0.0
    %2666 = vmatprep.subr.mxu0 0.0
    %2667 = vmatpush1.msra.mxu0 0.0
    %2668 = vmatprep.subr.mxu0 0.0
    %2669 = vmatpush1.msra.mxu0 0.0
    %2670 = vmatprep.subr.mxu0 0.0
    %2671 = vmatpush1.msra.mxu0 0.0
    %2672 = vmatprep.subr.mxu0 0.0
    %2673 = vmatpush1.msra.mxu0 0.0
    %2674 = vmatprep.subr.mxu0 0.0
    %2675 = vmatpush1.msra.mxu0 0.0
    %2676 = vmatprep.subr.mxu0 0.0
    %2677 = vmatpush1.msra.mxu0 0.0
    %2678 = vmatprep.subr.mxu0 0.0
    %2679 = vmatpush1.msra.mxu0 0.0
    %2680 = vmatprep.subr.mxu0 0.0
    %2681 = vmatpush1.msra.mxu0 0.0
    %2682 = vmatprep.subr.mxu0 0.0
    %2683 = vmatpush1.msra.mxu0 0.0
    %2684 = vmatprep.subr.mxu0 0.0
    %2685 = vmatpush1.msra.mxu0 0.0
    %2686 = vmatprep.subr.mxu0 0.0
    %2687 = vmatpush1.msra.mxu0 0.0
    %2688 = vmatprep.subr.mxu0 0.0
    %2689 = vmatpush1.msra.mxu0 0.0
    %2690 = vmatprep.mubr.f32.mxu0 0.0
    %2691 = vmatmul.mubr.f32.gmra.mrb[0].mxu0 %v2624
    %v2692 = vpop.f32.mrb[0].mxu0
    %v2693 = vadd.f32 0.0, %v2692
    %v2694 = vpop.f32.mrb[0].mxu0
    %2695 = vdwg.mxu0
    %v2696 = vrcp.pop %v2619
    %v2697 = vmul.f32 %v2693, %v2696
    %2698 = vrot.lane.b32.xlu0 %v2192, 104
    %v2699 = vpop.permute.xlu0 %2698
    %2700 = vrot.lane.b32.xlu0 %v2192, 72
    %v2701 = vpop.permute.xlu0 %2700
    %v2702 = vsel %vm231, %v2699, 0
    %v2704 = vsel %vm231, %v2701, 0
    %2706 = vmatprep.subr.mxu0 0.0
    %2707 = vmatpush1.xpose.msra.mxu0 %v2704
    %2708 = vmatprep.subr.mxu0 0.0
    %2709 = vmatpush1.xpose.msra.mxu0 0.0
    %2710 = vmatprep.subr.mxu0 0.0
    %2711 = vmatpush1.xpose.msra.mxu0 0.0
    %2712 = vmatprep.subr.mxu0 0.0
    %2713 = vmatpush1.xpose.msra.mxu0 0.0
    %2714 = vmatprep.subr.mxu0 0.0
    %2715 = vmatpush1.xpose.msra.mxu0 0.0
    %2716 = vmatprep.subr.mxu0 0.0
    %2717 = vmatpush1.xpose.msra.mxu0 0.0
    %2718 = vmatprep.subr.mxu0 0.0
    %2719 = vmatpush1.xpose.msra.mxu0 0.0
    %2720 = vmatprep.subr.mxu0 0.0
    %2721 = vmatpush1.xpose.msra.mxu0 0.0
    %2722 = vmatprep.subr.mxu0 0.0
    %2723 = vmatpush1.xpose.msra.mxu0 0.0
    %2724 = vmatprep.subr.mxu0 0.0
    %2725 = vmatpush1.xpose.msra.mxu0 0.0
    %2726 = vmatprep.subr.mxu0 0.0
    %2727 = vmatpush1.xpose.msra.mxu0 0.0
    %2728 = vmatprep.subr.mxu0 0.0
    %2729 = vmatpush1.xpose.msra.mxu0 0.0
    %2730 = vmatprep.subr.mxu0 0.0
    %2731 = vmatpush1.xpose.msra.mxu0 0.0
    %2732 = vmatprep.subr.mxu0 0.0
    %2733 = vmatpush1.xpose.msra.mxu0 0.0
    %2734 = vmatprep.subr.mxu0 0.0
    %2735 = vmatpush1.xpose.msra.mxu0 0.0
    %2736 = vmatprep.subr.mxu0 0.0
    %2737 = vmatpush1.xpose.msra.mxu0 0.0
    %2738 = vmatprep.subr.mxu0 0.0
    %2739 = vmatpush1.xpose.msra.mxu0 0.0
    %2740 = vmatprep.subr.mxu0 0.0
    %2741 = vmatpush1.xpose.msra.mxu0 0.0
    %2742 = vmatprep.subr.mxu0 0.0
    %2743 = vmatpush1.xpose.msra.mxu0 0.0
    %2744 = vmatprep.subr.mxu0 0.0
    %2745 = vmatpush1.xpose.msra.mxu0 0.0
    %2746 = vmatprep.subr.mxu0 0.0
    %2747 = vmatpush1.xpose.msra.mxu0 0.0
    %2748 = vmatprep.subr.mxu0 0.0
    %2749 = vmatpush1.xpose.msra.mxu0 0.0
    %2750 = vmatprep.subr.mxu0 0.0
    %2751 = vmatpush1.xpose.msra.mxu0 0.0
    %2752 = vmatprep.subr.mxu0 0.0
    %2753 = vmatpush1.xpose.msra.mxu0 0.0
    %2754 = vmatprep.subr.mxu0 0.0
    %2755 = vmatpush1.xpose.msra.mxu0 0.0
    %2756 = vmatprep.subr.mxu0 0.0
    %2757 = vmatpush1.xpose.msra.mxu0 0.0
    %2758 = vmatprep.subr.mxu0 0.0
    %2759 = vmatpush1.xpose.msra.mxu0 0.0
    %2760 = vmatprep.subr.mxu0 0.0
    %2761 = vmatpush1.xpose.msra.mxu0 0.0
    %2762 = vmatprep.subr.mxu0 0.0
    %2763 = vmatpush1.xpose.msra.mxu0 0.0
    %2764 = vmatprep.subr.mxu0 0.0
    %2765 = vmatpush1.xpose.msra.mxu0 0.0
    %2766 = vmatprep.subr.mxu0 0.0
    %2767 = vmatpush1.xpose.msra.mxu0 0.0
    %2768 = vmatprep.subr.mxu0 0.0
    %2769 = vmatpush1.xpose.msra.mxu0 0.0
    %2770 = vmatprep.mubr.f32.mxu0 0.0
    %2771 = vmatmul.mubr.f32.gmra.mrb[0].mxu0 %v2702
    %v2772 = vpop.f32.mrb[0].mxu0
    %v2773 = vadd.f32 %v2203, %v2772
    %v2774 = vpop.f32.mrb[0].mxu0
    %2775 = vdwg.mxu0
    %v2776 = vsel %vm231, %v2773, -inf
    %2777 = vmax.xlane.f32.xlu0 %v2776
    %v2778 = vpop.xlane.xlu0 %2777
    %v2779 = vsub.f32 %v2773, %v2778
    %v2780 = vmul.f32 %v2779, 1.442695
    %v2781 = vpow.pop %v2780
    %v2782 = vsel %vm231, %v2781, 0.0
    %2783 = vadd.xlane.f32.xlu0 %v2782
    %v2784 = vpop.xlane.xlu0 %2783
    %2785 = vrot.lane.b32.xlu0 %v2192, 40
    %v2786 = vpop.permute.xlu0 %2785
    %v2789 = vsel %vm231, %v2781, 0
    %2791 = vmatprep.subr.mxu0 0.0
    %2792 = vmatpush1.msra.mxu0 %v2786
    %2793 = vmatprep.subr.mxu0 0.0
    %2794 = vmatpush1.msra.mxu0 0.0
    %2795 = vmatprep.subr.mxu0 0.0
    %2796 = vmatpush1.msra.mxu0 0.0
    %2797 = vmatprep.subr.mxu0 0.0
    %2798 = vmatpush1.msra.mxu0 0.0
    %2799 = vmatprep.subr.mxu0 0.0
    %2800 = vmatpush1.msra.mxu0 0.0
    %2801 = vmatprep.subr.mxu0 0.0
    %2802 = vmatpush1.msra.mxu0 0.0
    %2803 = vmatprep.subr.mxu0 0.0
    %2804 = vmatpush1.msra.mxu0 0.0
    %2805 = vmatprep.subr.mxu0 0.0
    %2806 = vmatpush1.msra.mxu0 0.0
    %2807 = vmatprep.subr.mxu0 0.0
    %2808 = vmatpush1.msra.mxu0 0.0
    %2809 = vmatprep.subr.mxu0 0.0
    %2810 = vmatpush1.msra.mxu0 0.0
    %2811 = vmatprep.subr.mxu0 0.0
    %2812 = vmatpush1.msra.mxu0 0.0
    %2813 = vmatprep.subr.mxu0 0.0
    %2814 = vmatpush1.msra.mxu0 0.0
    %2815 = vmatprep.subr.mxu0 0.0
    %2816 = vmatpush1.msra.mxu0 0.0
    %2817 = vmatprep.subr.mxu0 0.0
    %2818 = vmatpush1.msra.mxu0 0.0
    %2819 = vmatprep.subr.mxu0 0.0
    %2820 = vmatpush1.msra.mxu0 0.0
    %2821 = vmatprep.subr.mxu0 0.0
    %2822 = vmatpush1.msra.mxu0 0.0
    %2823 = vmatprep.subr.mxu0 0.0
    %2824 = vmatpush1.msra.mxu0 0.0
    %2825 = vmatprep.subr.mxu0 0.0
    %2826 = vmatpush1.msra.mxu0 0.0
    %2827 = vmatprep.subr.mxu0 0.0
    %2828 = vmatpush1.msra.mxu0 0.0
    %2829 = vmatprep.subr.mxu0 0.0
    %2830 = vmatpush1.msra.mxu0 0.0
    %2831 = vmatprep.subr.mxu0 0.0
    %2832 = vmatpush1.msra.mxu0 0.0
    %2833 = vmatprep.subr.mxu0 0.0
    %2834 = vmatpush1.msra.mxu0 0.0
    %2835 = vmatprep.subr.mxu0 0.0
    %2836 = vmatpush1.msra.mxu0 0.0
    %2837 = vmatprep.subr.mxu0 0.0
    %2838 = vmatpush1.msra.mxu0 0.0
    %2839 = vmatprep.subr.mxu0 0.0
    %2840 = vmatpush1.msra.mxu0 0.0
    %2841 = vmatprep.subr.mxu0 0.0
    %2842 = vmatpush1.msra.mxu0 0.0
    %2843 = vmatprep.subr.mxu0 0.0
    %2844 = vmatpush1.msra.mxu0 0.0
    %2845 = vmatprep.subr.mxu0 0.0
    %2846 = vmatpush1.msra.mxu0 0.0
    %2847 = vmatprep.subr.mxu0 0.0
    %2848 = vmatpush1.msra.mxu0 0.0
    %2849 = vmatprep.subr.mxu0 0.0
    %2850 = vmatpush1.msra.mxu0 0.0
    %2851 = vmatprep.subr.mxu0 0.0
    %2852 = vmatpush1.msra.mxu0 0.0
    %2853 = vmatprep.subr.mxu0 0.0
    %2854 = vmatpush1.msra.mxu0 0.0
    %2855 = vmatprep.mubr.f32.mxu0 0.0
    %2856 = vmatmul.mubr.f32.gmra.mrb[0].mxu0 %v2789
    %v2857 = vpop.f32.mrb[0].mxu0
    %v2858 = vadd.f32 0.0, %v2857
    %v2859 = vpop.f32.mrb[0].mxu0
    %2860 = vdwg.mxu0
    %v2861 = vrcp.pop %v2784
    %v2862 = vmul.f32 %v2858, %v2861
    %2864 = vrot.lane.b32.xlu0 %v2532, 8
    %v2865 = vpop.permute.xlu0 %2864
    %2868 = vrot.lane.b32.xlu0 %v2697, 16
    %v2869 = vpop.permute.xlu0 %2868
    %2872 = vrot.lane.b32.xlu0 %v2862, 24
    %v2873 = vpop.permute.xlu0 %2872
    %v2875 = vsel %vm231, %v2367, %v2865
    %v2876 = vsel %vm901, %v2875, %v2869
    %v2877 = vsel %vm903, %v2876, %v2873
    %2879 = vrot.lane.b32.xlu0 %v2197, 96
    %v2880 = vpop.permute.xlu0 %2879
    %v2881 = vsel %vm231, %v2197, 0
    %v2883 = vsel %vm231, %v2880, 0
    %2885 = vmatprep.subr.mxu0 0.0
    %2886 = vmatpush1.xpose.msra.mxu0 %v2883
    %2887 = vmatprep.subr.mxu0 0.0
    %2888 = vmatpush1.xpose.msra.mxu0 0.0
    %2889 = vmatprep.subr.mxu0 0.0
    %2890 = vmatpush1.xpose.msra.mxu0 0.0
    %2891 = vmatprep.subr.mxu0 0.0
    %2892 = vmatpush1.xpose.msra.mxu0 0.0
    %2893 = vmatprep.subr.mxu0 0.0
    %2894 = vmatpush1.xpose.msra.mxu0 0.0
    %2895 = vmatprep.subr.mxu0 0.0
    %2896 = vmatpush1.xpose.msra.mxu0 0.0
    %2897 = vmatprep.subr.mxu0 0.0
    %2898 = vmatpush1.xpose.msra.mxu0 0.0
    %2899 = vmatprep.subr.mxu0 0.0
    %2900 = vmatpush1.xpose.msra.mxu0 0.0
    %2901 = vmatprep.subr.mxu0 0.0
    %2902 = vmatpush1.xpose.msra.mxu0 0.0
    %2903 = vmatprep.subr.mxu0 0.0
    %2904 = vmatpush1.xpose.msra.mxu0 0.0
    %2905 = vmatprep.subr.mxu0 0.0
    %2906 = vmatpush1.xpose.msra.mxu0 0.0
    %2907 = vmatprep.subr.mxu0 0.0
    %2908 = vmatpush1.xpose.msra.mxu0 0.0
    %2909 = vmatprep.subr.mxu0 0.0
    %2910 = vmatpush1.xpose.msra.mxu0 0.0
    %2911 = vmatprep.subr.mxu0 0.0
    %2912 = vmatpush1.xpose.msra.mxu0 0.0
    %2913 = vmatprep.subr.mxu0 0.0
    %2914 = vmatpush1.xpose.msra.mxu0 0.0
    %2915 = vmatprep.subr.mxu0 0.0
    %2916 = vmatpush1.xpose.msra.mxu0 0.0
    %2917 = vmatprep.subr.mxu0 0.0
    %2918 = vmatpush1.xpose.msra.mxu0 0.0
    %2919 = vmatprep.subr.mxu0 0.0
    %2920 = vmatpush1.xpose.msra.mxu0 0.0
    %2921 = vmatprep.subr.mxu0 0.0
    %2922 = vmatpush1.xpose.msra.mxu0 0.0
    %2923 = vmatprep.subr.mxu0 0.0
    %2924 = vmatpush1.xpose.msra.mxu0 0.0
    %2925 = vmatprep.subr.mxu0 0.0
    %2926 = vmatpush1.xpose.msra.mxu0 0.0
    %2927 = vmatprep.subr.mxu0 0.0
    %2928 = vmatpush1.xpose.msra.mxu0 0.0
    %2929 = vmatprep.subr.mxu0 0.0
    %2930 = vmatpush1.xpose.msra.mxu0 0.0
    %2931 = vmatprep.subr.mxu0 0.0
    %2932 = vmatpush1.xpose.msra.mxu0 0.0
    %2933 = vmatprep.subr.mxu0 0.0
    %2934 = vmatpush1.xpose.msra.mxu0 0.0
    %2935 = vmatprep.subr.mxu0 0.0
    %2936 = vmatpush1.xpose.msra.mxu0 0.0
    %2937 = vmatprep.subr.mxu0 0.0
    %2938 = vmatpush1.xpose.msra.mxu0 0.0
    %2939 = vmatprep.subr.mxu0 0.0
    %2940 = vmatpush1.xpose.msra.mxu0 0.0
    %2941 = vmatprep.subr.mxu0 0.0
    %2942 = vmatpush1.xpose.msra.mxu0 0.0
    %2943 = vmatprep.subr.mxu0 0.0
    %2944 = vmatpush1.xpose.msra.mxu0 0.0
    %2945 = vmatprep.subr.mxu0 0.0
    %2946 = vmatpush1.xpose.msra.mxu0 0.0
    %2947 = vmatprep.subr.mxu0 0.0
    %2948 = vmatpush1.xpose.msra.mxu0 0.0
    %2949 = vmatprep.mubr.f32.mxu0 0.0
    %2950 = vmatmul.mubr.f32.gmra.mrb[0].mxu0 %v2881
    %v2951 = vpop.f32.mrb[0].mxu0
    %v2952 = vadd.f32 %v2203, %v2951
    %v2953 = vpop.f32.mrb[0].mxu0
    %2954 = vdwg.mxu0
    %v2955 = vsel %vm231, %v2952, -inf
    %2956 = vmax.xlane.f32.xlu0 %v2955
    %v2957 = vpop.xlane.xlu0 %2956
    %v2958 = vsub.f32 %v2952, %v2957
    %v2959 = vmul.f32 %v2958, 1.442695
    %v2960 = vpow.pop %v2959
    %v2961 = vsel %vm231, %v2960, 0.0
    %2962 = vadd.xlane.f32.xlu0 %v2961
    %v2963 = vpop.xlane.xlu0 %2962
    %2964 = vrot.lane.b32.xlu0 %v2197, 64
    %v2965 = vpop.permute.xlu0 %2964
    %v2968 = vsel %vm231, %v2960, 0
    %2970 = vmatprep.subr.mxu0 0.0
    %2971 = vmatpush1.msra.mxu0 %v2965
    %2972 = vmatprep.subr.mxu0 0.0
    %2973 = vmatpush1.msra.mxu0 0.0
    %2974 = vmatprep.subr.mxu0 0.0
    %2975 = vmatpush1.msra.mxu0 0.0
    %2976 = vmatprep.subr.mxu0 0.0
    %2977 = vmatpush1.msra.mxu0 0.0
    %2978 = vmatprep.subr.mxu0 0.0
    %2979 = vmatpush1.msra.mxu0 0.0
    %2980 = vmatprep.subr.mxu0 0.0
    %2981 = vmatpush1.msra.mxu0 0.0
    %2982 = vmatprep.subr.mxu0 0.0
    %2983 = vmatpush1.msra.mxu0 0.0
    %2984 = vmatprep.subr.mxu0 0.0
    %2985 = vmatpush1.msra.mxu0 0.0
    %2986 = vmatprep.subr.mxu0 0.0
    %2987 = vmatpush1.msra.mxu0 0.0
    %2988 = vmatprep.subr.mxu0 0.0
    %2989 = vmatpush1.msra.mxu0 0.0
    %2990 = vmatprep.subr.mxu0 0.0
    %2991 = vmatpush1.msra.mxu0 0.0
    %2992 = vmatprep.subr.mxu0 0.0
    %2993 = vmatpush1.msra.mxu0 0.0
    %2994 = vmatprep.subr.mxu0 0.0
    %2995 = vmatpush1.msra.mxu0 0.0
    %2996 = vmatprep.subr.mxu0 0.0
    %2997 = vmatpush1.msra.mxu0 0.0
    %2998 = vmatprep.subr.mxu0 0.0
    %2999 = vmatpush1.msra.mxu0 0.0
    %3000 = vmatprep.subr.mxu0 0.0
    %3001 = vmatpush1.msra.mxu0 0.0
    %3002 = vmatprep.subr.mxu0 0.0
    %3003 = vmatpush1.msra.mxu0 0.0
    %3004 = vmatprep.subr.mxu0 0.0
    %3005 = vmatpush1.msra.mxu0 0.0
    %3006 = vmatprep.subr.mxu0 0.0
    %3007 = vmatpush1.msra.mxu0 0.0
    %3008 = vmatprep.subr.mxu0 0.0
    %3009 = vmatpush1.msra.mxu0 0.0
    %3010 = vmatprep.subr.mxu0 0.0
    %3011 = vmatpush1.msra.mxu0 0.0
    %3012 = vmatprep.subr.mxu0 0.0
    %3013 = vmatpush1.msra.mxu0 0.0
    %3014 = vmatprep.subr.mxu0 0.0
    %3015 = vmatpush1.msra.mxu0 0.0
    %3016 = vmatprep.subr.mxu0 0.0
    %3017 = vmatpush1.msra.mxu0 0.0
    %3018 = vmatprep.subr.mxu0 0.0
    %3019 = vmatpush1.msra.mxu0 0.0
    %3020 = vmatprep.subr.mxu0 0.0
    %3021 = vmatpush1.msra.mxu0 0.0
    %3022 = vmatprep.subr.mxu0 0.0
    %3023 = vmatpush1.msra.mxu0 0.0
    %3024 = vmatprep.subr.mxu0 0.0
    %3025 = vmatpush1.msra.mxu0 0.0
    %3026 = vmatprep.subr.mxu0 0.0
    %3027 = vmatpush1.msra.mxu0 0.0
    %3028 = vmatprep.subr.mxu0 0.0
    %3029 = vmatpush1.msra.mxu0 0.0
    %3030 = vmatprep.subr.mxu0 0.0
    %3031 = vmatpush1.msra.mxu0 0.0
    %3032 = vmatprep.subr.mxu0 0.0
    %3033 = vmatpush1.msra.mxu0 0.0
    %3034 = vmatprep.mubr.f32.mxu0 0.0
    %3035 = vmatmul.mubr.f32.gmra.mrb[0].mxu0 %v2968
    %v3036 = vpop.f32.mrb[0].mxu0
    %v3037 = vadd.f32 0.0, %v3036
    %v3038 = vpop.f32.mrb[0].mxu0
    %3039 = vdwg.mxu0
    %v3040 = vrcp.pop %v2963
    %v3041 = vmul.f32 %v3037, %v3040
    %3042 = vrot.lane.b32.xlu0 %v2197, 120
    %v3043 = vpop.permute.xlu0 %3042
    %3044 = vrot.lane.b32.xlu0 %v2197, 88
    %v3045 = vpop.permute.xlu0 %3044
    %v3046 = vsel %vm231, %v3043, 0
    %v3048 = vsel %vm231, %v3045, 0
    %3050 = vmatprep.subr.mxu0 0.0
    %3051 = vmatpush1.xpose.msra.mxu0 %v3048
    %3052 = vmatprep.subr.mxu0 0.0
    %3053 = vmatpush1.xpose.msra.mxu0 0.0
    %3054 = vmatprep.subr.mxu0 0.0
    %3055 = vmatpush1.xpose.msra.mxu0 0.0
    %3056 = vmatprep.subr.mxu0 0.0
    %3057 = vmatpush1.xpose.msra.mxu0 0.0
    %3058 = vmatprep.subr.mxu0 0.0
    %3059 = vmatpush1.xpose.msra.mxu0 0.0
    %3060 = vmatprep.subr.mxu0 0.0
    %3061 = vmatpush1.xpose.msra.mxu0 0.0
    %3062 = vmatprep.subr.mxu0 0.0
    %3063 = vmatpush1.xpose.msra.mxu0 0.0
    %3064 = vmatprep.subr.mxu0 0.0
    %3065 = vmatpush1.xpose.msra.mxu0 0.0
    %3066 = vmatprep.subr.mxu0 0.0
    %3067 = vmatpush1.xpose.msra.mxu0 0.0
    %3068 = vmatprep.subr.mxu0 0.0
    %3069 = vmatpush1.xpose.msra.mxu0 0.0
    %3070 = vmatprep.subr.mxu0 0.0
    %3071 = vmatpush1.xpose.msra.mxu0 0.0
    %3072 = vmatprep.subr.mxu0 0.0
    %3073 = vmatpush1.xpose.msra.mxu0 0.0
    %3074 = vmatprep.subr.mxu0 0.0
    %3075 = vmatpush1.xpose.msra.mxu0 0.0
    %3076 = vmatprep.subr.mxu0 0.0
    %3077 = vmatpush1.xpose.msra.mxu0 0.0
    %3078 = vmatprep.subr.mxu0 0.0
    %3079 = vmatpush1.xpose.msra.mxu0 0.0
    %3080 = vmatprep.subr.mxu0 0.0
    %3081 = vmatpush1.xpose.msra.mxu0 0.0
    %3082 = vmatprep.subr.mxu0 0.0
    %3083 = vmatpush1.xpose.msra.mxu0 0.0
    %3084 = vmatprep.subr.mxu0 0.0
    %3085 = vmatpush1.xpose.msra.mxu0 0.0
    %3086 = vmatprep.subr.mxu0 0.0
    %3087 = vmatpush1.xpose.msra.mxu0 0.0
    %3088 = vmatprep.subr.mxu0 0.0
    %3089 = vmatpush1.xpose.msra.mxu0 0.0
    %3090 = vmatprep.subr.mxu0 0.0
    %3091 = vmatpush1.xpose.msra.mxu0 0.0
    %3092 = vmatprep.subr.mxu0 0.0
    %3093 = vmatpush1.xpose.msra.mxu0 0.0
    %3094 = vmatprep.subr.mxu0 0.0
    %3095 = vmatpush1.xpose.msra.mxu0 0.0
    %3096 = vmatprep.subr.mxu0 0.0
    %3097 = vmatpush1.xpose.msra.mxu0 0.0
    %3098 = vmatprep.subr.mxu0 0.0
    %3099 = vmatpush1.xpose.msra.mxu0 0.0
    %3100 = vmatprep.subr.mxu0 0.0
    %3101 = vmatpush1.xpose.msra.mxu0 0.0
    %3102 = vmatprep.subr.mxu0 0.0
    %3103 = vmatpush1.xpose.msra.mxu0 0.0
    %3104 = vmatprep.subr.mxu0 0.0
    %3105 = vmatpush1.xpose.msra.mxu0 0.0
    %3106 = vmatprep.subr.mxu0 0.0
    %3107 = vmatpush1.xpose.msra.mxu0 0.0
    %3108 = vmatprep.subr.mxu0 0.0
    %3109 = vmatpush1.xpose.msra.mxu0 0.0
    %3110 = vmatprep.subr.mxu0 0.0
    %3111 = vmatpush1.xpose.msra.mxu0 0.0
    %3112 = vmatprep.subr.mxu0 0.0
    %3113 = vmatpush1.xpose.msra.mxu0 0.0
    %3114 = vmatprep.mubr.f32.mxu0 0.0
    %3115 = vmatmul.mubr.f32.gmra.mrb[0].mxu0 %v3046
    %v3116 = vpop.f32.mrb[0].mxu0
    %v3117 = vadd.f32 %v2203, %v3116
    %v3118 = vpop.f32.mrb[0].mxu0
    %3119 = vdwg.mxu0
    %v3120 = vsel %vm231, %v3117, -inf
    %3121 = vmax.xlane.f32.xlu0 %v3120
    %v3122 = vpop.xlane.xlu0 %3121
    %v3123 = vsub.f32 %v3117, %v3122
    %v3124 = vmul.f32 %v3123, 1.442695
    %v3125 = vpow.pop %v3124
    %v3126 = vsel %vm231, %v3125, 0.0
    %3127 = vadd.xlane.f32.xlu0 %v3126
    %v3128 = vpop.xlane.xlu0 %3127
    %3129 = vrot.lane.b32.xlu0 %v2197, 56
    %v3130 = vpop.permute.xlu0 %3129
    %v3133 = vsel %vm231, %v3125, 0
    %3135 = vmatprep.subr.mxu0 0.0
    %3136 = vmatpush1.msra.mxu0 %v3130
    %3137 = vmatprep.subr.mxu0 0.0
    %3138 = vmatpush1.msra.mxu0 0.0
    %3139 = vmatprep.subr.mxu0 0.0
    %3140 = vmatpush1.msra.mxu0 0.0
    %3141 = vmatprep.subr.mxu0 0.0
    %3142 = vmatpush1.msra.mxu0 0.0
    %3143 = vmatprep.subr.mxu0 0.0
    %3144 = vmatpush1.msra.mxu0 0.0
    %3145 = vmatprep.subr.mxu0 0.0
    %3146 = vmatpush1.msra.mxu0 0.0
    %3147 = vmatprep.subr.mxu0 0.0
    %3148 = vmatpush1.msra.mxu0 0.0
    %3149 = vmatprep.subr.mxu0 0.0
    %3150 = vmatpush1.msra.mxu0 0.0
    %3151 = vmatprep.subr.mxu0 0.0
    %3152 = vmatpush1.msra.mxu0 0.0
    %3153 = vmatprep.subr.mxu0 0.0
    %3154 = vmatpush1.msra.mxu0 0.0
    %3155 = vmatprep.subr.mxu0 0.0
    %3156 = vmatpush1.msra.mxu0 0.0
    %3157 = vmatprep.subr.mxu0 0.0
    %3158 = vmatpush1.msra.mxu0 0.0
    %3159 = vmatprep.subr.mxu0 0.0
    %3160 = vmatpush1.msra.mxu0 0.0
    %3161 = vmatprep.subr.mxu0 0.0
    %3162 = vmatpush1.msra.mxu0 0.0
    %3163 = vmatprep.subr.mxu0 0.0
    %3164 = vmatpush1.msra.mxu0 0.0
    %3165 = vmatprep.subr.mxu0 0.0
    %3166 = vmatpush1.msra.mxu0 0.0
    %3167 = vmatprep.subr.mxu0 0.0
    %3168 = vmatpush1.msra.mxu0 0.0
    %3169 = vmatprep.subr.mxu0 0.0
    %3170 = vmatpush1.msra.mxu0 0.0
    %3171 = vmatprep.subr.mxu0 0.0
    %3172 = vmatpush1.msra.mxu0 0.0
    %3173 = vmatprep.subr.mxu0 0.0
    %3174 = vmatpush1.msra.mxu0 0.0
    %3175 = vmatprep.subr.mxu0 0.0
    %3176 = vmatpush1.msra.mxu0 0.0
    %3177 = vmatprep.subr.mxu0 0.0
    %3178 = vmatpush1.msra.mxu0 0.0
    %3179 = vmatprep.subr.mxu0 0.0
    %3180 = vmatpush1.msra.mxu0 0.0
    %3181 = vmatprep.subr.mxu0 0.0
    %3182 = vmatpush1.msra.mxu0 0.0
    %3183 = vmatprep.subr.mxu0 0.0
    %3184 = vmatpush1.msra.mxu0 0.0
    %3185 = vmatprep.subr.mxu0 0.0
    %3186 = vmatpush1.msra.mxu0 0.0
    %3187 = vmatprep.subr.mxu0 0.0
    %3188 = vmatpush1.msra.mxu0 0.0
    %3189 = vmatprep.subr.mxu0 0.0
    %3190 = vmatpush1.msra.mxu0 0.0
    %3191 = vmatprep.subr.mxu0 0.0
    %3192 = vmatpush1.msra.mxu0 0.0
    %3193 = vmatprep.subr.mxu0 0.0
    %3194 = vmatpush1.msra.mxu0 0.0
    %3195 = vmatprep.subr.mxu0 0.0
    %3196 = vmatpush1.msra.mxu0 0.0
    %3197 = vmatprep.subr.mxu0 0.0
    %3198 = vmatpush1.msra.mxu0 0.0
    %3199 = vmatprep.mubr.f32.mxu0 0.0
    %3200 = vmatmul.mubr.f32.gmra.mrb[0].mxu0 %v3133
    %v3201 = vpop.f32.mrb[0].mxu0
    %v3202 = vadd.f32 0.0, %v3201
    %v3203 = vpop.f32.mrb[0].mxu0
    %3204 = vdwg.mxu0
    %v3205 = vrcp.pop %v3128
    %v3206 = vmul.f32 %v3202, %v3205
    %3207 = vrot.lane.b32.xlu0 %v2197, 112
    %v3208 = vpop.permute.xlu0 %3207
    %3209 = vrot.lane.b32.xlu0 %v2197, 80
    %v3210 = vpop.permute.xlu0 %3209
    %v3211 = vsel %vm231, %v3208, 0
    %v3213 = vsel %vm231, %v3210, 0
    %3215 = vmatprep.subr.mxu0 0.0
    %3216 = vmatpush1.xpose.msra.mxu0 %v3213
    %3217 = vmatprep.subr.mxu0 0.0
    %3218 = vmatpush1.xpose.msra.mxu0 0.0
    %3219 = vmatprep.subr.mxu0 0.0
    %3220 = vmatpush1.xpose.msra.mxu0 0.0
    %3221 = vmatprep.subr.mxu0 0.0
    %3222 = vmatpush1.xpose.msra.mxu0 0.0
    %3223 = vmatprep.subr.mxu0 0.0
    %3224 = vmatpush1.xpose.msra.mxu0 0.0
    %3225 = vmatprep.subr.mxu0 0.0
    %3226 = vmatpush1.xpose.msra.mxu0 0.0
    %3227 = vmatprep.subr.mxu0 0.0
    %3228 = vmatpush1.xpose.msra.mxu0 0.0
    %3229 = vmatprep.subr.mxu0 0.0
    %3230 = vmatpush1.xpose.msra.mxu0 0.0
    %3231 = vmatprep.subr.mxu0 0.0
    %3232 = vmatpush1.xpose.msra.mxu0 0.0
    %3233 = vmatprep.subr.mxu0 0.0
    %3234 = vmatpush1.xpose.msra.mxu0 0.0
    %3235 = vmatprep.subr.mxu0 0.0
    %3236 = vmatpush1.xpose.msra.mxu0 0.0
    %3237 = vmatprep.subr.mxu0 0.0
    %3238 = vmatpush1.xpose.msra.mxu0 0.0
    %3239 = vmatprep.subr.mxu0 0.0
    %3240 = vmatpush1.xpose.msra.mxu0 0.0
    %3241 = vmatprep.subr.mxu0 0.0
    %3242 = vmatpush1.xpose.msra.mxu0 0.0
    %3243 = vmatprep.subr.mxu0 0.0
    %3244 = vmatpush1.xpose.msra.mxu0 0.0
    %3245 = vmatprep.subr.mxu0 0.0
    %3246 = vmatpush1.xpose.msra.mxu0 0.0
    %3247 = vmatprep.subr.mxu0 0.0
    %3248 = vmatpush1.xpose.msra.mxu0 0.0
    %3249 = vmatprep.subr.mxu0 0.0
    %3250 = vmatpush1.xpose.msra.mxu0 0.0
    %3251 = vmatprep.subr.mxu0 0.0
    %3252 = vmatpush1.xpose.msra.mxu0 0.0
    %3253 = vmatprep.subr.mxu0 0.0
    %3254 = vmatpush1.xpose.msra.mxu0 0.0
    %3255 = vmatprep.subr.mxu0 0.0
    %3256 = vmatpush1.xpose.msra.mxu0 0.0
    %3257 = vmatprep.subr.mxu0 0.0
    %3258 = vmatpush1.xpose.msra.mxu0 0.0
    %3259 = vmatprep.subr.mxu0 0.0
    %3260 = vmatpush1.xpose.msra.mxu0 0.0
    %3261 = vmatprep.subr.mxu0 0.0
    %3262 = vmatpush1.xpose.msra.mxu0 0.0
    %3263 = vmatprep.subr.mxu0 0.0
    %3264 = vmatpush1.xpose.msra.mxu0 0.0
    %3265 = vmatprep.subr.mxu0 0.0
    %3266 = vmatpush1.xpose.msra.mxu0 0.0
    %3267 = vmatprep.subr.mxu0 0.0
    %3268 = vmatpush1.xpose.msra.mxu0 0.0
    %3269 = vmatprep.subr.mxu0 0.0
    %3270 = vmatpush1.xpose.msra.mxu0 0.0
    %3271 = vmatprep.subr.mxu0 0.0
    %3272 = vmatpush1.xpose.msra.mxu0 0.0
    %3273 = vmatprep.subr.mxu0 0.0
    %3274 = vmatpush1.xpose.msra.mxu0 0.0
    %3275 = vmatprep.subr.mxu0 0.0
    %3276 = vmatpush1.xpose.msra.mxu0 0.0
    %3277 = vmatprep.subr.mxu0 0.0
    %3278 = vmatpush1.xpose.msra.mxu0 0.0
    %3279 = vmatprep.mubr.f32.mxu0 0.0
    %3280 = vmatmul.mubr.f32.gmra.mrb[0].mxu0 %v3211
    %v3281 = vpop.f32.mrb[0].mxu0
    %v3282 = vadd.f32 %v2203, %v3281
    %v3283 = vpop.f32.mrb[0].mxu0
    %3284 = vdwg.mxu0
    %v3285 = vsel %vm231, %v3282, -inf
    %3286 = vmax.xlane.f32.xlu0 %v3285
    %v3287 = vpop.xlane.xlu0 %3286
    %v3288 = vsub.f32 %v3282, %v3287
    %v3289 = vmul.f32 %v3288, 1.442695
    %v3290 = vpow.pop %v3289
    %v3291 = vsel %vm231, %v3290, 0.0
    %3292 = vadd.xlane.f32.xlu0 %v3291
    %v3293 = vpop.xlane.xlu0 %3292
    %3294 = vrot.lane.b32.xlu0 %v2197, 48
    %v3295 = vpop.permute.xlu0 %3294
    %v3298 = vsel %vm231, %v3290, 0
    %3300 = vmatprep.subr.mxu0 0.0
    %3301 = vmatpush1.msra.mxu0 %v3295
    %3302 = vmatprep.subr.mxu0 0.0
    %3303 = vmatpush1.msra.mxu0 0.0
    %3304 = vmatprep.subr.mxu0 0.0
    %3305 = vmatpush1.msra.mxu0 0.0
    %3306 = vmatprep.subr.mxu0 0.0
    %3307 = vmatpush1.msra.mxu0 0.0
    %3308 = vmatprep.subr.mxu0 0.0
    %3309 = vmatpush1.msra.mxu0 0.0
    %3310 = vmatprep.subr.mxu0 0.0
    %3311 = vmatpush1.msra.mxu0 0.0
    %3312 = vmatprep.subr.mxu0 0.0
    %3313 = vmatpush1.msra.mxu0 0.0
    %3314 = vmatprep.subr.mxu0 0.0
    %3315 = vmatpush1.msra.mxu0 0.0
    %3316 = vmatprep.subr.mxu0 0.0
    %3317 = vmatpush1.msra.mxu0 0.0
    %3318 = vmatprep.subr.mxu0 0.0
    %3319 = vmatpush1.msra.mxu0 0.0
    %3320 = vmatprep.subr.mxu0 0.0
    %3321 = vmatpush1.msra.mxu0 0.0
    %3322 = vmatprep.subr.mxu0 0.0
    %3323 = vmatpush1.msra.mxu0 0.0
    %3324 = vmatprep.subr.mxu0 0.0
    %3325 = vmatpush1.msra.mxu0 0.0
    %3326 = vmatprep.subr.mxu0 0.0
    %3327 = vmatpush1.msra.mxu0 0.0
    %3328 = vmatprep.subr.mxu0 0.0
    %3329 = vmatpush1.msra.mxu0 0.0
    %3330 = vmatprep.subr.mxu0 0.0
    %3331 = vmatpush1.msra.mxu0 0.0
    %3332 = vmatprep.subr.mxu0 0.0
    %3333 = vmatpush1.msra.mxu0 0.0
    %3334 = vmatprep.subr.mxu0 0.0
    %3335 = vmatpush1.msra.mxu0 0.0
    %3336 = vmatprep.subr.mxu0 0.0
    %3337 = vmatpush1.msra.mxu0 0.0
    %3338 = vmatprep.subr.mxu0 0.0
    %3339 = vmatpush1.msra.mxu0 0.0
    %3340 = vmatprep.subr.mxu0 0.0
    %3341 = vmatpush1.msra.mxu0 0.0
    %3342 = vmatprep.subr.mxu0 0.0
    %3343 = vmatpush1.msra.mxu0 0.0
    %3344 = vmatprep.subr.mxu0 0.0
    %3345 = vmatpush1.msra.mxu0 0.0
    %3346 = vmatprep.subr.mxu0 0.0
    %3347 = vmatpush1.msra.mxu0 0.0
    %3348 = vmatprep.subr.mxu0 0.0
    %3349 = vmatpush1.msra.mxu0 0.0
    %3350 = vmatprep.subr.mxu0 0.0
    %3351 = vmatpush1.msra.mxu0 0.0
    %3352 = vmatprep.subr.mxu0 0.0
    %3353 = vmatpush1.msra.mxu0 0.0
    %3354 = vmatprep.subr.mxu0 0.0
    %3355 = vmatpush1.msra.mxu0 0.0
    %3356 = vmatprep.subr.mxu0 0.0
    %3357 = vmatpush1.msra.mxu0 0.0
    %3358 = vmatprep.subr.mxu0 0.0
    %3359 = vmatpush1.msra.mxu0 0.0
    %3360 = vmatprep.subr.mxu0 0.0
    %3361 = vmatpush1.msra.mxu0 0.0
    %3362 = vmatprep.subr.mxu0 0.0
    %3363 = vmatpush1.msra.mxu0 0.0
    %3364 = vmatprep.mubr.f32.mxu0 0.0
    %3365 = vmatmul.mubr.f32.gmra.mrb[0].mxu0 %v3298
    %v3366 = vpop.f32.mrb[0].mxu0
    %v3367 = vadd.f32 0.0, %v3366
    %v3368 = vpop.f32.mrb[0].mxu0
    %3369 = vdwg.mxu0
    %v3370 = vrcp.pop %v3293
    %v3371 = vmul.f32 %v3367, %v3370
    %3372 = vrot.lane.b32.xlu0 %v2197, 104
    %v3373 = vpop.permute.xlu0 %3372
    %3374 = vrot.lane.b32.xlu0 %v2197, 72
    %v3375 = vpop.permute.xlu0 %3374
    %v3376 = vsel %vm231, %v3373, 0
    %v3378 = vsel %vm231, %v3375, 0
    %3380 = vmatprep.subr.mxu0 0.0
    %3381 = vmatpush1.xpose.msra.mxu0 %v3378
    %3382 = vmatprep.subr.mxu0 0.0
    %3383 = vmatpush1.xpose.msra.mxu0 0.0
    %3384 = vmatprep.subr.mxu0 0.0
    %3385 = vmatpush1.xpose.msra.mxu0 0.0
    %3386 = vmatprep.subr.mxu0 0.0
    %3387 = vmatpush1.xpose.msra.mxu0 0.0
    %3388 = vmatprep.subr.mxu0 0.0
    %3389 = vmatpush1.xpose.msra.mxu0 0.0
    %3390 = vmatprep.subr.mxu0 0.0
    %3391 = vmatpush1.xpose.msra.mxu0 0.0
    %3392 = vmatprep.subr.mxu0 0.0
    %3393 = vmatpush1.xpose.msra.mxu0 0.0
    %3394 = vmatprep.subr.mxu0 0.0
    %3395 = vmatpush1.xpose.msra.mxu0 0.0
    %3396 = vmatprep.subr.mxu0 0.0
    %3397 = vmatpush1.xpose.msra.mxu0 0.0
    %3398 = vmatprep.subr.mxu0 0.0
    %3399 = vmatpush1.xpose.msra.mxu0 0.0
    %3400 = vmatprep.subr.mxu0 0.0
    %3401 = vmatpush1.xpose.msra.mxu0 0.0
    %3402 = vmatprep.subr.mxu0 0.0
    %3403 = vmatpush1.xpose.msra.mxu0 0.0
    %3404 = vmatprep.subr.mxu0 0.0
    %3405 = vmatpush1.xpose.msra.mxu0 0.0
    %3406 = vmatprep.subr.mxu0 0.0
    %3407 = vmatpush1.xpose.msra.mxu0 0.0
    %3408 = vmatprep.subr.mxu0 0.0
    %3409 = vmatpush1.xpose.msra.mxu0 0.0
    %3410 = vmatprep.subr.mxu0 0.0
    %3411 = vmatpush1.xpose.msra.mxu0 0.0
    %3412 = vmatprep.subr.mxu0 0.0
    %3413 = vmatpush1.xpose.msra.mxu0 0.0
    %3414 = vmatprep.subr.mxu0 0.0
    %3415 = vmatpush1.xpose.msra.mxu0 0.0
    %3416 = vmatprep.subr.mxu0 0.0
    %3417 = vmatpush1.xpose.msra.mxu0 0.0
    %3418 = vmatprep.subr.mxu0 0.0
    %3419 = vmatpush1.xpose.msra.mxu0 0.0
    %3420 = vmatprep.subr.mxu0 0.0
    %3421 = vmatpush1.xpose.msra.mxu0 0.0
    %3422 = vmatprep.subr.mxu0 0.0
    %3423 = vmatpush1.xpose.msra.mxu0 0.0
    %3424 = vmatprep.subr.mxu0 0.0
    %3425 = vmatpush1.xpose.msra.mxu0 0.0
    %3426 = vmatprep.subr.mxu0 0.0
    %3427 = vmatpush1.xpose.msra.mxu0 0.0
    %3428 = vmatprep.subr.mxu0 0.0
    %3429 = vmatpush1.xpose.msra.mxu0 0.0
    %3430 = vmatprep.subr.mxu0 0.0
    %3431 = vmatpush1.xpose.msra.mxu0 0.0
    %3432 = vmatprep.subr.mxu0 0.0
    %3433 = vmatpush1.xpose.msra.mxu0 0.0
    %3434 = vmatprep.subr.mxu0 0.0
    %3435 = vmatpush1.xpose.msra.mxu0 0.0
    %3436 = vmatprep.subr.mxu0 0.0
    %3437 = vmatpush1.xpose.msra.mxu0 0.0
    %3438 = vmatprep.subr.mxu0 0.0
    %3439 = vmatpush1.xpose.msra.mxu0 0.0
    %3440 = vmatprep.subr.mxu0 0.0
    %3441 = vmatpush1.xpose.msra.mxu0 0.0
    %3442 = vmatprep.subr.mxu0 0.0
    %3443 = vmatpush1.xpose.msra.mxu0 0.0
    %3444 = vmatprep.mubr.f32.mxu0 0.0
    %3445 = vmatmul.mubr.f32.gmra.mrb[0].mxu0 %v3376
    %v3446 = vpop.f32.mrb[0].mxu0
    %v3447 = vadd.f32 %v2203, %v3446
    %v3448 = vpop.f32.mrb[0].mxu0
    %3449 = vdwg.mxu0
    %v3450 = vsel %vm231, %v3447, -inf
    %3451 = vmax.xlane.f32.xlu0 %v3450
    %v3452 = vpop.xlane.xlu0 %3451
    %v3453 = vsub.f32 %v3447, %v3452
    %v3454 = vmul.f32 %v3453, 1.442695
    %v3455 = vpow.pop %v3454
    %v3456 = vsel %vm231, %v3455, 0.0
    %3457 = vadd.xlane.f32.xlu0 %v3456
    %v3458 = vpop.xlane.xlu0 %3457
    %3459 = vrot.lane.b32.xlu0 %v2197, 40
    %v3460 = vpop.permute.xlu0 %3459
    %v3463 = vsel %vm231, %v3455, 0
    %3465 = vmatprep.subr.mxu0 0.0
    %3466 = vmatpush1.msra.mxu0 %v3460
    %3467 = vmatprep.subr.mxu0 0.0
    %3468 = vmatpush1.msra.mxu0 0.0
    %3469 = vmatprep.subr.mxu0 0.0
    %3470 = vmatpush1.msra.mxu0 0.0
    %3471 = vmatprep.subr.mxu0 0.0
    %3472 = vmatpush1.msra.mxu0 0.0
    %3473 = vmatprep.subr.mxu0 0.0
    %3474 = vmatpush1.msra.mxu0 0.0
    %3475 = vmatprep.subr.mxu0 0.0
    %3476 = vmatpush1.msra.mxu0 0.0
    %3477 = vmatprep.subr.mxu0 0.0
    %3478 = vmatpush1.msra.mxu0 0.0
    %3479 = vmatprep.subr.mxu0 0.0
    %3480 = vmatpush1.msra.mxu0 0.0
    %3481 = vmatprep.subr.mxu0 0.0
    %3482 = vmatpush1.msra.mxu0 0.0
    %3483 = vmatprep.subr.mxu0 0.0
    %3484 = vmatpush1.msra.mxu0 0.0
    %3485 = vmatprep.subr.mxu0 0.0
    %3486 = vmatpush1.msra.mxu0 0.0
    %3487 = vmatprep.subr.mxu0 0.0
    %3488 = vmatpush1.msra.mxu0 0.0
    %3489 = vmatprep.subr.mxu0 0.0
    %3490 = vmatpush1.msra.mxu0 0.0
    %3491 = vmatprep.subr.mxu0 0.0
    %3492 = vmatpush1.msra.mxu0 0.0
    %3493 = vmatprep.subr.mxu0 0.0
    %3494 = vmatpush1.msra.mxu0 0.0
    %3495 = vmatprep.subr.mxu0 0.0
    %3496 = vmatpush1.msra.mxu0 0.0
    %3497 = vmatprep.subr.mxu0 0.0
    %3498 = vmatpush1.msra.mxu0 0.0
    %3499 = vmatprep.subr.mxu0 0.0
    %3500 = vmatpush1.msra.mxu0 0.0
    %3501 = vmatprep.subr.mxu0 0.0
    %3502 = vmatpush1.msra.mxu0 0.0
    %3503 = vmatprep.subr.mxu0 0.0
    %3504 = vmatpush1.msra.mxu0 0.0
    %3505 = vmatprep.subr.mxu0 0.0
    %3506 = vmatpush1.msra.mxu0 0.0
    %3507 = vmatprep.subr.mxu0 0.0
    %3508 = vmatpush1.msra.mxu0 0.0
    %3509 = vmatprep.subr.mxu0 0.0
    %3510 = vmatpush1.msra.mxu0 0.0
    %3511 = vmatprep.subr.mxu0 0.0
    %3512 = vmatpush1.msra.mxu0 0.0
    %3513 = vmatprep.subr.mxu0 0.0
    %3514 = vmatpush1.msra.mxu0 0.0
    %3515 = vmatprep.subr.mxu0 0.0
    %3516 = vmatpush1.msra.mxu0 0.0
    %3517 = vmatprep.subr.mxu0 0.0
    %3518 = vmatpush1.msra.mxu0 0.0
    %3519 = vmatprep.subr.mxu0 0.0
    %3520 = vmatpush1.msra.mxu0 0.0
    %3521 = vmatprep.subr.mxu0 0.0
    %3522 = vmatpush1.msra.mxu0 0.0
    %3523 = vmatprep.subr.mxu0 0.0
    %3524 = vmatpush1.msra.mxu0 0.0
    %3525 = vmatprep.subr.mxu0 0.0
    %3526 = vmatpush1.msra.mxu0 0.0
    %3527 = vmatprep.subr.mxu0 0.0
    %3528 = vmatpush1.msra.mxu0 0.0
    %3529 = vmatprep.mubr.f32.mxu0 0.0
    %3530 = vmatmul.mubr.f32.gmra.mrb[0].mxu0 %v3463
    %v3531 = vpop.f32.mrb[0].mxu0
    %v3532 = vadd.f32 0.0, %v3531
    %v3533 = vpop.f32.mrb[0].mxu0
    %3534 = vdwg.mxu0
    %v3535 = vrcp.pop %v3458
    %v3536 = vmul.f32 %v3532, %v3535
    %3538 = vrot.lane.b32.xlu0 %v3206, 8
    %v3539 = vpop.permute.xlu0 %3538
    %3542 = vrot.lane.b32.xlu0 %v3371, 16
    %v3543 = vpop.permute.xlu0 %3542
    %3546 = vrot.lane.b32.xlu0 %v3536, 24
    %v3547 = vpop.permute.xlu0 %3546
    %v3549 = vsel %vm231, %v3041, %v3539
    %v3550 = vsel %vm901, %v3549, %v3543
    %v3551 = vsel %vm903, %v3550, %v3547
    %v3552 = vld [vmem:[%s2 + $0x20] sm:$0xff]
    %v3553 = vld [vmem:[%s2 + $0x50] sm:$0xff]
    %v3554 = vld [vmem:[%s2 + $0x80] sm:$0xff]
    %v3555 = vld [vmem:[%s2 + $0xb0] sm:$0xff]
    %v3556 = vld [vmem:[%s4 + $0x9] sm:$0x1]
    %v3557 = vlaneseq
    %v3558 = vshrl.u32 %v3557, 7
    %v3559 = vsub.s32 0, %v3558
    %v3560 = vrot.slane %v3556, %v3559
    %3565 = vrot.lane.b32.xlu0 %v3552, 32
    %v3566 = vpop.permute.xlu0 %3565
    %3567 = vrot.lane.b32.xlu0 %v3553, 32
    %v3568 = vpop.permute.xlu0 %3567
    %3569 = vrot.lane.b32.xlu0 %v3554, 32
    %v3570 = vpop.permute.xlu0 %3569
    %3571 = vrot.lane.b32.xlu0 %v3555, 32
    %v3572 = vpop.permute.xlu0 %3571
    %v3578 = vsel %vm56, %v2877, 0
    %v3581 = vsel %vm56, %v3551, 0
    %3583 = vmatprep.subr.mxu0 0.0
    %3584 = vmatpush1.msra.mxu0 %v3566
    %3585 = vmatprep.subr.mxu0 0.0
    %3586 = vmatpush1.msra.mxu0 %v3568
    %3587 = vmatprep.subr.mxu0 0.0
    %3588 = vmatpush1.msra.mxu0 %v3570
    %3589 = vmatprep.subr.mxu0 0.0
    %3590 = vmatpush1.msra.mxu0 %v3572
    %3591 = vmatprep.subr.mxu0 0.0
    %3592 = vmatpush1.msra.mxu0 0.0
    %3593 = vmatprep.subr.mxu0 0.0
    %3594 = vmatpush1.msra.mxu0 0.0
    %3595 = vmatprep.subr.mxu0 0.0
    %3596 = vmatpush1.msra.mxu0 0.0
    %3597 = vmatprep.subr.mxu0 0.0
    %3598 = vmatpush1.msra.mxu0 0.0
    %3599 = vmatprep.subr.mxu0 0.0
    %3600 = vmatpush1.msra.mxu0 0.0
    %3601 = vmatprep.subr.mxu0 0.0
    %3602 = vmatpush1.msra.mxu0 0.0
    %3603 = vmatprep.subr.mxu0 0.0
    %3604 = vmatpush1.msra.mxu0 0.0
    %3605 = vmatprep.subr.mxu0 0.0
    %3606 = vmatpush1.msra.mxu0 0.0
    %3607 = vmatprep.subr.mxu0 0.0
    %3608 = vmatpush1.msra.mxu0 0.0
    %3609 = vmatprep.subr.mxu0 0.0
    %3610 = vmatpush1.msra.mxu0 0.0
    %3611 = vmatprep.subr.mxu0 0.0
    %3612 = vmatpush1.msra.mxu0 0.0
    %3613 = vmatprep.subr.mxu0 0.0
    %3614 = vmatpush1.msra.mxu0 0.0
    %3615 = vmatprep.subr.mxu0 0.0
    %3616 = vmatpush1.msra.mxu0 0.0
    %3617 = vmatprep.subr.mxu0 0.0
    %3618 = vmatpush1.msra.mxu0 0.0
    %3619 = vmatprep.subr.mxu0 0.0
    %3620 = vmatpush1.msra.mxu0 0.0
    %3621 = vmatprep.subr.mxu0 0.0
    %3622 = vmatpush1.msra.mxu0 0.0
    %3623 = vmatprep.subr.mxu0 0.0
    %3624 = vmatpush1.msra.mxu0 0.0
    %3625 = vmatprep.subr.mxu0 0.0
    %3626 = vmatpush1.msra.mxu0 0.0
    %3627 = vmatprep.subr.mxu0 0.0
    %3628 = vmatpush1.msra.mxu0 0.0
    %3629 = vmatprep.subr.mxu0 0.0
    %3630 = vmatpush1.msra.mxu0 0.0
    %3631 = vmatprep.subr.mxu0 0.0
    %3632 = vmatpush1.msra.mxu0 0.0
    %3633 = vmatprep.subr.mxu0 0.0
    %3634 = vmatpush1.msra.mxu0 0.0
    %3635 = vmatprep.subr.mxu0 0.0
    %3636 = vmatpush1.msra.mxu0 0.0
    %3637 = vmatprep.subr.mxu0 0.0
    %3638 = vmatpush1.msra.mxu0 0.0
    %3639 = vmatprep.subr.mxu0 0.0
    %3640 = vmatpush1.msra.mxu0 0.0
    %3641 = vmatprep.subr.mxu0 0.0
    %3642 = vmatpush1.msra.mxu0 0.0
    %3643 = vmatprep.subr.mxu0 0.0
    %3644 = vmatpush1.msra.mxu0 0.0
    %3645 = vmatprep.subr.mxu0 0.0
    %3646 = vmatpush1.msra.mxu0 0.0
    %3647 = vmatprep.mubr.f32.mxu0 0.0
    %3648 = vmatmul.mubr.f32.gmra.mrb[0].mxu0 %v3578
    %v3649 = vpop.f32.mrb[0].mxu0
    %v3650 = vadd.f32 %v3560, %v3649
    %v3651 = vpop.f32.mrb[0].mxu0
    %3652 = vmatprep.mubr.f32.mxu0 0.0
    %3653 = vmatmul.mubr.f32.gmra.mrb[0].mxu0 %v3581
    %v3654 = vpop.f32.mrb[0].mxu0
    %v3655 = vadd.f32 %v3560, %v3654
    %v3656 = vpop.f32.mrb[0].mxu0
    %3657 = vdwg.mxu0
    %v3658 = vadd.f32 %v2074, %v3650
    %v3659 = vadd.f32 %v2079, %v3655
    %v3660 = vld [vmem:[%s4 + $0xa] sm:$0x1]
    %v3661 = vld [vmem:[%s4 + $0xb] sm:$0x1]
    %v3662 = vsel %vm56, %v3658, 0.0
    %3663 = vadd.xlane.f32.xlu0 %v3662
    %v3664 = vpop.xlane.xlu0 %3663
    %v3665 = vsel %vm56, %v3659, 0.0
    %3666 = vadd.xlane.f32.xlu0 %v3665
    %v3667 = vpop.xlane.xlu0 %3666
    %v3668 = vmul.f32 %v3664, %v1695
    %v3669 = vmul.f32 %v3667, %v1695
    %v3670 = vsub.f32 %v3658, %v3668
    %v3671 = vsub.f32 %v3659, %v3669
    %v3672 = vmul.f32 %v3670, %v3670
    %v3673 = vmul.f32 %v3671, %v3671
    %v3674 = vsel %vm56, %v3672, 0.0
    %3675 = vadd.xlane.f32.xlu0 %v3674
    %v3676 = vpop.xlane.xlu0 %3675
    %v3677 = vsel %vm56, %v3673, 0.0
    %3678 = vadd.xlane.f32.xlu0 %v3677
    %v3679 = vpop.xlane.xlu0 %3678
    %v3680 = vmul.f32 %v3676, %v1695
    %v3681 = vmul.f32 %v3679, %v1695
    %v3682 = vadd.f32 %v3680, 1e-05
    %v3683 = vadd.f32 %v3681, 1e-05
    %v3684 = vrsqrt.pop %v3682
    %v3685 = vrsqrt.pop %v3683
    %v3686 = vmul.f32 %v3670, %v3684
    %v3687 = vmul.f32 %v3671, %v3685
    %v3688 = vlaneseq
    %v3689 = vshrl.u32 %v3688, 7
    %v3690 = vsub.s32 0, %v3689
    %v3691 = vrot.slane %v3660, %v3690
    %v3692 = vmul.f32 %v3686, %v3691
    %v3693 = vmul.f32 %v3687, %v3691
    %v3694 = vlaneseq
    %v3695 = vshrl.u32 %v3694, 7
    %v3696 = vsub.s32 0, %v3695
    %v3697 = vrot.slane %v3661, %v3696
    %v3698 = vadd.f32 %v3692, %v3697
    %v3699 = vadd.f32 %v3693, %v3697
    %v3700 = vld [vmem:[%s2 + $0x28] sm:$0xff]
    %v3701 = vld [vmem:[%s2 + $0x58] sm:$0xff]
    %v3702 = vld [vmem:[%s2 + $0x88] sm:$0xff]
    %v3703 = vld [vmem:[%s2 + $0xb8] sm:$0xff]
    %v3704 = vld [vmem:[%s4 + $0xc] sm:$0x1]
    %v3705 = vlaneseq
    %v3706 = vshrl.u32 %v3705, 7
    %v3707 = vsub.s32 0, %v3706
    %v3708 = vrot.slane %v3704, %v3707
    %v3710 = vsel %vm56, %v3698, 0
    %v3713 = vsel %vm56, %v3699, 0
    %3715 = vmatprep.subr.mxu0 0.0
    %3716 = vmatpush1.msra.mxu0 %v3700
    %3717 = vmatprep.subr.mxu0 0.0
    %3718 = vmatpush1.msra.mxu0 %v3701
    %3719 = vmatprep.subr.mxu0 0.0
    %3720 = vmatpush1.msra.mxu0 %v3702
    %3721 = vmatprep.subr.mxu0 0.0
    %3722 = vmatpush1.msra.mxu0 %v3703
    %3723 = vmatprep.subr.mxu0 0.0
    %3724 = vmatpush1.msra.mxu0 0.0
    %3725 = vmatprep.subr.mxu0 0.0
    %3726 = vmatpush1.msra.mxu0 0.0
    %3727 = vmatprep.subr.mxu0 0.0
    %3728 = vmatpush1.msra.mxu0 0.0
    %3729 = vmatprep.subr.mxu0 0.0
    %3730 = vmatpush1.msra.mxu0 0.0
    %3731 = vmatprep.subr.mxu0 0.0
    %3732 = vmatpush1.msra.mxu0 0.0
    %3733 = vmatprep.subr.mxu0 0.0
    %3734 = vmatpush1.msra.mxu0 0.0
    %3735 = vmatprep.subr.mxu0 0.0
    %3736 = vmatpush1.msra.mxu0 0.0
    %3737 = vmatprep.subr.mxu0 0.0
    %3738 = vmatpush1.msra.mxu0 0.0
    %3739 = vmatprep.subr.mxu0 0.0
    %3740 = vmatpush1.msra.mxu0 0.0
    %3741 = vmatprep.subr.mxu0 0.0
    %3742 = vmatpush1.msra.mxu0 0.0
    %3743 = vmatprep.subr.mxu0 0.0
    %3744 = vmatpush1.msra.mxu0 0.0
    %3745 = vmatprep.subr.mxu0 0.0
    %3746 = vmatpush1.msra.mxu0 0.0
    %3747 = vmatprep.subr.mxu0 0.0
    %3748 = vmatpush1.msra.mxu0 0.0
    %3749 = vmatprep.subr.mxu0 0.0
    %3750 = vmatpush1.msra.mxu0 0.0
    %3751 = vmatprep.subr.mxu0 0.0
    %3752 = vmatpush1.msra.mxu0 0.0
    %3753 = vmatprep.subr.mxu0 0.0
    %3754 = vmatpush1.msra.mxu0 0.0
    %3755 = vmatprep.subr.mxu0 0.0
    %3756 = vmatpush1.msra.mxu0 0.0
    %3757 = vmatprep.subr.mxu0 0.0
    %3758 = vmatpush1.msra.mxu0 0.0
    %3759 = vmatprep.subr.mxu0 0.0
    %3760 = vmatpush1.msra.mxu0 0.0
    %3761 = vmatprep.subr.mxu0 0.0
    %3762 = vmatpush1.msra.mxu0 0.0
    %3763 = vmatprep.subr.mxu0 0.0
    %3764 = vmatpush1.msra.mxu0 0.0
    %3765 = vmatprep.subr.mxu0 0.0
    %3766 = vmatpush1.msra.mxu0 0.0
    %3767 = vmatprep.subr.mxu0 0.0
    %3768 = vmatpush1.msra.mxu0 0.0
    %3769 = vmatprep.subr.mxu0 0.0
    %3770 = vmatpush1.msra.mxu0 0.0
    %3771 = vmatprep.subr.mxu0 0.0
    %3772 = vmatpush1.msra.mxu0 0.0
    %3773 = vmatprep.subr.mxu0 0.0
    %3774 = vmatpush1.msra.mxu0 0.0
    %3775 = vmatprep.subr.mxu0 0.0
    %3776 = vmatpush1.msra.mxu0 0.0
    %3777 = vmatprep.subr.mxu0 0.0
    %3778 = vmatpush1.msra.mxu0 0.0
    %3779 = vmatprep.mubr.f32.mxu0 0.0
    %3780 = vmatmul.mubr.f32.gmra.mrb[0].mxu0 %v3710
    %v3781 = vpop.f32.mrb[0].mxu0
    %v3782 = vadd.f32 %v3708, %v3781
    %v3783 = vpop.f32.mrb[0].mxu0
    %3784 = vmatprep.mubr.f32.mxu0 0.0
    %3785 = vmatmul.mubr.f32.gmra.mrb[0].mxu0 %v3713
    %v3786 = vpop.f32.mrb[0].mxu0
    %v3787 = vadd.f32 %v3708, %v3786
    %v3788 = vpop.f32.mrb[0].mxu0
    %3789 = vdwg.mxu0
    %v3790 = vld [vmem:[%s2 + $0x18] sm:$0xff]
    %v3791 = vld [vmem:[%s2 + $0x48] sm:$0xff]
    %v3792 = vld [vmem:[%s2 + $0x78] sm:$0xff]
    %v3793 = vld [vmem:[%s2 + $0xa8] sm:$0xff]
    %v3794 = vld [vmem:[%s4 + $0xd] sm:$0x1]
    %v3795 = vlaneseq
    %v3796 = vshrl.u32 %v3795, 7
    %v3797 = vsub.s32 0, %v3796
    %v3798 = vrot.slane %v3794, %v3797
    %v3800 = vsel %vm56, %v1971, 0
    %v3803 = vsel %vm56, %v1972, 0
    %3805 = vmatprep.subr.mxu0 0.0
    %3806 = vmatpush1.msra.mxu0 %v3790
    %3807 = vmatprep.subr.mxu0 0.0
    %3808 = vmatpush1.msra.mxu0 %v3791
    %3809 = vmatprep.subr.mxu0 0.0
    %3810 = vmatpush1.msra.mxu0 %v3792
    %3811 = vmatprep.subr.mxu0 0.0
    %3812 = vmatpush1.msra.mxu0 %v3793
    %3813 = vmatprep.subr.mxu0 0.0
    %3814 = vmatpush1.msra.mxu0 0.0
    %3815 = vmatprep.subr.mxu0 0.0
    %3816 = vmatpush1.msra.mxu0 0.0
    %3817 = vmatprep.subr.mxu0 0.0
    %3818 = vmatpush1.msra.mxu0 0.0
    %3819 = vmatprep.subr.mxu0 0.0
    %3820 = vmatpush1.msra.mxu0 0.0
    %3821 = vmatprep.subr.mxu0 0.0
    %3822 = vmatpush1.msra.mxu0 0.0
    %3823 = vmatprep.subr.mxu0 0.0
    %3824 = vmatpush1.msra.mxu0 0.0
    %3825 = vmatprep.subr.mxu0 0.0
    %3826 = vmatpush1.msra.mxu0 0.0
    %3827 = vmatprep.subr.mxu0 0.0
    %3828 = vmatpush1.msra.mxu0 0.0
    %3829 = vmatprep.subr.mxu0 0.0
    %3830 = vmatpush1.msra.mxu0 0.0
    %3831 = vmatprep.subr.mxu0 0.0
    %3832 = vmatpush1.msra.mxu0 0.0
    %3833 = vmatprep.subr.mxu0 0.0
    %3834 = vmatpush1.msra.mxu0 0.0
    %3835 = vmatprep.subr.mxu0 0.0
    %3836 = vmatpush1.msra.mxu0 0.0
    %3837 = vmatprep.subr.mxu0 0.0
    %3838 = vmatpush1.msra.mxu0 0.0
    %3839 = vmatprep.subr.mxu0 0.0
    %3840 = vmatpush1.msra.mxu0 0.0
    %3841 = vmatprep.subr.mxu0 0.0
    %3842 = vmatpush1.msra.mxu0 0.0
    %3843 = vmatprep.subr.mxu0 0.0
    %3844 = vmatpush1.msra.mxu0 0.0
    %3845 = vmatprep.subr.mxu0 0.0
    %3846 = vmatpush1.msra.mxu0 0.0
    %3847 = vmatprep.subr.mxu0 0.0
    %3848 = vmatpush1.msra.mxu0 0.0
    %3849 = vmatprep.subr.mxu0 0.0
    %3850 = vmatpush1.msra.mxu0 0.0
    %3851 = vmatprep.subr.mxu0 0.0
    %3852 = vmatpush1.msra.mxu0 0.0
    %3853 = vmatprep.subr.mxu0 0.0
    %3854 = vmatpush1.msra.mxu0 0.0
    %3855 = vmatprep.subr.mxu0 0.0
    %3856 = vmatpush1.msra.mxu0 0.0
    %3857 = vmatprep.subr.mxu0 0.0
    %3858 = vmatpush1.msra.mxu0 0.0
    %3859 = vmatprep.subr.mxu0 0.0
    %3860 = vmatpush1.msra.mxu0 0.0
    %3861 = vmatprep.subr.mxu0 0.0
    %3862 = vmatpush1.msra.mxu0 0.0
    %3863 = vmatprep.subr.mxu0 0.0
    %3864 = vmatpush1.msra.mxu0 0.0
    %3865 = vmatprep.subr.mxu0 0.0
    %3866 = vmatpush1.msra.mxu0 0.0
    %3867 = vmatprep.subr.mxu0 0.0
    %3868 = vmatpush1.msra.mxu0 0.0
    %3869 = vmatprep.mubr.f32.mxu0 0.0
    %3870 = vmatmul.mubr.f32.gmra.mrb[0].mxu0 %v3800
    %v3871 = vpop.f32.mrb[0].mxu0
    %v3872 = vadd.f32 %v3798, %v3871
    %v3873 = vpop.f32.mrb[0].mxu0
    %3874 = vmatprep.mubr.f32.mxu0 0.0
    %3875 = vmatmul.mubr.f32.gmra.mrb[0].mxu0 %v3803
    %v3876 = vpop.f32.mrb[0].mxu0
    %v3877 = vadd.f32 %v3798, %v3876
    %v3878 = vpop.f32.mrb[0].mxu0
    %3879 = vdwg.mxu0
    %v3881 = vsel %vm231, %v3782, 0
    %v3884 = vsel %vm231, %v3872, 0
    %3886 = vmatprep.subr.mxu0 0.0
    %3887 = vmatpush1.xpose.msra.mxu0 %v3884
    %3888 = vmatprep.subr.mxu0 0.0
    %3889 = vmatpush1.xpose.msra.mxu0 0.0
    %3890 = vmatprep.subr.mxu0 0.0
    %3891 = vmatpush1.xpose.msra.mxu0 0.0
    %3892 = vmatprep.subr.mxu0 0.0
    %3893 = vmatpush1.xpose.msra.mxu0 0.0
    %3894 = vmatprep.subr.mxu0 0.0
    %3895 = vmatpush1.xpose.msra.mxu0 0.0
    %3896 = vmatprep.subr.mxu0 0.0
    %3897 = vmatpush1.xpose.msra.mxu0 0.0
    %3898 = vmatprep.subr.mxu0 0.0
    %3899 = vmatpush1.xpose.msra.mxu0 0.0
    %3900 = vmatprep.subr.mxu0 0.0
    %3901 = vmatpush1.xpose.msra.mxu0 0.0
    %3902 = vmatprep.subr.mxu0 0.0
    %3903 = vmatpush1.xpose.msra.mxu0 0.0
    %3904 = vmatprep.subr.mxu0 0.0
    %3905 = vmatpush1.xpose.msra.mxu0 0.0
    %3906 = vmatprep.subr.mxu0 0.0
    %3907 = vmatpush1.xpose.msra.mxu0 0.0
    %3908 = vmatprep.subr.mxu0 0.0
    %3909 = vmatpush1.xpose.msra.mxu0 0.0
    %3910 = vmatprep.subr.mxu0 0.0
    %3911 = vmatpush1.xpose.msra.mxu0 0.0
    %3912 = vmatprep.subr.mxu0 0.0
    %3913 = vmatpush1.xpose.msra.mxu0 0.0
    %3914 = vmatprep.subr.mxu0 0.0
    %3915 = vmatpush1.xpose.msra.mxu0 0.0
    %3916 = vmatprep.subr.mxu0 0.0
    %3917 = vmatpush1.xpose.msra.mxu0 0.0
    %3918 = vmatprep.subr.mxu0 0.0
    %3919 = vmatpush1.xpose.msra.mxu0 0.0
    %3920 = vmatprep.subr.mxu0 0.0
    %3921 = vmatpush1.xpose.msra.mxu0 0.0
    %3922 = vmatprep.subr.mxu0 0.0
    %3923 = vmatpush1.xpose.msra.mxu0 0.0
    %3924 = vmatprep.subr.mxu0 0.0
    %3925 = vmatpush1.xpose.msra.mxu0 0.0
    %3926 = vmatprep.subr.mxu0 0.0
    %3927 = vmatpush1.xpose.msra.mxu0 0.0
    %3928 = vmatprep.subr.mxu0 0.0
    %3929 = vmatpush1.xpose.msra.mxu0 0.0
    %3930 = vmatprep.subr.mxu0 0.0
    %3931 = vmatpush1.xpose.msra.mxu0 0.0
    %3932 = vmatprep.subr.mxu0 0.0
    %3933 = vmatpush1.xpose.msra.mxu0 0.0
    %3934 = vmatprep.subr.mxu0 0.0
    %3935 = vmatpush1.xpose.msra.mxu0 0.0
    %3936 = vmatprep.subr.mxu0 0.0
    %3937 = vmatpush1.xpose.msra.mxu0 0.0
    %3938 = vmatprep.subr.mxu0 0.0
    %3939 = vmatpush1.xpose.msra.mxu0 0.0
    %3940 = vmatprep.subr.mxu0 0.0
    %3941 = vmatpush1.xpose.msra.mxu0 0.0
    %3942 = vmatprep.subr.mxu0 0.0
    %3943 = vmatpush1.xpose.msra.mxu0 0.0
    %3944 = vmatprep.subr.mxu0 0.0
    %3945 = vmatpush1.xpose.msra.mxu0 0.0
    %3946 = vmatprep.subr.mxu0 0.0
    %3947 = vmatpush1.xpose.msra.mxu0 0.0
    %3948 = vmatprep.subr.mxu0 0.0
    %3949 = vmatpush1.xpose.msra.mxu0 0.0
    %3950 = vmatprep.mubr.f32.mxu0 0.0
    %3951 = vmatmul.mubr.f32.gmra.mrb[0].mxu0 %v3881
    %v3952 = vpop.f32.mrb[0].mxu0
    %v3953 = vadd.f32 0.0, %v3952
    %v3954 = vpop.f32.mrb[0].mxu0
    %3955 = vdwg.mxu0
    %v3956 = vsel %vm231, %v3953, -inf
    %3957 = vmax.xlane.f32.xlu0 %v3956
    %v3958 = vpop.xlane.xlu0 %3957
    %v3959 = vsub.f32 %v3953, %v3958
    %v3960 = vmul.f32 %v3959, 1.442695
    %v3961 = vpow.pop %v3960
    %v3962 = vsel %vm231, %v3961, 0.0
    %3963 = vadd.xlane.f32.xlu0 %v3962
    %v3964 = vpop.xlane.xlu0 %3963
    %3965 = vrot.lane.b32.xlu0 %v3872, 96
    %v3966 = vpop.permute.xlu0 %3965
    %v3969 = vsel %vm231, %v3961, 0
    %3971 = vmatprep.subr.mxu0 0.0
    %3972 = vmatpush1.msra.mxu0 %v3966
    %3973 = vmatprep.subr.mxu0 0.0
    %3974 = vmatpush1.msra.mxu0 0.0
    %3975 = vmatprep.subr.mxu0 0.0
    %3976 = vmatpush1.msra.mxu0 0.0
    %3977 = vmatprep.subr.mxu0 0.0
    %3978 = vmatpush1.msra.mxu0 0.0
    %3979 = vmatprep.subr.mxu0 0.0
    %3980 = vmatpush1.msra.mxu0 0.0
    %3981 = vmatprep.subr.mxu0 0.0
    %3982 = vmatpush1.msra.mxu0 0.0
    %3983 = vmatprep.subr.mxu0 0.0
    %3984 = vmatpush1.msra.mxu0 0.0
    %3985 = vmatprep.subr.mxu0 0.0
    %3986 = vmatpush1.msra.mxu0 0.0
    %3987 = vmatprep.subr.mxu0 0.0
    %3988 = vmatpush1.msra.mxu0 0.0
    %3989 = vmatprep.subr.mxu0 0.0
    %3990 = vmatpush1.msra.mxu0 0.0
    %3991 = vmatprep.subr.mxu0 0.0
    %3992 = vmatpush1.msra.mxu0 0.0
    %3993 = vmatprep.subr.mxu0 0.0
    %3994 = vmatpush1.msra.mxu0 0.0
    %3995 = vmatprep.subr.mxu0 0.0
    %3996 = vmatpush1.msra.mxu0 0.0
    %3997 = vmatprep.subr.mxu0 0.0
    %3998 = vmatpush1.msra.mxu0 0.0
    %3999 = vmatprep.subr.mxu0 0.0
    %4000 = vmatpush1.msra.mxu0 0.0
    %4001 = vmatprep.subr.mxu0 0.0
    %4002 = vmatpush1.msra.mxu0 0.0
    %4003 = vmatprep.subr.mxu0 0.0
    %4004 = vmatpush1.msra.mxu0 0.0
    %4005 = vmatprep.subr.mxu0 0.0
    %4006 = vmatpush1.msra.mxu0 0.0
    %4007 = vmatprep.subr.mxu0 0.0
    %4008 = vmatpush1.msra.mxu0 0.0
    %4009 = vmatprep.subr.mxu0 0.0
    %4010 = vmatpush1.msra.mxu0 0.0
    %4011 = vmatprep.subr.mxu0 0.0
    %4012 = vmatpush1.msra.mxu0 0.0
    %4013 = vmatprep.subr.mxu0 0.0
    %4014 = vmatpush1.msra.mxu0 0.0
    %4015 = vmatprep.subr.mxu0 0.0
    %4016 = vmatpush1.msra.mxu0 0.0
    %4017 = vmatprep.subr.mxu0 0.0
    %4018 = vmatpush1.msra.mxu0 0.0
    %4019 = vmatprep.subr.mxu0 0.0
    %4020 = vmatpush1.msra.mxu0 0.0
    %4021 = vmatprep.subr.mxu0 0.0
    %4022 = vmatpush1.msra.mxu0 0.0
    %4023 = vmatprep.subr.mxu0 0.0
    %4024 = vmatpush1.msra.mxu0 0.0
    %4025 = vmatprep.subr.mxu0 0.0
    %4026 = vmatpush1.msra.mxu0 0.0
    %4027 = vmatprep.subr.mxu0 0.0
    %4028 = vmatpush1.msra.mxu0 0.0
    %4029 = vmatprep.subr.mxu0 0.0
    %4030 = vmatpush1.msra.mxu0 0.0
    %4031 = vmatprep.subr.mxu0 0.0
    %4032 = vmatpush1.msra.mxu0 0.0
    %4033 = vmatprep.subr.mxu0 0.0
    %4034 = vmatpush1.msra.mxu0 0.0
    %4035 = vmatprep.mubr.f32.mxu0 0.0
    %4036 = vmatmul.mubr.f32.gmra.mrb[0].mxu0 %v3969
    %v4037 = vpop.f32.mrb[0].mxu0
    %v4038 = vadd.f32 0.0, %v4037
    %v4039 = vpop.f32.mrb[0].mxu0
    %4040 = vdwg.mxu0
    %v4041 = vrcp.pop %v3964
    %v4042 = vmul.f32 %v4038, %v4041
    %4043 = vrot.lane.b32.xlu0 %v3782, 120
    %v4044 = vpop.permute.xlu0 %4043
    %4045 = vrot.lane.b32.xlu0 %v3872, 120
    %v4046 = vpop.permute.xlu0 %4045
    %v4047 = vsel %vm231, %v4044, 0
    %v4049 = vsel %vm231, %v4046, 0
    %4051 = vmatprep.subr.mxu0 0.0
    %4052 = vmatpush1.xpose.msra.mxu0 %v4049
    %4053 = vmatprep.subr.mxu0 0.0
    %4054 = vmatpush1.xpose.msra.mxu0 0.0
    %4055 = vmatprep.subr.mxu0 0.0
    %4056 = vmatpush1.xpose.msra.mxu0 0.0
    %4057 = vmatprep.subr.mxu0 0.0
    %4058 = vmatpush1.xpose.msra.mxu0 0.0
    %4059 = vmatprep.subr.mxu0 0.0
    %4060 = vmatpush1.xpose.msra.mxu0 0.0
    %4061 = vmatprep.subr.mxu0 0.0
    %4062 = vmatpush1.xpose.msra.mxu0 0.0
    %4063 = vmatprep.subr.mxu0 0.0
    %4064 = vmatpush1.xpose.msra.mxu0 0.0
    %4065 = vmatprep.subr.mxu0 0.0
    %4066 = vmatpush1.xpose.msra.mxu0 0.0
    %4067 = vmatprep.subr.mxu0 0.0
    %4068 = vmatpush1.xpose.msra.mxu0 0.0
    %4069 = vmatprep.subr.mxu0 0.0
    %4070 = vmatpush1.xpose.msra.mxu0 0.0
    %4071 = vmatprep.subr.mxu0 0.0
    %4072 = vmatpush1.xpose.msra.mxu0 0.0
    %4073 = vmatprep.subr.mxu0 0.0
    %4074 = vmatpush1.xpose.msra.mxu0 0.0
    %4075 = vmatprep.subr.mxu0 0.0
    %4076 = vmatpush1.xpose.msra.mxu0 0.0
    %4077 = vmatprep.subr.mxu0 0.0
    %4078 = vmatpush1.xpose.msra.mxu0 0.0
    %4079 = vmatprep.subr.mxu0 0.0
    %4080 = vmatpush1.xpose.msra.mxu0 0.0
    %4081 = vmatprep.subr.mxu0 0.0
    %4082 = vmatpush1.xpose.msra.mxu0 0.0
    %4083 = vmatprep.subr.mxu0 0.0
    %4084 = vmatpush1.xpose.msra.mxu0 0.0
    %4085 = vmatprep.subr.mxu0 0.0
    %4086 = vmatpush1.xpose.msra.mxu0 0.0
    %4087 = vmatprep.subr.mxu0 0.0
    %4088 = vmatpush1.xpose.msra.mxu0 0.0
    %4089 = vmatprep.subr.mxu0 0.0
    %4090 = vmatpush1.xpose.msra.mxu0 0.0
    %4091 = vmatprep.subr.mxu0 0.0
    %4092 = vmatpush1.xpose.msra.mxu0 0.0
    %4093 = vmatprep.subr.mxu0 0.0
    %4094 = vmatpush1.xpose.msra.mxu0 0.0
    %4095 = vmatprep.subr.mxu0 0.0
    %4096 = vmatpush1.xpose.msra.mxu0 0.0
    %4097 = vmatprep.subr.mxu0 0.0
    %4098 = vmatpush1.xpose.msra.mxu0 0.0
    %4099 = vmatprep.subr.mxu0 0.0
    %4100 = vmatpush1.xpose.msra.mxu0 0.0
    %4101 = vmatprep.subr.mxu0 0.0
    %4102 = vmatpush1.xpose.msra.mxu0 0.0
    %4103 = vmatprep.subr.mxu0 0.0
    %4104 = vmatpush1.xpose.msra.mxu0 0.0
    %4105 = vmatprep.subr.mxu0 0.0
    %4106 = vmatpush1.xpose.msra.mxu0 0.0
    %4107 = vmatprep.subr.mxu0 0.0
    %4108 = vmatpush1.xpose.msra.mxu0 0.0
    %4109 = vmatprep.subr.mxu0 0.0
    %4110 = vmatpush1.xpose.msra.mxu0 0.0
    %4111 = vmatprep.subr.mxu0 0.0
    %4112 = vmatpush1.xpose.msra.mxu0 0.0
    %4113 = vmatprep.subr.mxu0 0.0
    %4114 = vmatpush1.xpose.msra.mxu0 0.0
    %4115 = vmatprep.mubr.f32.mxu0 0.0
    %4116 = vmatmul.mubr.f32.gmra.mrb[0].mxu0 %v4047
    %v4117 = vpop.f32.mrb[0].mxu0
    %v4118 = vadd.f32 0.0, %v4117
    %v4119 = vpop.f32.mrb[0].mxu0
    %4120 = vdwg.mxu0
    %v4121 = vsel %vm231, %v4118, -inf
    %4122 = vmax.xlane.f32.xlu0 %v4121
    %v4123 = vpop.xlane.xlu0 %4122
    %v4124 = vsub.f32 %v4118, %v4123
    %v4125 = vmul.f32 %v4124, 1.442695
    %v4126 = vpow.pop %v4125
    %v4127 = vsel %vm231, %v4126, 0.0
    %4128 = vadd.xlane.f32.xlu0 %v4127
    %v4129 = vpop.xlane.xlu0 %4128
    %4130 = vrot.lane.b32.xlu0 %v3872, 88
    %v4131 = vpop.permute.xlu0 %4130
    %v4134 = vsel %vm231, %v4126, 0
    %4136 = vmatprep.subr.mxu0 0.0
    %4137 = vmatpush1.msra.mxu0 %v4131
    %4138 = vmatprep.subr.mxu0 0.0
    %4139 = vmatpush1.msra.mxu0 0.0
    %4140 = vmatprep.subr.mxu0 0.0
    %4141 = vmatpush1.msra.mxu0 0.0
    %4142 = vmatprep.subr.mxu0 0.0
    %4143 = vmatpush1.msra.mxu0 0.0
    %4144 = vmatprep.subr.mxu0 0.0
    %4145 = vmatpush1.msra.mxu0 0.0
    %4146 = vmatprep.subr.mxu0 0.0
    %4147 = vmatpush1.msra.mxu0 0.0
    %4148 = vmatprep.subr.mxu0 0.0
    %4149 = vmatpush1.msra.mxu0 0.0
    %4150 = vmatprep.subr.mxu0 0.0
    %4151 = vmatpush1.msra.mxu0 0.0
    %4152 = vmatprep.subr.mxu0 0.0
    %4153 = vmatpush1.msra.mxu0 0.0
    %4154 = vmatprep.subr.mxu0 0.0
    %4155 = vmatpush1.msra.mxu0 0.0
    %4156 = vmatprep.subr.mxu0 0.0
    %4157 = vmatpush1.msra.mxu0 0.0
    %4158 = vmatprep.subr.mxu0 0.0
    %4159 = vmatpush1.msra.mxu0 0.0
    %4160 = vmatprep.subr.mxu0 0.0
    %4161 = vmatpush1.msra.mxu0 0.0
    %4162 = vmatprep.subr.mxu0 0.0
    %4163 = vmatpush1.msra.mxu0 0.0
    %4164 = vmatprep.subr.mxu0 0.0
    %4165 = vmatpush1.msra.mxu0 0.0
    %4166 = vmatprep.subr.mxu0 0.0
    %4167 = vmatpush1.msra.mxu0 0.0
    %4168 = vmatprep.subr.mxu0 0.0
    %4169 = vmatpush1.msra.mxu0 0.0
    %4170 = vmatprep.subr.mxu0 0.0
    %4171 = vmatpush1.msra.mxu0 0.0
    %4172 = vmatprep.subr.mxu0 0.0
    %4173 = vmatpush1.msra.mxu0 0.0
    %4174 = vmatprep.subr.mxu0 0.0
    %4175 = vmatpush1.msra.mxu0 0.0
    %4176 = vmatprep.subr.mxu0 0.0
    %4177 = vmatpush1.msra.mxu0 0.0
    %4178 = vmatprep.subr.mxu0 0.0
    %4179 = vmatpush1.msra.mxu0 0.0
    %4180 = vmatprep.subr.mxu0 0.0
    %4181 = vmatpush1.msra.mxu0 0.0
    %4182 = vmatprep.subr.mxu0 0.0
    %4183 = vmatpush1.msra.mxu0 0.0
    %4184 = vmatprep.subr.mxu0 0.0
    %4185 = vmatpush1.msra.mxu0 0.0
    %4186 = vmatprep.subr.mxu0 0.0
    %4187 = vmatpush1.msra.mxu0 0.0
    %4188 = vmatprep.subr.mxu0 0.0
    %4189 = vmatpush1.msra.mxu0 0.0
    %4190 = vmatprep.subr.mxu0 0.0
    %4191 = vmatpush1.msra.mxu0 0.0
    %4192 = vmatprep.subr.mxu0 0.0
    %4193 = vmatpush1.msra.mxu0 0.0
    %4194 = vmatprep.subr.mxu0 0.0
    %4195 = vmatpush1.msra.mxu0 0.0
    %4196 = vmatprep.subr.mxu0 0.0
    %4197 = vmatpush1.msra.mxu0 0.0
    %4198 = vmatprep.subr.mxu0 0.0
    %4199 = vmatpush1.msra.mxu0 0.0
    %4200 = vmatprep.mubr.f32.mxu0 0.0
    %4201 = vmatmul.mubr.f32.gmra.mrb[0].mxu0 %v4134
    %v4202 = vpop.f32.mrb[0].mxu0
    %v4203 = vadd.f32 0.0, %v4202
    %v4204 = vpop.f32.mrb[0].mxu0
    %4205 = vdwg.mxu0
    %v4206 = vrcp.pop %v4129
    %v4207 = vmul.f32 %v4203, %v4206
    %4208 = vrot.lane.b32.xlu0 %v3782, 112
    %v4209 = vpop.permute.xlu0 %4208
    %4210 = vrot.lane.b32.xlu0 %v3872, 112
    %v4211 = vpop.permute.xlu0 %4210
    %v4212 = vsel %vm231, %v4209, 0
    %v4214 = vsel %vm231, %v4211, 0
    %4216 = vmatprep.subr.mxu0 0.0
    %4217 = vmatpush1.xpose.msra.mxu0 %v4214
    %4218 = vmatprep.subr.mxu0 0.0
    %4219 = vmatpush1.xpose.msra.mxu0 0.0
    %4220 = vmatprep.subr.mxu0 0.0
    %4221 = vmatpush1.xpose.msra.mxu0 0.0
    %4222 = vmatprep.subr.mxu0 0.0
    %4223 = vmatpush1.xpose.msra.mxu0 0.0
    %4224 = vmatprep.subr.mxu0 0.0
    %4225 = vmatpush1.xpose.msra.mxu0 0.0
    %4226 = vmatprep.subr.mxu0 0.0
    %4227 = vmatpush1.xpose.msra.mxu0 0.0
    %4228 = vmatprep.subr.mxu0 0.0
    %4229 = vmatpush1.xpose.msra.mxu0 0.0
    %4230 = vmatprep.subr.mxu0 0.0
    %4231 = vmatpush1.xpose.msra.mxu0 0.0
    %4232 = vmatprep.subr.mxu0 0.0
    %4233 = vmatpush1.xpose.msra.mxu0 0.0
    %4234 = vmatprep.subr.mxu0 0.0
    %4235 = vmatpush1.xpose.msra.mxu0 0.0
    %4236 = vmatprep.subr.mxu0 0.0
    %4237 = vmatpush1.xpose.msra.mxu0 0.0
    %4238 = vmatprep.subr.mxu0 0.0
    %4239 = vmatpush1.xpose.msra.mxu0 0.0
    %4240 = vmatprep.subr.mxu0 0.0
    %4241 = vmatpush1.xpose.msra.mxu0 0.0
    %4242 = vmatprep.subr.mxu0 0.0
    %4243 = vmatpush1.xpose.msra.mxu0 0.0
    %4244 = vmatprep.subr.mxu0 0.0
    %4245 = vmatpush1.xpose.msra.mxu0 0.0
    %4246 = vmatprep.subr.mxu0 0.0
    %4247 = vmatpush1.xpose.msra.mxu0 0.0
    %4248 = vmatprep.subr.mxu0 0.0
    %4249 = vmatpush1.xpose.msra.mxu0 0.0
    %4250 = vmatprep.subr.mxu0 0.0
    %4251 = vmatpush1.xpose.msra.mxu0 0.0
    %4252 = vmatprep.subr.mxu0 0.0
    %4253 = vmatpush1.xpose.msra.mxu0 0.0
    %4254 = vmatprep.subr.mxu0 0.0
    %4255 = vmatpush1.xpose.msra.mxu0 0.0
    %4256 = vmatprep.subr.mxu0 0.0
    %4257 = vmatpush1.xpose.msra.mxu0 0.0
    %4258 = vmatprep.subr.mxu0 0.0
    %4259 = vmatpush1.xpose.msra.mxu0 0.0
    %4260 = vmatprep.subr.mxu0 0.0
    %4261 = vmatpush1.xpose.msra.mxu0 0.0
    %4262 = vmatprep.subr.mxu0 0.0
    %4263 = vmatpush1.xpose.msra.mxu0 0.0
    %4264 = vmatprep.subr.mxu0 0.0
    %4265 = vmatpush1.xpose.msra.mxu0 0.0
    %4266 = vmatprep.subr.mxu0 0.0
    %4267 = vmatpush1.xpose.msra.mxu0 0.0
    %4268 = vmatprep.subr.mxu0 0.0
    %4269 = vmatpush1.xpose.msra.mxu0 0.0
    %4270 = vmatprep.subr.mxu0 0.0
    %4271 = vmatpush1.xpose.msra.mxu0 0.0
    %4272 = vmatprep.subr.mxu0 0.0
    %4273 = vmatpush1.xpose.msra.mxu0 0.0
    %4274 = vmatprep.subr.mxu0 0.0
    %4275 = vmatpush1.xpose.msra.mxu0 0.0
    %4276 = vmatprep.subr.mxu0 0.0
    %4277 = vmatpush1.xpose.msra.mxu0 0.0
    %4278 = vmatprep.subr.mxu0 0.0
    %4279 = vmatpush1.xpose.msra.mxu0 0.0
    %4280 = vmatprep.mubr.f32.mxu0 0.0
    %4281 = vmatmul.mubr.f32.gmra.mrb[0].mxu0 %v4212
    %v4282 = vpop.f32.mrb[0].mxu0
    %v4283 = vadd.f32 0.0, %v4282
    %v4284 = vpop.f32.mrb[0].mxu0
    %4285 = vdwg.mxu0
    %v4286 = vsel %vm231, %v4283, -inf
    %4287 = vmax.xlane.f32.xlu0 %v4286
    %v4288 = vpop.xlane.xlu0 %4287
    %v4289 = vsub.f32 %v4283, %v4288
    %v4290 = vmul.f32 %v4289, 1.442695
    %v4291 = vpow.pop %v4290
    %v4292 = vsel %vm231, %v4291, 0.0
    %4293 = vadd.xlane.f32.xlu0 %v4292
    %v4294 = vpop.xlane.xlu0 %4293
    %4295 = vrot.lane.b32.xlu0 %v3872, 80
    %v4296 = vpop.permute.xlu0 %4295
    %v4299 = vsel %vm231, %v4291, 0
    %4301 = vmatprep.subr.mxu0 0.0
    %4302 = vmatpush1.msra.mxu0 %v4296
    %4303 = vmatprep.subr.mxu0 0.0
    %4304 = vmatpush1.msra.mxu0 0.0
    %4305 = vmatprep.subr.mxu0 0.0
    %4306 = vmatpush1.msra.mxu0 0.0
    %4307 = vmatprep.subr.mxu0 0.0
    %4308 = vmatpush1.msra.mxu0 0.0
    %4309 = vmatprep.subr.mxu0 0.0
    %4310 = vmatpush1.msra.mxu0 0.0
    %4311 = vmatprep.subr.mxu0 0.0
    %4312 = vmatpush1.msra.mxu0 0.0
    %4313 = vmatprep.subr.mxu0 0.0
    %4314 = vmatpush1.msra.mxu0 0.0
    %4315 = vmatprep.subr.mxu0 0.0
    %4316 = vmatpush1.msra.mxu0 0.0
    %4317 = vmatprep.subr.mxu0 0.0
    %4318 = vmatpush1.msra.mxu0 0.0
    %4319 = vmatprep.subr.mxu0 0.0
    %4320 = vmatpush1.msra.mxu0 0.0
    %4321 = vmatprep.subr.mxu0 0.0
    %4322 = vmatpush1.msra.mxu0 0.0
    %4323 = vmatprep.subr.mxu0 0.0
    %4324 = vmatpush1.msra.mxu0 0.0
    %4325 = vmatprep.subr.mxu0 0.0
    %4326 = vmatpush1.msra.mxu0 0.0
    %4327 = vmatprep.subr.mxu0 0.0
    %4328 = vmatpush1.msra.mxu0 0.0
    %4329 = vmatprep.subr.mxu0 0.0
    %4330 = vmatpush1.msra.mxu0 0.0
    %4331 = vmatprep.subr.mxu0 0.0
    %4332 = vmatpush1.msra.mxu0 0.0
    %4333 = vmatprep.subr.mxu0 0.0
    %4334 = vmatpush1.msra.mxu0 0.0
    %4335 = vmatprep.subr.mxu0 0.0
    %4336 = vmatpush1.msra.mxu0 0.0
    %4337 = vmatprep.subr.mxu0 0.0
    %4338 = vmatpush1.msra.mxu0 0.0
    %4339 = vmatprep.subr.mxu0 0.0
    %4340 = vmatpush1.msra.mxu0 0.0
    %4341 = vmatprep.subr.mxu0 0.0
    %4342 = vmatpush1.msra.mxu0 0.0
    %4343 = vmatprep.subr.mxu0 0.0
    %4344 = vmatpush1.msra.mxu0 0.0
    %4345 = vmatprep.subr.mxu0 0.0
    %4346 = vmatpush1.msra.mxu0 0.0
    %4347 = vmatprep.subr.mxu0 0.0
    %4348 = vmatpush1.msra.mxu0 0.0
    %4349 = vmatprep.subr.mxu0 0.0
    %4350 = vmatpush1.msra.mxu0 0.0
    %4351 = vmatprep.subr.mxu0 0.0
    %4352 = vmatpush1.msra.mxu0 0.0
    %4353 = vmatprep.subr.mxu0 0.0
    %4354 = vmatpush1.msra.mxu0 0.0
    %4355 = vmatprep.subr.mxu0 0.0
    %4356 = vmatpush1.msra.mxu0 0.0
    %4357 = vmatprep.subr.mxu0 0.0
    %4358 = vmatpush1.msra.mxu0 0.0
    %4359 = vmatprep.subr.mxu0 0.0
    %4360 = vmatpush1.msra.mxu0 0.0
    %4361 = vmatprep.subr.mxu0 0.0
    %4362 = vmatpush1.msra.mxu0 0.0
    %4363 = vmatprep.subr.mxu0 0.0
    %4364 = vmatpush1.msra.mxu0 0.0
    %4365 = vmatprep.mubr.f32.mxu0 0.0
    %4366 = vmatmul.mubr.f32.gmra.mrb[0].mxu0 %v4299
    %v4367 = vpop.f32.mrb[0].mxu0
    %v4368 = vadd.f32 0.0, %v4367
    %v4369 = vpop.f32.mrb[0].mxu0
    %4370 = vdwg.mxu0
    %v4371 = vrcp.pop %v4294
    %v4372 = vmul.f32 %v4368, %v4371
    %4373 = vrot.lane.b32.xlu0 %v3782, 104
    %v4374 = vpop.permute.xlu0 %4373
    %4375 = vrot.lane.b32.xlu0 %v3872, 104
    %v4376 = vpop.permute.xlu0 %4375
    %v4377 = vsel %vm231, %v4374, 0
    %v4379 = vsel %vm231, %v4376, 0
    %4381 = vmatprep.subr.mxu0 0.0
    %4382 = vmatpush1.xpose.msra.mxu0 %v4379
    %4383 = vmatprep.subr.mxu0 0.0
    %4384 = vmatpush1.xpose.msra.mxu0 0.0
    %4385 = vmatprep.subr.mxu0 0.0
    %4386 = vmatpush1.xpose.msra.mxu0 0.0
    %4387 = vmatprep.subr.mxu0 0.0
    %4388 = vmatpush1.xpose.msra.mxu0 0.0
    %4389 = vmatprep.subr.mxu0 0.0
    %4390 = vmatpush1.xpose.msra.mxu0 0.0
    %4391 = vmatprep.subr.mxu0 0.0
    %4392 = vmatpush1.xpose.msra.mxu0 0.0
    %4393 = vmatprep.subr.mxu0 0.0
    %4394 = vmatpush1.xpose.msra.mxu0 0.0
    %4395 = vmatprep.subr.mxu0 0.0
    %4396 = vmatpush1.xpose.msra.mxu0 0.0
    %4397 = vmatprep.subr.mxu0 0.0
    %4398 = vmatpush1.xpose.msra.mxu0 0.0
    %4399 = vmatprep.subr.mxu0 0.0
    %4400 = vmatpush1.xpose.msra.mxu0 0.0
    %4401 = vmatprep.subr.mxu0 0.0
    %4402 = vmatpush1.xpose.msra.mxu0 0.0
    %4403 = vmatprep.subr.mxu0 0.0
    %4404 = vmatpush1.xpose.msra.mxu0 0.0
    %4405 = vmatprep.subr.mxu0 0.0
    %4406 = vmatpush1.xpose.msra.mxu0 0.0
    %4407 = vmatprep.subr.mxu0 0.0
    %4408 = vmatpush1.xpose.msra.mxu0 0.0
    %4409 = vmatprep.subr.mxu0 0.0
    %4410 = vmatpush1.xpose.msra.mxu0 0.0
    %4411 = vmatprep.subr.mxu0 0.0
    %4412 = vmatpush1.xpose.msra.mxu0 0.0
    %4413 = vmatprep.subr.mxu0 0.0
    %4414 = vmatpush1.xpose.msra.mxu0 0.0
    %4415 = vmatprep.subr.mxu0 0.0
    %4416 = vmatpush1.xpose.msra.mxu0 0.0
    %4417 = vmatprep.subr.mxu0 0.0
    %4418 = vmatpush1.xpose.msra.mxu0 0.0
    %4419 = vmatprep.subr.mxu0 0.0
    %4420 = vmatpush1.xpose.msra.mxu0 0.0
    %4421 = vmatprep.subr.mxu0 0.0
    %4422 = vmatpush1.xpose.msra.mxu0 0.0
    %4423 = vmatprep.subr.mxu0 0.0
    %4424 = vmatpush1.xpose.msra.mxu0 0.0
    %4425 = vmatprep.subr.mxu0 0.0
    %4426 = vmatpush1.xpose.msra.mxu0 0.0
    %4427 = vmatprep.subr.mxu0 0.0
    %4428 = vmatpush1.xpose.msra.mxu0 0.0
    %4429 = vmatprep.subr.mxu0 0.0
    %4430 = vmatpush1.xpose.msra.mxu0 0.0
    %4431 = vmatprep.subr.mxu0 0.0
    %4432 = vmatpush1.xpose.msra.mxu0 0.0
    %4433 = vmatprep.subr.mxu0 0.0
    %4434 = vmatpush1.xpose.msra.mxu0 0.0
    %4435 = vmatprep.subr.mxu0 0.0
    %4436 = vmatpush1.xpose.msra.mxu0 0.0
    %4437 = vmatprep.subr.mxu0 0.0
    %4438 = vmatpush1.xpose.msra.mxu0 0.0
    %4439 = vmatprep.subr.mxu0 0.0
    %4440 = vmatpush1.xpose.msra.mxu0 0.0
    %4441 = vmatprep.subr.mxu0 0.0
    %4442 = vmatpush1.xpose.msra.mxu0 0.0
    %4443 = vmatprep.subr.mxu0 0.0
    %4444 = vmatpush1.xpose.msra.mxu0 0.0
    %4445 = vmatprep.mubr.f32.mxu0 0.0
    %4446 = vmatmul.mubr.f32.gmra.mrb[0].mxu0 %v4377
    %v4447 = vpop.f32.mrb[0].mxu0
    %v4448 = vadd.f32 0.0, %v4447
    %v4449 = vpop.f32.mrb[0].mxu0
    %4450 = vdwg.mxu0
    %v4451 = vsel %vm231, %v4448, -inf
    %4452 = vmax.xlane.f32.xlu0 %v4451
    %v4453 = vpop.xlane.xlu0 %4452
    %v4454 = vsub.f32 %v4448, %v4453
    %v4455 = vmul.f32 %v4454, 1.442695
    %v4456 = vpow.pop %v4455
    %v4457 = vsel %vm231, %v4456, 0.0
    %4458 = vadd.xlane.f32.xlu0 %v4457
    %v4459 = vpop.xlane.xlu0 %4458
    %4460 = vrot.lane.b32.xlu0 %v3872, 72
    %v4461 = vpop.permute.xlu0 %4460
    %v4464 = vsel %vm231, %v4456, 0
    %4466 = vmatprep.subr.mxu0 0.0
    %4467 = vmatpush1.msra.mxu0 %v4461
    %4468 = vmatprep.subr.mxu0 0.0
    %4469 = vmatpush1.msra.mxu0 0.0
    %4470 = vmatprep.subr.mxu0 0.0
    %4471 = vmatpush1.msra.mxu0 0.0
    %4472 = vmatprep.subr.mxu0 0.0
    %4473 = vmatpush1.msra.mxu0 0.0
    %4474 = vmatprep.subr.mxu0 0.0
    %4475 = vmatpush1.msra.mxu0 0.0
    %4476 = vmatprep.subr.mxu0 0.0
    %4477 = vmatpush1.msra.mxu0 0.0
    %4478 = vmatprep.subr.mxu0 0.0
    %4479 = vmatpush1.msra.mxu0 0.0
    %4480 = vmatprep.subr.mxu0 0.0
    %4481 = vmatpush1.msra.mxu0 0.0
    %4482 = vmatprep.subr.mxu0 0.0
    %4483 = vmatpush1.msra.mxu0 0.0
    %4484 = vmatprep.subr.mxu0 0.0
    %4485 = vmatpush1.msra.mxu0 0.0
    %4486 = vmatprep.subr.mxu0 0.0
    %4487 = vmatpush1.msra.mxu0 0.0
    %4488 = vmatprep.subr.mxu0 0.0
    %4489 = vmatpush1.msra.mxu0 0.0
    %4490 = vmatprep.subr.mxu0 0.0
    %4491 = vmatpush1.msra.mxu0 0.0
    %4492 = vmatprep.subr.mxu0 0.0
    %4493 = vmatpush1.msra.mxu0 0.0
    %4494 = vmatprep.subr.mxu0 0.0
    %4495 = vmatpush1.msra.mxu0 0.0
    %4496 = vmatprep.subr.mxu0 0.0
    %4497 = vmatpush1.msra.mxu0 0.0
    %4498 = vmatprep.subr.mxu0 0.0
    %4499 = vmatpush1.msra.mxu0 0.0
    %4500 = vmatprep.subr.mxu0 0.0
    %4501 = vmatpush1.msra.mxu0 0.0
    %4502 = vmatprep.subr.mxu0 0.0
    %4503 = vmatpush1.msra.mxu0 0.0
    %4504 = vmatprep.subr.mxu0 0.0
    %4505 = vmatpush1.msra.mxu0 0.0
    %4506 = vmatprep.subr.mxu0 0.0
    %4507 = vmatpush1.msra.mxu0 0.0
    %4508 = vmatprep.subr.mxu0 0.0
    %4509 = vmatpush1.msra.mxu0 0.0
    %4510 = vmatprep.subr.mxu0 0.0
    %4511 = vmatpush1.msra.mxu0 0.0
    %4512 = vmatprep.subr.mxu0 0.0
    %4513 = vmatpush1.msra.mxu0 0.0
    %4514 = vmatprep.subr.mxu0 0.0
    %4515 = vmatpush1.msra.mxu0 0.0
    %4516 = vmatprep.subr.mxu0 0.0
    %4517 = vmatpush1.msra.mxu0 0.0
    %4518 = vmatprep.subr.mxu0 0.0
    %4519 = vmatpush1.msra.mxu0 0.0
    %4520 = vmatprep.subr.mxu0 0.0
    %4521 = vmatpush1.msra.mxu0 0.0
    %4522 = vmatprep.subr.mxu0 0.0
    %4523 = vmatpush1.msra.mxu0 0.0
    %4524 = vmatprep.subr.mxu0 0.0
    %4525 = vmatpush1.msra.mxu0 0.0
    %4526 = vmatprep.subr.mxu0 0.0
    %4527 = vmatpush1.msra.mxu0 0.0
    %4528 = vmatprep.subr.mxu0 0.0
    %4529 = vmatpush1.msra.mxu0 0.0
    %4530 = vmatprep.mubr.f32.mxu0 0.0
    %4531 = vmatmul.mubr.f32.gmra.mrb[0].mxu0 %v4464
    %v4532 = vpop.f32.mrb[0].mxu0
    %v4533 = vadd.f32 0.0, %v4532
    %v4534 = vpop.f32.mrb[0].mxu0
    %4535 = vdwg.mxu0
    %v4536 = vrcp.pop %v4459
    %v4537 = vmul.f32 %v4533, %v4536
    %4539 = vrot.lane.b32.xlu0 %v4207, 8
    %v4540 = vpop.permute.xlu0 %4539
    %4543 = vrot.lane.b32.xlu0 %v4372, 16
    %v4544 = vpop.permute.xlu0 %4543
    %4547 = vrot.lane.b32.xlu0 %v4537, 24
    %v4548 = vpop.permute.xlu0 %4547
    %v4550 = vsel %vm231, %v4042, %v4540
    %v4551 = vsel %vm901, %v4550, %v4544
    %v4552 = vsel %vm903, %v4551, %v4548
    %v4554 = vsel %vm231, %v3787, 0
    %v4557 = vsel %vm231, %v3877, 0
    %4559 = vmatprep.subr.mxu0 0.0
    %4560 = vmatpush1.xpose.msra.mxu0 %v4557
    %4561 = vmatprep.subr.mxu0 0.0
    %4562 = vmatpush1.xpose.msra.mxu0 0.0
    %4563 = vmatprep.subr.mxu0 0.0
    %4564 = vmatpush1.xpose.msra.mxu0 0.0
    %4565 = vmatprep.subr.mxu0 0.0
    %4566 = vmatpush1.xpose.msra.mxu0 0.0
    %4567 = vmatprep.subr.mxu0 0.0
    %4568 = vmatpush1.xpose.msra.mxu0 0.0
    %4569 = vmatprep.subr.mxu0 0.0
    %4570 = vmatpush1.xpose.msra.mxu0 0.0
    %4571 = vmatprep.subr.mxu0 0.0
    %4572 = vmatpush1.xpose.msra.mxu0 0.0
    %4573 = vmatprep.subr.mxu0 0.0
    %4574 = vmatpush1.xpose.msra.mxu0 0.0
    %4575 = vmatprep.subr.mxu0 0.0
    %4576 = vmatpush1.xpose.msra.mxu0 0.0
    %4577 = vmatprep.subr.mxu0 0.0
    %4578 = vmatpush1.xpose.msra.mxu0 0.0
    %4579 = vmatprep.subr.mxu0 0.0
    %4580 = vmatpush1.xpose.msra.mxu0 0.0
    %4581 = vmatprep.subr.mxu0 0.0
    %4582 = vmatpush1.xpose.msra.mxu0 0.0
    %4583 = vmatprep.subr.mxu0 0.0
    %4584 = vmatpush1.xpose.msra.mxu0 0.0
    %4585 = vmatprep.subr.mxu0 0.0
    %4586 = vmatpush1.xpose.msra.mxu0 0.0
    %4587 = vmatprep.subr.mxu0 0.0
    %4588 = vmatpush1.xpose.msra.mxu0 0.0
    %4589 = vmatprep.subr.mxu0 0.0
    %4590 = vmatpush1.xpose.msra.mxu0 0.0
    %4591 = vmatprep.subr.mxu0 0.0
    %4592 = vmatpush1.xpose.msra.mxu0 0.0
    %4593 = vmatprep.subr.mxu0 0.0
    %4594 = vmatpush1.xpose.msra.mxu0 0.0
    %4595 = vmatprep.subr.mxu0 0.0
    %4596 = vmatpush1.xpose.msra.mxu0 0.0
    %4597 = vmatprep.subr.mxu0 0.0
    %4598 = vmatpush1.xpose.msra.mxu0 0.0
    %4599 = vmatprep.subr.mxu0 0.0
    %4600 = vmatpush1.xpose.msra.mxu0 0.0
    %4601 = vmatprep.subr.mxu0 0.0
    %4602 = vmatpush1.xpose.msra.mxu0 0.0
    %4603 = vmatprep.subr.mxu0 0.0
    %4604 = vmatpush1.xpose.msra.mxu0 0.0
    %4605 = vmatprep.subr.mxu0 0.0
    %4606 = vmatpush1.xpose.msra.mxu0 0.0
    %4607 = vmatprep.subr.mxu0 0.0
    %4608 = vmatpush1.xpose.msra.mxu0 0.0
    %4609 = vmatprep.subr.mxu0 0.0
    %4610 = vmatpush1.xpose.msra.mxu0 0.0
    %4611 = vmatprep.subr.mxu0 0.0
    %4612 = vmatpush1.xpose.msra.mxu0 0.0
    %4613 = vmatprep.subr.mxu0 0.0
    %4614 = vmatpush1.xpose.msra.mxu0 0.0
    %4615 = vmatprep.subr.mxu0 0.0
    %4616 = vmatpush1.xpose.msra.mxu0 0.0
    %4617 = vmatprep.subr.mxu0 0.0
    %4618 = vmatpush1.xpose.msra.mxu0 0.0
    %4619 = vmatprep.subr.mxu0 0.0
    %4620 = vmatpush1.xpose.msra.mxu0 0.0
    %4621 = vmatprep.subr.mxu0 0.0
    %4622 = vmatpush1.xpose.msra.mxu0 0.0
    %4623 = vmatprep.mubr.f32.mxu0 0.0
    %4624 = vmatmul.mubr.f32.gmra.mrb[0].mxu0 %v4554
    %v4625 = vpop.f32.mrb[0].mxu0
    %v4626 = vadd.f32 0.0, %v4625
    %v4627 = vpop.f32.mrb[0].mxu0
    %4628 = vdwg.mxu0
    %v4629 = vsel %vm231, %v4626, -inf
    %4630 = vmax.xlane.f32.xlu0 %v4629
    %v4631 = vpop.xlane.xlu0 %4630
    %v4632 = vsub.f32 %v4626, %v4631
    %v4633 = vmul.f32 %v4632, 1.442695
    %v4634 = vpow.pop %v4633
    %v4635 = vsel %vm231, %v4634, 0.0
    %4636 = vadd.xlane.f32.xlu0 %v4635
    %v4637 = vpop.xlane.xlu0 %4636
    %4638 = vrot.lane.b32.xlu0 %v3877, 96
    %v4639 = vpop.permute.xlu0 %4638
    %v4642 = vsel %vm231, %v4634, 0
    %4644 = vmatprep.subr.mxu0 0.0
    %4645 = vmatpush1.msra.mxu0 %v4639
    %4646 = vmatprep.subr.mxu0 0.0
    %4647 = vmatpush1.msra.mxu0 0.0
    %4648 = vmatprep.subr.mxu0 0.0
    %4649 = vmatpush1.msra.mxu0 0.0
    %4650 = vmatprep.subr.mxu0 0.0
    %4651 = vmatpush1.msra.mxu0 0.0
    %4652 = vmatprep.subr.mxu0 0.0
    %4653 = vmatpush1.msra.mxu0 0.0
    %4654 = vmatprep.subr.mxu0 0.0
    %4655 = vmatpush1.msra.mxu0 0.0
    %4656 = vmatprep.subr.mxu0 0.0
    %4657 = vmatpush1.msra.mxu0 0.0
    %4658 = vmatprep.subr.mxu0 0.0
    %4659 = vmatpush1.msra.mxu0 0.0
    %4660 = vmatprep.subr.mxu0 0.0
    %4661 = vmatpush1.msra.mxu0 0.0
    %4662 = vmatprep.subr.mxu0 0.0
    %4663 = vmatpush1.msra.mxu0 0.0
    %4664 = vmatprep.subr.mxu0 0.0
    %4665 = vmatpush1.msra.mxu0 0.0
    %4666 = vmatprep.subr.mxu0 0.0
    %4667 = vmatpush1.msra.mxu0 0.0
    %4668 = vmatprep.subr.mxu0 0.0
    %4669 = vmatpush1.msra.mxu0 0.0
    %4670 = vmatprep.subr.mxu0 0.0
    %4671 = vmatpush1.msra.mxu0 0.0
    %4672 = vmatprep.subr.mxu0 0.0
    %4673 = vmatpush1.msra.mxu0 0.0
    %4674 = vmatprep.subr.mxu0 0.0
    %4675 = vmatpush1.msra.mxu0 0.0
    %4676 = vmatprep.subr.mxu0 0.0
    %4677 = vmatpush1.msra.mxu0 0.0
    %4678 = vmatprep.subr.mxu0 0.0
    %4679 = vmatpush1.msra.mxu0 0.0
    %4680 = vmatprep.subr.mxu0 0.0
    %4681 = vmatpush1.msra.mxu0 0.0
    %4682 = vmatprep.subr.mxu0 0.0
    %4683 = vmatpush1.msra.mxu0 0.0
    %4684 = vmatprep.subr.mxu0 0.0
    %4685 = vmatpush1.msra.mxu0 0.0
    %4686 = vmatprep.subr.mxu0 0.0
    %4687 = vmatpush1.msra.mxu0 0.0
    %4688 = vmatprep.subr.mxu0 0.0
    %4689 = vmatpush1.msra.mxu0 0.0
    %4690 = vmatprep.subr.mxu0 0.0
    %4691 = vmatpush1.msra.mxu0 0.0
    %4692 = vmatprep.subr.mxu0 0.0
    %4693 = vmatpush1.msra.mxu0 0.0
    %4694 = vmatprep.subr.mxu0 0.0
    %4695 = vmatpush1.msra.mxu0 0.0
    %4696 = vmatprep.subr.mxu0 0.0
    %4697 = vmatpush1.msra.mxu0 0.0
    %4698 = vmatprep.subr.mxu0 0.0
    %4699 = vmatpush1.msra.mxu0 0.0
    %4700 = vmatprep.subr.mxu0 0.0
    %4701 = vmatpush1.msra.mxu0 0.0
    %4702 = vmatprep.subr.mxu0 0.0
    %4703 = vmatpush1.msra.mxu0 0.0
    %4704 = vmatprep.subr.mxu0 0.0
    %4705 = vmatpush1.msra.mxu0 0.0
    %4706 = vmatprep.subr.mxu0 0.0
    %4707 = vmatpush1.msra.mxu0 0.0
    %4708 = vmatprep.mubr.f32.mxu0 0.0
    %4709 = vmatmul.mubr.f32.gmra.mrb[0].mxu0 %v4642
    %v4710 = vpop.f32.mrb[0].mxu0
    %v4711 = vadd.f32 0.0, %v4710
    %v4712 = vpop.f32.mrb[0].mxu0
    %4713 = vdwg.mxu0
    %v4714 = vrcp.pop %v4637
    %v4715 = vmul.f32 %v4711, %v4714
    %4716 = vrot.lane.b32.xlu0 %v3787, 120
    %v4717 = vpop.permute.xlu0 %4716
    %4718 = vrot.lane.b32.xlu0 %v3877, 120
    %v4719 = vpop.permute.xlu0 %4718
    %v4720 = vsel %vm231, %v4717, 0
    %v4722 = vsel %vm231, %v4719, 0
    %4724 = vmatprep.subr.mxu0 0.0
    %4725 = vmatpush1.xpose.msra.mxu0 %v4722
    %4726 = vmatprep.subr.mxu0 0.0
    %4727 = vmatpush1.xpose.msra.mxu0 0.0
    %4728 = vmatprep.subr.mxu0 0.0
    %4729 = vmatpush1.xpose.msra.mxu0 0.0
    %4730 = vmatprep.subr.mxu0 0.0
    %4731 = vmatpush1.xpose.msra.mxu0 0.0
    %4732 = vmatprep.subr.mxu0 0.0
    %4733 = vmatpush1.xpose.msra.mxu0 0.0
    %4734 = vmatprep.subr.mxu0 0.0
    %4735 = vmatpush1.xpose.msra.mxu0 0.0
    %4736 = vmatprep.subr.mxu0 0.0
    %4737 = vmatpush1.xpose.msra.mxu0 0.0
    %4738 = vmatprep.subr.mxu0 0.0
    %4739 = vmatpush1.xpose.msra.mxu0 0.0
    %4740 = vmatprep.subr.mxu0 0.0
    %4741 = vmatpush1.xpose.msra.mxu0 0.0
    %4742 = vmatprep.subr.mxu0 0.0
    %4743 = vmatpush1.xpose.msra.mxu0 0.0
    %4744 = vmatprep.subr.mxu0 0.0
    %4745 = vmatpush1.xpose.msra.mxu0 0.0
    %4746 = vmatprep.subr.mxu0 0.0
    %4747 = vmatpush1.xpose.msra.mxu0 0.0
    %4748 = vmatprep.subr.mxu0 0.0
    %4749 = vmatpush1.xpose.msra.mxu0 0.0
    %4750 = vmatprep.subr.mxu0 0.0
    %4751 = vmatpush1.xpose.msra.mxu0 0.0
    %4752 = vmatprep.subr.mxu0 0.0
    %4753 = vmatpush1.xpose.msra.mxu0 0.0
    %4754 = vmatprep.subr.mxu0 0.0
    %4755 = vmatpush1.xpose.msra.mxu0 0.0
    %4756 = vmatprep.subr.mxu0 0.0
    %4757 = vmatpush1.xpose.msra.mxu0 0.0
    %4758 = vmatprep.subr.mxu0 0.0
    %4759 = vmatpush1.xpose.msra.mxu0 0.0
    %4760 = vmatprep.subr.mxu0 0.0
    %4761 = vmatpush1.xpose.msra.mxu0 0.0
    %4762 = vmatprep.subr.mxu0 0.0
    %4763 = vmatpush1.xpose.msra.mxu0 0.0
    %4764 = vmatprep.subr.mxu0 0.0
    %4765 = vmatpush1.xpose.msra.mxu0 0.0
    %4766 = vmatprep.subr.mxu0 0.0
    %4767 = vmatpush1.xpose.msra.mxu0 0.0
    %4768 = vmatprep.subr.mxu0 0.0
    %4769 = vmatpush1.xpose.msra.mxu0 0.0
    %4770 = vmatprep.subr.mxu0 0.0
    %4771 = vmatpush1.xpose.msra.mxu0 0.0
    %4772 = vmatprep.subr.mxu0 0.0
    %4773 = vmatpush1.xpose.msra.mxu0 0.0
    %4774 = vmatprep.subr.mxu0 0.0
    %4775 = vmatpush1.xpose.msra.mxu0 0.0
    %4776 = vmatprep.subr.mxu0 0.0
    %4777 = vmatpush1.xpose.msra.mxu0 0.0
    %4778 = vmatprep.subr.mxu0 0.0
    %4779 = vmatpush1.xpose.msra.mxu0 0.0
    %4780 = vmatprep.subr.mxu0 0.0
    %4781 = vmatpush1.xpose.msra.mxu0 0.0
    %4782 = vmatprep.subr.mxu0 0.0
    %4783 = vmatpush1.xpose.msra.mxu0 0.0
    %4784 = vmatprep.subr.mxu0 0.0
    %4785 = vmatpush1.xpose.msra.mxu0 0.0
    %4786 = vmatprep.subr.mxu0 0.0
    %4787 = vmatpush1.xpose.msra.mxu0 0.0
    %4788 = vmatprep.mubr.f32.mxu0 0.0
    %4789 = vmatmul.mubr.f32.gmra.mrb[0].mxu0 %v4720
    %v4790 = vpop.f32.mrb[0].mxu0
    %v4791 = vadd.f32 0.0, %v4790
    %v4792 = vpop.f32.mrb[0].mxu0
    %4793 = vdwg.mxu0
    %v4794 = vsel %vm231, %v4791, -inf
    %4795 = vmax.xlane.f32.xlu0 %v4794
    %v4796 = vpop.xlane.xlu0 %4795
    %v4797 = vsub.f32 %v4791, %v4796
    %v4798 = vmul.f32 %v4797, 1.442695
    %v4799 = vpow.pop %v4798
    %v4800 = vsel %vm231, %v4799, 0.0
    %4801 = vadd.xlane.f32.xlu0 %v4800
    %v4802 = vpop.xlane.xlu0 %4801
    %4803 = vrot.lane.b32.xlu0 %v3877, 88
    %v4804 = vpop.permute.xlu0 %4803
    %v4807 = vsel %vm231, %v4799, 0
    %4809 = vmatprep.subr.mxu0 0.0
    %4810 = vmatpush1.msra.mxu0 %v4804
    %4811 = vmatprep.subr.mxu0 0.0
    %4812 = vmatpush1.msra.mxu0 0.0
    %4813 = vmatprep.subr.mxu0 0.0
    %4814 = vmatpush1.msra.mxu0 0.0
    %4815 = vmatprep.subr.mxu0 0.0
    %4816 = vmatpush1.msra.mxu0 0.0
    %4817 = vmatprep.subr.mxu0 0.0
    %4818 = vmatpush1.msra.mxu0 0.0
    %4819 = vmatprep.subr.mxu0 0.0
    %4820 = vmatpush1.msra.mxu0 0.0
    %4821 = vmatprep.subr.mxu0 0.0
    %4822 = vmatpush1.msra.mxu0 0.0
    %4823 = vmatprep.subr.mxu0 0.0
    %4824 = vmatpush1.msra.mxu0 0.0
    %4825 = vmatprep.subr.mxu0 0.0
    %4826 = vmatpush1.msra.mxu0 0.0
    %4827 = vmatprep.subr.mxu0 0.0
    %4828 = vmatpush1.msra.mxu0 0.0
    %4829 = vmatprep.subr.mxu0 0.0
    %4830 = vmatpush1.msra.mxu0 0.0
    %4831 = vmatprep.subr.mxu0 0.0
    %4832 = vmatpush1.msra.mxu0 0.0
    %4833 = vmatprep.subr.mxu0 0.0
    %4834 = vmatpush1.msra.mxu0 0.0
    %4835 = vmatprep.subr.mxu0 0.0
    %4836 = vmatpush1.msra.mxu0 0.0
    %4837 = vmatprep.subr.mxu0 0.0
    %4838 = vmatpush1.msra.mxu0 0.0
    %4839 = vmatprep.subr.mxu0 0.0
    %4840 = vmatpush1.msra.mxu0 0.0
    %4841 = vmatprep.subr.mxu0 0.0
    %4842 = vmatpush1.msra.mxu0 0.0
    %4843 = vmatprep.subr.mxu0 0.0
    %4844 = vmatpush1.msra.mxu0 0.0
    %4845 = vmatprep.subr.mxu0 0.0
    %4846 = vmatpush1.msra.mxu0 0.0
    %4847 = vmatprep.subr.mxu0 0.0
    %4848 = vmatpush1.msra.mxu0 0.0
    %4849 = vmatprep.subr.mxu0 0.0
    %4850 = vmatpush1.msra.mxu0 0.0
    %4851 = vmatprep.subr.mxu0 0.0
    %4852 = vmatpush1.msra.mxu0 0.0
    %4853 = vmatprep.subr.mxu0 0.0
    %4854 = vmatpush1.msra.mxu0 0.0
    %4855 = vmatprep.subr.mxu0 0.0
    %4856 = vmatpush1.msra.mxu0 0.0
    %4857 = vmatprep.subr.mxu0 0.0
    %4858 = vmatpush1.msra.mxu0 0.0
    %4859 = vmatprep.subr.mxu0 0.0
    %4860 = vmatpush1.msra.mxu0 0.0
    %4861 = vmatprep.subr.mxu0 0.0
    %4862 = vmatpush1.msra.mxu0 0.0
    %4863 = vmatprep.subr.mxu0 0.0
    %4864 = vmatpush1.msra.mxu0 0.0
    %4865 = vmatprep.subr.mxu0 0.0
    %4866 = vmatpush1.msra.mxu0 0.0
    %4867 = vmatprep.subr.mxu0 0.0
    %4868 = vmatpush1.msra.mxu0 0.0
    %4869 = vmatprep.subr.mxu0 0.0
    %4870 = vmatpush1.msra.mxu0 0.0
    %4871 = vmatprep.subr.mxu0 0.0
    %4872 = vmatpush1.msra.mxu0 0.0
    %4873 = vmatprep.mubr.f32.mxu0 0.0
    %4874 = vmatmul.mubr.f32.gmra.mrb[0].mxu0 %v4807
    %v4875 = vpop.f32.mrb[0].mxu0
    %v4876 = vadd.f32 0.0, %v4875
    %v4877 = vpop.f32.mrb[0].mxu0
    %4878 = vdwg.mxu0
    %v4879 = vrcp.pop %v4802
    %v4880 = vmul.f32 %v4876, %v4879
    %4881 = vrot.lane.b32.xlu0 %v3787, 112
    %v4882 = vpop.permute.xlu0 %4881
    %4883 = vrot.lane.b32.xlu0 %v3877, 112
    %v4884 = vpop.permute.xlu0 %4883
    %v4885 = vsel %vm231, %v4882, 0
    %v4887 = vsel %vm231, %v4884, 0
    %4889 = vmatprep.subr.mxu0 0.0
    %4890 = vmatpush1.xpose.msra.mxu0 %v4887
    %4891 = vmatprep.subr.mxu0 0.0
    %4892 = vmatpush1.xpose.msra.mxu0 0.0
    %4893 = vmatprep.subr.mxu0 0.0
    %4894 = vmatpush1.xpose.msra.mxu0 0.0
    %4895 = vmatprep.subr.mxu0 0.0
    %4896 = vmatpush1.xpose.msra.mxu0 0.0
    %4897 = vmatprep.subr.mxu0 0.0
    %4898 = vmatpush1.xpose.msra.mxu0 0.0
    %4899 = vmatprep.subr.mxu0 0.0
    %4900 = vmatpush1.xpose.msra.mxu0 0.0
    %4901 = vmatprep.subr.mxu0 0.0
    %4902 = vmatpush1.xpose.msra.mxu0 0.0
    %4903 = vmatprep.subr.mxu0 0.0
    %4904 = vmatpush1.xpose.msra.mxu0 0.0
    %4905 = vmatprep.subr.mxu0 0.0
    %4906 = vmatpush1.xpose.msra.mxu0 0.0
    %4907 = vmatprep.subr.mxu0 0.0
    %4908 = vmatpush1.xpose.msra.mxu0 0.0
    %4909 = vmatprep.subr.mxu0 0.0
    %4910 = vmatpush1.xpose.msra.mxu0 0.0
    %4911 = vmatprep.subr.mxu0 0.0
    %4912 = vmatpush1.xpose.msra.mxu0 0.0
    %4913 = vmatprep.subr.mxu0 0.0
    %4914 = vmatpush1.xpose.msra.mxu0 0.0
    %4915 = vmatprep.subr.mxu0 0.0
    %4916 = vmatpush1.xpose.msra.mxu0 0.0
    %4917 = vmatprep.subr.mxu0 0.0
    %4918 = vmatpush1.xpose.msra.mxu0 0.0
    %4919 = vmatprep.subr.mxu0 0.0
    %4920 = vmatpush1.xpose.msra.mxu0 0.0
    %4921 = vmatprep.subr.mxu0 0.0
    %4922 = vmatpush1.xpose.msra.mxu0 0.0
    %4923 = vmatprep.subr.mxu0 0.0
    %4924 = vmatpush1.xpose.msra.mxu0 0.0
    %4925 = vmatprep.subr.mxu0 0.0
    %4926 = vmatpush1.xpose.msra.mxu0 0.0
    %4927 = vmatprep.subr.mxu0 0.0
    %4928 = vmatpush1.xpose.msra.mxu0 0.0
    %4929 = vmatprep.subr.mxu0 0.0
    %4930 = vmatpush1.xpose.msra.mxu0 0.0
    %4931 = vmatprep.subr.mxu0 0.0
    %4932 = vmatpush1.xpose.msra.mxu0 0.0
    %4933 = vmatprep.subr.mxu0 0.0
    %4934 = vmatpush1.xpose.msra.mxu0 0.0
    %4935 = vmatprep.subr.mxu0 0.0
    %4936 = vmatpush1.xpose.msra.mxu0 0.0
    %4937 = vmatprep.subr.mxu0 0.0
    %4938 = vmatpush1.xpose.msra.mxu0 0.0
    %4939 = vmatprep.subr.mxu0 0.0
    %4940 = vmatpush1.xpose.msra.mxu0 0.0
    %4941 = vmatprep.subr.mxu0 0.0
    %4942 = vmatpush1.xpose.msra.mxu0 0.0
    %4943 = vmatprep.subr.mxu0 0.0
    %4944 = vmatpush1.xpose.msra.mxu0 0.0
    %4945 = vmatprep.subr.mxu0 0.0
    %4946 = vmatpush1.xpose.msra.mxu0 0.0
    %4947 = vmatprep.subr.mxu0 0.0
    %4948 = vmatpush1.xpose.msra.mxu0 0.0
    %4949 = vmatprep.subr.mxu0 0.0
    %4950 = vmatpush1.xpose.msra.mxu0 0.0
    %4951 = vmatprep.subr.mxu0 0.0
    %4952 = vmatpush1.xpose.msra.mxu0 0.0
    %4953 = vmatprep.mubr.f32.mxu0 0.0
    %4954 = vmatmul.mubr.f32.gmra.mrb[0].mxu0 %v4885
    %v4955 = vpop.f32.mrb[0].mxu0
    %v4956 = vadd.f32 0.0, %v4955
    %v4957 = vpop.f32.mrb[0].mxu0
    %4958 = vdwg.mxu0
    %v4959 = vsel %vm231, %v4956, -inf
    %4960 = vmax.xlane.f32.xlu0 %v4959
    %v4961 = vpop.xlane.xlu0 %4960
    %v4962 = vsub.f32 %v4956, %v4961
    %v4963 = vmul.f32 %v4962, 1.442695
    %v4964 = vpow.pop %v4963
    %v4965 = vsel %vm231, %v4964, 0.0
    %4966 = vadd.xlane.f32.xlu0 %v4965
    %v4967 = vpop.xlane.xlu0 %4966
    %4968 = vrot.lane.b32.xlu0 %v3877, 80
    %v4969 = vpop.permute.xlu0 %4968
    %v4972 = vsel %vm231, %v4964, 0
    %4974 = vmatprep.subr.mxu0 0.0
    %4975 = vmatpush1.msra.mxu0 %v4969
    %4976 = vmatprep.subr.mxu0 0.0
    %4977 = vmatpush1.msra.mxu0 0.0
    %4978 = vmatprep.subr.mxu0 0.0
    %4979 = vmatpush1.msra.mxu0 0.0
    %4980 = vmatprep.subr.mxu0 0.0
    %4981 = vmatpush1.msra.mxu0 0.0
    %4982 = vmatprep.subr.mxu0 0.0
    %4983 = vmatpush1.msra.mxu0 0.0
    %4984 = vmatprep.subr.mxu0 0.0
    %4985 = vmatpush1.msra.mxu0 0.0
    %4986 = vmatprep.subr.mxu0 0.0
    %4987 = vmatpush1.msra.mxu0 0.0
    %4988 = vmatprep.subr.mxu0 0.0
    %4989 = vmatpush1.msra.mxu0 0.0
    %4990 = vmatprep.subr.mxu0 0.0
    %4991 = vmatpush1.msra.mxu0 0.0
    %4992 = vmatprep.subr.mxu0 0.0
    %4993 = vmatpush1.msra.mxu0 0.0
    %4994 = vmatprep.subr.mxu0 0.0
    %4995 = vmatpush1.msra.mxu0 0.0
    %4996 = vmatprep.subr.mxu0 0.0
    %4997 = vmatpush1.msra.mxu0 0.0
    %4998 = vmatprep.subr.mxu0 0.0
    %4999 = vmatpush1.msra.mxu0 0.0
    %5000 = vmatprep.subr.mxu0 0.0
    %5001 = vmatpush1.msra.mxu0 0.0
    %5002 = vmatprep.subr.mxu0 0.0
    %5003 = vmatpush1.msra.mxu0 0.0
    %5004 = vmatprep.subr.mxu0 0.0
    %5005 = vmatpush1.msra.mxu0 0.0
    %5006 = vmatprep.subr.mxu0 0.0
    %5007 = vmatpush1.msra.mxu0 0.0
    %5008 = vmatprep.subr.mxu0 0.0
    %5009 = vmatpush1.msra.mxu0 0.0
    %5010 = vmatprep.subr.mxu0 0.0
    %5011 = vmatpush1.msra.mxu0 0.0
    %5012 = vmatprep.subr.mxu0 0.0
    %5013 = vmatpush1.msra.mxu0 0.0
    %5014 = vmatprep.subr.mxu0 0.0
    %5015 = vmatpush1.msra.mxu0 0.0
    %5016 = vmatprep.subr.mxu0 0.0
    %5017 = vmatpush1.msra.mxu0 0.0
    %5018 = vmatprep.subr.mxu0 0.0
    %5019 = vmatpush1.msra.mxu0 0.0
    %5020 = vmatprep.subr.mxu0 0.0
    %5021 = vmatpush1.msra.mxu0 0.0
    %5022 = vmatprep.subr.mxu0 0.0
    %5023 = vmatpush1.msra.mxu0 0.0
    %5024 = vmatprep.subr.mxu0 0.0
    %5025 = vmatpush1.msra.mxu0 0.0
    %5026 = vmatprep.subr.mxu0 0.0
    %5027 = vmatpush1.msra.mxu0 0.0
    %5028 = vmatprep.subr.mxu0 0.0
    %5029 = vmatpush1.msra.mxu0 0.0
    %5030 = vmatprep.subr.mxu0 0.0
    %5031 = vmatpush1.msra.mxu0 0.0
    %5032 = vmatprep.subr.mxu0 0.0
    %5033 = vmatpush1.msra.mxu0 0.0
    %5034 = vmatprep.subr.mxu0 0.0
    %5035 = vmatpush1.msra.mxu0 0.0
    %5036 = vmatprep.subr.mxu0 0.0
    %5037 = vmatpush1.msra.mxu0 0.0
    %5038 = vmatprep.mubr.f32.mxu0 0.0
    %5039 = vmatmul.mubr.f32.gmra.mrb[0].mxu0 %v4972
    %v5040 = vpop.f32.mrb[0].mxu0
    %v5041 = vadd.f32 0.0, %v5040
    %v5042 = vpop.f32.mrb[0].mxu0
    %5043 = vdwg.mxu0
    %v5044 = vrcp.pop %v4967
    %v5045 = vmul.f32 %v5041, %v5044
    %5046 = vrot.lane.b32.xlu0 %v3787, 104
    %v5047 = vpop.permute.xlu0 %5046
    %5048 = vrot.lane.b32.xlu0 %v3877, 104
    %v5049 = vpop.permute.xlu0 %5048
    %v5050 = vsel %vm231, %v5047, 0
    %v5052 = vsel %vm231, %v5049, 0
    %5054 = vmatprep.subr.mxu0 0.0
    %5055 = vmatpush1.xpose.msra.mxu0 %v5052
    %5056 = vmatprep.subr.mxu0 0.0
    %5057 = vmatpush1.xpose.msra.mxu0 0.0
    %5058 = vmatprep.subr.mxu0 0.0
    %5059 = vmatpush1.xpose.msra.mxu0 0.0
    %5060 = vmatprep.subr.mxu0 0.0
    %5061 = vmatpush1.xpose.msra.mxu0 0.0
    %5062 = vmatprep.subr.mxu0 0.0
    %5063 = vmatpush1.xpose.msra.mxu0 0.0
    %5064 = vmatprep.subr.mxu0 0.0
    %5065 = vmatpush1.xpose.msra.mxu0 0.0
    %5066 = vmatprep.subr.mxu0 0.0
    %5067 = vmatpush1.xpose.msra.mxu0 0.0
    %5068 = vmatprep.subr.mxu0 0.0
    %5069 = vmatpush1.xpose.msra.mxu0 0.0
    %5070 = vmatprep.subr.mxu0 0.0
    %5071 = vmatpush1.xpose.msra.mxu0 0.0
    %5072 = vmatprep.subr.mxu0 0.0
    %5073 = vmatpush1.xpose.msra.mxu0 0.0
    %5074 = vmatprep.subr.mxu0 0.0
    %5075 = vmatpush1.xpose.msra.mxu0 0.0
    %5076 = vmatprep.subr.mxu0 0.0
    %5077 = vmatpush1.xpose.msra.mxu0 0.0
    %5078 = vmatprep.subr.mxu0 0.0
    %5079 = vmatpush1.xpose.msra.mxu0 0.0
    %5080 = vmatprep.subr.mxu0 0.0
    %5081 = vmatpush1.xpose.msra.mxu0 0.0
    %5082 = vmatprep.subr.mxu0 0.0
    %5083 = vmatpush1.xpose.msra.mxu0 0.0
    %5084 = vmatprep.subr.mxu0 0.0
    %5085 = vmatpush1.xpose.msra.mxu0 0.0
    %5086 = vmatprep.subr.mxu0 0.0
    %5087 = vmatpush1.xpose.msra.mxu0 0.0
    %5088 = vmatprep.subr.mxu0 0.0
    %5089 = vmatpush1.xpose.msra.mxu0 0.0
    %5090 = vmatprep.subr.mxu0 0.0
    %5091 = vmatpush1.xpose.msra.mxu0 0.0
    %5092 = vmatprep.subr.mxu0 0.0
    %5093 = vmatpush1.xpose.msra.mxu0 0.0
    %5094 = vmatprep.subr.mxu0 0.0
    %5095 = vmatpush1.xpose.msra.mxu0 0.0
    %5096 = vmatprep.subr.mxu0 0.0
    %5097 = vmatpush1.xpose.msra.mxu0 0.0
    %5098 = vmatprep.subr.mxu0 0.0
    %5099 = vmatpush1.xpose.msra.mxu0 0.0
    %5100 = vmatprep.subr.mxu0 0.0
    %5101 = vmatpush1.xpose.msra.mxu0 0.0
    %5102 = vmatprep.subr.mxu0 0.0
    %5103 = vmatpush1.xpose.msra.mxu0 0.0
    %5104 = vmatprep.subr.mxu0 0.0
    %5105 = vmatpush1.xpose.msra.mxu0 0.0
    %5106 = vmatprep.subr.mxu0 0.0
    %5107 = vmatpush1.xpose.msra.mxu0 0.0
    %5108 = vmatprep.subr.mxu0 0.0
    %5109 = vmatpush1.xpose.msra.mxu0 0.0
    %5110 = vmatprep.subr.mxu0 0.0
    %5111 = vmatpush1.xpose.msra.mxu0 0.0
    %5112 = vmatprep.subr.mxu0 0.0
    %5113 = vmatpush1.xpose.msra.mxu0 0.0
    %5114 = vmatprep.subr.mxu0 0.0
    %5115 = vmatpush1.xpose.msra.mxu0 0.0
    %5116 = vmatprep.subr.mxu0 0.0
    %5117 = vmatpush1.xpose.msra.mxu0 0.0
    %5118 = vmatprep.mubr.f32.mxu0 0.0
    %5119 = vmatmul.mubr.f32.gmra.mrb[0].mxu0 %v5050
    %v5120 = vpop.f32.mrb[0].mxu0
    %v5121 = vadd.f32 0.0, %v5120
    %v5122 = vpop.f32.mrb[0].mxu0
    %5123 = vdwg.mxu0
    %v5124 = vsel %vm231, %v5121, -inf
    %5125 = vmax.xlane.f32.xlu0 %v5124
    %v5126 = vpop.xlane.xlu0 %5125
    %v5127 = vsub.f32 %v5121, %v5126
    %v5128 = vmul.f32 %v5127, 1.442695
    %v5129 = vpow.pop %v5128
    %v5130 = vsel %vm231, %v5129, 0.0
    %5131 = vadd.xlane.f32.xlu0 %v5130
    %v5132 = vpop.xlane.xlu0 %5131
    %5133 = vrot.lane.b32.xlu0 %v3877, 72
    %v5134 = vpop.permute.xlu0 %5133
    %v5137 = vsel %vm231, %v5129, 0
    %5139 = vmatprep.subr.mxu0 0.0
    %5140 = vmatpush1.msra.mxu0 %v5134
    %5141 = vmatprep.subr.mxu0 0.0
    %5142 = vmatpush1.msra.mxu0 0.0
    %5143 = vmatprep.subr.mxu0 0.0
    %5144 = vmatpush1.msra.mxu0 0.0
    %5145 = vmatprep.subr.mxu0 0.0
    %5146 = vmatpush1.msra.mxu0 0.0
    %5147 = vmatprep.subr.mxu0 0.0
    %5148 = vmatpush1.msra.mxu0 0.0
    %5149 = vmatprep.subr.mxu0 0.0
    %5150 = vmatpush1.msra.mxu0 0.0
    %5151 = vmatprep.subr.mxu0 0.0
    %5152 = vmatpush1.msra.mxu0 0.0
    %5153 = vmatprep.subr.mxu0 0.0
    %5154 = vmatpush1.msra.mxu0 0.0
    %5155 = vmatprep.subr.mxu0 0.0
    %5156 = vmatpush1.msra.mxu0 0.0
    %5157 = vmatprep.subr.mxu0 0.0
    %5158 = vmatpush1.msra.mxu0 0.0
    %5159 = vmatprep.subr.mxu0 0.0
    %5160 = vmatpush1.msra.mxu0 0.0
    %5161 = vmatprep.subr.mxu0 0.0
    %5162 = vmatpush1.msra.mxu0 0.0
    %5163 = vmatprep.subr.mxu0 0.0
    %5164 = vmatpush1.msra.mxu0 0.0
    %5165 = vmatprep.subr.mxu0 0.0
    %5166 = vmatpush1.msra.mxu0 0.0
    %5167 = vmatprep.subr.mxu0 0.0
    %5168 = vmatpush1.msra.mxu0 0.0
    %5169 = vmatprep.subr.mxu0 0.0
    %5170 = vmatpush1.msra.mxu0 0.0
    %5171 = vmatprep.subr.mxu0 0.0
    %5172 = vmatpush1.msra.mxu0 0.0
    %5173 = vmatprep.subr.mxu0 0.0
    %5174 = vmatpush1.msra.mxu0 0.0
    %5175 = vmatprep.subr.mxu0 0.0
    %5176 = vmatpush1.msra.mxu0 0.0
    %5177 = vmatprep.subr.mxu0 0.0
    %5178 = vmatpush1.msra.mxu0 0.0
    %5179 = vmatprep.subr.mxu0 0.0
    %5180 = vmatpush1.msra.mxu0 0.0
    %5181 = vmatprep.subr.mxu0 0.0
    %5182 = vmatpush1.msra.mxu0 0.0
    %5183 = vmatprep.subr.mxu0 0.0
    %5184 = vmatpush1.msra.mxu0 0.0
    %5185 = vmatprep.subr.mxu0 0.0
    %5186 = vmatpush1.msra.mxu0 0.0
    %5187 = vmatprep.subr.mxu0 0.0
    %5188 = vmatpush1.msra.mxu0 0.0
    %5189 = vmatprep.subr.mxu0 0.0
    %5190 = vmatpush1.msra.mxu0 0.0
    %5191 = vmatprep.subr.mxu0 0.0
    %5192 = vmatpush1.msra.mxu0 0.0
    %5193 = vmatprep.subr.mxu0 0.0
    %5194 = vmatpush1.msra.mxu0 0.0
    %5195 = vmatprep.subr.mxu0 0.0
    %5196 = vmatpush1.msra.mxu0 0.0
    %5197 = vmatprep.subr.mxu0 0.0
    %5198 = vmatpush1.msra.mxu0 0.0
    %5199 = vmatprep.subr.mxu0 0.0
    %5200 = vmatpush1.msra.mxu0 0.0
    %5201 = vmatprep.subr.mxu0 0.0
    %5202 = vmatpush1.msra.mxu0 0.0
    %5203 = vmatprep.mubr.f32.mxu0 0.0
    %5204 = vmatmul.mubr.f32.gmra.mrb[0].mxu0 %v5137
    %v5205 = vpop.f32.mrb[0].mxu0
    %v5206 = vadd.f32 0.0, %v5205
    %v5207 = vpop.f32.mrb[0].mxu0
    %5208 = vdwg.mxu0
    %v5209 = vrcp.pop %v5132
    %v5210 = vmul.f32 %v5206, %v5209
    %5212 = vrot.lane.b32.xlu0 %v4880, 8
    %v5213 = vpop.permute.xlu0 %5212
    %5216 = vrot.lane.b32.xlu0 %v5045, 16
    %v5217 = vpop.permute.xlu0 %5216
    %5220 = vrot.lane.b32.xlu0 %v5210, 24
    %v5221 = vpop.permute.xlu0 %5220
    %v5223 = vsel %vm231, %v4715, %v5213
    %v5224 = vsel %vm901, %v5223, %v5217
    %v5225 = vsel %vm903, %v5224, %v5221
    %v5226 = vld [vmem:[%s2 + $0x28] sm:$0xff]
    %v5227 = vld [vmem:[%s2 + $0x58] sm:$0xff]
    %v5228 = vld [vmem:[%s2 + $0x88] sm:$0xff]
    %v5229 = vld [vmem:[%s2 + $0xb8] sm:$0xff]
    %v5230 = vld [vmem:[%s4 + $0xe] sm:$0x1]
    %v5231 = vlaneseq
    %v5232 = vshrl.u32 %v5231, 7
    %v5233 = vsub.s32 0, %v5232
    %v5234 = vrot.slane %v5230, %v5233
    %5239 = vrot.lane.b32.xlu0 %v5226, 96
    %v5240 = vpop.permute.xlu0 %5239
    %5241 = vrot.lane.b32.xlu0 %v5227, 96
    %v5242 = vpop.permute.xlu0 %5241
    %5243 = vrot.lane.b32.xlu0 %v5228, 96
    %v5244 = vpop.permute.xlu0 %5243
    %5245 = vrot.lane.b32.xlu0 %v5229, 96
    %v5246 = vpop.permute.xlu0 %5245
    %v5252 = vsel %vm56, %v4552, 0
    %v5255 = vsel %vm56, %v5225, 0
    %5257 = vmatprep.subr.mxu0 0.0
    %5258 = vmatpush1.msra.mxu0 %v5240
    %5259 = vmatprep.subr.mxu0 0.0
    %5260 = vmatpush1.msra.mxu0 %v5242
    %5261 = vmatprep.subr.mxu0 0.0
    %5262 = vmatpush1.msra.mxu0 %v5244
    %5263 = vmatprep.subr.mxu0 0.0
    %5264 = vmatpush1.msra.mxu0 %v5246
    %5265 = vmatprep.subr.mxu0 0.0
    %5266 = vmatpush1.msra.mxu0 0.0
    %5267 = vmatprep.subr.mxu0 0.0
    %5268 = vmatpush1.msra.mxu0 0.0
    %5269 = vmatprep.subr.mxu0 0.0
    %5270 = vmatpush1.msra.mxu0 0.0
    %5271 = vmatprep.subr.mxu0 0.0
    %5272 = vmatpush1.msra.mxu0 0.0
    %5273 = vmatprep.subr.mxu0 0.0
    %5274 = vmatpush1.msra.mxu0 0.0
    %5275 = vmatprep.subr.mxu0 0.0
    %5276 = vmatpush1.msra.mxu0 0.0
    %5277 = vmatprep.subr.mxu0 0.0
    %5278 = vmatpush1.msra.mxu0 0.0
    %5279 = vmatprep.subr.mxu0 0.0
    %5280 = vmatpush1.msra.mxu0 0.0
    %5281 = vmatprep.subr.mxu0 0.0
    %5282 = vmatpush1.msra.mxu0 0.0
    %5283 = vmatprep.subr.mxu0 0.0
    %5284 = vmatpush1.msra.mxu0 0.0
    %5285 = vmatprep.subr.mxu0 0.0
    %5286 = vmatpush1.msra.mxu0 0.0
    %5287 = vmatprep.subr.mxu0 0.0
    %5288 = vmatpush1.msra.mxu0 0.0
    %5289 = vmatprep.subr.mxu0 0.0
    %5290 = vmatpush1.msra.mxu0 0.0
    %5291 = vmatprep.subr.mxu0 0.0
    %5292 = vmatpush1.msra.mxu0 0.0
    %5293 = vmatprep.subr.mxu0 0.0
    %5294 = vmatpush1.msra.mxu0 0.0
    %5295 = vmatprep.subr.mxu0 0.0
    %5296 = vmatpush1.msra.mxu0 0.0
    %5297 = vmatprep.subr.mxu0 0.0
    %5298 = vmatpush1.msra.mxu0 0.0
    %5299 = vmatprep.subr.mxu0 0.0
    %5300 = vmatpush1.msra.mxu0 0.0
    %5301 = vmatprep.subr.mxu0 0.0
    %5302 = vmatpush1.msra.mxu0 0.0
    %5303 = vmatprep.subr.mxu0 0.0
    %5304 = vmatpush1.msra.mxu0 0.0
    %5305 = vmatprep.subr.mxu0 0.0
    %5306 = vmatpush1.msra.mxu0 0.0
    %5307 = vmatprep.subr.mxu0 0.0
    %5308 = vmatpush1.msra.mxu0 0.0
    %5309 = vmatprep.subr.mxu0 0.0
    %5310 = vmatpush1.msra.mxu0 0.0
    %5311 = vmatprep.subr.mxu0 0.0
    %5312 = vmatpush1.msra.mxu0 0.0
    %5313 = vmatprep.subr.mxu0 0.0
    %5314 = vmatpush1.msra.mxu0 0.0
    %5315 = vmatprep.subr.mxu0 0.0
    %5316 = vmatpush1.msra.mxu0 0.0
    %5317 = vmatprep.subr.mxu0 0.0
    %5318 = vmatpush1.msra.mxu0 0.0
    %5319 = vmatprep.subr.mxu0 0.0
    %5320 = vmatpush1.msra.mxu0 0.0
    %5321 = vmatprep.mubr.f32.mxu0 0.0
    %5322 = vmatmul.mubr.f32.gmra.mrb[0].mxu0 %v5252
    %v5323 = vpop.f32.mrb[0].mxu0
    %v5324 = vadd.f32 %v5234, %v5323
    %v5325 = vpop.f32.mrb[0].mxu0
    %5326 = vmatprep.mubr.f32.mxu0 0.0
    %5327 = vmatmul.mubr.f32.gmra.mrb[0].mxu0 %v5255
    %v5328 = vpop.f32.mrb[0].mxu0
    %v5329 = vadd.f32 %v5234, %v5328
    %v5330 = vpop.f32.mrb[0].mxu0
    %5331 = vdwg.mxu0
    %v5332 = vadd.f32 %v3698, %v5324
    %v5333 = vadd.f32 %v3699, %v5329
    %v5334 = vld [vmem:[%s4 + $0xf] sm:$0x1]
    %v5335 = vld [vmem:[%s4 + $0x10] sm:$0x1]
    %v5336 = vsel %vm56, %v5332, 0.0
    %5337 = vadd.xlane.f32.xlu0 %v5336
    %v5338 = vpop.xlane.xlu0 %5337
    %v5339 = vsel %vm56, %v5333, 0.0
    %5340 = vadd.xlane.f32.xlu0 %v5339
    %v5341 = vpop.xlane.xlu0 %5340
    %v5342 = vmul.f32 %v5338, %v1695
    %v5343 = vmul.f32 %v5341, %v1695
    %v5344 = vsub.f32 %v5332, %v5342
    %v5345 = vsub.f32 %v5333, %v5343
    %v5346 = vmul.f32 %v5344, %v5344
    %v5347 = vmul.f32 %v5345, %v5345
    %v5348 = vsel %vm56, %v5346, 0.0
    %5349 = vadd.xlane.f32.xlu0 %v5348
    %v5350 = vpop.xlane.xlu0 %5349
    %v5351 = vsel %vm56, %v5347, 0.0
    %5352 = vadd.xlane.f32.xlu0 %v5351
    %v5353 = vpop.xlane.xlu0 %5352
    %v5354 = vmul.f32 %v5350, %v1695
    %v5355 = vmul.f32 %v5353, %v1695
    %v5356 = vadd.f32 %v5354, 1e-05
    %v5357 = vadd.f32 %v5355, 1e-05
    %v5358 = vrsqrt.pop %v5356
    %v5359 = vrsqrt.pop %v5357
    %v5360 = vmul.f32 %v5344, %v5358
    %v5361 = vmul.f32 %v5345, %v5359
    %v5362 = vlaneseq
    %v5363 = vshrl.u32 %v5362, 7
    %v5364 = vsub.s32 0, %v5363
    %v5365 = vrot.slane %v5334, %v5364
    %v5366 = vmul.f32 %v5360, %v5365
    %v5367 = vmul.f32 %v5361, %v5365
    %v5368 = vlaneseq
    %v5369 = vshrl.u32 %v5368, 7
    %v5370 = vsub.s32 0, %v5369
    %v5371 = vrot.slane %v5335, %v5370
    %v5372 = vadd.f32 %v5366, %v5371
    %v5373 = vadd.f32 %v5367, %v5371
    %v5374 = vld [vmem:[%s2 + $0x18] sm:$0xff]
    %v5375 = vld [vmem:[%s2 + $0x48] sm:$0xff]
    %v5376 = vld [vmem:[%s2 + $0x78] sm:$0xff]
    %v5377 = vld [vmem:[%s2 + $0xa8] sm:$0xff]
    %v5378 = vld [vmem:[%s4 + $0x11] sm:$0x1]
    %v5379 = vlaneseq
    %v5380 = vshrl.u32 %v5379, 7
    %v5381 = vsub.s32 0, %v5380
    %v5382 = vrot.slane %v5378, %v5381
    %5387 = vrot.lane.b32.xlu0 %v5374, 64
    %v5388 = vpop.permute.xlu0 %5387
    %5389 = vrot.lane.b32.xlu0 %v5375, 64
    %v5390 = vpop.permute.xlu0 %5389
    %5391 = vrot.lane.b32.xlu0 %v5376, 64
    %v5392 = vpop.permute.xlu0 %5391
    %5393 = vrot.lane.b32.xlu0 %v5377, 64
    %v5394 = vpop.permute.xlu0 %5393
    %v5400 = vsel %vm56, %v5372, 0
    %v5403 = vsel %vm56, %v5373, 0
    %5405 = vmatprep.subr.mxu0 0.0
    %5406 = vmatpush1.msra.mxu0 %v5388
    %5407 = vmatprep.subr.mxu0 0.0
    %5408 = vmatpush1.msra.mxu0 %v5390
    %5409 = vmatprep.subr.mxu0 0.0
    %5410 = vmatpush1.msra.mxu0 %v5392
    %5411 = vmatprep.subr.mxu0 0.0
    %5412 = vmatpush1.msra.mxu0 %v5394
    %5413 = vmatprep.subr.mxu0 0.0
    %5414 = vmatpush1.msra.mxu0 0.0
    %5415 = vmatprep.subr.mxu0 0.0
    %5416 = vmatpush1.msra.mxu0 0.0
    %5417 = vmatprep.subr.mxu0 0.0
    %5418 = vmatpush1.msra.mxu0 0.0
    %5419 = vmatprep.subr.mxu0 0.0
    %5420 = vmatpush1.msra.mxu0 0.0
    %5421 = vmatprep.subr.mxu0 0.0
    %5422 = vmatpush1.msra.mxu0 0.0
    %5423 = vmatprep.subr.mxu0 0.0
    %5424 = vmatpush1.msra.mxu0 0.0
    %5425 = vmatprep.subr.mxu0 0.0
    %5426 = vmatpush1.msra.mxu0 0.0
    %5427 = vmatprep.subr.mxu0 0.0
    %5428 = vmatpush1.msra.mxu0 0.0
    %5429 = vmatprep.subr.mxu0 0.0
    %5430 = vmatpush1.msra.mxu0 0.0
    %5431 = vmatprep.subr.mxu0 0.0
    %5432 = vmatpush1.msra.mxu0 0.0
    %5433 = vmatprep.subr.mxu0 0.0
    %5434 = vmatpush1.msra.mxu0 0.0
    %5435 = vmatprep.subr.mxu0 0.0
    %5436 = vmatpush1.msra.mxu0 0.0
    %5437 = vmatprep.subr.mxu0 0.0
    %5438 = vmatpush1.msra.mxu0 0.0
    %5439 = vmatprep.subr.mxu0 0.0
    %5440 = vmatpush1.msra.mxu0 0.0
    %5441 = vmatprep.subr.mxu0 0.0
    %5442 = vmatpush1.msra.mxu0 0.0
    %5443 = vmatprep.subr.mxu0 0.0
    %5444 = vmatpush1.msra.mxu0 0.0
    %5445 = vmatprep.subr.mxu0 0.0
    %5446 = vmatpush1.msra.mxu0 0.0
    %5447 = vmatprep.subr.mxu0 0.0
    %5448 = vmatpush1.msra.mxu0 0.0
    %5449 = vmatprep.subr.mxu0 0.0
    %5450 = vmatpush1.msra.mxu0 0.0
    %5451 = vmatprep.subr.mxu0 0.0
    %5452 = vmatpush1.msra.mxu0 0.0
    %5453 = vmatprep.subr.mxu0 0.0
    %5454 = vmatpush1.msra.mxu0 0.0
    %5455 = vmatprep.subr.mxu0 0.0
    %5456 = vmatpush1.msra.mxu0 0.0
    %5457 = vmatprep.subr.mxu0 0.0
    %5458 = vmatpush1.msra.mxu0 0.0
    %5459 = vmatprep.subr.mxu0 0.0
    %5460 = vmatpush1.msra.mxu0 0.0
    %5461 = vmatprep.subr.mxu0 0.0
    %5462 = vmatpush1.msra.mxu0 0.0
    %5463 = vmatprep.subr.mxu0 0.0
    %5464 = vmatpush1.msra.mxu0 0.0
    %5465 = vmatprep.subr.mxu0 0.0
    %5466 = vmatpush1.msra.mxu0 0.0
    %5467 = vmatprep.subr.mxu0 0.0
    %5468 = vmatpush1.msra.mxu0 0.0
    %5469 = vmatprep.mubr.f32.mxu0 0.0
    %5470 = vmatmul.mubr.f32.gmra.mrb[0].mxu0 %v5400
    %v5471 = vpop.f32.mrb[0].mxu0
    %v5472 = vadd.f32 %v5382, %v5471
    %v5473 = vpop.f32.mrb[0].mxu0
    %5474 = vmatprep.mubr.f32.mxu0 0.0
    %5475 = vmatmul.mubr.f32.gmra.mrb[0].mxu0 %v5403
    %v5476 = vpop.f32.mrb[0].mxu0
    %v5477 = vadd.f32 %v5382, %v5476
    %v5478 = vpop.f32.mrb[0].mxu0
    %5479 = vdwg.mxu0
    %v5480 = vmax.f32 %v5472, 0.0
    %v5481 = vmax.f32 %v5477, 0.0
    %v5482 = vld [vmem:[#allocation2] sm:$0xff]
    %v5483 = vld [vmem:[#allocation2 + $0x8] sm:$0xff]
    %v5484 = vld [vmem:[#allocation2 + $0x10] sm:$0xff]
    %v5485 = vld [vmem:[#allocation2 + $0x18] sm:$0xff]
    %v5486 = vld [vmem:[#allocation2 + $0x20] sm:$0xff]
    %v5487 = vld [vmem:[#allocation2 + $0x28] sm:$0xff]
    %v5488 = vld [vmem:[#allocation2 + $0x30] sm:$0xff]
    %v5489 = vld [vmem:[#allocation2 + $0x38] sm:$0xff]
    %v5490 = vld [vmem:[%s4 + $0x12] sm:$0x1]
    %v5491 = vlaneseq
    %v5492 = vshrl.u32 %v5491, 7
    %v5493 = vsub.s32 0, %v5492
    %v5494 = vrot.slane %v5490, %v5493
    %5503 = vrot.lane.b32.xlu0 %v5482, 96
    %v5504 = vpop.permute.xlu0 %5503
    %5505 = vrot.lane.b32.xlu0 %v5483, 96
    %v5506 = vpop.permute.xlu0 %5505
    %5507 = vrot.lane.b32.xlu0 %v5484, 96
    %v5508 = vpop.permute.xlu0 %5507
    %5509 = vrot.lane.b32.xlu0 %v5485, 96
    %v5510 = vpop.permute.xlu0 %5509
    %5511 = vrot.lane.b32.xlu0 %v5486, 96
    %v5512 = vpop.permute.xlu0 %5511
    %5513 = vrot.lane.b32.xlu0 %v5487, 96
    %v5514 = vpop.permute.xlu0 %5513
    %5515 = vrot.lane.b32.xlu0 %v5488, 96
    %v5516 = vpop.permute.xlu0 %5515
    %5517 = vrot.lane.b32.xlu0 %v5489, 96
    %v5518 = vpop.permute.xlu0 %5517
    %v5528 = vsel %vm1849, %v5480, 0
    %v5531 = vsel %vm1849, %v5481, 0
    %5533 = vmatprep.subr.mxu0 0.0
    %5534 = vmatpush1.msra.mxu0 %v5504
    %5535 = vmatprep.subr.mxu0 0.0
    %5536 = vmatpush1.msra.mxu0 %v5506
    %5537 = vmatprep.subr.mxu0 0.0
    %5538 = vmatpush1.msra.mxu0 %v5508
    %5539 = vmatprep.subr.mxu0 0.0
    %5540 = vmatpush1.msra.mxu0 %v5510
    %5541 = vmatprep.subr.mxu0 0.0
    %5542 = vmatpush1.msra.mxu0 %v5512
    %5543 = vmatprep.subr.mxu0 0.0
    %5544 = vmatpush1.msra.mxu0 %v5514
    %5545 = vmatprep.subr.mxu0 0.0
    %5546 = vmatpush1.msra.mxu0 %v5516
    %5547 = vmatprep.subr.mxu0 0.0
    %5548 = vmatpush1.msra.mxu0 %v5518
    %5549 = vmatprep.subr.mxu0 0.0
    %5550 = vmatpush1.msra.mxu0 0.0
    %5551 = vmatprep.subr.mxu0 0.0
    %5552 = vmatpush1.msra.mxu0 0.0
    %5553 = vmatprep.subr.mxu0 0.0
    %5554 = vmatpush1.msra.mxu0 0.0
    %5555 = vmatprep.subr.mxu0 0.0
    %5556 = vmatpush1.msra.mxu0 0.0
    %5557 = vmatprep.subr.mxu0 0.0
    %5558 = vmatpush1.msra.mxu0 0.0
    %5559 = vmatprep.subr.mxu0 0.0
    %5560 = vmatpush1.msra.mxu0 0.0
    %5561 = vmatprep.subr.mxu0 0.0
    %5562 = vmatpush1.msra.mxu0 0.0
    %5563 = vmatprep.subr.mxu0 0.0
    %5564 = vmatpush1.msra.mxu0 0.0
    %5565 = vmatprep.subr.mxu0 0.0
    %5566 = vmatpush1.msra.mxu0 0.0
    %5567 = vmatprep.subr.mxu0 0.0
    %5568 = vmatpush1.msra.mxu0 0.0
    %5569 = vmatprep.subr.mxu0 0.0
    %5570 = vmatpush1.msra.mxu0 0.0
    %5571 = vmatprep.subr.mxu0 0.0
    %5572 = vmatpush1.msra.mxu0 0.0
    %5573 = vmatprep.subr.mxu0 0.0
    %5574 = vmatpush1.msra.mxu0 0.0
    %5575 = vmatprep.subr.mxu0 0.0
    %5576 = vmatpush1.msra.mxu0 0.0
    %5577 = vmatprep.subr.mxu0 0.0
    %5578 = vmatpush1.msra.mxu0 0.0
    %5579 = vmatprep.subr.mxu0 0.0
    %5580 = vmatpush1.msra.mxu0 0.0
    %5581 = vmatprep.subr.mxu0 0.0
    %5582 = vmatpush1.msra.mxu0 0.0
    %5583 = vmatprep.subr.mxu0 0.0
    %5584 = vmatpush1.msra.mxu0 0.0
    %5585 = vmatprep.subr.mxu0 0.0
    %5586 = vmatpush1.msra.mxu0 0.0
    %5587 = vmatprep.subr.mxu0 0.0
    %5588 = vmatpush1.msra.mxu0 0.0
    %5589 = vmatprep.subr.mxu0 0.0
    %5590 = vmatpush1.msra.mxu0 0.0
    %5591 = vmatprep.subr.mxu0 0.0
    %5592 = vmatpush1.msra.mxu0 0.0
    %5593 = vmatprep.subr.mxu0 0.0
    %5594 = vmatpush1.msra.mxu0 0.0
    %5595 = vmatprep.subr.mxu0 0.0
    %5596 = vmatpush1.msra.mxu0 0.0
    %5597 = vmatprep.mubr.f32.mxu0 0.0
    %5598 = vmatmul.mubr.f32.gmra.mrb[0].mxu0 %v5528
    %v5599 = vpop.f32.mrb[0].mxu0
    %v5600 = vadd.f32 %v5494, %v5599
    %v5601 = vpop.f32.mrb[0].mxu0
    %5602 = vmatprep.mubr.f32.mxu0 0.0
    %5603 = vmatmul.mubr.f32.gmra.mrb[0].mxu0 %v5531
    %v5604 = vpop.f32.mrb[0].mxu0
    %v5605 = vadd.f32 %v5494, %v5604
    %v5606 = vpop.f32.mrb[0].mxu0
    %5607 = vdwg.mxu0
    %v5608 = vadd.f32 %v5372, %v5600
    %v5609 = vadd.f32 %v5373, %v5605
    %v5610 = vld [vmem:[%s4 + $0x13] sm:$0x1]
    %v5611 = vld [vmem:[%s4 + $0x14] sm:$0x1]
    %v5612 = vsel %vm56, %v5608, 0.0
    %5613 = vadd.xlane.f32.xlu0 %v5612
    %v5614 = vpop.xlane.xlu0 %5613
    %v5615 = vsel %vm56, %v5609, 0.0
    %5616 = vadd.xlane.f32.xlu0 %v5615
    %v5617 = vpop.xlane.xlu0 %5616
    %v5618 = vmul.f32 %v5614, %v1695
    %v5619 = vmul.f32 %v5617, %v1695
    %v5620 = vsub.f32 %v5608, %v5618
    %v5621 = vsub.f32 %v5609, %v5619
    %v5622 = vmul.f32 %v5620, %v5620
    %v5623 = vmul.f32 %v5621, %v5621
    %v5624 = vsel %vm56, %v5622, 0.0
    %5625 = vadd.xlane.f32.xlu0 %v5624
    %v5626 = vpop.xlane.xlu0 %5625
    %v5627 = vsel %vm56, %v5623, 0.0
    %5628 = vadd.xlane.f32.xlu0 %v5627
    %v5629 = vpop.xlane.xlu0 %5628
    %v5630 = vmul.f32 %v5626, %v1695
    %v5631 = vmul.f32 %v5629, %v1695
    %v5632 = vadd.f32 %v5630, 1e-05
    %v5633 = vadd.f32 %v5631, 1e-05
    %v5634 = vrsqrt.pop %v5632
    %v5635 = vrsqrt.pop %v5633
    %v5636 = vmul.f32 %v5620, %v5634
    %v5637 = vmul.f32 %v5621, %v5635
    %v5638 = vlaneseq
    %v5639 = vshrl.u32 %v5638, 7
    %v5640 = vsub.s32 0, %v5639
    %v5641 = vrot.slane %v5610, %v5640
    %v5642 = vmul.f32 %v5636, %v5641
    %v5643 = vmul.f32 %v5637, %v5641
    %v5644 = vlaneseq
    %v5645 = vshrl.u32 %v5644, 7
    %v5646 = vsub.s32 0, %v5645
    %v5647 = vrot.slane %v5611, %v5646
    %v5648 = vadd.f32 %v5642, %v5647
    %v5649 = vadd.f32 %v5643, %v5647
    %v5650 = vld [vmem:[%s2] sm:$0xff]
    %v5651 = vld [vmem:[%s2 + $0x30] sm:$0xff]
    %v5652 = vld [vmem:[%s2 + $0x60] sm:$0xff]
    %v5653 = vld [vmem:[%s2 + $0x90] sm:$0xff]
    %v5654 = vld [vmem:[%s4 + $0x15] sm:$0x1]
    %v5655 = vlaneseq
    %v5656 = vshrl.u32 %v5655, 7
    %v5657 = vsub.s32 0, %v5656
    %v5658 = vrot.slane %v5654, %v5657
    %v5660 = vsel %vm56, %v5648, 0
    %v5663 = vsel %vm56, %v5649, 0
    %5665 = vmatprep.subr.mxu0 0.0
    %5666 = vmatpush1.msra.mxu0 %v5650
    %5667 = vmatprep.subr.mxu0 0.0
    %5668 = vmatpush1.msra.mxu0 %v5651
    %5669 = vmatprep.subr.mxu0 0.0
    %5670 = vmatpush1.msra.mxu0 %v5652
    %5671 = vmatprep.subr.mxu0 0.0
    %5672 = vmatpush1.msra.mxu0 %v5653
    %5673 = vmatprep.subr.mxu0 0.0
    %5674 = vmatpush1.msra.mxu0 0.0
    %5675 = vmatprep.subr.mxu0 0.0
    %5676 = vmatpush1.msra.mxu0 0.0
    %5677 = vmatprep.subr.mxu0 0.0
    %5678 = vmatpush1.msra.mxu0 0.0
    %5679 = vmatprep.subr.mxu0 0.0
    %5680 = vmatpush1.msra.mxu0 0.0
    %5681 = vmatprep.subr.mxu0 0.0
    %5682 = vmatpush1.msra.mxu0 0.0
    %5683 = vmatprep.subr.mxu0 0.0
    %5684 = vmatpush1.msra.mxu0 0.0
    %5685 = vmatprep.subr.mxu0 0.0
    %5686 = vmatpush1.msra.mxu0 0.0
    %5687 = vmatprep.subr.mxu0 0.0
    %5688 = vmatpush1.msra.mxu0 0.0
    %5689 = vmatprep.subr.mxu0 0.0
    %5690 = vmatpush1.msra.mxu0 0.0
    %5691 = vmatprep.subr.mxu0 0.0
    %5692 = vmatpush1.msra.mxu0 0.0
    %5693 = vmatprep.subr.mxu0 0.0
    %5694 = vmatpush1.msra.mxu0 0.0
    %5695 = vmatprep.subr.mxu0 0.0
    %5696 = vmatpush1.msra.mxu0 0.0
    %5697 = vmatprep.subr.mxu0 0.0
    %5698 = vmatpush1.msra.mxu0 0.0
    %5699 = vmatprep.subr.mxu0 0.0
    %5700 = vmatpush1.msra.mxu0 0.0
    %5701 = vmatprep.subr.mxu0 0.0
    %5702 = vmatpush1.msra.mxu0 0.0
    %5703 = vmatprep.subr.mxu0 0.0
    %5704 = vmatpush1.msra.mxu0 0.0
    %5705 = vmatprep.subr.mxu0 0.0
    %5706 = vmatpush1.msra.mxu0 0.0
    %5707 = vmatprep.subr.mxu0 0.0
    %5708 = vmatpush1.msra.mxu0 0.0
    %5709 = vmatprep.subr.mxu0 0.0
    %5710 = vmatpush1.msra.mxu0 0.0
    %5711 = vmatprep.subr.mxu0 0.0
    %5712 = vmatpush1.msra.mxu0 0.0
    %5713 = vmatprep.subr.mxu0 0.0
    %5714 = vmatpush1.msra.mxu0 0.0
    %5715 = vmatprep.subr.mxu0 0.0
    %5716 = vmatpush1.msra.mxu0 0.0
    %5717 = vmatprep.subr.mxu0 0.0
    %5718 = vmatpush1.msra.mxu0 0.0
    %5719 = vmatprep.subr.mxu0 0.0
    %5720 = vmatpush1.msra.mxu0 0.0
    %5721 = vmatprep.subr.mxu0 0.0
    %5722 = vmatpush1.msra.mxu0 0.0
    %5723 = vmatprep.subr.mxu0 0.0
    %5724 = vmatpush1.msra.mxu0 0.0
    %5725 = vmatprep.subr.mxu0 0.0
    %5726 = vmatpush1.msra.mxu0 0.0
    %5727 = vmatprep.subr.mxu0 0.0
    %5728 = vmatpush1.msra.mxu0 0.0
    %5729 = vmatprep.mubr.f32.mxu0 0.0
    %5730 = vmatmul.mubr.f32.gmra.mrb[0].mxu0 %v5660
    %v5731 = vpop.f32.mrb[0].mxu0
    %v5732 = vadd.f32 %v5658, %v5731
    %v5733 = vpop.f32.mrb[0].mxu0
    %5734 = vmatprep.mubr.f32.mxu0 0.0
    %5735 = vmatmul.mubr.f32.gmra.mrb[0].mxu0 %v5663
    %v5736 = vpop.f32.mrb[0].mxu0
    %v5737 = vadd.f32 %v5658, %v5736
    %v5738 = vpop.f32.mrb[0].mxu0
    %5739 = vdwg.mxu0
    %5740 = vst [vmem:[%s5] sm:$0xff] %v5732
    %5741 = vst [vmem:[%s5 + $0x8] sm:$0xff] %v5737
    // Predicated region
    $region26: #{encoder_decoder_forward.1} parent=1 // pred_check
      _
    $region27: #{encoder_decoder_forward.1} parent=1 // pred_check_branch
      %5743 = sbr.rel (0) target = $region29
    $region28: #{encoder_decoder_forward.1} parent=1 // pred_region
      _
    $region29: #{encoder_decoder_forward.1} parent=1 // pred_fallthru
      _
    // Predicated region
    $region30: #{encoder_decoder_forward.1} parent=1 // pred_check
      _
    $region31: #{encoder_decoder_forward.1} parent=1 // pred_check_branch
      %5745 = sbr.rel (0) target = $region33
    $region32: #{encoder_decoder_forward.1} parent=1 // pred_region
      _
    $region33: #{encoder_decoder_forward.1} parent=1 // pred_fallthru
      _
    %5746 = vsyncpa [#allocation3], 1

</llo_original>
